<compile_context>
chip_gen: v7x
topology: tpu7x:2x2x1
jax: 0.10.0
libtpu: 0.0.40
codegen_flags: <defaults>
</compile_context>

<pallas_src>
import functools

import jax
import jax.numpy as jnp
from jax.experimental import pallas as pl
from jax.experimental.pallas import tpu as pltpu


# --------------------------------------------------------------------------- #
# helpers
# --------------------------------------------------------------------------- #
def full_spec(shape):
    """BlockSpec covering the whole array (grid-invariant)."""
    nd = len(shape)
    return pl.BlockSpec(tuple(shape), lambda *_, nd=nd: (0,) * nd)


def conv_im2col(x_nhwc):
    """(N,H,W,Cin) -> (N,H,W,9*Cin), feature order (dy*3+dx)*Cin + cin (3x3, pad=1)."""
    N, H, W, Cin = x_nhwc.shape
    xp = jnp.pad(x_nhwc, ((0, 0), (1, 1), (1, 1), (0, 0)))
    cols = [xp[:, dy:dy + H, dx:dx + W, :] for dy in range(3) for dx in range(3)]
    return jnp.concatenate(cols, axis=-1)


def conv_w_mat(weight_oihw):
    """OIHW conv weight -> (9*Cin, Cout) matching conv_im2col's feature order."""
    cin = weight_oihw.shape[1]
    return jnp.transpose(weight_oihw, (2, 3, 1, 0)).reshape(9 * cin, weight_oihw.shape[0])


# --------------------------------------------------------------------------- #
# conv kernels: one im2col matmul + bias + ReLU (+ fused 2x2 maxpool)
# --------------------------------------------------------------------------- #
def conv_relu_pool_kernel(x_ref, w_ref, b_ref, o_ref):
    # x_ref: (4, M, 9*Cin) -- im2col rows for the 4 positions of every 2x2 pool window
    w = w_ref[...]
    b = b_ref[...]

    def branch(i):
        acc = jnp.dot(x_ref[i], w, preferred_element_type=jnp.float32) + b
        return jnp.maximum(acc, 0.0)

    pooled = jnp.maximum(jnp.maximum(branch(0), branch(1)),
                         jnp.maximum(branch(2), branch(3)))
    o_ref[...] = pooled.astype(o_ref.dtype)


def conv_relu_kernel(x_ref, w_ref, b_ref, o_ref):
    acc = jnp.dot(x_ref[...], w_ref[...], preferred_element_type=jnp.float32) + b_ref[...]
    o_ref[...] = jnp.maximum(acc, 0.0).astype(o_ref.dtype)


def conv3x3_relu_pool(x_nhwc, wmat, brow):
    N, H, W, _ = x_nhwc.shape
    assert H % 2 == 0 and W % 2 == 0, "2x2 maxpool needs even spatial dims"
    K, Cout = wmat.shape
    Ho, Wo = H // 2, W // 2
    M = N * Ho * Wo
    im = conv_im2col(x_nhwc).reshape(N, Ho, 2, Wo, 2, K)
    im = jnp.transpose(im, (2, 4, 0, 1, 3, 5)).reshape(4, M, K).astype(jnp.bfloat16)
    out = pl.pallas_call(
        conv_relu_pool_kernel,
        out_shape=jax.ShapeDtypeStruct((M, Cout), jnp.bfloat16),
        grid=(1,),
        in_specs=[full_spec((4, M, K)), full_spec((K, Cout)), full_spec((1, Cout))],
        out_specs=full_spec((M, Cout)),
    )(im, wmat, brow)
    return out.reshape(N, Ho, Wo, Cout)


def conv3x3_relu(x_nhwc, wmat, brow):
    N, H, W, _ = x_nhwc.shape
    K, Cout = wmat.shape
    M = N * H * W
    im = conv_im2col(x_nhwc).reshape(M, K).astype(jnp.bfloat16)
    out = pl.pallas_call(
        conv_relu_kernel,
        out_shape=jax.ShapeDtypeStruct((M, Cout), jnp.bfloat16),
        grid=(1,),
        in_specs=[full_spec((M, K)), full_spec((K, Cout)), full_spec((1, Cout))],
        out_specs=full_spec((M, Cout)),
    )(im, wmat, brow)
    return out.reshape(N, H, W, Cout)


# --------------------------------------------------------------------------- #
# RNN head: linear1 (fused) -> bidir GRU1 (sum) -> bidir GRU2 (concat) -> linear2
# --------------------------------------------------------------------------- #
def rnn_head_kernel(x_ref, wf1_ref, bf1_ref, whh1_ref, bhh1_ref,
                    wih2_ref, bih2_ref, whh2_ref, bhh2_ref,
                    w2a_ref, w2b_ref, b2_ref, o_ref,
                    gxf_s, gxb_s, f_s, b_s, *, T, BP, H):
    H3 = 3 * H

    def gru_cell(gx, h, whh, bhh):
        # single fused (H, 3H) recurrent matmul; gates [r|z|n] sliced from the result
        gh = jnp.dot(h.astype(jnp.bfloat16), whh,
                     preferred_element_type=jnp.float32) + bhh
        r = jax.nn.sigmoid(gx[:, 0:H] + gh[:, 0:H])
        z = jax.nn.sigmoid(gx[:, H:2 * H] + gh[:, H:2 * H])
        n = jnp.tanh(gx[:, 2 * H:H3] + r * gh[:, 2 * H:H3])
        return (1.0 - z) * n + z * h

    def gru_layer(whh_ref, bhh_ref):
        # both directions in one fully-unrolled pass over time
        whh_f, whh_b = whh_ref[0], whh_ref[1]
        bhh_f, bhh_b = bhh_ref[0], bhh_ref[1]
        hf = jnp.zeros((BP, H), jnp.float32)
        hb = jnp.zeros((BP, H), jnp.float32)
        for s in range(T):
            tf, tb = s, T - 1 - s
            hf = gru_cell(gxf_s[tf * BP:(tf + 1) * BP, :], hf, whh_f, bhh_f)
            hb = gru_cell(gxb_s[tb * BP:(tb + 1) * BP, :], hb, whh_b, bhh_b)
            f_s[tf * BP:(tf + 1) * BP, :] = hf
            b_s[tb * BP:(tb + 1) * BP, :] = hb

    # ---- layer 1: linear1 fused into the input projection, hoisted out of the loop
    x = x_ref[...]
    gxf_s[...] = jnp.dot(x, wf1_ref[0], preferred_element_type=jnp.float32) + bf1_ref[0]
    gxb_s[...] = jnp.dot(x, wf1_ref[1], preferred_element_type=jnp.float32) + bf1_ref[1]
    gru_layer(whh1_ref, bhh1_ref)

    # ---- layer 2: input = sum of the two directions of layer 1
    x2 = (f_s[...] + b_s[...]).astype(jnp.bfloat16)
    gxf_s[...] = jnp.dot(x2, wih2_ref[0], preferred_element_type=jnp.float32) + bih2_ref[0]
    gxb_s[...] = jnp.dot(x2, wih2_ref[1], preferred_element_type=jnp.float32) + bih2_ref[1]
    gru_layer(whh2_ref, bhh2_ref)

    # ---- linear2 on [fwd | bwd]: split-K over the two halves (avoids a lane concat)
    out = (jnp.dot(f_s[...].astype(jnp.bfloat16), w2a_ref[...],
                   preferred_element_type=jnp.float32)
           + jnp.dot(b_s[...].astype(jnp.bfloat16), w2b_ref[...],
                     preferred_element_type=jnp.float32)
           + b2_ref[...])
    o_ref[...] = out


def rnn_head(seq_tbf, q, *, B, nc):
    # seq_tbf: (T, B, 768) bf16, rows ordered (t, n), feature order h*C + c
    T, _, F = seq_tbf.shape
    H = q["whh1"].shape[1]
    NCP = q["b2"].shape[1]
    BP = ((B + 7) // 8) * 8                      # pad batch rows to the 8-sublane tile
    seq_p = jnp.zeros((T, BP, F), seq_tbf.dtype).at[:, :B, :].set(seq_tbf)
    seq_p = seq_p.reshape(T * BP, F)

    args = (seq_p, q["wf1"], q["bf1"], q["whh1"], q["bhh1"],
            q["wih2"], q["bih2"], q["whh2"], q["bhh2"],
            q["w2a"], q["w2b"], q["b2"])
    kern = functools.partial(rnn_head_kernel, T=T, BP=BP, H=H)
    out = pl.pallas_call(
        kern,
        out_shape=jax.ShapeDtypeStruct((T * BP, NCP), jnp.float32),
        grid=(1,),
        in_specs=[full_spec(a.shape) for a in args],
        out_specs=full_spec((T * BP, NCP)),
        scratch_shapes=[pltpu.VMEM((T * BP, 3 * H), jnp.float32),
                        pltpu.VMEM((T * BP, 3 * H), jnp.float32),
                        pltpu.VMEM((T * BP, H), jnp.float32),
                        pltpu.VMEM((T * BP, H), jnp.float32)],
    )(*args)
    return out.reshape(T, BP, NCP)[:, :B, :nc]


# --------------------------------------------------------------------------- #
# CRNN forward
# --------------------------------------------------------------------------- #
def crnn_forward(x_nchw, q, *, num_chars):
    x = jnp.transpose(x_nchw, (0, 2, 3, 1))                          # NCHW -> NHWC
    y = conv3x3_relu_pool(x, q["c1w"], q["c1b"])                     # (N, H/2, W/2, 32)
    y = conv3x3_relu_pool(y, q["c2w"], q["c2b"])                     # (N, H/4, W/4, 64)
    y = conv3x3_relu(y, q["c3w"], q["c3b"])                          # (N, H/4, W/4, 128)

    N, Hh, Ww, C = y.shape
    # rows ordered (t=w, n); feature order h*C + c (linear1 weight is permuted to match)
    seq = jnp.transpose(y, (2, 0, 1, 3)).reshape(Ww, N, Hh * C)
    return rnn_head(seq, q, B=N, nc=num_chars)                       # (T, N, num_chars)


# --------------------------------------------------------------------------- #
# parameter preparation (layout packing, BN fold, linear1 fusion, bf16 casts)
# --------------------------------------------------------------------------- #
def prepare_params(p, *, hidden, num_chars):
    f32, bf16 = jnp.float32, jnp.bfloat16
    H = hidden
    q = {}
    # conv1 / conv2
    q["c1w"] = conv_w_mat(p["c1w"]).astype(bf16)
    q["c1b"] = p["c1b"].reshape(1, -1).astype(f32)
    q["c2w"] = conv_w_mat(p["c2w"]).astype(bf16)
    q["c2b"] = p["c2b"].reshape(1, -1).astype(f32)
    # conv3 with eval-mode BatchNorm folded in
    scale = p["bn_g"] / jnp.sqrt(p["bn_v"] + 1e-5)
    w3 = p["c3w"] * scale[:, None, None, None]
    b3 = (p["c3b"] - p["bn_m"]) * scale + p["bn_b"]
    q["c3w"] = conv_w_mat(w3).astype(bf16)
    q["c3b"] = b3.reshape(1, -1).astype(f32)

    # linear1, permuted from PyTorch feature order (c*Hh + h) to kernel order (h*C + c)
    C = 128
    Hh = p["l1w"].shape[1] // C
    W1 = jnp.transpose(p["l1w"].reshape(H, C, Hh), (2, 1, 0)).reshape(Hh * C, H)
    l1b = p["l1b"]

    def packed(gru):
        wih, whh, bih, bhh = gru       # PyTorch layouts: (3H,In) (3H,H) (3H,) (3H,)
        return wih.T, whh.T, bih, bhh  # gate order stays [r | z | n]

    # rnn1: linear1 algebraically fused into both directions' input projections
    wih1f, whh1f, bih1f, bhh1f = packed(p["g1_fwd"])
    wih1b, whh1b, bih1b, bhh1b = packed(p["g1_bwd"])
    q["wf1"] = jnp.stack([W1 @ wih1f, W1 @ wih1b]).astype(bf16)            # (2,768,3H)
    q["bf1"] = jnp.stack([(l1b @ wih1f + bih1f).reshape(1, -1),
                          (l1b @ wih1b + bih1b).reshape(1, -1)]).astype(f32)
    q["whh1"] = jnp.stack([whh1f, whh1b]).astype(bf16)                     # (2,H,3H)
    q["bhh1"] = jnp.stack([bhh1f.reshape(1, -1),
                           bhh1b.reshape(1, -1)]).astype(f32)              # (2,1,3H)
    # rnn2
    wih2f, whh2f, bih2f, bhh2f = packed(p["g2_fwd"])
    wih2b, whh2b, bih2b, bhh2b = packed(p["g2_bwd"])
    q["wih2"] = jnp.stack([wih2f, wih2b]).astype(bf16)                     # (2,H,3H)
    q["bih2"] = jnp.stack([bih2f.reshape(1, -1),
                           bih2b.reshape(1, -1)]).astype(f32)
    q["whh2"] = jnp.stack([whh2f, whh2b]).astype(bf16)
    q["bhh2"] = jnp.stack([bhh2f.reshape(1, -1),
                           bhh2b.reshape(1, -1)]).astype(f32)
    # linear2, output lanes zero-padded to 128 for lane-dense stores
    NCP = 128
    w2 = p["l2w"].T                                                        # (2H, nc)
    w2p = jnp.zeros((2 * H, NCP), f32).at[:, :num_chars].set(w2)
    q["w2a"] = w2p[:H].astype(bf16)
    q["w2b"] = w2p[H:].astype(bf16)
    q["b2"] = jnp.zeros((1, NCP), f32).at[:, :num_chars].set(p["l2b"].reshape(1, -1))
    return q


# --------------------------------------------------------------------------- #
# deterministic synthetic parameters (PyTorch layouts)
# --------------------------------------------------------------------------- #
def init_params(key, num_chars=16, hidden=64):
    keys = iter(jax.random.split(key, 64))

    def nrm(shape, s):
        return jax.random.normal(next(keys), shape, jnp.float32) * s

    p = {}
    p["c1w"], p["c1b"] = nrm((32, 3, 3, 3), 0.20), nrm((32,), 0.10)
    p["c2w"], p["c2b"] = nrm((64, 32, 3, 3), 0.08), nrm((64,), 0.10)
    p["c3w"], p["c3b"] = nrm((128, 64, 3, 3), 0.05), nrm((128,), 0.10)
    p["bn_g"] = 1.0 + nrm((128,), 0.10)
    p["bn_b"] = nrm((128,), 0.10)
    p["bn_m"] = nrm((128,), 0.10)
    p["bn_v"] = jax.random.uniform(next(keys), (128,), jnp.float32, 0.5, 1.5)
    p["l1w"], p["l1b"] = nrm((hidden, 768), 0.03), nrm((hidden,), 0.10)

    def gru(in_size):
        return (nrm((3 * hidden, in_size), 0.08), nrm((3 * hidden, hidden), 0.08),
                nrm((3 * hidden,), 0.10), nrm((3 * hidden,), 0.10))

    p["g1_fwd"], p["g1_bwd"] = gru(hidden), gru(hidden)
    p["g2_fwd"], p["g2_bwd"] = gru(hidden), gru(hidden)
    p["l2w"], p["l2b"] = nrm((num_chars, 2 * hidden), 0.05), nrm((num_chars,), 0.10)
    return p


# --------------------------------------------------------------------------- #
if __name__ == "__main__":
    NUM_CHARS = 16
    HIDDEN = 64           # rnn_hidden_size (small for the demo)
    B, Cin, Himg, Wimg = 2, 3, 24, 32   # H=24 so 128 * (24/4) = 768 = linear1 in_features

    root = jax.random.PRNGKey(0)
    k_params, k_x = jax.random.split(root)
    params = init_params(k_params, num_chars=NUM_CHARS, hidden=HIDDEN)
    prep = prepare_params(params, hidden=HIDDEN, num_chars=NUM_CHARS)
    x = jax.random.normal(k_x, (B, Cin, Himg, Wimg), jnp.float32)

    fwd = jax.jit(functools.partial(crnn_forward, num_chars=NUM_CHARS))
    out = jax.block_until_ready(fwd(x, prep))

    T_expected = Wimg // 4
    assert out.shape == (T_expected, B, NUM_CHARS), out.shape
    assert bool(jnp.all(jnp.isfinite(out)))
    print("KERNEL_OK")
</pallas_src>

<mosaic_0001>
module attributes {stable_mosaic.version = 11 : i64} {
  func.func @conv_relu_pool_kernel(%arg0: i32, %arg1: memref<4x384x27xbf16, #tpu.memory_space<vmem>>, %arg2: memref<27x32xbf16, #tpu.memory_space<vmem>>, %arg3: memref<1x32xf32, #tpu.memory_space<vmem>>, %arg4: memref<384x32xbf16, #tpu.memory_space<vmem>>) attributes {dimension_semantics = [#tpu.dimension_semantics<arbitrary>], iteration_bounds = array<i64: 1>, scalar_prefetch = 0 : i64, scratch_operands = 0 : i64, tpu.core_type = #tpu.core_type<tc>, window_params = [{pipeline_mode = #tpu.pipeline_mode<synchronous>, transform_indices = @transform_0, window_bounds = array<i64: 4, 384, 27>}, {pipeline_mode = #tpu.pipeline_mode<synchronous>, transform_indices = @transform_1, window_bounds = array<i64: 27, 32>}, {pipeline_mode = #tpu.pipeline_mode<synchronous>, transform_indices = @transform_2, window_bounds = array<i64: 1, 32>}, {pipeline_mode = #tpu.pipeline_mode<synchronous>, transform_indices = @transform_3, window_bounds = array<i64: 384, 32>}]} {
    %c0 = arith.constant 0 : index
    %c0_0 = arith.constant 0 : index
    %0 = vector.load %arg2[%c0, %c0_0] : memref<27x32xbf16, #tpu.memory_space<vmem>>, vector<27x32xbf16>
    %c0_1 = arith.constant 0 : index
    %c0_2 = arith.constant 0 : index
    %1 = vector.load %arg3[%c0_1, %c0_2] : memref<1x32xf32, #tpu.memory_space<vmem>>, vector<1x32xf32>
    %c0_3 = arith.constant 0 : index
    %c0_4 = arith.constant 0 : index
    %c0_5 = arith.constant 0 : index
    %2 = vector.load %arg1[%c0_3, %c0_4, %c0_5] : memref<4x384x27xbf16, #tpu.memory_space<vmem>>, vector<1x384x27xbf16>
    %3 = vector.shape_cast %2 : vector<1x384x27xbf16> to vector<384x27xbf16>
    %cst = arith.constant dense<0.000000e+00> : vector<384x32xf32>
    %4 = tpu.matmul %3, %0, %cst {dimension_numbers = #tpu.dot_dimension_numbers<[1], [0], [0], [1], [0, 0, 1, 1], [], []>} : vector<384x27xbf16>, vector<27x32xbf16>, vector<384x32xf32> -> vector<384x32xf32>
    %5 = vector.broadcast %1 : vector<1x32xf32> to vector<384x32xf32>
    %6 = arith.addf %4, %5 : vector<384x32xf32>
    %cst_6 = arith.constant 0.000000e+00 : f32
    %7 = vector.broadcast %cst_6 : f32 to vector<384x32xf32>
    %8 = arith.maximumf %6, %7 : vector<384x32xf32>
    %c1 = arith.constant 1 : index
    %c0_7 = arith.constant 0 : index
    %c0_8 = arith.constant 0 : index
    %9 = vector.load %arg1[%c1, %c0_7, %c0_8] : memref<4x384x27xbf16, #tpu.memory_space<vmem>>, vector<1x384x27xbf16>
    %10 = vector.shape_cast %9 : vector<1x384x27xbf16> to vector<384x27xbf16>
    %cst_9 = arith.constant dense<0.000000e+00> : vector<384x32xf32>
    %11 = tpu.matmul %10, %0, %cst_9 {dimension_numbers = #tpu.dot_dimension_numbers<[1], [0], [0], [1], [0, 0, 1, 1], [], []>} : vector<384x27xbf16>, vector<27x32xbf16>, vector<384x32xf32> -> vector<384x32xf32>
    %12 = vector.broadcast %1 : vector<1x32xf32> to vector<384x32xf32>
    %13 = arith.addf %11, %12 : vector<384x32xf32>
    %cst_10 = arith.constant 0.000000e+00 : f32
    %14 = vector.broadcast %cst_10 : f32 to vector<384x32xf32>
    %15 = arith.maximumf %13, %14 : vector<384x32xf32>
    %16 = arith.maximumf %8, %15 : vector<384x32xf32>
    %c2 = arith.constant 2 : index
    %c0_11 = arith.constant 0 : index
    %c0_12 = arith.constant 0 : index
    %17 = vector.load %arg1[%c2, %c0_11, %c0_12] : memref<4x384x27xbf16, #tpu.memory_space<vmem>>, vector<1x384x27xbf16>
    %18 = vector.shape_cast %17 : vector<1x384x27xbf16> to vector<384x27xbf16>
    %cst_13 = arith.constant dense<0.000000e+00> : vector<384x32xf32>
    %19 = tpu.matmul %18, %0, %cst_13 {dimension_numbers = #tpu.dot_dimension_numbers<[1], [0], [0], [1], [0, 0, 1, 1], [], []>} : vector<384x27xbf16>, vector<27x32xbf16>, vector<384x32xf32> -> vector<384x32xf32>
    %20 = vector.broadcast %1 : vector<1x32xf32> to vector<384x32xf32>
    %21 = arith.addf %19, %20 : vector<384x32xf32>
    %cst_14 = arith.constant 0.000000e+00 : f32
    %22 = vector.broadcast %cst_14 : f32 to vector<384x32xf32>
    %23 = arith.maximumf %21, %22 : vector<384x32xf32>
    %c3 = arith.constant 3 : index
    %c0_15 = arith.constant 0 : index
    %c0_16 = arith.constant 0 : index
    %24 = vector.load %arg1[%c3, %c0_15, %c0_16] : memref<4x384x27xbf16, #tpu.memory_space<vmem>>, vector<1x384x27xbf16>
    %25 = vector.shape_cast %24 : vector<1x384x27xbf16> to vector<384x27xbf16>
    %cst_17 = arith.constant dense<0.000000e+00> : vector<384x32xf32>
    %26 = tpu.matmul %25, %0, %cst_17 {dimension_numbers = #tpu.dot_dimension_numbers<[1], [0], [0], [1], [0, 0, 1, 1], [], []>} : vector<384x27xbf16>, vector<27x32xbf16>, vector<384x32xf32> -> vector<384x32xf32>
    %27 = vector.broadcast %1 : vector<1x32xf32> to vector<384x32xf32>
    %28 = arith.addf %26, %27 : vector<384x32xf32>
    %cst_18 = arith.constant 0.000000e+00 : f32
    %29 = vector.broadcast %cst_18 : f32 to vector<384x32xf32>
    %30 = arith.maximumf %28, %29 : vector<384x32xf32>
    %31 = arith.maximumf %23, %30 : vector<384x32xf32>
    %32 = arith.maximumf %16, %31 : vector<384x32xf32>
    %33 = arith.truncf %32 : vector<384x32xf32> to vector<384x32xbf16>
    %c0_19 = arith.constant 0 : index
    %c0_20 = arith.constant 0 : index
    %34 = vector.load %arg4[%c0_19, %c0_20] : memref<384x32xbf16, #tpu.memory_space<vmem>>, vector<384x32xbf16>
    tpu.vector_store %arg4[%c0_19, %c0_20], %33 {strides = array<i32>} : memref<384x32xbf16, #tpu.memory_space<vmem>>, vector<384x32xbf16>,
    return
  }
  func.func @transform_0(%arg0: i32) -> (i32, i32, i32) {
    %c0_i32 = arith.constant 0 : i32
    %c0_i32_0 = arith.constant 0 : i32
    %c0_i32_1 = arith.constant 0 : i32
    %c0_i32_2 = arith.constant 0 : i32
    return %c0_i32, %c0_i32_0, %c0_i32_1 : i32, i32, i32
  }
  func.func @transform_1(%arg0: i32) -> (i32, i32) {
    %c0_i32 = arith.constant 0 : i32
    %c0_i32_0 = arith.constant 0 : i32
    %c0_i32_1 = arith.constant 0 : i32
    return %c0_i32, %c0_i32_0 : i32, i32
  }
  func.func @transform_2(%arg0: i32) -> (i32, i32) {
    %c0_i32 = arith.constant 0 : i32
    %c0_i32_0 = arith.constant 0 : i32
    %c0_i32_1 = arith.constant 0 : i32
    return %c0_i32, %c0_i32_0 : i32, i32
  }
  func.func @transform_3(%arg0: i32) -> (i32, i32) {
    %c0_i32 = arith.constant 0 : i32
    %c0_i32_0 = arith.constant 0 : i32
    %c0_i32_1 = arith.constant 0 : i32
    return %c0_i32, %c0_i32_0 : i32, i32
  }
}

module attributes {stable_mosaic.version = 11 : i64} {
  func.func @conv_relu_pool_kernel(%arg0: i32, %arg1: memref<4x96x288xbf16, #tpu.memory_space<vmem>>, %arg2: memref<288x64xbf16, #tpu.memory_space<vmem>>, %arg3: memref<1x64xf32, #tpu.memory_space<vmem>>, %arg4: memref<96x64xbf16, #tpu.memory_space<vmem>>) attributes {dimension_semantics = [#tpu.dimension_semantics<arbitrary>], iteration_bounds = array<i64: 1>, scalar_prefetch = 0 : i64, scratch_operands = 0 : i64, tpu.core_type = #tpu.core_type<tc>, window_params = [{pipeline_mode = #tpu.pipeline_mode<synchronous>, transform_indices = @transform_0, window_bounds = array<i64: 4, 96, 288>}, {pipeline_mode = #tpu.pipeline_mode<synchronous>, transform_indices = @transform_1, window_bounds = array<i64: 288, 64>}, {pipeline_mode = #tpu.pipeline_mode<synchronous>, transform_indices = @transform_2, window_bounds = array<i64: 1, 64>}, {pipeline_mode = #tpu.pipeline_mode<synchronous>, transform_indices = @transform_3, window_bounds = array<i64: 96, 64>}]} {
    %c0 = arith.constant 0 : index
    %c0_0 = arith.constant 0 : index
    %0 = vector.load %arg2[%c0, %c0_0] : memref<288x64xbf16, #tpu.memory_space<vmem>>, vector<288x64xbf16>
    %c0_1 = arith.constant 0 : index
    %c0_2 = arith.constant 0 : index
    %1 = vector.load %arg3[%c0_1, %c0_2] : memref<1x64xf32, #tpu.memory_space<vmem>>, vector<1x64xf32>
    %c0_3 = arith.constant 0 : index
    %c0_4 = arith.constant 0 : index
    %c0_5 = arith.constant 0 : index
    %2 = vector.load %arg1[%c0_3, %c0_4, %c0_5] : memref<4x96x288xbf16, #tpu.memory_space<vmem>>, vector<1x96x288xbf16>
    %3 = vector.shape_cast %2 : vector<1x96x288xbf16> to vector<96x288xbf16>
    %cst = arith.constant dense<0.000000e+00> : vector<96x64xf32>
    %4 = tpu.matmul %3, %0, %cst {dimension_numbers = #tpu.dot_dimension_numbers<[1], [0], [0], [1], [0, 0, 1, 1], [], []>} : vector<96x288xbf16>, vector<288x64xbf16>, vector<96x64xf32> -> vector<96x64xf32>
    %5 = vector.broadcast %1 : vector<1x64xf32> to vector<96x64xf32>
    %6 = arith.addf %4, %5 : vector<96x64xf32>
    %cst_6 = arith.constant 0.000000e+00 : f32
    %7 = vector.broadcast %cst_6 : f32 to vector<96x64xf32>
    %8 = arith.maximumf %6, %7 : vector<96x64xf32>
    %c1 = arith.constant 1 : index
    %c0_7 = arith.constant 0 : index
    %c0_8 = arith.constant 0 : index
    %9 = vector.load %arg1[%c1, %c0_7, %c0_8] : memref<4x96x288xbf16, #tpu.memory_space<vmem>>, vector<1x96x288xbf16>
    %10 = vector.shape_cast %9 : vector<1x96x288xbf16> to vector<96x288xbf16>
    %cst_9 = arith.constant dense<0.000000e+00> : vector<96x64xf32>
    %11 = tpu.matmul %10, %0, %cst_9 {dimension_numbers = #tpu.dot_dimension_numbers<[1], [0], [0], [1], [0, 0, 1, 1], [], []>} : vector<96x288xbf16>, vector<288x64xbf16>, vector<96x64xf32> -> vector<96x64xf32>
    %12 = vector.broadcast %1 : vector<1x64xf32> to vector<96x64xf32>
    %13 = arith.addf %11, %12 : vector<96x64xf32>
    %cst_10 = arith.constant 0.000000e+00 : f32
    %14 = vector.broadcast %cst_10 : f32 to vector<96x64xf32>
    %15 = arith.maximumf %13, %14 : vector<96x64xf32>
    %16 = arith.maximumf %8, %15 : vector<96x64xf32>
    %c2 = arith.constant 2 : index
    %c0_11 = arith.constant 0 : index
    %c0_12 = arith.constant 0 : index
    %17 = vector.load %arg1[%c2, %c0_11, %c0_12] : memref<4x96x288xbf16, #tpu.memory_space<vmem>>, vector<1x96x288xbf16>
    %18 = vector.shape_cast %17 : vector<1x96x288xbf16> to vector<96x288xbf16>
    %cst_13 = arith.constant dense<0.000000e+00> : vector<96x64xf32>
    %19 = tpu.matmul %18, %0, %cst_13 {dimension_numbers = #tpu.dot_dimension_numbers<[1], [0], [0], [1], [0, 0, 1, 1], [], []>} : vector<96x288xbf16>, vector<288x64xbf16>, vector<96x64xf32> -> vector<96x64xf32>
    %20 = vector.broadcast %1 : vector<1x64xf32> to vector<96x64xf32>
    %21 = arith.addf %19, %20 : vector<96x64xf32>
    %cst_14 = arith.constant 0.000000e+00 : f32
    %22 = vector.broadcast %cst_14 : f32 to vector<96x64xf32>
    %23 = arith.maximumf %21, %22 : vector<96x64xf32>
    %c3 = arith.constant 3 : index
    %c0_15 = arith.constant 0 : index
    %c0_16 = arith.constant 0 : index
    %24 = vector.load %arg1[%c3, %c0_15, %c0_16] : memref<4x96x288xbf16, #tpu.memory_space<vmem>>, vector<1x96x288xbf16>
    %25 = vector.shape_cast %24 : vector<1x96x288xbf16> to vector<96x288xbf16>
    %cst_17 = arith.constant dense<0.000000e+00> : vector<96x64xf32>
    %26 = tpu.matmul %25, %0, %cst_17 {dimension_numbers = #tpu.dot_dimension_numbers<[1], [0], [0], [1], [0, 0, 1, 1], [], []>} : vector<96x288xbf16>, vector<288x64xbf16>, vector<96x64xf32> -> vector<96x64xf32>
    %27 = vector.broadcast %1 : vector<1x64xf32> to vector<96x64xf32>
    %28 = arith.addf %26, %27 : vector<96x64xf32>
    %cst_18 = arith.constant 0.000000e+00 : f32
    %29 = vector.broadcast %cst_18 : f32 to vector<96x64xf32>
    %30 = arith.maximumf %28, %29 : vector<96x64xf32>
    %31 = arith.maximumf %23, %30 : vector<96x64xf32>
    %32 = arith.maximumf %16, %31 : vector<96x64xf32>
    %33 = arith.truncf %32 : vector<96x64xf32> to vector<96x64xbf16>
    %c0_19 = arith.constant 0 : index
    %c0_20 = arith.constant 0 : index
    %34 = vector.load %arg4[%c0_19, %c0_20] : memref<96x64xbf16, #tpu.memory_space<vmem>>, vector<96x64xbf16>
    tpu.vector_store %arg4[%c0_19, %c0_20], %33 {strides = array<i32>} : memref<96x64xbf16, #tpu.memory_space<vmem>>, vector<96x64xbf16>,
    return
  }
  func.func @transform_0(%arg0: i32) -> (i32, i32, i32) {
    %c0_i32 = arith.constant 0 : i32
    %c0_i32_0 = arith.constant 0 : i32
    %c0_i32_1 = arith.constant 0 : i32
    %c0_i32_2 = arith.constant 0 : i32
    return %c0_i32, %c0_i32_0, %c0_i32_1 : i32, i32, i32
  }
  func.func @transform_1(%arg0: i32) -> (i32, i32) {
    %c0_i32 = arith.constant 0 : i32
    %c0_i32_0 = arith.constant 0 : i32
    %c0_i32_1 = arith.constant 0 : i32
    return %c0_i32, %c0_i32_0 : i32, i32
  }
  func.func @transform_2(%arg0: i32) -> (i32, i32) {
    %c0_i32 = arith.constant 0 : i32
    %c0_i32_0 = arith.constant 0 : i32
    %c0_i32_1 = arith.constant 0 : i32
    return %c0_i32, %c0_i32_0 : i32, i32
  }
  func.func @transform_3(%arg0: i32) -> (i32, i32) {
    %c0_i32 = arith.constant 0 : i32
    %c0_i32_0 = arith.constant 0 : i32
    %c0_i32_1 = arith.constant 0 : i32
    return %c0_i32, %c0_i32_0 : i32, i32
  }
}

module attributes {stable_mosaic.version = 11 : i64} {
  func.func @conv_relu_kernel(%arg0: i32, %arg1: memref<96x576xbf16, #tpu.memory_space<vmem>>, %arg2: memref<576x128xbf16, #tpu.memory_space<vmem>>, %arg3: memref<1x128xf32, #tpu.memory_space<vmem>>, %arg4: memref<96x128xbf16, #tpu.memory_space<vmem>>) attributes {dimension_semantics = [#tpu.dimension_semantics<arbitrary>], iteration_bounds = array<i64: 1>, scalar_prefetch = 0 : i64, scratch_operands = 0 : i64, tpu.core_type = #tpu.core_type<tc>, window_params = [{pipeline_mode = #tpu.pipeline_mode<synchronous>, transform_indices = @transform_0, window_bounds = array<i64: 96, 576>}, {pipeline_mode = #tpu.pipeline_mode<synchronous>, transform_indices = @transform_1, window_bounds = array<i64: 576, 128>}, {pipeline_mode = #tpu.pipeline_mode<synchronous>, transform_indices = @transform_2, window_bounds = array<i64: 1, 128>}, {pipeline_mode = #tpu.pipeline_mode<synchronous>, transform_indices = @transform_3, window_bounds = array<i64: 96, 128>}]} {
    %c0 = arith.constant 0 : index
    %c0_0 = arith.constant 0 : index
    %0 = vector.load %arg1[%c0, %c0_0] : memref<96x576xbf16, #tpu.memory_space<vmem>>, vector<96x576xbf16>
    %c0_1 = arith.constant 0 : index
    %c0_2 = arith.constant 0 : index
    %1 = vector.load %arg2[%c0_1, %c0_2] : memref<576x128xbf16, #tpu.memory_space<vmem>>, vector<576x128xbf16>
    %cst = arith.constant dense<0.000000e+00> : vector<96x128xf32>
    %2 = tpu.matmul %0, %1, %cst {dimension_numbers = #tpu.dot_dimension_numbers<[1], [0], [0], [1], [0, 0, 1, 1], [], []>} : vector<96x576xbf16>, vector<576x128xbf16>, vector<96x128xf32> -> vector<96x128xf32>
    %c0_3 = arith.constant 0 : index
    %c0_4 = arith.constant 0 : index
    %3 = vector.load %arg3[%c0_3, %c0_4] : memref<1x128xf32, #tpu.memory_space<vmem>>, vector<1x128xf32>
    %4 = vector.broadcast %3 : vector<1x128xf32> to vector<96x128xf32>
    %5 = arith.addf %2, %4 : vector<96x128xf32>
    %cst_5 = arith.constant 0.000000e+00 : f32
    %6 = vector.broadcast %cst_5 : f32 to vector<96x128xf32>
    %7 = arith.maximumf %5, %6 : vector<96x128xf32>
    %8 = arith.truncf %7 : vector<96x128xf32> to vector<96x128xbf16>
    %c0_6 = arith.constant 0 : index
    %c0_7 = arith.constant 0 : index
    %9 = vector.load %arg4[%c0_6, %c0_7] : memref<96x128xbf16, #tpu.memory_space<vmem>>, vector<96x128xbf16>
    tpu.vector_store %arg4[%c0_6, %c0_7], %8 {strides = array<i32>} : memref<96x128xbf16, #tpu.memory_space<vmem>>, vector<96x128xbf16>,
    return
  }
  func.func @transform_0(%arg0: i32) -> (i32, i32) {
    %c0_i32 = arith.constant 0 : i32
    %c0_i32_0 = arith.constant 0 : i32
    %c0_i32_1 = arith.constant 0 : i32
    return %c0_i32, %c0_i32_0 : i32, i32
  }
  func.func @transform_1(%arg0: i32) -> (i32, i32) {
    %c0_i32 = arith.constant 0 : i32
    %c0_i32_0 = arith.constant 0 : i32
    %c0_i32_1 = arith.constant 0 : i32
    return %c0_i32, %c0_i32_0 : i32, i32
  }
  func.func @transform_2(%arg0: i32) -> (i32, i32) {
    %c0_i32 = arith.constant 0 : i32
    %c0_i32_0 = arith.constant 0 : i32
    %c0_i32_1 = arith.constant 0 : i32
    return %c0_i32, %c0_i32_0 : i32, i32
  }
  func.func @transform_3(%arg0: i32) -> (i32, i32) {
    %c0_i32 = arith.constant 0 : i32
    %c0_i32_0 = arith.constant 0 : i32
    %c0_i32_1 = arith.constant 0 : i32
    return %c0_i32, %c0_i32_0 : i32, i32
  }
}

module attributes {stable_mosaic.version = 11 : i64} {
  func.func @rnn_head_kernel(%arg0: i32, %arg1: memref<64x768xbf16, #tpu.memory_space<vmem>>, %arg2: memref<2x768x192xbf16, #tpu.memory_space<vmem>>, %arg3: memref<2x1x192xf32, #tpu.memory_space<vmem>>, %arg4: memref<2x64x192xbf16, #tpu.memory_space<vmem>>, %arg5: memref<2x1x192xf32, #tpu.memory_space<vmem>>, %arg6: memref<2x64x192xbf16, #tpu.memory_space<vmem>>, %arg7: memref<2x1x192xf32, #tpu.memory_space<vmem>>, %arg8: memref<2x64x192xbf16, #tpu.memory_space<vmem>>, %arg9: memref<2x1x192xf32, #tpu.memory_space<vmem>>, %arg10: memref<64x128xbf16, #tpu.memory_space<vmem>>, %arg11: memref<64x128xbf16, #tpu.memory_space<vmem>>, %arg12: memref<1x128xf32, #tpu.memory_space<vmem>>, %arg13: memref<64x128xf32, #tpu.memory_space<vmem>>, %arg14: memref<64x192xf32, #tpu.memory_space<vmem>>, %arg15: memref<64x192xf32, #tpu.memory_space<vmem>>, %arg16: memref<64x64xf32, #tpu.memory_space<vmem>>, %arg17: memref<64x64xf32, #tpu.memory_space<vmem>>) attributes {dimension_semantics = [#tpu.dimension_semantics<arbitrary>], iteration_bounds = array<i64: 1>, scalar_prefetch = 0 : i64, scratch_operands = 4 : i64, tpu.core_type = #tpu.core_type<tc>, window_params = [{pipeline_mode = #tpu.pipeline_mode<synchronous>, transform_indices = @transform_0, window_bounds = array<i64: 64, 768>}, {pipeline_mode = #tpu.pipeline_mode<synchronous>, transform_indices = @transform_1, window_bounds = array<i64: 2, 768, 192>}, {pipeline_mode = #tpu.pipeline_mode<synchronous>, transform_indices = @transform_2, window_bounds = array<i64: 2, 1, 192>}, {pipeline_mode = #tpu.pipeline_mode<synchronous>, transform_indices = @transform_3, window_bounds = array<i64: 2, 64, 192>}, {pipeline_mode = #tpu.pipeline_mode<synchronous>, transform_indices = @transform_4, window_bounds = array<i64: 2, 1, 192>}, {pipeline_mode = #tpu.pipeline_mode<synchronous>, transform_indices = @transform_5, window_bounds = array<i64: 2, 64, 192>}, {pipeline_mode = #tpu.pipeline_mode<synchronous>, transform_indices = @transform_6, window_bounds = array<i64: 2, 1, 192>}, {pipeline_mode = #tpu.pipeline_mode<synchronous>, transform_indices = @transform_7, window_bounds = array<i64: 2, 64, 192>}, {pipeline_mode = #tpu.pipeline_mode<synchronous>, transform_indices = @transform_8, window_bounds = array<i64: 2, 1, 192>}, {pipeline_mode = #tpu.pipeline_mode<synchronous>, transform_indices = @transform_9, window_bounds = array<i64: 64, 128>}, {pipeline_mode = #tpu.pipeline_mode<synchronous>, transform_indices = @transform_10, window_bounds = array<i64: 64, 128>}, {pipeline_mode = #tpu.pipeline_mode<synchronous>, transform_indices = @transform_11, window_bounds = array<i64: 1, 128>}, {pipeline_mode = #tpu.pipeline_mode<synchronous>, transform_indices = @transform_12, window_bounds = array<i64: 64, 128>}]} {
    %c0 = arith.constant 0 : index
    %c0_0 = arith.constant 0 : index
    %0 = vector.load %arg1[%c0, %c0_0] : memref<64x768xbf16, #tpu.memory_space<vmem>>, vector<64x768xbf16>
    %c0_1 = arith.constant 0 : index
    %c0_2 = arith.constant 0 : index
    %c0_3 = arith.constant 0 : index
    %1 = vector.load %arg2[%c0_1, %c0_2, %c0_3] : memref<2x768x192xbf16, #tpu.memory_space<vmem>>, vector<1x768x192xbf16>
    %2 = vector.shape_cast %1 : vector<1x768x192xbf16> to vector<768x192xbf16>
    %cst = arith.constant dense<0.000000e+00> : vector<64x192xf32>
    %3 = tpu.matmul %0, %2, %cst {dimension_numbers = #tpu.dot_dimension_numbers<[1], [0], [0], [1], [0, 0, 1, 1], [], []>} : vector<64x768xbf16>, vector<768x192xbf16>, vector<64x192xf32> -> vector<64x192xf32>
    %c0_4 = arith.constant 0 : index
    %c0_5 = arith.constant 0 : index
    %c0_6 = arith.constant 0 : index
    %4 = vector.load %arg3[%c0_4, %c0_5, %c0_6] : memref<2x1x192xf32, #tpu.memory_space<vmem>>, vector<1x1x192xf32>
    %5 = vector.shape_cast %4 : vector<1x1x192xf32> to vector<1x192xf32>
    %6 = vector.broadcast %5 : vector<1x192xf32> to vector<64x192xf32>
    %7 = arith.addf %3, %6 : vector<64x192xf32>
    %c0_7 = arith.constant 0 : index
    %c0_8 = arith.constant 0 : index
    %8 = vector.load %arg14[%c0_7, %c0_8] : memref<64x192xf32, #tpu.memory_space<vmem>>, vector<64x192xf32>
    tpu.vector_store %arg14[%c0_7, %c0_8], %7 {strides = array<i32>} : memref<64x192xf32, #tpu.memory_space<vmem>>, vector<64x192xf32>,
    %c1 = arith.constant 1 : index
    %c0_9 = arith.constant 0 : index
    %c0_10 = arith.constant 0 : index
    %9 = vector.load %arg2[%c1, %c0_9, %c0_10] : memref<2x768x192xbf16, #tpu.memory_space<vmem>>, vector<1x768x192xbf16>
    %10 = vector.shape_cast %9 : vector<1x768x192xbf16> to vector<768x192xbf16>
    %cst_11 = arith.constant dense<0.000000e+00> : vector<64x192xf32>
    %11 = tpu.matmul %0, %10, %cst_11 {dimension_numbers = #tpu.dot_dimension_numbers<[1], [0], [0], [1], [0, 0, 1, 1], [], []>} : vector<64x768xbf16>, vector<768x192xbf16>, vector<64x192xf32> -> vector<64x192xf32>
    %c1_12 = arith.constant 1 : index
    %c0_13 = arith.constant 0 : index
    %c0_14 = arith.constant 0 : index
    %12 = vector.load %arg3[%c1_12, %c0_13, %c0_14] : memref<2x1x192xf32, #tpu.memory_space<vmem>>, vector<1x1x192xf32>
    %13 = vector.shape_cast %12 : vector<1x1x192xf32> to vector<1x192xf32>
    %14 = vector.broadcast %13 : vector<1x192xf32> to vector<64x192xf32>
    %15 = arith.addf %11, %14 : vector<64x192xf32>
    %c0_15 = arith.constant 0 : index
    %c0_16 = arith.constant 0 : index
    %16 = vector.load %arg15[%c0_15, %c0_16] : memref<64x192xf32, #tpu.memory_space<vmem>>, vector<64x192xf32>
    tpu.vector_store %arg15[%c0_15, %c0_16], %15 {strides = array<i32>} : memref<64x192xf32, #tpu.memory_space<vmem>>, vector<64x192xf32>,
    %c0_17 = arith.constant 0 : index
    %c0_18 = arith.constant 0 : index
    %c0_19 = arith.constant 0 : index
    %17 = vector.load %arg4[%c0_17, %c0_18, %c0_19] : memref<2x64x192xbf16, #tpu.memory_space<vmem>>, vector<1x64x192xbf16>
    %18 = vector.shape_cast %17 : vector<1x64x192xbf16> to vector<64x192xbf16>
    %c1_20 = arith.constant 1 : index
    %c0_21 = arith.constant 0 : index
    %c0_22 = arith.constant 0 : index
    %19 = vector.load %arg4[%c1_20, %c0_21, %c0_22] : memref<2x64x192xbf16, #tpu.memory_space<vmem>>, vector<1x64x192xbf16>
    %20 = vector.shape_cast %19 : vector<1x64x192xbf16> to vector<64x192xbf16>
    %c0_23 = arith.constant 0 : index
    %c0_24 = arith.constant 0 : index
    %c0_25 = arith.constant 0 : index
    %21 = vector.load %arg5[%c0_23, %c0_24, %c0_25] : memref<2x1x192xf32, #tpu.memory_space<vmem>>, vector<1x1x192xf32>
    %22 = vector.shape_cast %21 : vector<1x1x192xf32> to vector<1x192xf32>
    %c1_26 = arith.constant 1 : index
    %c0_27 = arith.constant 0 : index
    %c0_28 = arith.constant 0 : index
    %23 = vector.load %arg5[%c1_26, %c0_27, %c0_28] : memref<2x1x192xf32, #tpu.memory_space<vmem>>, vector<1x1x192xf32>
    %24 = vector.shape_cast %23 : vector<1x1x192xf32> to vector<1x192xf32>
    %cst_29 = arith.constant 0.000000e+00 : f32
    %25 = vector.broadcast %cst_29 : f32 to vector<8x64xf32>
    %cst_30 = arith.constant 0.000000e+00 : f32
    %26 = vector.broadcast %cst_30 : f32 to vector<8x64xf32>
    %c0_31 = arith.constant 0 : index
    %c0_32 = arith.constant 0 : index
    %27 = vector.load %arg14[%c0_31, %c0_32] : memref<64x192xf32, #tpu.memory_space<vmem>>, vector<8x192xf32>
    %28 = arith.truncf %25 : vector<8x64xf32> to vector<8x64xbf16>
    %cst_33 = arith.constant dense<0.000000e+00> : vector<8x192xf32>
    %29 = tpu.matmul %28, %18, %cst_33 {dimension_numbers = #tpu.dot_dimension_numbers<[1], [0], [0], [1], [0, 0, 1, 1], [], []>} : vector<8x64xbf16>, vector<64x192xbf16>, vector<8x192xf32> -> vector<8x192xf32>
    %30 = vector.broadcast %22 : vector<1x192xf32> to vector<8x192xf32>
    %31 = arith.addf %29, %30 : vector<8x192xf32>
    %32 = vector.extract_strided_slice %27 {offsets = [0, 0], sizes = [8, 64], strides = [1, 1]} : vector<8x192xf32> to vector<8x64xf32>
    %33 = vector.extract_strided_slice %31 {offsets = [0, 0], sizes = [8, 64], strides = [1, 1]} : vector<8x192xf32> to vector<8x64xf32>
    %34 = arith.addf %32, %33 : vector<8x64xf32>
    %35 = arith.negf %34 : vector<8x64xf32>
    %36 = math.exp %35 : vector<8x64xf32>
    %cst_34 = arith.constant 1.000000e+00 : f32
    %37 = vector.broadcast %cst_34 : f32 to vector<8x64xf32>
    %38 = arith.addf %37, %36 : vector<8x64xf32>
    %39 = arith.divf %37, %38 : vector<8x64xf32>
    %40 = vector.extract_strided_slice %27 {offsets = [0, 64], sizes = [8, 64], strides = [1, 1]} : vector<8x192xf32> to vector<8x64xf32>
    %41 = vector.extract_strided_slice %31 {offsets = [0, 64], sizes = [8, 64], strides = [1, 1]} : vector<8x192xf32> to vector<8x64xf32>
    %42 = arith.addf %40, %41 : vector<8x64xf32>
    %43 = arith.negf %42 : vector<8x64xf32>
    %44 = math.exp %43 : vector<8x64xf32>
    %cst_35 = arith.constant 1.000000e+00 : f32
    %45 = vector.broadcast %cst_35 : f32 to vector<8x64xf32>
    %46 = arith.addf %45, %44 : vector<8x64xf32>
    %47 = arith.divf %45, %46 : vector<8x64xf32>
    %48 = vector.extract_strided_slice %27 {offsets = [0, 128], sizes = [8, 64], strides = [1, 1]} : vector<8x192xf32> to vector<8x64xf32>
    %49 = vector.extract_strided_slice %31 {offsets = [0, 128], sizes = [8, 64], strides = [1, 1]} : vector<8x192xf32> to vector<8x64xf32>
    %50 = arith.mulf %39, %49 : vector<8x64xf32>
    %51 = arith.addf %48, %50 : vector<8x64xf32>
    %52 = math.tanh %51 : vector<8x64xf32>
    %cst_36 = arith.constant 1.000000e+00 : f32
    %53 = vector.broadcast %cst_36 : f32 to vector<8x64xf32>
    %54 = arith.subf %53, %47 : vector<8x64xf32>
    %55 = arith.mulf %54, %52 : vector<8x64xf32>
    %56 = arith.mulf %47, %25 : vector<8x64xf32>
    %57 = arith.addf %55, %56 : vector<8x64xf32>
    %c56 = arith.constant 56 : index
    %c0_37 = arith.constant 0 : index
    %58 = vector.load %arg15[%c56, %c0_37] : memref<64x192xf32, #tpu.memory_space<vmem>>, vector<8x192xf32>
    %59 = arith.truncf %26 : vector<8x64xf32> to vector<8x64xbf16>
    %cst_38 = arith.constant dense<0.000000e+00> : vector<8x192xf32>
    %60 = tpu.matmul %59, %20, %cst_38 {dimension_numbers = #tpu.dot_dimension_numbers<[1], [0], [0], [1], [0, 0, 1, 1], [], []>} : vector<8x64xbf16>, vector<64x192xbf16>, vector<8x192xf32> -> vector<8x192xf32>
    %61 = vector.broadcast %24 : vector<1x192xf32> to vector<8x192xf32>
    %62 = arith.addf %60, %61 : vector<8x192xf32>
    %63 = vector.extract_strided_slice %58 {offsets = [0, 0], sizes = [8, 64], strides = [1, 1]} : vector<8x192xf32> to vector<8x64xf32>
    %64 = vector.extract_strided_slice %62 {offsets = [0, 0], sizes = [8, 64], strides = [1, 1]} : vector<8x192xf32> to vector<8x64xf32>
    %65 = arith.addf %63, %64 : vector<8x64xf32>
    %66 = arith.negf %65 : vector<8x64xf32>
    %67 = math.exp %66 : vector<8x64xf32>
    %cst_39 = arith.constant 1.000000e+00 : f32
    %68 = vector.broadcast %cst_39 : f32 to vector<8x64xf32>
    %69 = arith.addf %68, %67 : vector<8x64xf32>
    %70 = arith.divf %68, %69 : vector<8x64xf32>
    %71 = vector.extract_strided_slice %58 {offsets = [0, 64], sizes = [8, 64], strides = [1, 1]} : vector<8x192xf32> to vector<8x64xf32>
    %72 = vector.extract_strided_slice %62 {offsets = [0, 64], sizes = [8, 64], strides = [1, 1]} : vector<8x192xf32> to vector<8x64xf32>
    %73 = arith.addf %71, %72 : vector<8x64xf32>
    %74 = arith.negf %73 : vector<8x64xf32>
    %75 = math.exp %74 : vector<8x64xf32>
    %cst_40 = arith.constant 1.000000e+00 : f32
    %76 = vector.broadcast %cst_40 : f32 to vector<8x64xf32>
    %77 = arith.addf %76, %75 : vector<8x64xf32>
    %78 = arith.divf %76, %77 : vector<8x64xf32>
    %79 = vector.extract_strided_slice %58 {offsets = [0, 128], sizes = [8, 64], strides = [1, 1]} : vector<8x192xf32> to vector<8x64xf32>
    %80 = vector.extract_strided_slice %62 {offsets = [0, 128], sizes = [8, 64], strides = [1, 1]} : vector<8x192xf32> to vector<8x64xf32>
    %81 = arith.mulf %70, %80 : vector<8x64xf32>
    %82 = arith.addf %79, %81 : vector<8x64xf32>
    %83 = math.tanh %82 : vector<8x64xf32>
    %cst_41 = arith.constant 1.000000e+00 : f32
    %84 = vector.broadcast %cst_41 : f32 to vector<8x64xf32>
    %85 = arith.subf %84, %78 : vector<8x64xf32>
    %86 = arith.mulf %85, %83 : vector<8x64xf32>
    %87 = arith.mulf %78, %26 : vector<8x64xf32>
    %88 = arith.addf %86, %87 : vector<8x64xf32>
    %c0_42 = arith.constant 0 : index
    %c0_43 = arith.constant 0 : index
    %89 = vector.load %arg16[%c0_42, %c0_43] : memref<64x64xf32, #tpu.memory_space<vmem>>, vector<8x64xf32>
    tpu.vector_store %arg16[%c0_42, %c0_43], %57 {strides = array<i32>} : memref<64x64xf32, #tpu.memory_space<vmem>>, vector<8x64xf32>,
    %c56_44 = arith.constant 56 : index
    %c0_45 = arith.constant 0 : index
    %90 = vector.load %arg17[%c56_44, %c0_45] : memref<64x64xf32, #tpu.memory_space<vmem>>, vector<8x64xf32>
    tpu.vector_store %arg17[%c56_44, %c0_45], %88 {strides = array<i32>} : memref<64x64xf32, #tpu.memory_space<vmem>>, vector<8x64xf32>,
    %c8 = arith.constant 8 : index
    %c0_46 = arith.constant 0 : index
    %91 = vector.load %arg14[%c8, %c0_46] : memref<64x192xf32, #tpu.memory_space<vmem>>, vector<8x192xf32>
    %92 = arith.truncf %57 : vector<8x64xf32> to vector<8x64xbf16>
    %cst_47 = arith.constant dense<0.000000e+00> : vector<8x192xf32>
    %93 = tpu.matmul %92, %18, %cst_47 {dimension_numbers = #tpu.dot_dimension_numbers<[1], [0], [0], [1], [0, 0, 1, 1], [], []>} : vector<8x64xbf16>, vector<64x192xbf16>, vector<8x192xf32> -> vector<8x192xf32>
    %94 = vector.broadcast %22 : vector<1x192xf32> to vector<8x192xf32>
    %95 = arith.addf %93, %94 : vector<8x192xf32>
    %96 = vector.extract_strided_slice %91 {offsets = [0, 0], sizes = [8, 64], strides = [1, 1]} : vector<8x192xf32> to vector<8x64xf32>
    %97 = vector.extract_strided_slice %95 {offsets = [0, 0], sizes = [8, 64], strides = [1, 1]} : vector<8x192xf32> to vector<8x64xf32>
    %98 = arith.addf %96, %97 : vector<8x64xf32>
    %99 = arith.negf %98 : vector<8x64xf32>
    %100 = math.exp %99 : vector<8x64xf32>
    %cst_48 = arith.constant 1.000000e+00 : f32
    %101 = vector.broadcast %cst_48 : f32 to vector<8x64xf32>
    %102 = arith.addf %101, %100 : vector<8x64xf32>
    %103 = arith.divf %101, %102 : vector<8x64xf32>
    %104 = vector.extract_strided_slice %91 {offsets = [0, 64], sizes = [8, 64], strides = [1, 1]} : vector<8x192xf32> to vector<8x64xf32>
    %105 = vector.extract_strided_slice %95 {offsets = [0, 64], sizes = [8, 64], strides = [1, 1]} : vector<8x192xf32> to vector<8x64xf32>
    %106 = arith.addf %104, %105 : vector<8x64xf32>
    %107 = arith.negf %106 : vector<8x64xf32>
    %108 = math.exp %107 : vector<8x64xf32>
    %cst_49 = arith.constant 1.000000e+00 : f32
    %109 = vector.broadcast %cst_49 : f32 to vector<8x64xf32>
    %110 = arith.addf %109, %108 : vector<8x64xf32>
    %111 = arith.divf %109, %110 : vector<8x64xf32>
    %112 = vector.extract_strided_slice %91 {offsets = [0, 128], sizes = [8, 64], strides = [1, 1]} : vector<8x192xf32> to vector<8x64xf32>
    %113 = vector.extract_strided_slice %95 {offsets = [0, 128], sizes = [8, 64], strides = [1, 1]} : vector<8x192xf32> to vector<8x64xf32>
    %114 = arith.mulf %103, %113 : vector<8x64xf32>
    %115 = arith.addf %112, %114 : vector<8x64xf32>
    %116 = math.tanh %115 : vector<8x64xf32>
    %cst_50 = arith.constant 1.000000e+00 : f32
    %117 = vector.broadcast %cst_50 : f32 to vector<8x64xf32>
    %118 = arith.subf %117, %111 : vector<8x64xf32>
    %119 = arith.mulf %118, %116 : vector<8x64xf32>
    %120 = arith.mulf %111, %57 : vector<8x64xf32>
    %121 = arith.addf %119, %120 : vector<8x64xf32>
    %c48 = arith.constant 48 : index
    %c0_51 = arith.constant 0 : index
    %122 = vector.load %arg15[%c48, %c0_51] : memref<64x192xf32, #tpu.memory_space<vmem>>, vector<8x192xf32>
    %123 = arith.truncf %88 : vector<8x64xf32> to vector<8x64xbf16>
    %cst_52 = arith.constant dense<0.000000e+00> : vector<8x192xf32>
    %124 = tpu.matmul %123, %20, %cst_52 {dimension_numbers = #tpu.dot_dimension_numbers<[1], [0], [0], [1], [0, 0, 1, 1], [], []>} : vector<8x64xbf16>, vector<64x192xbf16>, vector<8x192xf32> -> vector<8x192xf32>
    %125 = vector.broadcast %24 : vector<1x192xf32> to vector<8x192xf32>
    %126 = arith.addf %124, %125 : vector<8x192xf32>
    %127 = vector.extract_strided_slice %122 {offsets = [0, 0], sizes = [8, 64], strides = [1, 1]} : vector<8x192xf32> to vector<8x64xf32>
    %128 = vector.extract_strided_slice %126 {offsets = [0, 0], sizes = [8, 64], strides = [1, 1]} : vector<8x192xf32> to vector<8x64xf32>
    %129 = arith.addf %127, %128 : vector<8x64xf32>
    %130 = arith.negf %129 : vector<8x64xf32>
    %131 = math.exp %130 : vector<8x64xf32>
    %cst_53 = arith.constant 1.000000e+00 : f32
    %132 = vector.broadcast %cst_53 : f32 to vector<8x64xf32>
    %133 = arith.addf %132, %131 : vector<8x64xf32>
    %134 = arith.divf %132, %133 : vector<8x64xf32>
    %135 = vector.extract_strided_slice %122 {offsets = [0, 64], sizes = [8, 64], strides = [1, 1]} : vector<8x192xf32> to vector<8x64xf32>
    %136 = vector.extract_strided_slice %126 {offsets = [0, 64], sizes = [8, 64], strides = [1, 1]} : vector<8x192xf32> to vector<8x64xf32>
    %137 = arith.addf %135, %136 : vector<8x64xf32>
    %138 = arith.negf %137 : vector<8x64xf32>
    %139 = math.exp %138 : vector<8x64xf32>
    %cst_54 = arith.constant 1.000000e+00 : f32
    %140 = vector.broadcast %cst_54 : f32 to vector<8x64xf32>
    %141 = arith.addf %140, %139 : vector<8x64xf32>
    %142 = arith.divf %140, %141 : vector<8x64xf32>
    %143 = vector.extract_strided_slice %122 {offsets = [0, 128], sizes = [8, 64], strides = [1, 1]} : vector<8x192xf32> to vector<8x64xf32>
    %144 = vector.extract_strided_slice %126 {offsets = [0, 128], sizes = [8, 64], strides = [1, 1]} : vector<8x192xf32> to vector<8x64xf32>
    %145 = arith.mulf %134, %144 : vector<8x64xf32>
    %146 = arith.addf %143, %145 : vector<8x64xf32>
    %147 = math.tanh %146 : vector<8x64xf32>
    %cst_55 = arith.constant 1.000000e+00 : f32
    %148 = vector.broadcast %cst_55 : f32 to vector<8x64xf32>
    %149 = arith.subf %148, %142 : vector<8x64xf32>
    %150 = arith.mulf %149, %147 : vector<8x64xf32>
    %151 = arith.mulf %142, %88 : vector<8x64xf32>
    %152 = arith.addf %150, %151 : vector<8x64xf32>
    %c8_56 = arith.constant 8 : index
    %c0_57 = arith.constant 0 : index
    %153 = vector.load %arg16[%c8_56, %c0_57] : memref<64x64xf32, #tpu.memory_space<vmem>>, vector<8x64xf32>
    tpu.vector_store %arg16[%c8_56, %c0_57], %121 {strides = array<i32>} : memref<64x64xf32, #tpu.memory_space<vmem>>, vector<8x64xf32>,
    %c48_58 = arith.constant 48 : index
    %c0_59 = arith.constant 0 : index
    %154 = vector.load %arg17[%c48_58, %c0_59] : memref<64x64xf32, #tpu.memory_space<vmem>>, vector<8x64xf32>
    tpu.vector_store %arg17[%c48_58, %c0_59], %152 {strides = array<i32>} : memref<64x64xf32, #tpu.memory_space<vmem>>, vector<8x64xf32>,
    %c16 = arith.constant 16 : index
    %c0_60 = arith.constant 0 : index
    %155 = vector.load %arg14[%c16, %c0_60] : memref<64x192xf32, #tpu.memory_space<vmem>>, vector<8x192xf32>
    %156 = arith.truncf %121 : vector<8x64xf32> to vector<8x64xbf16>
    %cst_61 = arith.constant dense<0.000000e+00> : vector<8x192xf32>
    %157 = tpu.matmul %156, %18, %cst_61 {dimension_numbers = #tpu.dot_dimension_numbers<[1], [0], [0], [1], [0, 0, 1, 1], [], []>} : vector<8x64xbf16>, vector<64x192xbf16>, vector<8x192xf32> -> vector<8x192xf32>
    %158 = vector.broadcast %22 : vector<1x192xf32> to vector<8x192xf32>
    %159 = arith.addf %157, %158 : vector<8x192xf32>
    %160 = vector.extract_strided_slice %155 {offsets = [0, 0], sizes = [8, 64], strides = [1, 1]} : vector<8x192xf32> to vector<8x64xf32>
    %161 = vector.extract_strided_slice %159 {offsets = [0, 0], sizes = [8, 64], strides = [1, 1]} : vector<8x192xf32> to vector<8x64xf32>
    %162 = arith.addf %160, %161 : vector<8x64xf32>
    %163 = arith.negf %162 : vector<8x64xf32>
    %164 = math.exp %163 : vector<8x64xf32>
    %cst_62 = arith.constant 1.000000e+00 : f32
    %165 = vector.broadcast %cst_62 : f32 to vector<8x64xf32>
    %166 = arith.addf %165, %164 : vector<8x64xf32>
    %167 = arith.divf %165, %166 : vector<8x64xf32>
    %168 = vector.extract_strided_slice %155 {offsets = [0, 64], sizes = [8, 64], strides = [1, 1]} : vector<8x192xf32> to vector<8x64xf32>
    %169 = vector.extract_strided_slice %159 {offsets = [0, 64], sizes = [8, 64], strides = [1, 1]} : vector<8x192xf32> to vector<8x64xf32>
    %170 = arith.addf %168, %169 : vector<8x64xf32>
    %171 = arith.negf %170 : vector<8x64xf32>
    %172 = math.exp %171 : vector<8x64xf32>
    %cst_63 = arith.constant 1.000000e+00 : f32
    %173 = vector.broadcast %cst_63 : f32 to vector<8x64xf32>
    %174 = arith.addf %173, %172 : vector<8x64xf32>
    %175 = arith.divf %173, %174 : vector<8x64xf32>
    %176 = vector.extract_strided_slice %155 {offsets = [0, 128], sizes = [8, 64], strides = [1, 1]} : vector<8x192xf32> to vector<8x64xf32>
    %177 = vector.extract_strided_slice %159 {offsets = [0, 128], sizes = [8, 64], strides = [1, 1]} : vector<8x192xf32> to vector<8x64xf32>
    %178 = arith.mulf %167, %177 : vector<8x64xf32>
    %179 = arith.addf %176, %178 : vector<8x64xf32>
    %180 = math.tanh %179 : vector<8x64xf32>
    %cst_64 = arith.constant 1.000000e+00 : f32
    %181 = vector.broadcast %cst_64 : f32 to vector<8x64xf32>
    %182 = arith.subf %181, %175 : vector<8x64xf32>
    %183 = arith.mulf %182, %180 : vector<8x64xf32>
    %184 = arith.mulf %175, %121 : vector<8x64xf32>
    %185 = arith.addf %183, %184 : vector<8x64xf32>
    %c40 = arith.constant 40 : index
    %c0_65 = arith.constant 0 : index
    %186 = vector.load %arg15[%c40, %c0_65] : memref<64x192xf32, #tpu.memory_space<vmem>>, vector<8x192xf32>
    %187 = arith.truncf %152 : vector<8x64xf32> to vector<8x64xbf16>
    %cst_66 = arith.constant dense<0.000000e+00> : vector<8x192xf32>
    %188 = tpu.matmul %187, %20, %cst_66 {dimension_numbers = #tpu.dot_dimension_numbers<[1], [0], [0], [1], [0, 0, 1, 1], [], []>} : vector<8x64xbf16>, vector<64x192xbf16>, vector<8x192xf32> -> vector<8x192xf32>
    %189 = vector.broadcast %24 : vector<1x192xf32> to vector<8x192xf32>
    %190 = arith.addf %188, %189 : vector<8x192xf32>
    %191 = vector.extract_strided_slice %186 {offsets = [0, 0], sizes = [8, 64], strides = [1, 1]} : vector<8x192xf32> to vector<8x64xf32>
    %192 = vector.extract_strided_slice %190 {offsets = [0, 0], sizes = [8, 64], strides = [1, 1]} : vector<8x192xf32> to vector<8x64xf32>
    %193 = arith.addf %191, %192 : vector<8x64xf32>
    %194 = arith.negf %193 : vector<8x64xf32>
    %195 = math.exp %194 : vector<8x64xf32>
    %cst_67 = arith.constant 1.000000e+00 : f32
    %196 = vector.broadcast %cst_67 : f32 to vector<8x64xf32>
    %197 = arith.addf %196, %195 : vector<8x64xf32>
    %198 = arith.divf %196, %197 : vector<8x64xf32>
    %199 = vector.extract_strided_slice %186 {offsets = [0, 64], sizes = [8, 64], strides = [1, 1]} : vector<8x192xf32> to vector<8x64xf32>
    %200 = vector.extract_strided_slice %190 {offsets = [0, 64], sizes = [8, 64], strides = [1, 1]} : vector<8x192xf32> to vector<8x64xf32>
    %201 = arith.addf %199, %200 : vector<8x64xf32>
    %202 = arith.negf %201 : vector<8x64xf32>
    %203 = math.exp %202 : vector<8x64xf32>
    %cst_68 = arith.constant 1.000000e+00 : f32
    %204 = vector.broadcast %cst_68 : f32 to vector<8x64xf32>
    %205 = arith.addf %204, %203 : vector<8x64xf32>
    %206 = arith.divf %204, %205 : vector<8x64xf32>
    %207 = vector.extract_strided_slice %186 {offsets = [0, 128], sizes = [8, 64], strides = [1, 1]} : vector<8x192xf32> to vector<8x64xf32>
    %208 = vector.extract_strided_slice %190 {offsets = [0, 128], sizes = [8, 64], strides = [1, 1]} : vector<8x192xf32> to vector<8x64xf32>
    %209 = arith.mulf %198, %208 : vector<8x64xf32>
    %210 = arith.addf %207, %209 : vector<8x64xf32>
    %211 = math.tanh %210 : vector<8x64xf32>
    %cst_69 = arith.constant 1.000000e+00 : f32
    %212 = vector.broadcast %cst_69 : f32 to vector<8x64xf32>
    %213 = arith.subf %212, %206 : vector<8x64xf32>
    %214 = arith.mulf %213, %211 : vector<8x64xf32>
    %215 = arith.mulf %206, %152 : vector<8x64xf32>
    %216 = arith.addf %214, %215 : vector<8x64xf32>
    %c16_70 = arith.constant 16 : index
    %c0_71 = arith.constant 0 : index
    %217 = vector.load %arg16[%c16_70, %c0_71] : memref<64x64xf32, #tpu.memory_space<vmem>>, vector<8x64xf32>
    tpu.vector_store %arg16[%c16_70, %c0_71], %185 {strides = array<i32>} : memref<64x64xf32, #tpu.memory_space<vmem>>, vector<8x64xf32>,
    %c40_72 = arith.constant 40 : index
    %c0_73 = arith.constant 0 : index
    %218 = vector.load %arg17[%c40_72, %c0_73] : memref<64x64xf32, #tpu.memory_space<vmem>>, vector<8x64xf32>
    tpu.vector_store %arg17[%c40_72, %c0_73], %216 {strides = array<i32>} : memref<64x64xf32, #tpu.memory_space<vmem>>, vector<8x64xf32>,
    %c24 = arith.constant 24 : index
    %c0_74 = arith.constant 0 : index
    %219 = vector.load %arg14[%c24, %c0_74] : memref<64x192xf32, #tpu.memory_space<vmem>>, vector<8x192xf32>
    %220 = arith.truncf %185 : vector<8x64xf32> to vector<8x64xbf16>
    %cst_75 = arith.constant dense<0.000000e+00> : vector<8x192xf32>
    %221 = tpu.matmul %220, %18, %cst_75 {dimension_numbers = #tpu.dot_dimension_numbers<[1], [0], [0], [1], [0, 0, 1, 1], [], []>} : vector<8x64xbf16>, vector<64x192xbf16>, vector<8x192xf32> -> vector<8x192xf32>
    %222 = vector.broadcast %22 : vector<1x192xf32> to vector<8x192xf32>
    %223 = arith.addf %221, %222 : vector<8x192xf32>
    %224 = vector.extract_strided_slice %219 {offsets = [0, 0], sizes = [8, 64], strides = [1, 1]} : vector<8x192xf32> to vector<8x64xf32>
    %225 = vector.extract_strided_slice %223 {offsets = [0, 0], sizes = [8, 64], strides = [1, 1]} : vector<8x192xf32> to vector<8x64xf32>
    %226 = arith.addf %224, %225 : vector<8x64xf32>
    %227 = arith.negf %226 : vector<8x64xf32>
    %228 = math.exp %227 : vector<8x64xf32>
    %cst_76 = arith.constant 1.000000e+00 : f32
    %229 = vector.broadcast %cst_76 : f32 to vector<8x64xf32>
    %230 = arith.addf %229, %228 : vector<8x64xf32>
    %231 = arith.divf %229, %230 : vector<8x64xf32>
    %232 = vector.extract_strided_slice %219 {offsets = [0, 64], sizes = [8, 64], strides = [1, 1]} : vector<8x192xf32> to vector<8x64xf32>
    %233 = vector.extract_strided_slice %223 {offsets = [0, 64], sizes = [8, 64], strides = [1, 1]} : vector<8x192xf32> to vector<8x64xf32>
    %234 = arith.addf %232, %233 : vector<8x64xf32>
    %235 = arith.negf %234 : vector<8x64xf32>
    %236 = math.exp %235 : vector<8x64xf32>
    %cst_77 = arith.constant 1.000000e+00 : f32
    %237 = vector.broadcast %cst_77 : f32 to vector<8x64xf32>
    %238 = arith.addf %237, %236 : vector<8x64xf32>
    %239 = arith.divf %237, %238 : vector<8x64xf32>
    %240 = vector.extract_strided_slice %219 {offsets = [0, 128], sizes = [8, 64], strides = [1, 1]} : vector<8x192xf32> to vector<8x64xf32>
    %241 = vector.extract_strided_slice %223 {offsets = [0, 128], sizes = [8, 64], strides = [1, 1]} : vector<8x192xf32> to vector<8x64xf32>
    %242 = arith.mulf %231, %241 : vector<8x64xf32>
    %243 = arith.addf %240, %242 : vector<8x64xf32>
    %244 = math.tanh %243 : vector<8x64xf32>
    %cst_78 = arith.constant 1.000000e+00 : f32
    %245 = vector.broadcast %cst_78 : f32 to vector<8x64xf32>
    %246 = arith.subf %245, %239 : vector<8x64xf32>
    %247 = arith.mulf %246, %244 : vector<8x64xf32>
    %248 = arith.mulf %239, %185 : vector<8x64xf32>
    %249 = arith.addf %247, %248 : vector<8x64xf32>
    %c32 = arith.constant 32 : index
    %c0_79 = arith.constant 0 : index
    %250 = vector.load %arg15[%c32, %c0_79] : memref<64x192xf32, #tpu.memory_space<vmem>>, vector<8x192xf32>
    %251 = arith.truncf %216 : vector<8x64xf32> to vector<8x64xbf16>
    %cst_80 = arith.constant dense<0.000000e+00> : vector<8x192xf32>
    %252 = tpu.matmul %251, %20, %cst_80 {dimension_numbers = #tpu.dot_dimension_numbers<[1], [0], [0], [1], [0, 0, 1, 1], [], []>} : vector<8x64xbf16>, vector<64x192xbf16>, vector<8x192xf32> -> vector<8x192xf32>
    %253 = vector.broadcast %24 : vector<1x192xf32> to vector<8x192xf32>
    %254 = arith.addf %252, %253 : vector<8x192xf32>
    %255 = vector.extract_strided_slice %250 {offsets = [0, 0], sizes = [8, 64], strides = [1, 1]} : vector<8x192xf32> to vector<8x64xf32>
    %256 = vector.extract_strided_slice %254 {offsets = [0, 0], sizes = [8, 64], strides = [1, 1]} : vector<8x192xf32> to vector<8x64xf32>
    %257 = arith.addf %255, %256 : vector<8x64xf32>
    %258 = arith.negf %257 : vector<8x64xf32>
    %259 = math.exp %258 : vector<8x64xf32>
    %cst_81 = arith.constant 1.000000e+00 : f32
    %260 = vector.broadcast %cst_81 : f32 to vector<8x64xf32>
    %261 = arith.addf %260, %259 : vector<8x64xf32>
    %262 = arith.divf %260, %261 : vector<8x64xf32>
    %263 = vector.extract_strided_slice %250 {offsets = [0, 64], sizes = [8, 64], strides = [1, 1]} : vector<8x192xf32> to vector<8x64xf32>
    %264 = vector.extract_strided_slice %254 {offsets = [0, 64], sizes = [8, 64], strides = [1, 1]} : vector<8x192xf32> to vector<8x64xf32>
    %265 = arith.addf %263, %264 : vector<8x64xf32>
    %266 = arith.negf %265 : vector<8x64xf32>
    %267 = math.exp %266 : vector<8x64xf32>
    %cst_82 = arith.constant 1.000000e+00 : f32
    %268 = vector.broadcast %cst_82 : f32 to vector<8x64xf32>
    %269 = arith.addf %268, %267 : vector<8x64xf32>
    %270 = arith.divf %268, %269 : vector<8x64xf32>
    %271 = vector.extract_strided_slice %250 {offsets = [0, 128], sizes = [8, 64], strides = [1, 1]} : vector<8x192xf32> to vector<8x64xf32>
    %272 = vector.extract_strided_slice %254 {offsets = [0, 128], sizes = [8, 64], strides = [1, 1]} : vector<8x192xf32> to vector<8x64xf32>
    %273 = arith.mulf %262, %272 : vector<8x64xf32>
    %274 = arith.addf %271, %273 : vector<8x64xf32>
    %275 = math.tanh %274 : vector<8x64xf32>
    %cst_83 = arith.constant 1.000000e+00 : f32
    %276 = vector.broadcast %cst_83 : f32 to vector<8x64xf32>
    %277 = arith.subf %276, %270 : vector<8x64xf32>
    %278 = arith.mulf %277, %275 : vector<8x64xf32>
    %279 = arith.mulf %270, %216 : vector<8x64xf32>
    %280 = arith.addf %278, %279 : vector<8x64xf32>
    %c24_84 = arith.constant 24 : index
    %c0_85 = arith.constant 0 : index
    %281 = vector.load %arg16[%c24_84, %c0_85] : memref<64x64xf32, #tpu.memory_space<vmem>>, vector<8x64xf32>
    tpu.vector_store %arg16[%c24_84, %c0_85], %249 {strides = array<i32>} : memref<64x64xf32, #tpu.memory_space<vmem>>, vector<8x64xf32>,
    %c32_86 = arith.constant 32 : index
    %c0_87 = arith.constant 0 : index
    %282 = vector.load %arg17[%c32_86, %c0_87] : memref<64x64xf32, #tpu.memory_space<vmem>>, vector<8x64xf32>
    tpu.vector_store %arg17[%c32_86, %c0_87], %280 {strides = array<i32>} : memref<64x64xf32, #tpu.memory_space<vmem>>, vector<8x64xf32>,
    %c32_88 = arith.constant 32 : index
    %c0_89 = arith.constant 0 : index
    %283 = vector.load %arg14[%c32_88, %c0_89] : memref<64x192xf32, #tpu.memory_space<vmem>>, vector<8x192xf32>
    %284 = arith.truncf %249 : vector<8x64xf32> to vector<8x64xbf16>
    %cst_90 = arith.constant dense<0.000000e+00> : vector<8x192xf32>
    %285 = tpu.matmul %284, %18, %cst_90 {dimension_numbers = #tpu.dot_dimension_numbers<[1], [0], [0], [1], [0, 0, 1, 1], [], []>} : vector<8x64xbf16>, vector<64x192xbf16>, vector<8x192xf32> -> vector<8x192xf32>
    %286 = vector.broadcast %22 : vector<1x192xf32> to vector<8x192xf32>
    %287 = arith.addf %285, %286 : vector<8x192xf32>
    %288 = vector.extract_strided_slice %283 {offsets = [0, 0], sizes = [8, 64], strides = [1, 1]} : vector<8x192xf32> to vector<8x64xf32>
    %289 = vector.extract_strided_slice %287 {offsets = [0, 0], sizes = [8, 64], strides = [1, 1]} : vector<8x192xf32> to vector<8x64xf32>
    %290 = arith.addf %288, %289 : vector<8x64xf32>
    %291 = arith.negf %290 : vector<8x64xf32>
    %292 = math.exp %291 : vector<8x64xf32>
    %cst_91 = arith.constant 1.000000e+00 : f32
    %293 = vector.broadcast %cst_91 : f32 to vector<8x64xf32>
    %294 = arith.addf %293, %292 : vector<8x64xf32>
    %295 = arith.divf %293, %294 : vector<8x64xf32>
    %296 = vector.extract_strided_slice %283 {offsets = [0, 64], sizes = [8, 64], strides = [1, 1]} : vector<8x192xf32> to vector<8x64xf32>
    %297 = vector.extract_strided_slice %287 {offsets = [0, 64], sizes = [8, 64], strides = [1, 1]} : vector<8x192xf32> to vector<8x64xf32>
    %298 = arith.addf %296, %297 : vector<8x64xf32>
    %299 = arith.negf %298 : vector<8x64xf32>
    %300 = math.exp %299 : vector<8x64xf32>
    %cst_92 = arith.constant 1.000000e+00 : f32
    %301 = vector.broadcast %cst_92 : f32 to vector<8x64xf32>
    %302 = arith.addf %301, %300 : vector<8x64xf32>
    %303 = arith.divf %301, %302 : vector<8x64xf32>
    %304 = vector.extract_strided_slice %283 {offsets = [0, 128], sizes = [8, 64], strides = [1, 1]} : vector<8x192xf32> to vector<8x64xf32>
    %305 = vector.extract_strided_slice %287 {offsets = [0, 128], sizes = [8, 64], strides = [1, 1]} : vector<8x192xf32> to vector<8x64xf32>
    %306 = arith.mulf %295, %305 : vector<8x64xf32>
    %307 = arith.addf %304, %306 : vector<8x64xf32>
    %308 = math.tanh %307 : vector<8x64xf32>
    %cst_93 = arith.constant 1.000000e+00 : f32
    %309 = vector.broadcast %cst_93 : f32 to vector<8x64xf32>
    %310 = arith.subf %309, %303 : vector<8x64xf32>
    %311 = arith.mulf %310, %308 : vector<8x64xf32>
    %312 = arith.mulf %303, %249 : vector<8x64xf32>
    %313 = arith.addf %311, %312 : vector<8x64xf32>
    %c24_94 = arith.constant 24 : index
    %c0_95 = arith.constant 0 : index
    %314 = vector.load %arg15[%c24_94, %c0_95] : memref<64x192xf32, #tpu.memory_space<vmem>>, vector<8x192xf32>
    %315 = arith.truncf %280 : vector<8x64xf32> to vector<8x64xbf16>
    %cst_96 = arith.constant dense<0.000000e+00> : vector<8x192xf32>
    %316 = tpu.matmul %315, %20, %cst_96 {dimension_numbers = #tpu.dot_dimension_numbers<[1], [0], [0], [1], [0, 0, 1, 1], [], []>} : vector<8x64xbf16>, vector<64x192xbf16>, vector<8x192xf32> -> vector<8x192xf32>
    %317 = vector.broadcast %24 : vector<1x192xf32> to vector<8x192xf32>
    %318 = arith.addf %316, %317 : vector<8x192xf32>
    %319 = vector.extract_strided_slice %314 {offsets = [0, 0], sizes = [8, 64], strides = [1, 1]} : vector<8x192xf32> to vector<8x64xf32>
    %320 = vector.extract_strided_slice %318 {offsets = [0, 0], sizes = [8, 64], strides = [1, 1]} : vector<8x192xf32> to vector<8x64xf32>
    %321 = arith.addf %319, %320 : vector<8x64xf32>
    %322 = arith.negf %321 : vector<8x64xf32>
    %323 = math.exp %322 : vector<8x64xf32>
    %cst_97 = arith.constant 1.000000e+00 : f32
    %324 = vector.broadcast %cst_97 : f32 to vector<8x64xf32>
    %325 = arith.addf %324, %323 : vector<8x64xf32>
    %326 = arith.divf %324, %325 : vector<8x64xf32>
    %327 = vector.extract_strided_slice %314 {offsets = [0, 64], sizes = [8, 64], strides = [1, 1]} : vector<8x192xf32> to vector<8x64xf32>
    %328 = vector.extract_strided_slice %318 {offsets = [0, 64], sizes = [8, 64], strides = [1, 1]} : vector<8x192xf32> to vector<8x64xf32>
    %329 = arith.addf %327, %328 : vector<8x64xf32>
    %330 = arith.negf %329 : vector<8x64xf32>
    %331 = math.exp %330 : vector<8x64xf32>
    %cst_98 = arith.constant 1.000000e+00 : f32
    %332 = vector.broadcast %cst_98 : f32 to vector<8x64xf32>
    %333 = arith.addf %332, %331 : vector<8x64xf32>
    %334 = arith.divf %332, %333 : vector<8x64xf32>
    %335 = vector.extract_strided_slice %314 {offsets = [0, 128], sizes = [8, 64], strides = [1, 1]} : vector<8x192xf32> to vector<8x64xf32>
    %336 = vector.extract_strided_slice %318 {offsets = [0, 128], sizes = [8, 64], strides = [1, 1]} : vector<8x192xf32> to vector<8x64xf32>
    %337 = arith.mulf %326, %336 : vector<8x64xf32>
    %338 = arith.addf %335, %337 : vector<8x64xf32>
    %339 = math.tanh %338 : vector<8x64xf32>
    %cst_99 = arith.constant 1.000000e+00 : f32
    %340 = vector.broadcast %cst_99 : f32 to vector<8x64xf32>
    %341 = arith.subf %340, %334 : vector<8x64xf32>
    %342 = arith.mulf %341, %339 : vector<8x64xf32>
    %343 = arith.mulf %334, %280 : vector<8x64xf32>
    %344 = arith.addf %342, %343 : vector<8x64xf32>
    %c32_100 = arith.constant 32 : index
    %c0_101 = arith.constant 0 : index
    %345 = vector.load %arg16[%c32_100, %c0_101] : memref<64x64xf32, #tpu.memory_space<vmem>>, vector<8x64xf32>
    tpu.vector_store %arg16[%c32_100, %c0_101], %313 {strides = array<i32>} : memref<64x64xf32, #tpu.memory_space<vmem>>, vector<8x64xf32>,
    %c24_102 = arith.constant 24 : index
    %c0_103 = arith.constant 0 : index
    %346 = vector.load %arg17[%c24_102, %c0_103] : memref<64x64xf32, #tpu.memory_space<vmem>>, vector<8x64xf32>
    tpu.vector_store %arg17[%c24_102, %c0_103], %344 {strides = array<i32>} : memref<64x64xf32, #tpu.memory_space<vmem>>, vector<8x64xf32>,
    %c40_104 = arith.constant 40 : index
    %c0_105 = arith.constant 0 : index
    %347 = vector.load %arg14[%c40_104, %c0_105] : memref<64x192xf32, #tpu.memory_space<vmem>>, vector<8x192xf32>
    %348 = arith.truncf %313 : vector<8x64xf32> to vector<8x64xbf16>
    %cst_106 = arith.constant dense<0.000000e+00> : vector<8x192xf32>
    %349 = tpu.matmul %348, %18, %cst_106 {dimension_numbers = #tpu.dot_dimension_numbers<[1], [0], [0], [1], [0, 0, 1, 1], [], []>} : vector<8x64xbf16>, vector<64x192xbf16>, vector<8x192xf32> -> vector<8x192xf32>
    %350 = vector.broadcast %22 : vector<1x192xf32> to vector<8x192xf32>
    %351 = arith.addf %349, %350 : vector<8x192xf32>
    %352 = vector.extract_strided_slice %347 {offsets = [0, 0], sizes = [8, 64], strides = [1, 1]} : vector<8x192xf32> to vector<8x64xf32>
    %353 = vector.extract_strided_slice %351 {offsets = [0, 0], sizes = [8, 64], strides = [1, 1]} : vector<8x192xf32> to vector<8x64xf32>
    %354 = arith.addf %352, %353 : vector<8x64xf32>
    %355 = arith.negf %354 : vector<8x64xf32>
    %356 = math.exp %355 : vector<8x64xf32>
    %cst_107 = arith.constant 1.000000e+00 : f32
    %357 = vector.broadcast %cst_107 : f32 to vector<8x64xf32>
    %358 = arith.addf %357, %356 : vector<8x64xf32>
    %359 = arith.divf %357, %358 : vector<8x64xf32>
    %360 = vector.extract_strided_slice %347 {offsets = [0, 64], sizes = [8, 64], strides = [1, 1]} : vector<8x192xf32> to vector<8x64xf32>
    %361 = vector.extract_strided_slice %351 {offsets = [0, 64], sizes = [8, 64], strides = [1, 1]} : vector<8x192xf32> to vector<8x64xf32>
    %362 = arith.addf %360, %361 : vector<8x64xf32>
    %363 = arith.negf %362 : vector<8x64xf32>
    %364 = math.exp %363 : vector<8x64xf32>
    %cst_108 = arith.constant 1.000000e+00 : f32
    %365 = vector.broadcast %cst_108 : f32 to vector<8x64xf32>
    %366 = arith.addf %365, %364 : vector<8x64xf32>
    %367 = arith.divf %365, %366 : vector<8x64xf32>
    %368 = vector.extract_strided_slice %347 {offsets = [0, 128], sizes = [8, 64], strides = [1, 1]} : vector<8x192xf32> to vector<8x64xf32>
    %369 = vector.extract_strided_slice %351 {offsets = [0, 128], sizes = [8, 64], strides = [1, 1]} : vector<8x192xf32> to vector<8x64xf32>
    %370 = arith.mulf %359, %369 : vector<8x64xf32>
    %371 = arith.addf %368, %370 : vector<8x64xf32>
    %372 = math.tanh %371 : vector<8x64xf32>
    %cst_109 = arith.constant 1.000000e+00 : f32
    %373 = vector.broadcast %cst_109 : f32 to vector<8x64xf32>
    %374 = arith.subf %373, %367 : vector<8x64xf32>
    %375 = arith.mulf %374, %372 : vector<8x64xf32>
    %376 = arith.mulf %367, %313 : vector<8x64xf32>
    %377 = arith.addf %375, %376 : vector<8x64xf32>
    %c16_110 = arith.constant 16 : index
    %c0_111 = arith.constant 0 : index
    %378 = vector.load %arg15[%c16_110, %c0_111] : memref<64x192xf32, #tpu.memory_space<vmem>>, vector<8x192xf32>
    %379 = arith.truncf %344 : vector<8x64xf32> to vector<8x64xbf16>
    %cst_112 = arith.constant dense<0.000000e+00> : vector<8x192xf32>
    %380 = tpu.matmul %379, %20, %cst_112 {dimension_numbers = #tpu.dot_dimension_numbers<[1], [0], [0], [1], [0, 0, 1, 1], [], []>} : vector<8x64xbf16>, vector<64x192xbf16>, vector<8x192xf32> -> vector<8x192xf32>
    %381 = vector.broadcast %24 : vector<1x192xf32> to vector<8x192xf32>
    %382 = arith.addf %380, %381 : vector<8x192xf32>
    %383 = vector.extract_strided_slice %378 {offsets = [0, 0], sizes = [8, 64], strides = [1, 1]} : vector<8x192xf32> to vector<8x64xf32>
    %384 = vector.extract_strided_slice %382 {offsets = [0, 0], sizes = [8, 64], strides = [1, 1]} : vector<8x192xf32> to vector<8x64xf32>
    %385 = arith.addf %383, %384 : vector<8x64xf32>
    %386 = arith.negf %385 : vector<8x64xf32>
    %387 = math.exp %386 : vector<8x64xf32>
    %cst_113 = arith.constant 1.000000e+00 : f32
    %388 = vector.broadcast %cst_113 : f32 to vector<8x64xf32>
    %389 = arith.addf %388, %387 : vector<8x64xf32>
    %390 = arith.divf %388, %389 : vector<8x64xf32>
    %391 = vector.extract_strided_slice %378 {offsets = [0, 64], sizes = [8, 64], strides = [1, 1]} : vector<8x192xf32> to vector<8x64xf32>
    %392 = vector.extract_strided_slice %382 {offsets = [0, 64], sizes = [8, 64], strides = [1, 1]} : vector<8x192xf32> to vector<8x64xf32>
    %393 = arith.addf %391, %392 : vector<8x64xf32>
    %394 = arith.negf %393 : vector<8x64xf32>
    %395 = math.exp %394 : vector<8x64xf32>
    %cst_114 = arith.constant 1.000000e+00 : f32
    %396 = vector.broadcast %cst_114 : f32 to vector<8x64xf32>
    %397 = arith.addf %396, %395 : vector<8x64xf32>
    %398 = arith.divf %396, %397 : vector<8x64xf32>
    %399 = vector.extract_strided_slice %378 {offsets = [0, 128], sizes = [8, 64], strides = [1, 1]} : vector<8x192xf32> to vector<8x64xf32>
    %400 = vector.extract_strided_slice %382 {offsets = [0, 128], sizes = [8, 64], strides = [1, 1]} : vector<8x192xf32> to vector<8x64xf32>
    %401 = arith.mulf %390, %400 : vector<8x64xf32>
    %402 = arith.addf %399, %401 : vector<8x64xf32>
    %403 = math.tanh %402 : vector<8x64xf32>
    %cst_115 = arith.constant 1.000000e+00 : f32
    %404 = vector.broadcast %cst_115 : f32 to vector<8x64xf32>
    %405 = arith.subf %404, %398 : vector<8x64xf32>
    %406 = arith.mulf %405, %403 : vector<8x64xf32>
    %407 = arith.mulf %398, %344 : vector<8x64xf32>
    %408 = arith.addf %406, %407 : vector<8x64xf32>
    %c40_116 = arith.constant 40 : index
    %c0_117 = arith.constant 0 : index
    %409 = vector.load %arg16[%c40_116, %c0_117] : memref<64x64xf32, #tpu.memory_space<vmem>>, vector<8x64xf32>
    tpu.vector_store %arg16[%c40_116, %c0_117], %377 {strides = array<i32>} : memref<64x64xf32, #tpu.memory_space<vmem>>, vector<8x64xf32>,
    %c16_118 = arith.constant 16 : index
    %c0_119 = arith.constant 0 : index
    %410 = vector.load %arg17[%c16_118, %c0_119] : memref<64x64xf32, #tpu.memory_space<vmem>>, vector<8x64xf32>
    tpu.vector_store %arg17[%c16_118, %c0_119], %408 {strides = array<i32>} : memref<64x64xf32, #tpu.memory_space<vmem>>, vector<8x64xf32>,
    %c48_120 = arith.constant 48 : index
    %c0_121 = arith.constant 0 : index
    %411 = vector.load %arg14[%c48_120, %c0_121] : memref<64x192xf32, #tpu.memory_space<vmem>>, vector<8x192xf32>
    %412 = arith.truncf %377 : vector<8x64xf32> to vector<8x64xbf16>
    %cst_122 = arith.constant dense<0.000000e+00> : vector<8x192xf32>
    %413 = tpu.matmul %412, %18, %cst_122 {dimension_numbers = #tpu.dot_dimension_numbers<[1], [0], [0], [1], [0, 0, 1, 1], [], []>} : vector<8x64xbf16>, vector<64x192xbf16>, vector<8x192xf32> -> vector<8x192xf32>
    %414 = vector.broadcast %22 : vector<1x192xf32> to vector<8x192xf32>
    %415 = arith.addf %413, %414 : vector<8x192xf32>
    %416 = vector.extract_strided_slice %411 {offsets = [0, 0], sizes = [8, 64], strides = [1, 1]} : vector<8x192xf32> to vector<8x64xf32>
    %417 = vector.extract_strided_slice %415 {offsets = [0, 0], sizes = [8, 64], strides = [1, 1]} : vector<8x192xf32> to vector<8x64xf32>
    %418 = arith.addf %416, %417 : vector<8x64xf32>
    %419 = arith.negf %418 : vector<8x64xf32>
    %420 = math.exp %419 : vector<8x64xf32>
    %cst_123 = arith.constant 1.000000e+00 : f32
    %421 = vector.broadcast %cst_123 : f32 to vector<8x64xf32>
    %422 = arith.addf %421, %420 : vector<8x64xf32>
    %423 = arith.divf %421, %422 : vector<8x64xf32>
    %424 = vector.extract_strided_slice %411 {offsets = [0, 64], sizes = [8, 64], strides = [1, 1]} : vector<8x192xf32> to vector<8x64xf32>
    %425 = vector.extract_strided_slice %415 {offsets = [0, 64], sizes = [8, 64], strides = [1, 1]} : vector<8x192xf32> to vector<8x64xf32>
    %426 = arith.addf %424, %425 : vector<8x64xf32>
    %427 = arith.negf %426 : vector<8x64xf32>
    %428 = math.exp %427 : vector<8x64xf32>
    %cst_124 = arith.constant 1.000000e+00 : f32
    %429 = vector.broadcast %cst_124 : f32 to vector<8x64xf32>
    %430 = arith.addf %429, %428 : vector<8x64xf32>
    %431 = arith.divf %429, %430 : vector<8x64xf32>
    %432 = vector.extract_strided_slice %411 {offsets = [0, 128], sizes = [8, 64], strides = [1, 1]} : vector<8x192xf32> to vector<8x64xf32>
    %433 = vector.extract_strided_slice %415 {offsets = [0, 128], sizes = [8, 64], strides = [1, 1]} : vector<8x192xf32> to vector<8x64xf32>
    %434 = arith.mulf %423, %433 : vector<8x64xf32>
    %435 = arith.addf %432, %434 : vector<8x64xf32>
    %436 = math.tanh %435 : vector<8x64xf32>
    %cst_125 = arith.constant 1.000000e+00 : f32
    %437 = vector.broadcast %cst_125 : f32 to vector<8x64xf32>
    %438 = arith.subf %437, %431 : vector<8x64xf32>
    %439 = arith.mulf %438, %436 : vector<8x64xf32>
    %440 = arith.mulf %431, %377 : vector<8x64xf32>
    %441 = arith.addf %439, %440 : vector<8x64xf32>
    %c8_126 = arith.constant 8 : index
    %c0_127 = arith.constant 0 : index
    %442 = vector.load %arg15[%c8_126, %c0_127] : memref<64x192xf32, #tpu.memory_space<vmem>>, vector<8x192xf32>
    %443 = arith.truncf %408 : vector<8x64xf32> to vector<8x64xbf16>
    %cst_128 = arith.constant dense<0.000000e+00> : vector<8x192xf32>
    %444 = tpu.matmul %443, %20, %cst_128 {dimension_numbers = #tpu.dot_dimension_numbers<[1], [0], [0], [1], [0, 0, 1, 1], [], []>} : vector<8x64xbf16>, vector<64x192xbf16>, vector<8x192xf32> -> vector<8x192xf32>
    %445 = vector.broadcast %24 : vector<1x192xf32> to vector<8x192xf32>
    %446 = arith.addf %444, %445 : vector<8x192xf32>
    %447 = vector.extract_strided_slice %442 {offsets = [0, 0], sizes = [8, 64], strides = [1, 1]} : vector<8x192xf32> to vector<8x64xf32>
    %448 = vector.extract_strided_slice %446 {offsets = [0, 0], sizes = [8, 64], strides = [1, 1]} : vector<8x192xf32> to vector<8x64xf32>
    %449 = arith.addf %447, %448 : vector<8x64xf32>
    %450 = arith.negf %449 : vector<8x64xf32>
    %451 = math.exp %450 : vector<8x64xf32>
    %cst_129 = arith.constant 1.000000e+00 : f32
    %452 = vector.broadcast %cst_129 : f32 to vector<8x64xf32>
    %453 = arith.addf %452, %451 : vector<8x64xf32>
    %454 = arith.divf %452, %453 : vector<8x64xf32>
    %455 = vector.extract_strided_slice %442 {offsets = [0, 64], sizes = [8, 64], strides = [1, 1]} : vector<8x192xf32> to vector<8x64xf32>
    %456 = vector.extract_strided_slice %446 {offsets = [0, 64], sizes = [8, 64], strides = [1, 1]} : vector<8x192xf32> to vector<8x64xf32>
    %457 = arith.addf %455, %456 : vector<8x64xf32>
    %458 = arith.negf %457 : vector<8x64xf32>
    %459 = math.exp %458 : vector<8x64xf32>
    %cst_130 = arith.constant 1.000000e+00 : f32
    %460 = vector.broadcast %cst_130 : f32 to vector<8x64xf32>
    %461 = arith.addf %460, %459 : vector<8x64xf32>
    %462 = arith.divf %460, %461 : vector<8x64xf32>
    %463 = vector.extract_strided_slice %442 {offsets = [0, 128], sizes = [8, 64], strides = [1, 1]} : vector<8x192xf32> to vector<8x64xf32>
    %464 = vector.extract_strided_slice %446 {offsets = [0, 128], sizes = [8, 64], strides = [1, 1]} : vector<8x192xf32> to vector<8x64xf32>
    %465 = arith.mulf %454, %464 : vector<8x64xf32>
    %466 = arith.addf %463, %465 : vector<8x64xf32>
    %467 = math.tanh %466 : vector<8x64xf32>
    %cst_131 = arith.constant 1.000000e+00 : f32
    %468 = vector.broadcast %cst_131 : f32 to vector<8x64xf32>
    %469 = arith.subf %468, %462 : vector<8x64xf32>
    %470 = arith.mulf %469, %467 : vector<8x64xf32>
    %471 = arith.mulf %462, %408 : vector<8x64xf32>
    %472 = arith.addf %470, %471 : vector<8x64xf32>
    %c48_132 = arith.constant 48 : index
    %c0_133 = arith.constant 0 : index
    %473 = vector.load %arg16[%c48_132, %c0_133] : memref<64x64xf32, #tpu.memory_space<vmem>>, vector<8x64xf32>
    tpu.vector_store %arg16[%c48_132, %c0_133], %441 {strides = array<i32>} : memref<64x64xf32, #tpu.memory_space<vmem>>, vector<8x64xf32>,
    %c8_134 = arith.constant 8 : index
    %c0_135 = arith.constant 0 : index
    %474 = vector.load %arg17[%c8_134, %c0_135] : memref<64x64xf32, #tpu.memory_space<vmem>>, vector<8x64xf32>
    tpu.vector_store %arg17[%c8_134, %c0_135], %472 {strides = array<i32>} : memref<64x64xf32, #tpu.memory_space<vmem>>, vector<8x64xf32>,
    %c56_136 = arith.constant 56 : index
    %c0_137 = arith.constant 0 : index
    %475 = vector.load %arg14[%c56_136, %c0_137] : memref<64x192xf32, #tpu.memory_space<vmem>>, vector<8x192xf32>
    %476 = arith.truncf %441 : vector<8x64xf32> to vector<8x64xbf16>
    %cst_138 = arith.constant dense<0.000000e+00> : vector<8x192xf32>
    %477 = tpu.matmul %476, %18, %cst_138 {dimension_numbers = #tpu.dot_dimension_numbers<[1], [0], [0], [1], [0, 0, 1, 1], [], []>} : vector<8x64xbf16>, vector<64x192xbf16>, vector<8x192xf32> -> vector<8x192xf32>
    %478 = vector.broadcast %22 : vector<1x192xf32> to vector<8x192xf32>
    %479 = arith.addf %477, %478 : vector<8x192xf32>
    %480 = vector.extract_strided_slice %475 {offsets = [0, 0], sizes = [8, 64], strides = [1, 1]} : vector<8x192xf32> to vector<8x64xf32>
    %481 = vector.extract_strided_slice %479 {offsets = [0, 0], sizes = [8, 64], strides = [1, 1]} : vector<8x192xf32> to vector<8x64xf32>
    %482 = arith.addf %480, %481 : vector<8x64xf32>
    %483 = arith.negf %482 : vector<8x64xf32>
    %484 = math.exp %483 : vector<8x64xf32>
    %cst_139 = arith.constant 1.000000e+00 : f32
    %485 = vector.broadcast %cst_139 : f32 to vector<8x64xf32>
    %486 = arith.addf %485, %484 : vector<8x64xf32>
    %487 = arith.divf %485, %486 : vector<8x64xf32>
    %488 = vector.extract_strided_slice %475 {offsets = [0, 64], sizes = [8, 64], strides = [1, 1]} : vector<8x192xf32> to vector<8x64xf32>
    %489 = vector.extract_strided_slice %479 {offsets = [0, 64], sizes = [8, 64], strides = [1, 1]} : vector<8x192xf32> to vector<8x64xf32>
    %490 = arith.addf %488, %489 : vector<8x64xf32>
    %491 = arith.negf %490 : vector<8x64xf32>
    %492 = math.exp %491 : vector<8x64xf32>
    %cst_140 = arith.constant 1.000000e+00 : f32
    %493 = vector.broadcast %cst_140 : f32 to vector<8x64xf32>
    %494 = arith.addf %493, %492 : vector<8x64xf32>
    %495 = arith.divf %493, %494 : vector<8x64xf32>
    %496 = vector.extract_strided_slice %475 {offsets = [0, 128], sizes = [8, 64], strides = [1, 1]} : vector<8x192xf32> to vector<8x64xf32>
    %497 = vector.extract_strided_slice %479 {offsets = [0, 128], sizes = [8, 64], strides = [1, 1]} : vector<8x192xf32> to vector<8x64xf32>
    %498 = arith.mulf %487, %497 : vector<8x64xf32>
    %499 = arith.addf %496, %498 : vector<8x64xf32>
    %500 = math.tanh %499 : vector<8x64xf32>
    %cst_141 = arith.constant 1.000000e+00 : f32
    %501 = vector.broadcast %cst_141 : f32 to vector<8x64xf32>
    %502 = arith.subf %501, %495 : vector<8x64xf32>
    %503 = arith.mulf %502, %500 : vector<8x64xf32>
    %504 = arith.mulf %495, %441 : vector<8x64xf32>
    %505 = arith.addf %503, %504 : vector<8x64xf32>
    %c0_142 = arith.constant 0 : index
    %c0_143 = arith.constant 0 : index
    %506 = vector.load %arg15[%c0_142, %c0_143] : memref<64x192xf32, #tpu.memory_space<vmem>>, vector<8x192xf32>
    %507 = arith.truncf %472 : vector<8x64xf32> to vector<8x64xbf16>
    %cst_144 = arith.constant dense<0.000000e+00> : vector<8x192xf32>
    %508 = tpu.matmul %507, %20, %cst_144 {dimension_numbers = #tpu.dot_dimension_numbers<[1], [0], [0], [1], [0, 0, 1, 1], [], []>} : vector<8x64xbf16>, vector<64x192xbf16>, vector<8x192xf32> -> vector<8x192xf32>
    %509 = vector.broadcast %24 : vector<1x192xf32> to vector<8x192xf32>
    %510 = arith.addf %508, %509 : vector<8x192xf32>
    %511 = vector.extract_strided_slice %506 {offsets = [0, 0], sizes = [8, 64], strides = [1, 1]} : vector<8x192xf32> to vector<8x64xf32>
    %512 = vector.extract_strided_slice %510 {offsets = [0, 0], sizes = [8, 64], strides = [1, 1]} : vector<8x192xf32> to vector<8x64xf32>
    %513 = arith.addf %511, %512 : vector<8x64xf32>
    %514 = arith.negf %513 : vector<8x64xf32>
    %515 = math.exp %514 : vector<8x64xf32>
    %cst_145 = arith.constant 1.000000e+00 : f32
    %516 = vector.broadcast %cst_145 : f32 to vector<8x64xf32>
    %517 = arith.addf %516, %515 : vector<8x64xf32>
    %518 = arith.divf %516, %517 : vector<8x64xf32>
    %519 = vector.extract_strided_slice %506 {offsets = [0, 64], sizes = [8, 64], strides = [1, 1]} : vector<8x192xf32> to vector<8x64xf32>
    %520 = vector.extract_strided_slice %510 {offsets = [0, 64], sizes = [8, 64], strides = [1, 1]} : vector<8x192xf32> to vector<8x64xf32>
    %521 = arith.addf %519, %520 : vector<8x64xf32>
    %522 = arith.negf %521 : vector<8x64xf32>
    %523 = math.exp %522 : vector<8x64xf32>
    %cst_146 = arith.constant 1.000000e+00 : f32
    %524 = vector.broadcast %cst_146 : f32 to vector<8x64xf32>
    %525 = arith.addf %524, %523 : vector<8x64xf32>
    %526 = arith.divf %524, %525 : vector<8x64xf32>
    %527 = vector.extract_strided_slice %506 {offsets = [0, 128], sizes = [8, 64], strides = [1, 1]} : vector<8x192xf32> to vector<8x64xf32>
    %528 = vector.extract_strided_slice %510 {offsets = [0, 128], sizes = [8, 64], strides = [1, 1]} : vector<8x192xf32> to vector<8x64xf32>
    %529 = arith.mulf %518, %528 : vector<8x64xf32>
    %530 = arith.addf %527, %529 : vector<8x64xf32>
    %531 = math.tanh %530 : vector<8x64xf32>
    %cst_147 = arith.constant 1.000000e+00 : f32
    %532 = vector.broadcast %cst_147 : f32 to vector<8x64xf32>
    %533 = arith.subf %532, %526 : vector<8x64xf32>
    %534 = arith.mulf %533, %531 : vector<8x64xf32>
    %535 = arith.mulf %526, %472 : vector<8x64xf32>
    %536 = arith.addf %534, %535 : vector<8x64xf32>
    %c56_148 = arith.constant 56 : index
    %c0_149 = arith.constant 0 : index
    %537 = vector.load %arg16[%c56_148, %c0_149] : memref<64x64xf32, #tpu.memory_space<vmem>>, vector<8x64xf32>
    tpu.vector_store %arg16[%c56_148, %c0_149], %505 {strides = array<i32>} : memref<64x64xf32, #tpu.memory_space<vmem>>, vector<8x64xf32>,
    %c0_150 = arith.constant 0 : index
    %c0_151 = arith.constant 0 : index
    %538 = vector.load %arg17[%c0_150, %c0_151] : memref<64x64xf32, #tpu.memory_space<vmem>>, vector<8x64xf32>
    tpu.vector_store %arg17[%c0_150, %c0_151], %536 {strides = array<i32>} : memref<64x64xf32, #tpu.memory_space<vmem>>, vector<8x64xf32>,
    %c0_152 = arith.constant 0 : index
    %c0_153 = arith.constant 0 : index
    %539 = vector.load %arg16[%c0_152, %c0_153] : memref<64x64xf32, #tpu.memory_space<vmem>>, vector<64x64xf32>
    %c0_154 = arith.constant 0 : index
    %c0_155 = arith.constant 0 : index
    %540 = vector.load %arg17[%c0_154, %c0_155] : memref<64x64xf32, #tpu.memory_space<vmem>>, vector<64x64xf32>
    %541 = arith.addf %539, %540 : vector<64x64xf32>
    %542 = arith.truncf %541 : vector<64x64xf32> to vector<64x64xbf16>
    %c0_156 = arith.constant 0 : index
    %c0_157 = arith.constant 0 : index
    %c0_158 = arith.constant 0 : index
    %543 = vector.load %arg6[%c0_156, %c0_157, %c0_158] : memref<2x64x192xbf16, #tpu.memory_space<vmem>>, vector<1x64x192xbf16>
    %544 = vector.shape_cast %543 : vector<1x64x192xbf16> to vector<64x192xbf16>
    %cst_159 = arith.constant dense<0.000000e+00> : vector<64x192xf32>
    %545 = tpu.matmul %542, %544, %cst_159 {dimension_numbers = #tpu.dot_dimension_numbers<[1], [0], [0], [1], [0, 0, 1, 1], [], []>} : vector<64x64xbf16>, vector<64x192xbf16>, vector<64x192xf32> -> vector<64x192xf32>
    %c0_160 = arith.constant 0 : index
    %c0_161 = arith.constant 0 : index
    %c0_162 = arith.constant 0 : index
    %546 = vector.load %arg7[%c0_160, %c0_161, %c0_162] : memref<2x1x192xf32, #tpu.memory_space<vmem>>, vector<1x1x192xf32>
    %547 = vector.shape_cast %546 : vector<1x1x192xf32> to vector<1x192xf32>
    %548 = vector.broadcast %547 : vector<1x192xf32> to vector<64x192xf32>
    %549 = arith.addf %545, %548 : vector<64x192xf32>
    %c0_163 = arith.constant 0 : index
    %c0_164 = arith.constant 0 : index
    %550 = vector.load %arg14[%c0_163, %c0_164] : memref<64x192xf32, #tpu.memory_space<vmem>>, vector<64x192xf32>
    tpu.vector_store %arg14[%c0_163, %c0_164], %549 {strides = array<i32>} : memref<64x192xf32, #tpu.memory_space<vmem>>, vector<64x192xf32>,
    %c1_165 = arith.constant 1 : index
    %c0_166 = arith.constant 0 : index
    %c0_167 = arith.constant 0 : index
    %551 = vector.load %arg6[%c1_165, %c0_166, %c0_167] : memref<2x64x192xbf16, #tpu.memory_space<vmem>>, vector<1x64x192xbf16>
    %552 = vector.shape_cast %551 : vector<1x64x192xbf16> to vector<64x192xbf16>
    %cst_168 = arith.constant dense<0.000000e+00> : vector<64x192xf32>
    %553 = tpu.matmul %542, %552, %cst_168 {dimension_numbers = #tpu.dot_dimension_numbers<[1], [0], [0], [1], [0, 0, 1, 1], [], []>} : vector<64x64xbf16>, vector<64x192xbf16>, vector<64x192xf32> -> vector<64x192xf32>
    %c1_169 = arith.constant 1 : index
    %c0_170 = arith.constant 0 : index
    %c0_171 = arith.constant 0 : index
    %554 = vector.load %arg7[%c1_169, %c0_170, %c0_171] : memref<2x1x192xf32, #tpu.memory_space<vmem>>, vector<1x1x192xf32>
    %555 = vector.shape_cast %554 : vector<1x1x192xf32> to vector<1x192xf32>
    %556 = vector.broadcast %555 : vector<1x192xf32> to vector<64x192xf32>
    %557 = arith.addf %553, %556 : vector<64x192xf32>
    %c0_172 = arith.constant 0 : index
    %c0_173 = arith.constant 0 : index
    %558 = vector.load %arg15[%c0_172, %c0_173] : memref<64x192xf32, #tpu.memory_space<vmem>>, vector<64x192xf32>
    tpu.vector_store %arg15[%c0_172, %c0_173], %557 {strides = array<i32>} : memref<64x192xf32, #tpu.memory_space<vmem>>, vector<64x192xf32>,
    %c0_174 = arith.constant 0 : index
    %c0_175 = arith.constant 0 : index
    %c0_176 = arith.constant 0 : index
    %559 = vector.load %arg8[%c0_174, %c0_175, %c0_176] : memref<2x64x192xbf16, #tpu.memory_space<vmem>>, vector<1x64x192xbf16>
    %560 = vector.shape_cast %559 : vector<1x64x192xbf16> to vector<64x192xbf16>
    %c1_177 = arith.constant 1 : index
    %c0_178 = arith.constant 0 : index
    %c0_179 = arith.constant 0 : index
    %561 = vector.load %arg8[%c1_177, %c0_178, %c0_179] : memref<2x64x192xbf16, #tpu.memory_space<vmem>>, vector<1x64x192xbf16>
    %562 = vector.shape_cast %561 : vector<1x64x192xbf16> to vector<64x192xbf16>
    %c0_180 = arith.constant 0 : index
    %c0_181 = arith.constant 0 : index
    %c0_182 = arith.constant 0 : index
    %563 = vector.load %arg9[%c0_180, %c0_181, %c0_182] : memref<2x1x192xf32, #tpu.memory_space<vmem>>, vector<1x1x192xf32>
    %564 = vector.shape_cast %563 : vector<1x1x192xf32> to vector<1x192xf32>
    %c1_183 = arith.constant 1 : index
    %c0_184 = arith.constant 0 : index
    %c0_185 = arith.constant 0 : index
    %565 = vector.load %arg9[%c1_183, %c0_184, %c0_185] : memref<2x1x192xf32, #tpu.memory_space<vmem>>, vector<1x1x192xf32>
    %566 = vector.shape_cast %565 : vector<1x1x192xf32> to vector<1x192xf32>
    %cst_186 = arith.constant 0.000000e+00 : f32
    %567 = vector.broadcast %cst_186 : f32 to vector<8x64xf32>
    %cst_187 = arith.constant 0.000000e+00 : f32
    %568 = vector.broadcast %cst_187 : f32 to vector<8x64xf32>
    %c0_188 = arith.constant 0 : index
    %c0_189 = arith.constant 0 : index
    %569 = vector.load %arg14[%c0_188, %c0_189] : memref<64x192xf32, #tpu.memory_space<vmem>>, vector<8x192xf32>
    %570 = arith.truncf %567 : vector<8x64xf32> to vector<8x64xbf16>
    %cst_190 = arith.constant dense<0.000000e+00> : vector<8x192xf32>
    %571 = tpu.matmul %570, %560, %cst_190 {dimension_numbers = #tpu.dot_dimension_numbers<[1], [0], [0], [1], [0, 0, 1, 1], [], []>} : vector<8x64xbf16>, vector<64x192xbf16>, vector<8x192xf32> -> vector<8x192xf32>
    %572 = vector.broadcast %564 : vector<1x192xf32> to vector<8x192xf32>
    %573 = arith.addf %571, %572 : vector<8x192xf32>
    %574 = vector.extract_strided_slice %569 {offsets = [0, 0], sizes = [8, 64], strides = [1, 1]} : vector<8x192xf32> to vector<8x64xf32>
    %575 = vector.extract_strided_slice %573 {offsets = [0, 0], sizes = [8, 64], strides = [1, 1]} : vector<8x192xf32> to vector<8x64xf32>
    %576 = arith.addf %574, %575 : vector<8x64xf32>
    %577 = arith.negf %576 : vector<8x64xf32>
    %578 = math.exp %577 : vector<8x64xf32>
    %cst_191 = arith.constant 1.000000e+00 : f32
    %579 = vector.broadcast %cst_191 : f32 to vector<8x64xf32>
    %580 = arith.addf %579, %578 : vector<8x64xf32>
    %581 = arith.divf %579, %580 : vector<8x64xf32>
    %582 = vector.extract_strided_slice %569 {offsets = [0, 64], sizes = [8, 64], strides = [1, 1]} : vector<8x192xf32> to vector<8x64xf32>
    %583 = vector.extract_strided_slice %573 {offsets = [0, 64], sizes = [8, 64], strides = [1, 1]} : vector<8x192xf32> to vector<8x64xf32>
    %584 = arith.addf %582, %583 : vector<8x64xf32>
    %585 = arith.negf %584 : vector<8x64xf32>
    %586 = math.exp %585 : vector<8x64xf32>
    %cst_192 = arith.constant 1.000000e+00 : f32
    %587 = vector.broadcast %cst_192 : f32 to vector<8x64xf32>
    %588 = arith.addf %587, %586 : vector<8x64xf32>
    %589 = arith.divf %587, %588 : vector<8x64xf32>
    %590 = vector.extract_strided_slice %569 {offsets = [0, 128], sizes = [8, 64], strides = [1, 1]} : vector<8x192xf32> to vector<8x64xf32>
    %591 = vector.extract_strided_slice %573 {offsets = [0, 128], sizes = [8, 64], strides = [1, 1]} : vector<8x192xf32> to vector<8x64xf32>
    %592 = arith.mulf %581, %591 : vector<8x64xf32>
    %593 = arith.addf %590, %592 : vector<8x64xf32>
    %594 = math.tanh %593 : vector<8x64xf32>
    %cst_193 = arith.constant 1.000000e+00 : f32
    %595 = vector.broadcast %cst_193 : f32 to vector<8x64xf32>
    %596 = arith.subf %595, %589 : vector<8x64xf32>
    %597 = arith.mulf %596, %594 : vector<8x64xf32>
    %598 = arith.mulf %589, %567 : vector<8x64xf32>
    %599 = arith.addf %597, %598 : vector<8x64xf32>
    %c56_194 = arith.constant 56 : index
    %c0_195 = arith.constant 0 : index
    %600 = vector.load %arg15[%c56_194, %c0_195] : memref<64x192xf32, #tpu.memory_space<vmem>>, vector<8x192xf32>
    %601 = arith.truncf %568 : vector<8x64xf32> to vector<8x64xbf16>
    %cst_196 = arith.constant dense<0.000000e+00> : vector<8x192xf32>
    %602 = tpu.matmul %601, %562, %cst_196 {dimension_numbers = #tpu.dot_dimension_numbers<[1], [0], [0], [1], [0, 0, 1, 1], [], []>} : vector<8x64xbf16>, vector<64x192xbf16>, vector<8x192xf32> -> vector<8x192xf32>
    %603 = vector.broadcast %566 : vector<1x192xf32> to vector<8x192xf32>
    %604 = arith.addf %602, %603 : vector<8x192xf32>
    %605 = vector.extract_strided_slice %600 {offsets = [0, 0], sizes = [8, 64], strides = [1, 1]} : vector<8x192xf32> to vector<8x64xf32>
    %606 = vector.extract_strided_slice %604 {offsets = [0, 0], sizes = [8, 64], strides = [1, 1]} : vector<8x192xf32> to vector<8x64xf32>
    %607 = arith.addf %605, %606 : vector<8x64xf32>
    %608 = arith.negf %607 : vector<8x64xf32>
    %609 = math.exp %608 : vector<8x64xf32>
    %cst_197 = arith.constant 1.000000e+00 : f32
    %610 = vector.broadcast %cst_197 : f32 to vector<8x64xf32>
    %611 = arith.addf %610, %609 : vector<8x64xf32>
    %612 = arith.divf %610, %611 : vector<8x64xf32>
    %613 = vector.extract_strided_slice %600 {offsets = [0, 64], sizes = [8, 64], strides = [1, 1]} : vector<8x192xf32> to vector<8x64xf32>
    %614 = vector.extract_strided_slice %604 {offsets = [0, 64], sizes = [8, 64], strides = [1, 1]} : vector<8x192xf32> to vector<8x64xf32>
    %615 = arith.addf %613, %614 : vector<8x64xf32>
    %616 = arith.negf %615 : vector<8x64xf32>
    %617 = math.exp %616 : vector<8x64xf32>
    %cst_198 = arith.constant 1.000000e+00 : f32
    %618 = vector.broadcast %cst_198 : f32 to vector<8x64xf32>
    %619 = arith.addf %618, %617 : vector<8x64xf32>
    %620 = arith.divf %618, %619 : vector<8x64xf32>
    %621 = vector.extract_strided_slice %600 {offsets = [0, 128], sizes = [8, 64], strides = [1, 1]} : vector<8x192xf32> to vector<8x64xf32>
    %622 = vector.extract_strided_slice %604 {offsets = [0, 128], sizes = [8, 64], strides = [1, 1]} : vector<8x192xf32> to vector<8x64xf32>
    %623 = arith.mulf %612, %622 : vector<8x64xf32>
    %624 = arith.addf %621, %623 : vector<8x64xf32>
    %625 = math.tanh %624 : vector<8x64xf32>
    %cst_199 = arith.constant 1.000000e+00 : f32
    %626 = vector.broadcast %cst_199 : f32 to vector<8x64xf32>
    %627 = arith.subf %626, %620 : vector<8x64xf32>
    %628 = arith.mulf %627, %625 : vector<8x64xf32>
    %629 = arith.mulf %620, %568 : vector<8x64xf32>
    %630 = arith.addf %628, %629 : vector<8x64xf32>
    %c0_200 = arith.constant 0 : index
    %c0_201 = arith.constant 0 : index
    %631 = vector.load %arg16[%c0_200, %c0_201] : memref<64x64xf32, #tpu.memory_space<vmem>>, vector<8x64xf32>
    tpu.vector_store %arg16[%c0_200, %c0_201], %599 {strides = array<i32>} : memref<64x64xf32, #tpu.memory_space<vmem>>, vector<8x64xf32>,
    %c56_202 = arith.constant 56 : index
    %c0_203 = arith.constant 0 : index
    %632 = vector.load %arg17[%c56_202, %c0_203] : memref<64x64xf32, #tpu.memory_space<vmem>>, vector<8x64xf32>
    tpu.vector_store %arg17[%c56_202, %c0_203], %630 {strides = array<i32>} : memref<64x64xf32, #tpu.memory_space<vmem>>, vector<8x64xf32>,
    %c8_204 = arith.constant 8 : index
    %c0_205 = arith.constant 0 : index
    %633 = vector.load %arg14[%c8_204, %c0_205] : memref<64x192xf32, #tpu.memory_space<vmem>>, vector<8x192xf32>
    %634 = arith.truncf %599 : vector<8x64xf32> to vector<8x64xbf16>
    %cst_206 = arith.constant dense<0.000000e+00> : vector<8x192xf32>
    %635 = tpu.matmul %634, %560, %cst_206 {dimension_numbers = #tpu.dot_dimension_numbers<[1], [0], [0], [1], [0, 0, 1, 1], [], []>} : vector<8x64xbf16>, vector<64x192xbf16>, vector<8x192xf32> -> vector<8x192xf32>
    %636 = vector.broadcast %564 : vector<1x192xf32> to vector<8x192xf32>
    %637 = arith.addf %635, %636 : vector<8x192xf32>
    %638 = vector.extract_strided_slice %633 {offsets = [0, 0], sizes = [8, 64], strides = [1, 1]} : vector<8x192xf32> to vector<8x64xf32>
    %639 = vector.extract_strided_slice %637 {offsets = [0, 0], sizes = [8, 64], strides = [1, 1]} : vector<8x192xf32> to vector<8x64xf32>
    %640 = arith.addf %638, %639 : vector<8x64xf32>
    %641 = arith.negf %640 : vector<8x64xf32>
    %642 = math.exp %641 : vector<8x64xf32>
    %cst_207 = arith.constant 1.000000e+00 : f32
    %643 = vector.broadcast %cst_207 : f32 to vector<8x64xf32>
    %644 = arith.addf %643, %642 : vector<8x64xf32>
    %645 = arith.divf %643, %644 : vector<8x64xf32>
    %646 = vector.extract_strided_slice %633 {offsets = [0, 64], sizes = [8, 64], strides = [1, 1]} : vector<8x192xf32> to vector<8x64xf32>
    %647 = vector.extract_strided_slice %637 {offsets = [0, 64], sizes = [8, 64], strides = [1, 1]} : vector<8x192xf32> to vector<8x64xf32>
    %648 = arith.addf %646, %647 : vector<8x64xf32>
    %649 = arith.negf %648 : vector<8x64xf32>
    %650 = math.exp %649 : vector<8x64xf32>
    %cst_208 = arith.constant 1.000000e+00 : f32
    %651 = vector.broadcast %cst_208 : f32 to vector<8x64xf32>
    %652 = arith.addf %651, %650 : vector<8x64xf32>
    %653 = arith.divf %651, %652 : vector<8x64xf32>
    %654 = vector.extract_strided_slice %633 {offsets = [0, 128], sizes = [8, 64], strides = [1, 1]} : vector<8x192xf32> to vector<8x64xf32>
    %655 = vector.extract_strided_slice %637 {offsets = [0, 128], sizes = [8, 64], strides = [1, 1]} : vector<8x192xf32> to vector<8x64xf32>
    %656 = arith.mulf %645, %655 : vector<8x64xf32>
    %657 = arith.addf %654, %656 : vector<8x64xf32>
    %658 = math.tanh %657 : vector<8x64xf32>
    %cst_209 = arith.constant 1.000000e+00 : f32
    %659 = vector.broadcast %cst_209 : f32 to vector<8x64xf32>
    %660 = arith.subf %659, %653 : vector<8x64xf32>
    %661 = arith.mulf %660, %658 : vector<8x64xf32>
    %662 = arith.mulf %653, %599 : vector<8x64xf32>
    %663 = arith.addf %661, %662 : vector<8x64xf32>
    %c48_210 = arith.constant 48 : index
    %c0_211 = arith.constant 0 : index
    %664 = vector.load %arg15[%c48_210, %c0_211] : memref<64x192xf32, #tpu.memory_space<vmem>>, vector<8x192xf32>
    %665 = arith.truncf %630 : vector<8x64xf32> to vector<8x64xbf16>
    %cst_212 = arith.constant dense<0.000000e+00> : vector<8x192xf32>
    %666 = tpu.matmul %665, %562, %cst_212 {dimension_numbers = #tpu.dot_dimension_numbers<[1], [0], [0], [1], [0, 0, 1, 1], [], []>} : vector<8x64xbf16>, vector<64x192xbf16>, vector<8x192xf32> -> vector<8x192xf32>
    %667 = vector.broadcast %566 : vector<1x192xf32> to vector<8x192xf32>
    %668 = arith.addf %666, %667 : vector<8x192xf32>
    %669 = vector.extract_strided_slice %664 {offsets = [0, 0], sizes = [8, 64], strides = [1, 1]} : vector<8x192xf32> to vector<8x64xf32>
    %670 = vector.extract_strided_slice %668 {offsets = [0, 0], sizes = [8, 64], strides = [1, 1]} : vector<8x192xf32> to vector<8x64xf32>
    %671 = arith.addf %669, %670 : vector<8x64xf32>
    %672 = arith.negf %671 : vector<8x64xf32>
    %673 = math.exp %672 : vector<8x64xf32>
    %cst_213 = arith.constant 1.000000e+00 : f32
    %674 = vector.broadcast %cst_213 : f32 to vector<8x64xf32>
    %675 = arith.addf %674, %673 : vector<8x64xf32>
    %676 = arith.divf %674, %675 : vector<8x64xf32>
    %677 = vector.extract_strided_slice %664 {offsets = [0, 64], sizes = [8, 64], strides = [1, 1]} : vector<8x192xf32> to vector<8x64xf32>
    %678 = vector.extract_strided_slice %668 {offsets = [0, 64], sizes = [8, 64], strides = [1, 1]} : vector<8x192xf32> to vector<8x64xf32>
    %679 = arith.addf %677, %678 : vector<8x64xf32>
    %680 = arith.negf %679 : vector<8x64xf32>
    %681 = math.exp %680 : vector<8x64xf32>
    %cst_214 = arith.constant 1.000000e+00 : f32
    %682 = vector.broadcast %cst_214 : f32 to vector<8x64xf32>
    %683 = arith.addf %682, %681 : vector<8x64xf32>
    %684 = arith.divf %682, %683 : vector<8x64xf32>
    %685 = vector.extract_strided_slice %664 {offsets = [0, 128], sizes = [8, 64], strides = [1, 1]} : vector<8x192xf32> to vector<8x64xf32>
    %686 = vector.extract_strided_slice %668 {offsets = [0, 128], sizes = [8, 64], strides = [1, 1]} : vector<8x192xf32> to vector<8x64xf32>
    %687 = arith.mulf %676, %686 : vector<8x64xf32>
    %688 = arith.addf %685, %687 : vector<8x64xf32>
    %689 = math.tanh %688 : vector<8x64xf32>
    %cst_215 = arith.constant 1.000000e+00 : f32
    %690 = vector.broadcast %cst_215 : f32 to vector<8x64xf32>
    %691 = arith.subf %690, %684 : vector<8x64xf32>
    %692 = arith.mulf %691, %689 : vector<8x64xf32>
    %693 = arith.mulf %684, %630 : vector<8x64xf32>
    %694 = arith.addf %692, %693 : vector<8x64xf32>
    %c8_216 = arith.constant 8 : index
    %c0_217 = arith.constant 0 : index
    %695 = vector.load %arg16[%c8_216, %c0_217] : memref<64x64xf32, #tpu.memory_space<vmem>>, vector<8x64xf32>
    tpu.vector_store %arg16[%c8_216, %c0_217], %663 {strides = array<i32>} : memref<64x64xf32, #tpu.memory_space<vmem>>, vector<8x64xf32>,
    %c48_218 = arith.constant 48 : index
    %c0_219 = arith.constant 0 : index
    %696 = vector.load %arg17[%c48_218, %c0_219] : memref<64x64xf32, #tpu.memory_space<vmem>>, vector<8x64xf32>
    tpu.vector_store %arg17[%c48_218, %c0_219], %694 {strides = array<i32>} : memref<64x64xf32, #tpu.memory_space<vmem>>, vector<8x64xf32>,
    %c16_220 = arith.constant 16 : index
    %c0_221 = arith.constant 0 : index
    %697 = vector.load %arg14[%c16_220, %c0_221] : memref<64x192xf32, #tpu.memory_space<vmem>>, vector<8x192xf32>
    %698 = arith.truncf %663 : vector<8x64xf32> to vector<8x64xbf16>
    %cst_222 = arith.constant dense<0.000000e+00> : vector<8x192xf32>
    %699 = tpu.matmul %698, %560, %cst_222 {dimension_numbers = #tpu.dot_dimension_numbers<[1], [0], [0], [1], [0, 0, 1, 1], [], []>} : vector<8x64xbf16>, vector<64x192xbf16>, vector<8x192xf32> -> vector<8x192xf32>
    %700 = vector.broadcast %564 : vector<1x192xf32> to vector<8x192xf32>
    %701 = arith.addf %699, %700 : vector<8x192xf32>
    %702 = vector.extract_strided_slice %697 {offsets = [0, 0], sizes = [8, 64], strides = [1, 1]} : vector<8x192xf32> to vector<8x64xf32>
    %703 = vector.extract_strided_slice %701 {offsets = [0, 0], sizes = [8, 64], strides = [1, 1]} : vector<8x192xf32> to vector<8x64xf32>
    %704 = arith.addf %702, %703 : vector<8x64xf32>
    %705 = arith.negf %704 : vector<8x64xf32>
    %706 = math.exp %705 : vector<8x64xf32>
    %cst_223 = arith.constant 1.000000e+00 : f32
    %707 = vector.broadcast %cst_223 : f32 to vector<8x64xf32>
    %708 = arith.addf %707, %706 : vector<8x64xf32>
    %709 = arith.divf %707, %708 : vector<8x64xf32>
    %710 = vector.extract_strided_slice %697 {offsets = [0, 64], sizes = [8, 64], strides = [1, 1]} : vector<8x192xf32> to vector<8x64xf32>
    %711 = vector.extract_strided_slice %701 {offsets = [0, 64], sizes = [8, 64], strides = [1, 1]} : vector<8x192xf32> to vector<8x64xf32>
    %712 = arith.addf %710, %711 : vector<8x64xf32>
    %713 = arith.negf %712 : vector<8x64xf32>
    %714 = math.exp %713 : vector<8x64xf32>
    %cst_224 = arith.constant 1.000000e+00 : f32
    %715 = vector.broadcast %cst_224 : f32 to vector<8x64xf32>
    %716 = arith.addf %715, %714 : vector<8x64xf32>
    %717 = arith.divf %715, %716 : vector<8x64xf32>
    %718 = vector.extract_strided_slice %697 {offsets = [0, 128], sizes = [8, 64], strides = [1, 1]} : vector<8x192xf32> to vector<8x64xf32>
    %719 = vector.extract_strided_slice %701 {offsets = [0, 128], sizes = [8, 64], strides = [1, 1]} : vector<8x192xf32> to vector<8x64xf32>
    %720 = arith.mulf %709, %719 : vector<8x64xf32>
    %721 = arith.addf %718, %720 : vector<8x64xf32>
    %722 = math.tanh %721 : vector<8x64xf32>
    %cst_225 = arith.constant 1.000000e+00 : f32
    %723 = vector.broadcast %cst_225 : f32 to vector<8x64xf32>
    %724 = arith.subf %723, %717 : vector<8x64xf32>
    %725 = arith.mulf %724, %722 : vector<8x64xf32>
    %726 = arith.mulf %717, %663 : vector<8x64xf32>
    %727 = arith.addf %725, %726 : vector<8x64xf32>
    %c40_226 = arith.constant 40 : index
    %c0_227 = arith.constant 0 : index
    %728 = vector.load %arg15[%c40_226, %c0_227] : memref<64x192xf32, #tpu.memory_space<vmem>>, vector<8x192xf32>
    %729 = arith.truncf %694 : vector<8x64xf32> to vector<8x64xbf16>
    %cst_228 = arith.constant dense<0.000000e+00> : vector<8x192xf32>
    %730 = tpu.matmul %729, %562, %cst_228 {dimension_numbers = #tpu.dot_dimension_numbers<[1], [0], [0], [1], [0, 0, 1, 1], [], []>} : vector<8x64xbf16>, vector<64x192xbf16>, vector<8x192xf32> -> vector<8x192xf32>
    %731 = vector.broadcast %566 : vector<1x192xf32> to vector<8x192xf32>
    %732 = arith.addf %730, %731 : vector<8x192xf32>
    %733 = vector.extract_strided_slice %728 {offsets = [0, 0], sizes = [8, 64], strides = [1, 1]} : vector<8x192xf32> to vector<8x64xf32>
    %734 = vector.extract_strided_slice %732 {offsets = [0, 0], sizes = [8, 64], strides = [1, 1]} : vector<8x192xf32> to vector<8x64xf32>
    %735 = arith.addf %733, %734 : vector<8x64xf32>
    %736 = arith.negf %735 : vector<8x64xf32>
    %737 = math.exp %736 : vector<8x64xf32>
    %cst_229 = arith.constant 1.000000e+00 : f32
    %738 = vector.broadcast %cst_229 : f32 to vector<8x64xf32>
    %739 = arith.addf %738, %737 : vector<8x64xf32>
    %740 = arith.divf %738, %739 : vector<8x64xf32>
    %741 = vector.extract_strided_slice %728 {offsets = [0, 64], sizes = [8, 64], strides = [1, 1]} : vector<8x192xf32> to vector<8x64xf32>
    %742 = vector.extract_strided_slice %732 {offsets = [0, 64], sizes = [8, 64], strides = [1, 1]} : vector<8x192xf32> to vector<8x64xf32>
    %743 = arith.addf %741, %742 : vector<8x64xf32>
    %744 = arith.negf %743 : vector<8x64xf32>
    %745 = math.exp %744 : vector<8x64xf32>
    %cst_230 = arith.constant 1.000000e+00 : f32
    %746 = vector.broadcast %cst_230 : f32 to vector<8x64xf32>
    %747 = arith.addf %746, %745 : vector<8x64xf32>
    %748 = arith.divf %746, %747 : vector<8x64xf32>
    %749 = vector.extract_strided_slice %728 {offsets = [0, 128], sizes = [8, 64], strides = [1, 1]} : vector<8x192xf32> to vector<8x64xf32>
    %750 = vector.extract_strided_slice %732 {offsets = [0, 128], sizes = [8, 64], strides = [1, 1]} : vector<8x192xf32> to vector<8x64xf32>
    %751 = arith.mulf %740, %750 : vector<8x64xf32>
    %752 = arith.addf %749, %751 : vector<8x64xf32>
    %753 = math.tanh %752 : vector<8x64xf32>
    %cst_231 = arith.constant 1.000000e+00 : f32
    %754 = vector.broadcast %cst_231 : f32 to vector<8x64xf32>
    %755 = arith.subf %754, %748 : vector<8x64xf32>
    %756 = arith.mulf %755, %753 : vector<8x64xf32>
    %757 = arith.mulf %748, %694 : vector<8x64xf32>
    %758 = arith.addf %756, %757 : vector<8x64xf32>
    %c16_232 = arith.constant 16 : index
    %c0_233 = arith.constant 0 : index
    %759 = vector.load %arg16[%c16_232, %c0_233] : memref<64x64xf32, #tpu.memory_space<vmem>>, vector<8x64xf32>
    tpu.vector_store %arg16[%c16_232, %c0_233], %727 {strides = array<i32>} : memref<64x64xf32, #tpu.memory_space<vmem>>, vector<8x64xf32>,
    %c40_234 = arith.constant 40 : index
    %c0_235 = arith.constant 0 : index
    %760 = vector.load %arg17[%c40_234, %c0_235] : memref<64x64xf32, #tpu.memory_space<vmem>>, vector<8x64xf32>
    tpu.vector_store %arg17[%c40_234, %c0_235], %758 {strides = array<i32>} : memref<64x64xf32, #tpu.memory_space<vmem>>, vector<8x64xf32>,
    %c24_236 = arith.constant 24 : index
    %c0_237 = arith.constant 0 : index
    %761 = vector.load %arg14[%c24_236, %c0_237] : memref<64x192xf32, #tpu.memory_space<vmem>>, vector<8x192xf32>
    %762 = arith.truncf %727 : vector<8x64xf32> to vector<8x64xbf16>
    %cst_238 = arith.constant dense<0.000000e+00> : vector<8x192xf32>
    %763 = tpu.matmul %762, %560, %cst_238 {dimension_numbers = #tpu.dot_dimension_numbers<[1], [0], [0], [1], [0, 0, 1, 1], [], []>} : vector<8x64xbf16>, vector<64x192xbf16>, vector<8x192xf32> -> vector<8x192xf32>
    %764 = vector.broadcast %564 : vector<1x192xf32> to vector<8x192xf32>
    %765 = arith.addf %763, %764 : vector<8x192xf32>
    %766 = vector.extract_strided_slice %761 {offsets = [0, 0], sizes = [8, 64], strides = [1, 1]} : vector<8x192xf32> to vector<8x64xf32>
    %767 = vector.extract_strided_slice %765 {offsets = [0, 0], sizes = [8, 64], strides = [1, 1]} : vector<8x192xf32> to vector<8x64xf32>
    %768 = arith.addf %766, %767 : vector<8x64xf32>
    %769 = arith.negf %768 : vector<8x64xf32>
    %770 = math.exp %769 : vector<8x64xf32>
    %cst_239 = arith.constant 1.000000e+00 : f32
    %771 = vector.broadcast %cst_239 : f32 to vector<8x64xf32>
    %772 = arith.addf %771, %770 : vector<8x64xf32>
    %773 = arith.divf %771, %772 : vector<8x64xf32>
    %774 = vector.extract_strided_slice %761 {offsets = [0, 64], sizes = [8, 64], strides = [1, 1]} : vector<8x192xf32> to vector<8x64xf32>
    %775 = vector.extract_strided_slice %765 {offsets = [0, 64], sizes = [8, 64], strides = [1, 1]} : vector<8x192xf32> to vector<8x64xf32>
    %776 = arith.addf %774, %775 : vector<8x64xf32>
    %777 = arith.negf %776 : vector<8x64xf32>
    %778 = math.exp %777 : vector<8x64xf32>
    %cst_240 = arith.constant 1.000000e+00 : f32
    %779 = vector.broadcast %cst_240 : f32 to vector<8x64xf32>
    %780 = arith.addf %779, %778 : vector<8x64xf32>
    %781 = arith.divf %779, %780 : vector<8x64xf32>
    %782 = vector.extract_strided_slice %761 {offsets = [0, 128], sizes = [8, 64], strides = [1, 1]} : vector<8x192xf32> to vector<8x64xf32>
    %783 = vector.extract_strided_slice %765 {offsets = [0, 128], sizes = [8, 64], strides = [1, 1]} : vector<8x192xf32> to vector<8x64xf32>
    %784 = arith.mulf %773, %783 : vector<8x64xf32>
    %785 = arith.addf %782, %784 : vector<8x64xf32>
    %786 = math.tanh %785 : vector<8x64xf32>
    %cst_241 = arith.constant 1.000000e+00 : f32
    %787 = vector.broadcast %cst_241 : f32 to vector<8x64xf32>
    %788 = arith.subf %787, %781 : vector<8x64xf32>
    %789 = arith.mulf %788, %786 : vector<8x64xf32>
    %790 = arith.mulf %781, %727 : vector<8x64xf32>
    %791 = arith.addf %789, %790 : vector<8x64xf32>
    %c32_242 = arith.constant 32 : index
    %c0_243 = arith.constant 0 : index
    %792 = vector.load %arg15[%c32_242, %c0_243] : memref<64x192xf32, #tpu.memory_space<vmem>>, vector<8x192xf32>
    %793 = arith.truncf %758 : vector<8x64xf32> to vector<8x64xbf16>
    %cst_244 = arith.constant dense<0.000000e+00> : vector<8x192xf32>
    %794 = tpu.matmul %793, %562, %cst_244 {dimension_numbers = #tpu.dot_dimension_numbers<[1], [0], [0], [1], [0, 0, 1, 1], [], []>} : vector<8x64xbf16>, vector<64x192xbf16>, vector<8x192xf32> -> vector<8x192xf32>
    %795 = vector.broadcast %566 : vector<1x192xf32> to vector<8x192xf32>
    %796 = arith.addf %794, %795 : vector<8x192xf32>
    %797 = vector.extract_strided_slice %792 {offsets = [0, 0], sizes = [8, 64], strides = [1, 1]} : vector<8x192xf32> to vector<8x64xf32>
    %798 = vector.extract_strided_slice %796 {offsets = [0, 0], sizes = [8, 64], strides = [1, 1]} : vector<8x192xf32> to vector<8x64xf32>
    %799 = arith.addf %797, %798 : vector<8x64xf32>
    %800 = arith.negf %799 : vector<8x64xf32>
    %801 = math.exp %800 : vector<8x64xf32>
    %cst_245 = arith.constant 1.000000e+00 : f32
    %802 = vector.broadcast %cst_245 : f32 to vector<8x64xf32>
    %803 = arith.addf %802, %801 : vector<8x64xf32>
    %804 = arith.divf %802, %803 : vector<8x64xf32>
    %805 = vector.extract_strided_slice %792 {offsets = [0, 64], sizes = [8, 64], strides = [1, 1]} : vector<8x192xf32> to vector<8x64xf32>
    %806 = vector.extract_strided_slice %796 {offsets = [0, 64], sizes = [8, 64], strides = [1, 1]} : vector<8x192xf32> to vector<8x64xf32>
    %807 = arith.addf %805, %806 : vector<8x64xf32>
    %808 = arith.negf %807 : vector<8x64xf32>
    %809 = math.exp %808 : vector<8x64xf32>
    %cst_246 = arith.constant 1.000000e+00 : f32
    %810 = vector.broadcast %cst_246 : f32 to vector<8x64xf32>
    %811 = arith.addf %810, %809 : vector<8x64xf32>
    %812 = arith.divf %810, %811 : vector<8x64xf32>
    %813 = vector.extract_strided_slice %792 {offsets = [0, 128], sizes = [8, 64], strides = [1, 1]} : vector<8x192xf32> to vector<8x64xf32>
    %814 = vector.extract_strided_slice %796 {offsets = [0, 128], sizes = [8, 64], strides = [1, 1]} : vector<8x192xf32> to vector<8x64xf32>
    %815 = arith.mulf %804, %814 : vector<8x64xf32>
    %816 = arith.addf %813, %815 : vector<8x64xf32>
    %817 = math.tanh %816 : vector<8x64xf32>
    %cst_247 = arith.constant 1.000000e+00 : f32
    %818 = vector.broadcast %cst_247 : f32 to vector<8x64xf32>
    %819 = arith.subf %818, %812 : vector<8x64xf32>
    %820 = arith.mulf %819, %817 : vector<8x64xf32>
    %821 = arith.mulf %812, %758 : vector<8x64xf32>
    %822 = arith.addf %820, %821 : vector<8x64xf32>
    %c24_248 = arith.constant 24 : index
    %c0_249 = arith.constant 0 : index
    %823 = vector.load %arg16[%c24_248, %c0_249] : memref<64x64xf32, #tpu.memory_space<vmem>>, vector<8x64xf32>
    tpu.vector_store %arg16[%c24_248, %c0_249], %791 {strides = array<i32>} : memref<64x64xf32, #tpu.memory_space<vmem>>, vector<8x64xf32>,
    %c32_250 = arith.constant 32 : index
    %c0_251 = arith.constant 0 : index
    %824 = vector.load %arg17[%c32_250, %c0_251] : memref<64x64xf32, #tpu.memory_space<vmem>>, vector<8x64xf32>
    tpu.vector_store %arg17[%c32_250, %c0_251], %822 {strides = array<i32>} : memref<64x64xf32, #tpu.memory_space<vmem>>, vector<8x64xf32>,
    %c32_252 = arith.constant 32 : index
    %c0_253 = arith.constant 0 : index
    %825 = vector.load %arg14[%c32_252, %c0_253] : memref<64x192xf32, #tpu.memory_space<vmem>>, vector<8x192xf32>
    %826 = arith.truncf %791 : vector<8x64xf32> to vector<8x64xbf16>
    %cst_254 = arith.constant dense<0.000000e+00> : vector<8x192xf32>
    %827 = tpu.matmul %826, %560, %cst_254 {dimension_numbers = #tpu.dot_dimension_numbers<[1], [0], [0], [1], [0, 0, 1, 1], [], []>} : vector<8x64xbf16>, vector<64x192xbf16>, vector<8x192xf32> -> vector<8x192xf32>
    %828 = vector.broadcast %564 : vector<1x192xf32> to vector<8x192xf32>
    %829 = arith.addf %827, %828 : vector<8x192xf32>
    %830 = vector.extract_strided_slice %825 {offsets = [0, 0], sizes = [8, 64], strides = [1, 1]} : vector<8x192xf32> to vector<8x64xf32>
    %831 = vector.extract_strided_slice %829 {offsets = [0, 0], sizes = [8, 64], strides = [1, 1]} : vector<8x192xf32> to vector<8x64xf32>
    %832 = arith.addf %830, %831 : vector<8x64xf32>
    %833 = arith.negf %832 : vector<8x64xf32>
    %834 = math.exp %833 : vector<8x64xf32>
    %cst_255 = arith.constant 1.000000e+00 : f32
    %835 = vector.broadcast %cst_255 : f32 to vector<8x64xf32>
    %836 = arith.addf %835, %834 : vector<8x64xf32>
    %837 = arith.divf %835, %836 : vector<8x64xf32>
    %838 = vector.extract_strided_slice %825 {offsets = [0, 64], sizes = [8, 64], strides = [1, 1]} : vector<8x192xf32> to vector<8x64xf32>
    %839 = vector.extract_strided_slice %829 {offsets = [0, 64], sizes = [8, 64], strides = [1, 1]} : vector<8x192xf32> to vector<8x64xf32>
    %840 = arith.addf %838, %839 : vector<8x64xf32>
    %841 = arith.negf %840 : vector<8x64xf32>
    %842 = math.exp %841 : vector<8x64xf32>
    %cst_256 = arith.constant 1.000000e+00 : f32
    %843 = vector.broadcast %cst_256 : f32 to vector<8x64xf32>
    %844 = arith.addf %843, %842 : vector<8x64xf32>
    %845 = arith.divf %843, %844 : vector<8x64xf32>
    %846 = vector.extract_strided_slice %825 {offsets = [0, 128], sizes = [8, 64], strides = [1, 1]} : vector<8x192xf32> to vector<8x64xf32>
    %847 = vector.extract_strided_slice %829 {offsets = [0, 128], sizes = [8, 64], strides = [1, 1]} : vector<8x192xf32> to vector<8x64xf32>
    %848 = arith.mulf %837, %847 : vector<8x64xf32>
    %849 = arith.addf %846, %848 : vector<8x64xf32>
    %850 = math.tanh %849 : vector<8x64xf32>
    %cst_257 = arith.constant 1.000000e+00 : f32
    %851 = vector.broadcast %cst_257 : f32 to vector<8x64xf32>
    %852 = arith.subf %851, %845 : vector<8x64xf32>
    %853 = arith.mulf %852, %850 : vector<8x64xf32>
    %854 = arith.mulf %845, %791 : vector<8x64xf32>
    %855 = arith.addf %853, %854 : vector<8x64xf32>
    %c24_258 = arith.constant 24 : index
    %c0_259 = arith.constant 0 : index
    %856 = vector.load %arg15[%c24_258, %c0_259] : memref<64x192xf32, #tpu.memory_space<vmem>>, vector<8x192xf32>
    %857 = arith.truncf %822 : vector<8x64xf32> to vector<8x64xbf16>
    %cst_260 = arith.constant dense<0.000000e+00> : vector<8x192xf32>
    %858 = tpu.matmul %857, %562, %cst_260 {dimension_numbers = #tpu.dot_dimension_numbers<[1], [0], [0], [1], [0, 0, 1, 1], [], []>} : vector<8x64xbf16>, vector<64x192xbf16>, vector<8x192xf32> -> vector<8x192xf32>
    %859 = vector.broadcast %566 : vector<1x192xf32> to vector<8x192xf32>
    %860 = arith.addf %858, %859 : vector<8x192xf32>
    %861 = vector.extract_strided_slice %856 {offsets = [0, 0], sizes = [8, 64], strides = [1, 1]} : vector<8x192xf32> to vector<8x64xf32>
    %862 = vector.extract_strided_slice %860 {offsets = [0, 0], sizes = [8, 64], strides = [1, 1]} : vector<8x192xf32> to vector<8x64xf32>
    %863 = arith.addf %861, %862 : vector<8x64xf32>
    %864 = arith.negf %863 : vector<8x64xf32>
    %865 = math.exp %864 : vector<8x64xf32>
    %cst_261 = arith.constant 1.000000e+00 : f32
    %866 = vector.broadcast %cst_261 : f32 to vector<8x64xf32>
    %867 = arith.addf %866, %865 : vector<8x64xf32>
    %868 = arith.divf %866, %867 : vector<8x64xf32>
    %869 = vector.extract_strided_slice %856 {offsets = [0, 64], sizes = [8, 64], strides = [1, 1]} : vector<8x192xf32> to vector<8x64xf32>
    %870 = vector.extract_strided_slice %860 {offsets = [0, 64], sizes = [8, 64], strides = [1, 1]} : vector<8x192xf32> to vector<8x64xf32>
    %871 = arith.addf %869, %870 : vector<8x64xf32>
    %872 = arith.negf %871 : vector<8x64xf32>
    %873 = math.exp %872 : vector<8x64xf32>
    %cst_262 = arith.constant 1.000000e+00 : f32
    %874 = vector.broadcast %cst_262 : f32 to vector<8x64xf32>
    %875 = arith.addf %874, %873 : vector<8x64xf32>
    %876 = arith.divf %874, %875 : vector<8x64xf32>
    %877 = vector.extract_strided_slice %856 {offsets = [0, 128], sizes = [8, 64], strides = [1, 1]} : vector<8x192xf32> to vector<8x64xf32>
    %878 = vector.extract_strided_slice %860 {offsets = [0, 128], sizes = [8, 64], strides = [1, 1]} : vector<8x192xf32> to vector<8x64xf32>
    %879 = arith.mulf %868, %878 : vector<8x64xf32>
    %880 = arith.addf %877, %879 : vector<8x64xf32>
    %881 = math.tanh %880 : vector<8x64xf32>
    %cst_263 = arith.constant 1.000000e+00 : f32
    %882 = vector.broadcast %cst_263 : f32 to vector<8x64xf32>
    %883 = arith.subf %882, %876 : vector<8x64xf32>
    %884 = arith.mulf %883, %881 : vector<8x64xf32>
    %885 = arith.mulf %876, %822 : vector<8x64xf32>
    %886 = arith.addf %884, %885 : vector<8x64xf32>
    %c32_264 = arith.constant 32 : index
    %c0_265 = arith.constant 0 : index
    %887 = vector.load %arg16[%c32_264, %c0_265] : memref<64x64xf32, #tpu.memory_space<vmem>>, vector<8x64xf32>
    tpu.vector_store %arg16[%c32_264, %c0_265], %855 {strides = array<i32>} : memref<64x64xf32, #tpu.memory_space<vmem>>, vector<8x64xf32>,
    %c24_266 = arith.constant 24 : index
    %c0_267 = arith.constant 0 : index
    %888 = vector.load %arg17[%c24_266, %c0_267] : memref<64x64xf32, #tpu.memory_space<vmem>>, vector<8x64xf32>
    tpu.vector_store %arg17[%c24_266, %c0_267], %886 {strides = array<i32>} : memref<64x64xf32, #tpu.memory_space<vmem>>, vector<8x64xf32>,
    %c40_268 = arith.constant 40 : index
    %c0_269 = arith.constant 0 : index
    %889 = vector.load %arg14[%c40_268, %c0_269] : memref<64x192xf32, #tpu.memory_space<vmem>>, vector<8x192xf32>
    %890 = arith.truncf %855 : vector<8x64xf32> to vector<8x64xbf16>
    %cst_270 = arith.constant dense<0.000000e+00> : vector<8x192xf32>
    %891 = tpu.matmul %890, %560, %cst_270 {dimension_numbers = #tpu.dot_dimension_numbers<[1], [0], [0], [1], [0, 0, 1, 1], [], []>} : vector<8x64xbf16>, vector<64x192xbf16>, vector<8x192xf32> -> vector<8x192xf32>
    %892 = vector.broadcast %564 : vector<1x192xf32> to vector<8x192xf32>
    %893 = arith.addf %891, %892 : vector<8x192xf32>
    %894 = vector.extract_strided_slice %889 {offsets = [0, 0], sizes = [8, 64], strides = [1, 1]} : vector<8x192xf32> to vector<8x64xf32>
    %895 = vector.extract_strided_slice %893 {offsets = [0, 0], sizes = [8, 64], strides = [1, 1]} : vector<8x192xf32> to vector<8x64xf32>
    %896 = arith.addf %894, %895 : vector<8x64xf32>
    %897 = arith.negf %896 : vector<8x64xf32>
    %898 = math.exp %897 : vector<8x64xf32>
    %cst_271 = arith.constant 1.000000e+00 : f32
    %899 = vector.broadcast %cst_271 : f32 to vector<8x64xf32>
    %900 = arith.addf %899, %898 : vector<8x64xf32>
    %901 = arith.divf %899, %900 : vector<8x64xf32>
    %902 = vector.extract_strided_slice %889 {offsets = [0, 64], sizes = [8, 64], strides = [1, 1]} : vector<8x192xf32> to vector<8x64xf32>
    %903 = vector.extract_strided_slice %893 {offsets = [0, 64], sizes = [8, 64], strides = [1, 1]} : vector<8x192xf32> to vector<8x64xf32>
    %904 = arith.addf %902, %903 : vector<8x64xf32>
    %905 = arith.negf %904 : vector<8x64xf32>
    %906 = math.exp %905 : vector<8x64xf32>
    %cst_272 = arith.constant 1.000000e+00 : f32
    %907 = vector.broadcast %cst_272 : f32 to vector<8x64xf32>
    %908 = arith.addf %907, %906 : vector<8x64xf32>
    %909 = arith.divf %907, %908 : vector<8x64xf32>
    %910 = vector.extract_strided_slice %889 {offsets = [0, 128], sizes = [8, 64], strides = [1, 1]} : vector<8x192xf32> to vector<8x64xf32>
    %911 = vector.extract_strided_slice %893 {offsets = [0, 128], sizes = [8, 64], strides = [1, 1]} : vector<8x192xf32> to vector<8x64xf32>
    %912 = arith.mulf %901, %911 : vector<8x64xf32>
    %913 = arith.addf %910, %912 : vector<8x64xf32>
    %914 = math.tanh %913 : vector<8x64xf32>
    %cst_273 = arith.constant 1.000000e+00 : f32
    %915 = vector.broadcast %cst_273 : f32 to vector<8x64xf32>
    %916 = arith.subf %915, %909 : vector<8x64xf32>
    %917 = arith.mulf %916, %914 : vector<8x64xf32>
    %918 = arith.mulf %909, %855 : vector<8x64xf32>
    %919 = arith.addf %917, %918 : vector<8x64xf32>
    %c16_274 = arith.constant 16 : index
    %c0_275 = arith.constant 0 : index
    %920 = vector.load %arg15[%c16_274, %c0_275] : memref<64x192xf32, #tpu.memory_space<vmem>>, vector<8x192xf32>
    %921 = arith.truncf %886 : vector<8x64xf32> to vector<8x64xbf16>
    %cst_276 = arith.constant dense<0.000000e+00> : vector<8x192xf32>
    %922 = tpu.matmul %921, %562, %cst_276 {dimension_numbers = #tpu.dot_dimension_numbers<[1], [0], [0], [1], [0, 0, 1, 1], [], []>} : vector<8x64xbf16>, vector<64x192xbf16>, vector<8x192xf32> -> vector<8x192xf32>
    %923 = vector.broadcast %566 : vector<1x192xf32> to vector<8x192xf32>
    %924 = arith.addf %922, %923 : vector<8x192xf32>
    %925 = vector.extract_strided_slice %920 {offsets = [0, 0], sizes = [8, 64], strides = [1, 1]} : vector<8x192xf32> to vector<8x64xf32>
    %926 = vector.extract_strided_slice %924 {offsets = [0, 0], sizes = [8, 64], strides = [1, 1]} : vector<8x192xf32> to vector<8x64xf32>
    %927 = arith.addf %925, %926 : vector<8x64xf32>
    %928 = arith.negf %927 : vector<8x64xf32>
    %929 = math.exp %928 : vector<8x64xf32>
    %cst_277 = arith.constant 1.000000e+00 : f32
    %930 = vector.broadcast %cst_277 : f32 to vector<8x64xf32>
    %931 = arith.addf %930, %929 : vector<8x64xf32>
    %932 = arith.divf %930, %931 : vector<8x64xf32>
    %933 = vector.extract_strided_slice %920 {offsets = [0, 64], sizes = [8, 64], strides = [1, 1]} : vector<8x192xf32> to vector<8x64xf32>
    %934 = vector.extract_strided_slice %924 {offsets = [0, 64], sizes = [8, 64], strides = [1, 1]} : vector<8x192xf32> to vector<8x64xf32>
    %935 = arith.addf %933, %934 : vector<8x64xf32>
    %936 = arith.negf %935 : vector<8x64xf32>
    %937 = math.exp %936 : vector<8x64xf32>
    %cst_278 = arith.constant 1.000000e+00 : f32
    %938 = vector.broadcast %cst_278 : f32 to vector<8x64xf32>
    %939 = arith.addf %938, %937 : vector<8x64xf32>
    %940 = arith.divf %938, %939 : vector<8x64xf32>
    %941 = vector.extract_strided_slice %920 {offsets = [0, 128], sizes = [8, 64], strides = [1, 1]} : vector<8x192xf32> to vector<8x64xf32>
    %942 = vector.extract_strided_slice %924 {offsets = [0, 128], sizes = [8, 64], strides = [1, 1]} : vector<8x192xf32> to vector<8x64xf32>
    %943 = arith.mulf %932, %942 : vector<8x64xf32>
    %944 = arith.addf %941, %943 : vector<8x64xf32>
    %945 = math.tanh %944 : vector<8x64xf32>
    %cst_279 = arith.constant 1.000000e+00 : f32
    %946 = vector.broadcast %cst_279 : f32 to vector<8x64xf32>
    %947 = arith.subf %946, %940 : vector<8x64xf32>
    %948 = arith.mulf %947, %945 : vector<8x64xf32>
    %949 = arith.mulf %940, %886 : vector<8x64xf32>
    %950 = arith.addf %948, %949 : vector<8x64xf32>
    %c40_280 = arith.constant 40 : index
    %c0_281 = arith.constant 0 : index
    %951 = vector.load %arg16[%c40_280, %c0_281] : memref<64x64xf32, #tpu.memory_space<vmem>>, vector<8x64xf32>
    tpu.vector_store %arg16[%c40_280, %c0_281], %919 {strides = array<i32>} : memref<64x64xf32, #tpu.memory_space<vmem>>, vector<8x64xf32>,
    %c16_282 = arith.constant 16 : index
    %c0_283 = arith.constant 0 : index
    %952 = vector.load %arg17[%c16_282, %c0_283] : memref<64x64xf32, #tpu.memory_space<vmem>>, vector<8x64xf32>
    tpu.vector_store %arg17[%c16_282, %c0_283], %950 {strides = array<i32>} : memref<64x64xf32, #tpu.memory_space<vmem>>, vector<8x64xf32>,
    %c48_284 = arith.constant 48 : index
    %c0_285 = arith.constant 0 : index
    %953 = vector.load %arg14[%c48_284, %c0_285] : memref<64x192xf32, #tpu.memory_space<vmem>>, vector<8x192xf32>
    %954 = arith.truncf %919 : vector<8x64xf32> to vector<8x64xbf16>
    %cst_286 = arith.constant dense<0.000000e+00> : vector<8x192xf32>
    %955 = tpu.matmul %954, %560, %cst_286 {dimension_numbers = #tpu.dot_dimension_numbers<[1], [0], [0], [1], [0, 0, 1, 1], [], []>} : vector<8x64xbf16>, vector<64x192xbf16>, vector<8x192xf32> -> vector<8x192xf32>
    %956 = vector.broadcast %564 : vector<1x192xf32> to vector<8x192xf32>
    %957 = arith.addf %955, %956 : vector<8x192xf32>
    %958 = vector.extract_strided_slice %953 {offsets = [0, 0], sizes = [8, 64], strides = [1, 1]} : vector<8x192xf32> to vector<8x64xf32>
    %959 = vector.extract_strided_slice %957 {offsets = [0, 0], sizes = [8, 64], strides = [1, 1]} : vector<8x192xf32> to vector<8x64xf32>
    %960 = arith.addf %958, %959 : vector<8x64xf32>
    %961 = arith.negf %960 : vector<8x64xf32>
    %962 = math.exp %961 : vector<8x64xf32>
    %cst_287 = arith.constant 1.000000e+00 : f32
    %963 = vector.broadcast %cst_287 : f32 to vector<8x64xf32>
    %964 = arith.addf %963, %962 : vector<8x64xf32>
    %965 = arith.divf %963, %964 : vector<8x64xf32>
    %966 = vector.extract_strided_slice %953 {offsets = [0, 64], sizes = [8, 64], strides = [1, 1]} : vector<8x192xf32> to vector<8x64xf32>
    %967 = vector.extract_strided_slice %957 {offsets = [0, 64], sizes = [8, 64], strides = [1, 1]} : vector<8x192xf32> to vector<8x64xf32>
    %968 = arith.addf %966, %967 : vector<8x64xf32>
    %969 = arith.negf %968 : vector<8x64xf32>
    %970 = math.exp %969 : vector<8x64xf32>
    %cst_288 = arith.constant 1.000000e+00 : f32
    %971 = vector.broadcast %cst_288 : f32 to vector<8x64xf32>
    %972 = arith.addf %971, %970 : vector<8x64xf32>
    %973 = arith.divf %971, %972 : vector<8x64xf32>
    %974 = vector.extract_strided_slice %953 {offsets = [0, 128], sizes = [8, 64], strides = [1, 1]} : vector<8x192xf32> to vector<8x64xf32>
    %975 = vector.extract_strided_slice %957 {offsets = [0, 128], sizes = [8, 64], strides = [1, 1]} : vector<8x192xf32> to vector<8x64xf32>
    %976 = arith.mulf %965, %975 : vector<8x64xf32>
    %977 = arith.addf %974, %976 : vector<8x64xf32>
    %978 = math.tanh %977 : vector<8x64xf32>
    %cst_289 = arith.constant 1.000000e+00 : f32
    %979 = vector.broadcast %cst_289 : f32 to vector<8x64xf32>
    %980 = arith.subf %979, %973 : vector<8x64xf32>
    %981 = arith.mulf %980, %978 : vector<8x64xf32>
    %982 = arith.mulf %973, %919 : vector<8x64xf32>
    %983 = arith.addf %981, %982 : vector<8x64xf32>
    %c8_290 = arith.constant 8 : index
    %c0_291 = arith.constant 0 : index
    %984 = vector.load %arg15[%c8_290, %c0_291] : memref<64x192xf32, #tpu.memory_space<vmem>>, vector<8x192xf32>
    %985 = arith.truncf %950 : vector<8x64xf32> to vector<8x64xbf16>
    %cst_292 = arith.constant dense<0.000000e+00> : vector<8x192xf32>
    %986 = tpu.matmul %985, %562, %cst_292 {dimension_numbers = #tpu.dot_dimension_numbers<[1], [0], [0], [1], [0, 0, 1, 1], [], []>} : vector<8x64xbf16>, vector<64x192xbf16>, vector<8x192xf32> -> vector<8x192xf32>
    %987 = vector.broadcast %566 : vector<1x192xf32> to vector<8x192xf32>
    %988 = arith.addf %986, %987 : vector<8x192xf32>
    %989 = vector.extract_strided_slice %984 {offsets = [0, 0], sizes = [8, 64], strides = [1, 1]} : vector<8x192xf32> to vector<8x64xf32>
    %990 = vector.extract_strided_slice %988 {offsets = [0, 0], sizes = [8, 64], strides = [1, 1]} : vector<8x192xf32> to vector<8x64xf32>
    %991 = arith.addf %989, %990 : vector<8x64xf32>
    %992 = arith.negf %991 : vector<8x64xf32>
    %993 = math.exp %992 : vector<8x64xf32>
    %cst_293 = arith.constant 1.000000e+00 : f32
    %994 = vector.broadcast %cst_293 : f32 to vector<8x64xf32>
    %995 = arith.addf %994, %993 : vector<8x64xf32>
    %996 = arith.divf %994, %995 : vector<8x64xf32>
    %997 = vector.extract_strided_slice %984 {offsets = [0, 64], sizes = [8, 64], strides = [1, 1]} : vector<8x192xf32> to vector<8x64xf32>
    %998 = vector.extract_strided_slice %988 {offsets = [0, 64], sizes = [8, 64], strides = [1, 1]} : vector<8x192xf32> to vector<8x64xf32>
    %999 = arith.addf %997, %998 : vector<8x64xf32>
    %1000 = arith.negf %999 : vector<8x64xf32>
    %1001 = math.exp %1000 : vector<8x64xf32>
    %cst_294 = arith.constant 1.000000e+00 : f32
    %1002 = vector.broadcast %cst_294 : f32 to vector<8x64xf32>
    %1003 = arith.addf %1002, %1001 : vector<8x64xf32>
    %1004 = arith.divf %1002, %1003 : vector<8x64xf32>
    %1005 = vector.extract_strided_slice %984 {offsets = [0, 128], sizes = [8, 64], strides = [1, 1]} : vector<8x192xf32> to vector<8x64xf32>
    %1006 = vector.extract_strided_slice %988 {offsets = [0, 128], sizes = [8, 64], strides = [1, 1]} : vector<8x192xf32> to vector<8x64xf32>
    %1007 = arith.mulf %996, %1006 : vector<8x64xf32>
    %1008 = arith.addf %1005, %1007 : vector<8x64xf32>
    %1009 = math.tanh %1008 : vector<8x64xf32>
    %cst_295 = arith.constant 1.000000e+00 : f32
    %1010 = vector.broadcast %cst_295 : f32 to vector<8x64xf32>
    %1011 = arith.subf %1010, %1004 : vector<8x64xf32>
    %1012 = arith.mulf %1011, %1009 : vector<8x64xf32>
    %1013 = arith.mulf %1004, %950 : vector<8x64xf32>
    %1014 = arith.addf %1012, %1013 : vector<8x64xf32>
    %c48_296 = arith.constant 48 : index
    %c0_297 = arith.constant 0 : index
    %1015 = vector.load %arg16[%c48_296, %c0_297] : memref<64x64xf32, #tpu.memory_space<vmem>>, vector<8x64xf32>
    tpu.vector_store %arg16[%c48_296, %c0_297], %983 {strides = array<i32>} : memref<64x64xf32, #tpu.memory_space<vmem>>, vector<8x64xf32>,
    %c8_298 = arith.constant 8 : index
    %c0_299 = arith.constant 0 : index
    %1016 = vector.load %arg17[%c8_298, %c0_299] : memref<64x64xf32, #tpu.memory_space<vmem>>, vector<8x64xf32>
    tpu.vector_store %arg17[%c8_298, %c0_299], %1014 {strides = array<i32>} : memref<64x64xf32, #tpu.memory_space<vmem>>, vector<8x64xf32>,
    %c56_300 = arith.constant 56 : index
    %c0_301 = arith.constant 0 : index
    %1017 = vector.load %arg14[%c56_300, %c0_301] : memref<64x192xf32, #tpu.memory_space<vmem>>, vector<8x192xf32>
    %1018 = arith.truncf %983 : vector<8x64xf32> to vector<8x64xbf16>
    %cst_302 = arith.constant dense<0.000000e+00> : vector<8x192xf32>
    %1019 = tpu.matmul %1018, %560, %cst_302 {dimension_numbers = #tpu.dot_dimension_numbers<[1], [0], [0], [1], [0, 0, 1, 1], [], []>} : vector<8x64xbf16>, vector<64x192xbf16>, vector<8x192xf32> -> vector<8x192xf32>
    %1020 = vector.broadcast %564 : vector<1x192xf32> to vector<8x192xf32>
    %1021 = arith.addf %1019, %1020 : vector<8x192xf32>
    %1022 = vector.extract_strided_slice %1017 {offsets = [0, 0], sizes = [8, 64], strides = [1, 1]} : vector<8x192xf32> to vector<8x64xf32>
    %1023 = vector.extract_strided_slice %1021 {offsets = [0, 0], sizes = [8, 64], strides = [1, 1]} : vector<8x192xf32> to vector<8x64xf32>
    %1024 = arith.addf %1022, %1023 : vector<8x64xf32>
    %1025 = arith.negf %1024 : vector<8x64xf32>
    %1026 = math.exp %1025 : vector<8x64xf32>
    %cst_303 = arith.constant 1.000000e+00 : f32
    %1027 = vector.broadcast %cst_303 : f32 to vector<8x64xf32>
    %1028 = arith.addf %1027, %1026 : vector<8x64xf32>
    %1029 = arith.divf %1027, %1028 : vector<8x64xf32>
    %1030 = vector.extract_strided_slice %1017 {offsets = [0, 64], sizes = [8, 64], strides = [1, 1]} : vector<8x192xf32> to vector<8x64xf32>
    %1031 = vector.extract_strided_slice %1021 {offsets = [0, 64], sizes = [8, 64], strides = [1, 1]} : vector<8x192xf32> to vector<8x64xf32>
    %1032 = arith.addf %1030, %1031 : vector<8x64xf32>
    %1033 = arith.negf %1032 : vector<8x64xf32>
    %1034 = math.exp %1033 : vector<8x64xf32>
    %cst_304 = arith.constant 1.000000e+00 : f32
    %1035 = vector.broadcast %cst_304 : f32 to vector<8x64xf32>
    %1036 = arith.addf %1035, %1034 : vector<8x64xf32>
    %1037 = arith.divf %1035, %1036 : vector<8x64xf32>
    %1038 = vector.extract_strided_slice %1017 {offsets = [0, 128], sizes = [8, 64], strides = [1, 1]} : vector<8x192xf32> to vector<8x64xf32>
    %1039 = vector.extract_strided_slice %1021 {offsets = [0, 128], sizes = [8, 64], strides = [1, 1]} : vector<8x192xf32> to vector<8x64xf32>
    %1040 = arith.mulf %1029, %1039 : vector<8x64xf32>
    %1041 = arith.addf %1038, %1040 : vector<8x64xf32>
    %1042 = math.tanh %1041 : vector<8x64xf32>
    %cst_305 = arith.constant 1.000000e+00 : f32
    %1043 = vector.broadcast %cst_305 : f32 to vector<8x64xf32>
    %1044 = arith.subf %1043, %1037 : vector<8x64xf32>
    %1045 = arith.mulf %1044, %1042 : vector<8x64xf32>
    %1046 = arith.mulf %1037, %983 : vector<8x64xf32>
    %1047 = arith.addf %1045, %1046 : vector<8x64xf32>
    %c0_306 = arith.constant 0 : index
    %c0_307 = arith.constant 0 : index
    %1048 = vector.load %arg15[%c0_306, %c0_307] : memref<64x192xf32, #tpu.memory_space<vmem>>, vector<8x192xf32>
    %1049 = arith.truncf %1014 : vector<8x64xf32> to vector<8x64xbf16>
    %cst_308 = arith.constant dense<0.000000e+00> : vector<8x192xf32>
    %1050 = tpu.matmul %1049, %562, %cst_308 {dimension_numbers = #tpu.dot_dimension_numbers<[1], [0], [0], [1], [0, 0, 1, 1], [], []>} : vector<8x64xbf16>, vector<64x192xbf16>, vector<8x192xf32> -> vector<8x192xf32>
    %1051 = vector.broadcast %566 : vector<1x192xf32> to vector<8x192xf32>
    %1052 = arith.addf %1050, %1051 : vector<8x192xf32>
    %1053 = vector.extract_strided_slice %1048 {offsets = [0, 0], sizes = [8, 64], strides = [1, 1]} : vector<8x192xf32> to vector<8x64xf32>
    %1054 = vector.extract_strided_slice %1052 {offsets = [0, 0], sizes = [8, 64], strides = [1, 1]} : vector<8x192xf32> to vector<8x64xf32>
    %1055 = arith.addf %1053, %1054 : vector<8x64xf32>
    %1056 = arith.negf %1055 : vector<8x64xf32>
    %1057 = math.exp %1056 : vector<8x64xf32>
    %cst_309 = arith.constant 1.000000e+00 : f32
    %1058 = vector.broadcast %cst_309 : f32 to vector<8x64xf32>
    %1059 = arith.addf %1058, %1057 : vector<8x64xf32>
    %1060 = arith.divf %1058, %1059 : vector<8x64xf32>
    %1061 = vector.extract_strided_slice %1048 {offsets = [0, 64], sizes = [8, 64], strides = [1, 1]} : vector<8x192xf32> to vector<8x64xf32>
    %1062 = vector.extract_strided_slice %1052 {offsets = [0, 64], sizes = [8, 64], strides = [1, 1]} : vector<8x192xf32> to vector<8x64xf32>
    %1063 = arith.addf %1061, %1062 : vector<8x64xf32>
    %1064 = arith.negf %1063 : vector<8x64xf32>
    %1065 = math.exp %1064 : vector<8x64xf32>
    %cst_310 = arith.constant 1.000000e+00 : f32
    %1066 = vector.broadcast %cst_310 : f32 to vector<8x64xf32>
    %1067 = arith.addf %1066, %1065 : vector<8x64xf32>
    %1068 = arith.divf %1066, %1067 : vector<8x64xf32>
    %1069 = vector.extract_strided_slice %1048 {offsets = [0, 128], sizes = [8, 64], strides = [1, 1]} : vector<8x192xf32> to vector<8x64xf32>
    %1070 = vector.extract_strided_slice %1052 {offsets = [0, 128], sizes = [8, 64], strides = [1, 1]} : vector<8x192xf32> to vector<8x64xf32>
    %1071 = arith.mulf %1060, %1070 : vector<8x64xf32>
    %1072 = arith.addf %1069, %1071 : vector<8x64xf32>
    %1073 = math.tanh %1072 : vector<8x64xf32>
    %cst_311 = arith.constant 1.000000e+00 : f32
    %1074 = vector.broadcast %cst_311 : f32 to vector<8x64xf32>
    %1075 = arith.subf %1074, %1068 : vector<8x64xf32>
    %1076 = arith.mulf %1075, %1073 : vector<8x64xf32>
    %1077 = arith.mulf %1068, %1014 : vector<8x64xf32>
    %1078 = arith.addf %1076, %1077 : vector<8x64xf32>
    %c56_312 = arith.constant 56 : index
    %c0_313 = arith.constant 0 : index
    %1079 = vector.load %arg16[%c56_312, %c0_313] : memref<64x64xf32, #tpu.memory_space<vmem>>, vector<8x64xf32>
    tpu.vector_store %arg16[%c56_312, %c0_313], %1047 {strides = array<i32>} : memref<64x64xf32, #tpu.memory_space<vmem>>, vector<8x64xf32>,
    %c0_314 = arith.constant 0 : index
    %c0_315 = arith.constant 0 : index
    %1080 = vector.load %arg17[%c0_314, %c0_315] : memref<64x64xf32, #tpu.memory_space<vmem>>, vector<8x64xf32>
    tpu.vector_store %arg17[%c0_314, %c0_315], %1078 {strides = array<i32>} : memref<64x64xf32, #tpu.memory_space<vmem>>, vector<8x64xf32>,
    %c0_316 = arith.constant 0 : index
    %c0_317 = arith.constant 0 : index
    %1081 = vector.load %arg16[%c0_316, %c0_317] : memref<64x64xf32, #tpu.memory_space<vmem>>, vector<64x64xf32>
    %1082 = arith.truncf %1081 : vector<64x64xf32> to vector<64x64xbf16>
    %c0_318 = arith.constant 0 : index
    %c0_319 = arith.constant 0 : index
    %1083 = vector.load %arg10[%c0_318, %c0_319] : memref<64x128xbf16, #tpu.memory_space<vmem>>, vector<64x128xbf16>
    %cst_320 = arith.constant dense<0.000000e+00> : vector<64x128xf32>
    %1084 = tpu.matmul %1082, %1083, %cst_320 {dimension_numbers = #tpu.dot_dimension_numbers<[1], [0], [0], [1], [0, 0, 1, 1], [], []>} : vector<64x64xbf16>, vector<64x128xbf16>, vector<64x128xf32> -> vector<64x128xf32>
    %c0_321 = arith.constant 0 : index
    %c0_322 = arith.constant 0 : index
    %1085 = vector.load %arg17[%c0_321, %c0_322] : memref<64x64xf32, #tpu.memory_space<vmem>>, vector<64x64xf32>
    %1086 = arith.truncf %1085 : vector<64x64xf32> to vector<64x64xbf16>
    %c0_323 = arith.constant 0 : index
    %c0_324 = arith.constant 0 : index
    %1087 = vector.load %arg11[%c0_323, %c0_324] : memref<64x128xbf16, #tpu.memory_space<vmem>>, vector<64x128xbf16>
    %cst_325 = arith.constant dense<0.000000e+00> : vector<64x128xf32>
    %1088 = tpu.matmul %1086, %1087, %cst_325 {dimension_numbers = #tpu.dot_dimension_numbers<[1], [0], [0], [1], [0, 0, 1, 1], [], []>} : vector<64x64xbf16>, vector<64x128xbf16>, vector<64x128xf32> -> vector<64x128xf32>
    %1089 = arith.addf %1084, %1088 : vector<64x128xf32>
    %c0_326 = arith.constant 0 : index
    %c0_327 = arith.constant 0 : index
    %1090 = vector.load %arg12[%c0_326, %c0_327] : memref<1x128xf32, #tpu.memory_space<vmem>>, vector<1x128xf32>
    %1091 = vector.broadcast %1090 : vector<1x128xf32> to vector<64x128xf32>
    %1092 = arith.addf %1089, %1091 : vector<64x128xf32>
    %c0_328 = arith.constant 0 : index
    %c0_329 = arith.constant 0 : index
    %1093 = vector.load %arg13[%c0_328, %c0_329] : memref<64x128xf32, #tpu.memory_space<vmem>>, vector<64x128xf32>
    tpu.vector_store %arg13[%c0_328, %c0_329], %1092 {strides = array<i32>} : memref<64x128xf32, #tpu.memory_space<vmem>>, vector<64x128xf32>,
    return
  }
  func.func @transform_0(%arg0: i32) -> (i32, i32) {
    %c0_i32 = arith.constant 0 : i32
    %c0_i32_0 = arith.constant 0 : i32
    %c0_i32_1 = arith.constant 0 : i32
    return %c0_i32, %c0_i32_0 : i32, i32
  }
  func.func @transform_1(%arg0: i32) -> (i32, i32, i32) {
    %c0_i32 = arith.constant 0 : i32
    %c0_i32_0 = arith.constant 0 : i32
    %c0_i32_1 = arith.constant 0 : i32
    %c0_i32_2 = arith.constant 0 : i32
    return %c0_i32, %c0_i32_0, %c0_i32_1 : i32, i32, i32
  }
  func.func @transform_2(%arg0: i32) -> (i32, i32, i32) {
    %c0_i32 = arith.constant 0 : i32
    %c0_i32_0 = arith.constant 0 : i32
    %c0_i32_1 = arith.constant 0 : i32
    %c0_i32_2 = arith.constant 0 : i32
    return %c0_i32, %c0_i32_0, %c0_i32_1 : i32, i32, i32
  }
  func.func @transform_3(%arg0: i32) -> (i32, i32, i32) {
    %c0_i32 = arith.constant 0 : i32
    %c0_i32_0 = arith.constant 0 : i32
    %c0_i32_1 = arith.constant 0 : i32
    %c0_i32_2 = arith.constant 0 : i32
    return %c0_i32, %c0_i32_0, %c0_i32_1 : i32, i32, i32
  }
  func.func @transform_4(%arg0: i32) -> (i32, i32, i32) {
    %c0_i32 = arith.constant 0 : i32
    %c0_i32_0 = arith.constant 0 : i32
    %c0_i32_1 = arith.constant 0 : i32
    %c0_i32_2 = arith.constant 0 : i32
    return %c0_i32, %c0_i32_0, %c0_i32_1 : i32, i32, i32
  }
  func.func @transform_5(%arg0: i32) -> (i32, i32, i32) {
    %c0_i32 = arith.constant 0 : i32
    %c0_i32_0 = arith.constant 0 : i32
    %c0_i32_1 = arith.constant 0 : i32
    %c0_i32_2 = arith.constant 0 : i32
    return %c0_i32, %c0_i32_0, %c0_i32_1 : i32, i32, i32
  }
  func.func @transform_6(%arg0: i32) -> (i32, i32, i32) {
    %c0_i32 = arith.constant 0 : i32
    %c0_i32_0 = arith.constant 0 : i32
    %c0_i32_1 = arith.constant 0 : i32
    %c0_i32_2 = arith.constant 0 : i32
    return %c0_i32, %c0_i32_0, %c0_i32_1 : i32, i32, i32
  }
  func.func @transform_7(%arg0: i32) -> (i32, i32, i32) {
    %c0_i32 = arith.constant 0 : i32
    %c0_i32_0 = arith.constant 0 : i32
    %c0_i32_1 = arith.constant 0 : i32
    %c0_i32_2 = arith.constant 0 : i32
    return %c0_i32, %c0_i32_0, %c0_i32_1 : i32, i32, i32
  }
  func.func @transform_8(%arg0: i32) -> (i32, i32, i32) {
    %c0_i32 = arith.constant 0 : i32
    %c0_i32_0 = arith.constant 0 : i32
    %c0_i32_1 = arith.constant 0 : i32
    %c0_i32_2 = arith.constant 0 : i32
    return %c0_i32, %c0_i32_0, %c0_i32_1 : i32, i32, i32
  }
  func.func @transform_9(%arg0: i32) -> (i32, i32) {
    %c0_i32 = arith.constant 0 : i32
    %c0_i32_0 = arith.constant 0 : i32
    %c0_i32_1 = arith.constant 0 : i32
    return %c0_i32, %c0_i32_0 : i32, i32
  }
  func.func @transform_10(%arg0: i32) -> (i32, i32) {
    %c0_i32 = arith.constant 0 : i32
    %c0_i32_0 = arith.constant 0 : i32
    %c0_i32_1 = arith.constant 0 : i32
    return %c0_i32, %c0_i32_0 : i32, i32
  }
  func.func @transform_11(%arg0: i32) -> (i32, i32) {
    %c0_i32 = arith.constant 0 : i32
    %c0_i32_0 = arith.constant 0 : i32
    %c0_i32_1 = arith.constant 0 : i32
    return %c0_i32, %c0_i32_0 : i32, i32
  }
  func.func @transform_12(%arg0: i32) -> (i32, i32) {
    %c0_i32 = arith.constant 0 : i32
    %c0_i32_0 = arith.constant 0 : i32
    %c0_i32_1 = arith.constant 0 : i32
    return %c0_i32, %c0_i32_0 : i32, i32
  }
}

</mosaic_0001>

<llo_original>
// kernel: crnn_forward.4
$region0: #{crnn_forward.4}
  #allocation0 [shape = 'u32[]', space=smem, size = 0x4, offset = 0x4, fixed_abs, tag = 'smem constant byte address 0x4 - core index']
  #allocation1 [shape = 'u32[144,128]{1,0:T(1,128)}', space=vmem, size = 0x12000, scoped, tag = 'internal scratch']
  %s0 = inlined_call_operand.vmem [shape: bf16[4,384,27], index: 0, kind: input, shape index: {}]
  %s1 = inlined_call_operand.vmem [shape: bf16[27,32], index: 1, kind: input, shape index: {}]
  %s2 = inlined_call_operand.vmem [shape: f32[1,32], index: 2, kind: input, shape index: {}]
  %s3 = inlined_call_operand.vmem [shape: bf16[384,32], index: 3, kind: output, shape index: {}]
  %s4 = sld [smem:[#allocation0]]
  $region22: #{crnn_forward.4} parent=0
    _
  %s6 = ssub.s32 1, %s4
  %s7 = scalar_select 0, %s6, %s4
  // Predicated region
  $region2: #{crnn_forward.4} parent=0 // pred_check
    _
  $region3: #{crnn_forward.4} parent=0 // pred_check_branch
    %9 = sbr.rel (0) target = $region5
  $region4: #{crnn_forward.4} parent=0 // pred_region
    _
  $region5: #{crnn_forward.4} parent=0 // pred_fallthru
    _
  // Predicated region
  $region6: #{crnn_forward.4} parent=0 // pred_check
    _
  $region7: #{crnn_forward.4} parent=0 // pred_check_branch
    %11 = sbr.rel (0) target = $region9
  $region8: #{crnn_forward.4} parent=0 // pred_region
    _
  $region9: #{crnn_forward.4} parent=0 // pred_fallthru
    _
  // Predicated region
  $region10: #{crnn_forward.4} parent=0 // pred_check
    _
  $region11: #{crnn_forward.4} parent=0 // pred_check_branch
    %13 = sbr.rel (0) target = $region13
  $region12: #{crnn_forward.4} parent=0 // pred_region
    _
  $region13: #{crnn_forward.4} parent=0 // pred_fallthru
    _
  %v15 = vld [vmem:[%s1] sm:$0xf]
  %v16 = vld [vmem:[%s1 + $0x4] sm:$0xf]
  %v17 = vld [vmem:[%s1 + $0x8] sm:$0xf]
  %v18 = vld [vmem:[%s1 + $0xc] sm:$0x3]
  %v19 = vld [vmem:[%s2] sm:$0x1]
  %v20 = vld [vmem:[%s0] sm:$0xf]
  %v21 = vld [vmem:[%s0 + $0x4] sm:$0xf]
  %v22 = vld [vmem:[%s0 + $0x8] sm:$0xf]
  %v23 = vld [vmem:[%s0 + $0xc] sm:$0xf]
  %v24 = vld [vmem:[%s0 + $0x10] sm:$0xf]
  %v25 = vld [vmem:[%s0 + $0x14] sm:$0xf]
  %v26 = vld [vmem:[%s0 + $0x18] sm:$0xf]
  %v27 = vld [vmem:[%s0 + $0x1c] sm:$0xf]
  %v28 = vld [vmem:[%s0 + $0x20] sm:$0xf]
  %v29 = vld [vmem:[%s0 + $0x24] sm:$0xf]
  %v30 = vld [vmem:[%s0 + $0x28] sm:$0xf]
  %v31 = vld [vmem:[%s0 + $0x2c] sm:$0xf]
  %v32 = vld [vmem:[%s0 + $0x30] sm:$0xf]
  %v33 = vld [vmem:[%s0 + $0x34] sm:$0xf]
  %v34 = vld [vmem:[%s0 + $0x38] sm:$0xf]
  %v35 = vld [vmem:[%s0 + $0x3c] sm:$0xf]
  %v36 = vld [vmem:[%s0 + $0x40] sm:$0xf]
  %v37 = vld [vmem:[%s0 + $0x44] sm:$0xf]
  %v38 = vld [vmem:[%s0 + $0x48] sm:$0xf]
  %v39 = vld [vmem:[%s0 + $0x4c] sm:$0xf]
  %v40 = vld [vmem:[%s0 + $0x50] sm:$0xf]
  %v41 = vld [vmem:[%s0 + $0x54] sm:$0xf]
  %v42 = vld [vmem:[%s0 + $0x58] sm:$0xf]
  %v43 = vld [vmem:[%s0 + $0x5c] sm:$0xf]
  %v44 = vld [vmem:[%s0 + $0x60] sm:$0xf]
  %v45 = vld [vmem:[%s0 + $0x64] sm:$0xf]
  %v46 = vld [vmem:[%s0 + $0x68] sm:$0xf]
  %v47 = vld [vmem:[%s0 + $0x6c] sm:$0xf]
  %v48 = vld [vmem:[%s0 + $0x70] sm:$0xf]
  %v49 = vld [vmem:[%s0 + $0x74] sm:$0xf]
  %v50 = vld [vmem:[%s0 + $0x78] sm:$0xf]
  %v51 = vld [vmem:[%s0 + $0x7c] sm:$0xf]
  %v52 = vld [vmem:[%s0 + $0x80] sm:$0xf]
  %v53 = vld [vmem:[%s0 + $0x84] sm:$0xf]
  %v54 = vld [vmem:[%s0 + $0x88] sm:$0xf]
  %v55 = vld [vmem:[%s0 + $0x8c] sm:$0xf]
  %v56 = vld [vmem:[%s0 + $0x90] sm:$0xf]
  %v57 = vld [vmem:[%s0 + $0x94] sm:$0xf]
  %v58 = vld [vmem:[%s0 + $0x98] sm:$0xf]
  %v59 = vld [vmem:[%s0 + $0x9c] sm:$0xf]
  %v60 = vld [vmem:[%s0 + $0xa0] sm:$0xf]
  %v61 = vld [vmem:[%s0 + $0xa4] sm:$0xf]
  %v62 = vld [vmem:[%s0 + $0xa8] sm:$0xf]
  %v63 = vld [vmem:[%s0 + $0xac] sm:$0xf]
  %v64 = vld [vmem:[%s0 + $0xb0] sm:$0xf]
  %v65 = vld [vmem:[%s0 + $0xb4] sm:$0xf]
  %v66 = vld [vmem:[%s0 + $0xb8] sm:$0xf]
  %v67 = vld [vmem:[%s0 + $0xbc] sm:$0xf]
  %v69 = vlaneseq
  %v70 = vshrl.u32 %v69, 7
  %v71 = vsub.s32 0, %v70
  %v72 = vrot.slane %v19, %v71
  %v122 = vunpack.c.l.b16 %v20
  %v123 = vunpack.c.l.b16 %v21
  %v124 = vunpack.c.l.b16 %v22
  %v125 = vunpack.c.l.b16 %v23
  %v126 = vunpack.c.l.b16 %v24
  %v127 = vunpack.c.l.b16 %v25
  %v128 = vunpack.c.l.b16 %v26
  %v129 = vunpack.c.l.b16 %v27
  %v130 = vunpack.c.l.b16 %v28
  %v131 = vunpack.c.l.b16 %v29
  %v132 = vunpack.c.l.b16 %v30
  %v133 = vunpack.c.l.b16 %v31
  %v134 = vunpack.c.l.b16 %v32
  %v135 = vunpack.c.l.b16 %v33
  %v136 = vunpack.c.l.b16 %v34
  %v137 = vunpack.c.l.b16 %v35
  %v138 = vunpack.c.l.b16 %v36
  %v139 = vunpack.c.l.b16 %v37
  %v140 = vunpack.c.l.b16 %v38
  %v141 = vunpack.c.l.b16 %v39
  %v142 = vunpack.c.l.b16 %v40
  %v143 = vunpack.c.l.b16 %v41
  %v144 = vunpack.c.l.b16 %v42
  %v145 = vunpack.c.l.b16 %v43
  %v146 = vunpack.c.l.b16 %v44
  %v147 = vunpack.c.l.b16 %v45
  %v148 = vunpack.c.l.b16 %v46
  %v149 = vunpack.c.l.b16 %v47
  %v150 = vunpack.c.l.b16 %v48
  %v151 = vunpack.c.l.b16 %v49
  %v152 = vunpack.c.l.b16 %v50
  %v153 = vunpack.c.l.b16 %v51
  %v154 = vunpack.c.l.b16 %v52
  %v155 = vunpack.c.l.b16 %v53
  %v156 = vunpack.c.l.b16 %v54
  %v157 = vunpack.c.l.b16 %v55
  %v158 = vunpack.c.l.b16 %v56
  %v159 = vunpack.c.l.b16 %v57
  %v160 = vunpack.c.l.b16 %v58
  %v161 = vunpack.c.l.b16 %v59
  %v162 = vunpack.c.l.b16 %v60
  %v163 = vunpack.c.l.b16 %v61
  %v164 = vunpack.c.l.b16 %v62
  %v165 = vunpack.c.l.b16 %v63
  %v166 = vunpack.c.l.b16 %v64
  %v167 = vunpack.c.l.b16 %v65
  %v168 = vunpack.c.l.b16 %v66
  %v169 = vunpack.c.l.b16 %v67
  %v170 = vpack.c.b16 %v123, %v122
  %v171 = vpack.c.b16 %v125, %v124
  %v172 = vpack.c.b16 %v127, %v126
  %v173 = vpack.c.b16 %v129, %v128
  %v174 = vpack.c.b16 %v131, %v130
  %v175 = vpack.c.b16 %v133, %v132
  %v176 = vpack.c.b16 %v135, %v134
  %v177 = vpack.c.b16 %v137, %v136
  %v178 = vpack.c.b16 %v139, %v138
  %v179 = vpack.c.b16 %v141, %v140
  %v180 = vpack.c.b16 %v143, %v142
  %v181 = vpack.c.b16 %v145, %v144
  %v182 = vpack.c.b16 %v147, %v146
  %v183 = vpack.c.b16 %v149, %v148
  %v184 = vpack.c.b16 %v151, %v150
  %v185 = vpack.c.b16 %v153, %v152
  %v186 = vpack.c.b16 %v155, %v154
  %v187 = vpack.c.b16 %v157, %v156
  %v188 = vpack.c.b16 %v159, %v158
  %v189 = vpack.c.b16 %v161, %v160
  %v190 = vpack.c.b16 %v163, %v162
  %v191 = vpack.c.b16 %v165, %v164
  %v192 = vpack.c.b16 %v167, %v166
  %v193 = vpack.c.b16 %v169, %v168
  %v198 = vunpack.c.l.b16 %v15
  %v199 = vunpack.c.l.b16 %v16
  %v200 = vunpack.c.l.b16 %v17
  %v201 = vunpack.c.l.b16 %v18
  %v202 = vpack.c.b16 %v199, %v198
  %v203 = vpack.c.b16 %v201, %v200
  %vm205 = vcmask 220160
  %v207 = vsel %vm205, %v170, 0
  %v210 = vsel %vm205, %v171, 0
  %v213 = vsel %vm205, %v172, 0
  %v216 = vsel %vm205, %v173, 0
  %v219 = vsel %vm205, %v174, 0
  %v222 = vsel %vm205, %v175, 0
  %v225 = vsel %vm205, %v176, 0
  %v228 = vsel %vm205, %v177, 0
  %v231 = vsel %vm205, %v178, 0
  %v234 = vsel %vm205, %v179, 0
  %v237 = vsel %vm205, %v180, 0
  %v240 = vsel %vm205, %v181, 0
  %v243 = vsel %vm205, %v182, 0
  %v246 = vsel %vm205, %v183, 0
  %v249 = vsel %vm205, %v184, 0
  %v252 = vsel %vm205, %v185, 0
  %v255 = vsel %vm205, %v186, 0
  %v258 = vsel %vm205, %v187, 0
  %v261 = vsel %vm205, %v188, 0
  %v264 = vsel %vm205, %v189, 0
  %v267 = vsel %vm205, %v190, 0
  %v270 = vsel %vm205, %v191, 0
  %v273 = vsel %vm205, %v192, 0
  %v276 = vsel %vm205, %v193, 0
  %vm278 = vcmask 1044480
  %vm279 = vcmask 1045504
  %v280 = vsel %vm278, 4294967295, 65535
  %v281 = vsel %vm279, %v280, 0
  %v283 = vand.u32 %v203, %v281
  %285 = vmatprep.subr.bf16.mxu0 0
  %286 = vmatpush1.bf16.msra.mxu0 %v202
  %287 = vmatprep.subr.bf16.mxu0 0
  %288 = vmatpush1.bf16.msra.mxu0 %v283
  %289 = vmatprep.subr.bf16.mxu0 0
  %290 = vmatpush1.bf16.msra.mxu0 0
  %291 = vmatprep.subr.bf16.mxu0 0
  %292 = vmatpush1.bf16.msra.mxu0 0
  %293 = vmatprep.subr.bf16.mxu0 0
  %294 = vmatpush1.bf16.msra.mxu0 0
  %295 = vmatprep.subr.bf16.mxu0 0
  %296 = vmatpush1.bf16.msra.mxu0 0
  %297 = vmatprep.subr.bf16.mxu0 0
  %298 = vmatpush1.bf16.msra.mxu0 0
  %299 = vmatprep.subr.bf16.mxu0 0
  %300 = vmatpush1.bf16.msra.mxu0 0
  %301 = vmatprep.subr.bf16.mxu0 0
  %302 = vmatpush1.bf16.msra.mxu0 0
  %303 = vmatprep.subr.bf16.mxu0 0
  %304 = vmatpush1.bf16.msra.mxu0 0
  %305 = vmatprep.subr.bf16.mxu0 0
  %306 = vmatpush1.bf16.msra.mxu0 0
  %307 = vmatprep.subr.bf16.mxu0 0
  %308 = vmatpush1.bf16.msra.mxu0 0
  %309 = vmatprep.subr.bf16.mxu0 0
  %310 = vmatpush1.bf16.msra.mxu0 0
  %311 = vmatprep.subr.bf16.mxu0 0
  %312 = vmatpush1.bf16.msra.mxu0 0
  %313 = vmatprep.subr.bf16.mxu0 0
  %314 = vmatpush1.bf16.msra.mxu0 0
  %315 = vmatprep.subr.bf16.mxu0 0
  %316 = vmatpush1.bf16.msra.mxu0 0
  %317 = vmatprep.mubr.bf16.mxu0 0
  %318 = vmatmul.mubr.bf16.gmra.mrb[0].mxu0 %v207
  %v319 = vpop.f32.mrb[0].mxu0
  %v320 = vadd.f32 %v72, %v319
  %v321 = vpop.f32.mrb[0].mxu0
  %v322 = vpop.f32.mrb[0].mxu0
  %v323 = vadd.f32 %v72, %v322
  %v324 = vpop.f32.mrb[0].mxu0
  %325 = vmatprep.mubr.bf16.mxu0 0
  %326 = vmatmul.mubr.bf16.gmra.mrb[0].mxu0 %v210
  %v327 = vpop.f32.mrb[0].mxu0
  %v328 = vadd.f32 %v72, %v327
  %v329 = vpop.f32.mrb[0].mxu0
  %v330 = vpop.f32.mrb[0].mxu0
  %v331 = vadd.f32 %v72, %v330
  %v332 = vpop.f32.mrb[0].mxu0
  %333 = vmatprep.mubr.bf16.mxu0 0
  %334 = vmatmul.mubr.bf16.gmra.mrb[0].mxu0 %v213
  %v335 = vpop.f32.mrb[0].mxu0
  %v336 = vadd.f32 %v72, %v335
  %v337 = vpop.f32.mrb[0].mxu0
  %v338 = vpop.f32.mrb[0].mxu0
  %v339 = vadd.f32 %v72, %v338
  %v340 = vpop.f32.mrb[0].mxu0
  %341 = vmatprep.mubr.bf16.mxu0 0
  %342 = vmatmul.mubr.bf16.gmra.mrb[0].mxu0 %v216
  %v343 = vpop.f32.mrb[0].mxu0
  %v344 = vadd.f32 %v72, %v343
  %v345 = vpop.f32.mrb[0].mxu0
  %v346 = vpop.f32.mrb[0].mxu0
  %v347 = vadd.f32 %v72, %v346
  %v348 = vpop.f32.mrb[0].mxu0
  %349 = vmatprep.mubr.bf16.mxu0 0
  %350 = vmatmul.mubr.bf16.gmra.mrb[0].mxu0 %v219
  %v351 = vpop.f32.mrb[0].mxu0
  %v352 = vadd.f32 %v72, %v351
  %v353 = vpop.f32.mrb[0].mxu0
  %v354 = vpop.f32.mrb[0].mxu0
  %v355 = vadd.f32 %v72, %v354
  %v356 = vpop.f32.mrb[0].mxu0
  %357 = vmatprep.mubr.bf16.mxu0 0
  %358 = vmatmul.mubr.bf16.gmra.mrb[0].mxu0 %v222
  %v359 = vpop.f32.mrb[0].mxu0
  %v360 = vadd.f32 %v72, %v359
  %v361 = vpop.f32.mrb[0].mxu0
  %v362 = vpop.f32.mrb[0].mxu0
  %v363 = vadd.f32 %v72, %v362
  %v364 = vpop.f32.mrb[0].mxu0
  %365 = vmatprep.mubr.bf16.mxu0 0
  %366 = vmatmul.mubr.bf16.gmra.mrb[0].mxu0 %v225
  %v367 = vpop.f32.mrb[0].mxu0
  %v368 = vadd.f32 %v72, %v367
  %v369 = vpop.f32.mrb[0].mxu0
  %v370 = vpop.f32.mrb[0].mxu0
  %v371 = vadd.f32 %v72, %v370
  %v372 = vpop.f32.mrb[0].mxu0
  %373 = vmatprep.mubr.bf16.mxu0 0
  %374 = vmatmul.mubr.bf16.gmra.mrb[0].mxu0 %v228
  %v375 = vpop.f32.mrb[0].mxu0
  %v376 = vadd.f32 %v72, %v375
  %v377 = vpop.f32.mrb[0].mxu0
  %v378 = vpop.f32.mrb[0].mxu0
  %v379 = vadd.f32 %v72, %v378
  %v380 = vpop.f32.mrb[0].mxu0
  %381 = vmatprep.mubr.bf16.mxu0 0
  %382 = vmatmul.mubr.bf16.gmra.mrb[0].mxu0 %v231
  %v383 = vpop.f32.mrb[0].mxu0
  %v384 = vadd.f32 %v72, %v383
  %v385 = vpop.f32.mrb[0].mxu0
  %v386 = vpop.f32.mrb[0].mxu0
  %v387 = vadd.f32 %v72, %v386
  %v388 = vpop.f32.mrb[0].mxu0
  %389 = vmatprep.mubr.bf16.mxu0 0
  %390 = vmatmul.mubr.bf16.gmra.mrb[0].mxu0 %v234
  %v391 = vpop.f32.mrb[0].mxu0
  %v392 = vadd.f32 %v72, %v391
  %v393 = vpop.f32.mrb[0].mxu0
  %v394 = vpop.f32.mrb[0].mxu0
  %v395 = vadd.f32 %v72, %v394
  %v396 = vpop.f32.mrb[0].mxu0
  %397 = vmatprep.mubr.bf16.mxu0 0
  %398 = vmatmul.mubr.bf16.gmra.mrb[0].mxu0 %v237
  %v399 = vpop.f32.mrb[0].mxu0
  %v400 = vadd.f32 %v72, %v399
  %v401 = vpop.f32.mrb[0].mxu0
  %v402 = vpop.f32.mrb[0].mxu0
  %v403 = vadd.f32 %v72, %v402
  %v404 = vpop.f32.mrb[0].mxu0
  %405 = vmatprep.mubr.bf16.mxu0 0
  %406 = vmatmul.mubr.bf16.gmra.mrb[0].mxu0 %v240
  %v407 = vpop.f32.mrb[0].mxu0
  %v408 = vadd.f32 %v72, %v407
  %v409 = vpop.f32.mrb[0].mxu0
  %v410 = vpop.f32.mrb[0].mxu0
  %v411 = vadd.f32 %v72, %v410
  %v412 = vpop.f32.mrb[0].mxu0
  %413 = vmatprep.mubr.bf16.mxu0 0
  %414 = vmatmul.mubr.bf16.gmra.mrb[0].mxu0 %v243
  %v415 = vpop.f32.mrb[0].mxu0
  %v416 = vadd.f32 %v72, %v415
  %v417 = vpop.f32.mrb[0].mxu0
  %v418 = vpop.f32.mrb[0].mxu0
  %v419 = vadd.f32 %v72, %v418
  %v420 = vpop.f32.mrb[0].mxu0
  %421 = vmatprep.mubr.bf16.mxu0 0
  %422 = vmatmul.mubr.bf16.gmra.mrb[0].mxu0 %v246
  %v423 = vpop.f32.mrb[0].mxu0
  %v424 = vadd.f32 %v72, %v423
  %v425 = vpop.f32.mrb[0].mxu0
  %v426 = vpop.f32.mrb[0].mxu0
  %v427 = vadd.f32 %v72, %v426
  %v428 = vpop.f32.mrb[0].mxu0
  %429 = vmatprep.mubr.bf16.mxu0 0
  %430 = vmatmul.mubr.bf16.gmra.mrb[0].mxu0 %v249
  %v431 = vpop.f32.mrb[0].mxu0
  %v432 = vadd.f32 %v72, %v431
  %v433 = vpop.f32.mrb[0].mxu0
  %v434 = vpop.f32.mrb[0].mxu0
  %v435 = vadd.f32 %v72, %v434
  %v436 = vpop.f32.mrb[0].mxu0
  %437 = vmatprep.mubr.bf16.mxu0 0
  %438 = vmatmul.mubr.bf16.gmra.mrb[0].mxu0 %v252
  %v439 = vpop.f32.mrb[0].mxu0
  %v440 = vadd.f32 %v72, %v439
  %v441 = vpop.f32.mrb[0].mxu0
  %v442 = vpop.f32.mrb[0].mxu0
  %v443 = vadd.f32 %v72, %v442
  %v444 = vpop.f32.mrb[0].mxu0
  %445 = vmatprep.mubr.bf16.mxu0 0
  %446 = vmatmul.mubr.bf16.gmra.mrb[0].mxu0 %v255
  %v447 = vpop.f32.mrb[0].mxu0
  %v448 = vadd.f32 %v72, %v447
  %v449 = vpop.f32.mrb[0].mxu0
  %v450 = vpop.f32.mrb[0].mxu0
  %v451 = vadd.f32 %v72, %v450
  %v452 = vpop.f32.mrb[0].mxu0
  %453 = vmatprep.mubr.bf16.mxu0 0
  %454 = vmatmul.mubr.bf16.gmra.mrb[0].mxu0 %v258
  %v455 = vpop.f32.mrb[0].mxu0
  %v456 = vadd.f32 %v72, %v455
  %v457 = vpop.f32.mrb[0].mxu0
  %v458 = vpop.f32.mrb[0].mxu0
  %v459 = vadd.f32 %v72, %v458
  %v460 = vpop.f32.mrb[0].mxu0
  %461 = vmatprep.mubr.bf16.mxu0 0
  %462 = vmatmul.mubr.bf16.gmra.mrb[0].mxu0 %v261
  %v463 = vpop.f32.mrb[0].mxu0
  %v464 = vadd.f32 %v72, %v463
  %v465 = vpop.f32.mrb[0].mxu0
  %v466 = vpop.f32.mrb[0].mxu0
  %v467 = vadd.f32 %v72, %v466
  %v468 = vpop.f32.mrb[0].mxu0
  %469 = vmatprep.mubr.bf16.mxu0 0
  %470 = vmatmul.mubr.bf16.gmra.mrb[0].mxu0 %v264
  %v471 = vpop.f32.mrb[0].mxu0
  %v472 = vadd.f32 %v72, %v471
  %v473 = vpop.f32.mrb[0].mxu0
  %v474 = vpop.f32.mrb[0].mxu0
  %v475 = vadd.f32 %v72, %v474
  %v476 = vpop.f32.mrb[0].mxu0
  %477 = vmatprep.mubr.bf16.mxu0 0
  %478 = vmatmul.mubr.bf16.gmra.mrb[0].mxu0 %v267
  %v479 = vpop.f32.mrb[0].mxu0
  %v480 = vadd.f32 %v72, %v479
  %v481 = vpop.f32.mrb[0].mxu0
  %v482 = vpop.f32.mrb[0].mxu0
  %v483 = vadd.f32 %v72, %v482
  %v484 = vpop.f32.mrb[0].mxu0
  %485 = vmatprep.mubr.bf16.mxu0 0
  %486 = vmatmul.mubr.bf16.gmra.mrb[0].mxu0 %v270
  %v487 = vpop.f32.mrb[0].mxu0
  %v488 = vadd.f32 %v72, %v487
  %v489 = vpop.f32.mrb[0].mxu0
  %v490 = vpop.f32.mrb[0].mxu0
  %v491 = vadd.f32 %v72, %v490
  %v492 = vpop.f32.mrb[0].mxu0
  %493 = vmatprep.mubr.bf16.mxu0 0
  %494 = vmatmul.mubr.bf16.gmra.mrb[0].mxu0 %v273
  %v495 = vpop.f32.mrb[0].mxu0
  %v496 = vadd.f32 %v72, %v495
  %v497 = vpop.f32.mrb[0].mxu0
  %v498 = vpop.f32.mrb[0].mxu0
  %v499 = vadd.f32 %v72, %v498
  %v500 = vpop.f32.mrb[0].mxu0
  %501 = vmatprep.mubr.bf16.mxu0 0
  %502 = vmatmul.mubr.bf16.gmra.mrb[0].mxu0 %v276
  %v503 = vpop.f32.mrb[0].mxu0
  %v504 = vadd.f32 %v72, %v503
  %v505 = vpop.f32.mrb[0].mxu0
  %v506 = vpop.f32.mrb[0].mxu0
  %v507 = vadd.f32 %v72, %v506
  %v508 = vpop.f32.mrb[0].mxu0
  %509 = vdwg.mxu0
  %v510 = vmax.f32 %v320, 0.0
  %v511 = vmax.f32 %v323, 0.0
  %v512 = vmax.f32 %v328, 0.0
  %v513 = vmax.f32 %v331, 0.0
  %v514 = vmax.f32 %v336, 0.0
  %v515 = vmax.f32 %v339, 0.0
  %v516 = vmax.f32 %v344, 0.0
  %v517 = vmax.f32 %v347, 0.0
  %v518 = vmax.f32 %v352, 0.0
  %v519 = vmax.f32 %v355, 0.0
  %v520 = vmax.f32 %v360, 0.0
  %v521 = vmax.f32 %v363, 0.0
  %v522 = vmax.f32 %v368, 0.0
  %v523 = vmax.f32 %v371, 0.0
  %v524 = vmax.f32 %v376, 0.0
  %v525 = vmax.f32 %v379, 0.0
  %v526 = vmax.f32 %v384, 0.0
  %v527 = vmax.f32 %v387, 0.0
  %v528 = vmax.f32 %v392, 0.0
  %v529 = vmax.f32 %v395, 0.0
  %v530 = vmax.f32 %v400, 0.0
  %v531 = vmax.f32 %v403, 0.0
  %v532 = vmax.f32 %v408, 0.0
  %v533 = vmax.f32 %v411, 0.0
  %v534 = vmax.f32 %v416, 0.0
  %v535 = vmax.f32 %v419, 0.0
  %v536 = vmax.f32 %v424, 0.0
  %v537 = vmax.f32 %v427, 0.0
  %v538 = vmax.f32 %v432, 0.0
  %v539 = vmax.f32 %v435, 0.0
  %v540 = vmax.f32 %v440, 0.0
  %v541 = vmax.f32 %v443, 0.0
  %v542 = vmax.f32 %v448, 0.0
  %v543 = vmax.f32 %v451, 0.0
  %v544 = vmax.f32 %v456, 0.0
  %v545 = vmax.f32 %v459, 0.0
  %v546 = vmax.f32 %v464, 0.0
  %v547 = vmax.f32 %v467, 0.0
  %v548 = vmax.f32 %v472, 0.0
  %v549 = vmax.f32 %v475, 0.0
  %v550 = vmax.f32 %v480, 0.0
  %v551 = vmax.f32 %v483, 0.0
  %v552 = vmax.f32 %v488, 0.0
  %v553 = vmax.f32 %v491, 0.0
  %v554 = vmax.f32 %v496, 0.0
  %v555 = vmax.f32 %v499, 0.0
  %v556 = vmax.f32 %v504, 0.0
  %v557 = vmax.f32 %v507, 0.0
  %s558 = scalar_lea.vmem %s0, 192
  %v559 = vld [vmem:[%s558] sm:$0xf]
  %v560 = vld [vmem:[%s558 + $0x4] sm:$0xf]
  %v561 = vld [vmem:[%s558 + $0x8] sm:$0xf]
  %v562 = vld [vmem:[%s558 + $0xc] sm:$0xf]
  %v563 = vld [vmem:[%s558 + $0x10] sm:$0xf]
  %v564 = vld [vmem:[%s558 + $0x14] sm:$0xf]
  %v565 = vld [vmem:[%s558 + $0x18] sm:$0xf]
  %v566 = vld [vmem:[%s558 + $0x1c] sm:$0xf]
  %v567 = vld [vmem:[%s558 + $0x20] sm:$0xf]
  %v568 = vld [vmem:[%s558 + $0x24] sm:$0xf]
  %v569 = vld [vmem:[%s558 + $0x28] sm:$0xf]
  %v570 = vld [vmem:[%s558 + $0x2c] sm:$0xf]
  %v571 = vld [vmem:[%s558 + $0x30] sm:$0xf]
  %v572 = vld [vmem:[%s558 + $0x34] sm:$0xf]
  %v573 = vld [vmem:[%s558 + $0x38] sm:$0xf]
  %v574 = vld [vmem:[%s558 + $0x3c] sm:$0xf]
  %v575 = vld [vmem:[%s558 + $0x40] sm:$0xf]
  %v576 = vld [vmem:[%s558 + $0x44] sm:$0xf]
  %v577 = vld [vmem:[%s558 + $0x48] sm:$0xf]
  %v578 = vld [vmem:[%s558 + $0x4c] sm:$0xf]
  %v579 = vld [vmem:[%s558 + $0x50] sm:$0xf]
  %v580 = vld [vmem:[%s558 + $0x54] sm:$0xf]
  %v581 = vld [vmem:[%s558 + $0x58] sm:$0xf]
  %v582 = vld [vmem:[%s558 + $0x5c] sm:$0xf]
  %v583 = vld [vmem:[%s558 + $0x60] sm:$0xf]
  %v584 = vld [vmem:[%s558 + $0x64] sm:$0xf]
  %v585 = vld [vmem:[%s558 + $0x68] sm:$0xf]
  %v586 = vld [vmem:[%s558 + $0x6c] sm:$0xf]
  %v587 = vld [vmem:[%s558 + $0x70] sm:$0xf]
  %v588 = vld [vmem:[%s558 + $0x74] sm:$0xf]
  %v589 = vld [vmem:[%s558 + $0x78] sm:$0xf]
  %v590 = vld [vmem:[%s558 + $0x7c] sm:$0xf]
  %v591 = vld [vmem:[%s558 + $0x80] sm:$0xf]
  %v592 = vld [vmem:[%s558 + $0x84] sm:$0xf]
  %v593 = vld [vmem:[%s558 + $0x88] sm:$0xf]
  %v594 = vld [vmem:[%s558 + $0x8c] sm:$0xf]
  %v595 = vld [vmem:[%s558 + $0x90] sm:$0xf]
  %v596 = vld [vmem:[%s558 + $0x94] sm:$0xf]
  %v597 = vld [vmem:[%s558 + $0x98] sm:$0xf]
  %v598 = vld [vmem:[%s558 + $0x9c] sm:$0xf]
  %v599 = vld [vmem:[%s558 + $0xa0] sm:$0xf]
  %v600 = vld [vmem:[%s558 + $0xa4] sm:$0xf]
  %v601 = vld [vmem:[%s558 + $0xa8] sm:$0xf]
  %v602 = vld [vmem:[%s558 + $0xac] sm:$0xf]
  %v603 = vld [vmem:[%s558 + $0xb0] sm:$0xf]
  %v604 = vld [vmem:[%s558 + $0xb4] sm:$0xf]
  %v605 = vld [vmem:[%s558 + $0xb8] sm:$0xf]
  %v606 = vld [vmem:[%s558 + $0xbc] sm:$0xf]
  %v655 = vunpack.c.l.b16 %v559
  %v656 = vunpack.c.l.b16 %v560
  %v657 = vunpack.c.l.b16 %v561
  %v658 = vunpack.c.l.b16 %v562
  %v659 = vunpack.c.l.b16 %v563
  %v660 = vunpack.c.l.b16 %v564
  %v661 = vunpack.c.l.b16 %v565
  %v662 = vunpack.c.l.b16 %v566
  %v663 = vunpack.c.l.b16 %v567
  %v664 = vunpack.c.l.b16 %v568
  %v665 = vunpack.c.l.b16 %v569
  %v666 = vunpack.c.l.b16 %v570
  %v667 = vunpack.c.l.b16 %v571
  %v668 = vunpack.c.l.b16 %v572
  %v669 = vunpack.c.l.b16 %v573
  %v670 = vunpack.c.l.b16 %v574
  %v671 = vunpack.c.l.b16 %v575
  %v672 = vunpack.c.l.b16 %v576
  %v673 = vunpack.c.l.b16 %v577
  %v674 = vunpack.c.l.b16 %v578
  %v675 = vunpack.c.l.b16 %v579
  %v676 = vunpack.c.l.b16 %v580
  %v677 = vunpack.c.l.b16 %v581
  %v678 = vunpack.c.l.b16 %v582
  %v679 = vunpack.c.l.b16 %v583
  %v680 = vunpack.c.l.b16 %v584
  %v681 = vunpack.c.l.b16 %v585
  %v682 = vunpack.c.l.b16 %v586
  %v683 = vunpack.c.l.b16 %v587
  %v684 = vunpack.c.l.b16 %v588
  %v685 = vunpack.c.l.b16 %v589
  %v686 = vunpack.c.l.b16 %v590
  %v687 = vunpack.c.l.b16 %v591
  %v688 = vunpack.c.l.b16 %v592
  %v689 = vunpack.c.l.b16 %v593
  %v690 = vunpack.c.l.b16 %v594
  %v691 = vunpack.c.l.b16 %v595
  %v692 = vunpack.c.l.b16 %v596
  %v693 = vunpack.c.l.b16 %v597
  %v694 = vunpack.c.l.b16 %v598
  %v695 = vunpack.c.l.b16 %v599
  %v696 = vunpack.c.l.b16 %v600
  %v697 = vunpack.c.l.b16 %v601
  %v698 = vunpack.c.l.b16 %v602
  %v699 = vunpack.c.l.b16 %v603
  %v700 = vunpack.c.l.b16 %v604
  %v701 = vunpack.c.l.b16 %v605
  %v702 = vunpack.c.l.b16 %v606
  %v703 = vpack.c.b16 %v656, %v655
  %v704 = vpack.c.b16 %v658, %v657
  %v705 = vpack.c.b16 %v660, %v659
  %v706 = vpack.c.b16 %v662, %v661
  %v707 = vpack.c.b16 %v664, %v663
  %v708 = vpack.c.b16 %v666, %v665
  %v709 = vpack.c.b16 %v668, %v667
  %v710 = vpack.c.b16 %v670, %v669
  %v711 = vpack.c.b16 %v672, %v671
  %v712 = vpack.c.b16 %v674, %v673
  %v713 = vpack.c.b16 %v676, %v675
  %v714 = vpack.c.b16 %v678, %v677
  %v715 = vpack.c.b16 %v680, %v679
  %v716 = vpack.c.b16 %v682, %v681
  %v717 = vpack.c.b16 %v684, %v683
  %v718 = vpack.c.b16 %v686, %v685
  %v719 = vpack.c.b16 %v688, %v687
  %v720 = vpack.c.b16 %v690, %v689
  %v721 = vpack.c.b16 %v692, %v691
  %v722 = vpack.c.b16 %v694, %v693
  %v723 = vpack.c.b16 %v696, %v695
  %v724 = vpack.c.b16 %v698, %v697
  %v725 = vpack.c.b16 %v700, %v699
  %v726 = vpack.c.b16 %v702, %v701
  %v728 = vsel %vm205, %v703, 0
  %v731 = vsel %vm205, %v704, 0
  %v734 = vsel %vm205, %v705, 0
  %v737 = vsel %vm205, %v706, 0
  %v740 = vsel %vm205, %v707, 0
  %v743 = vsel %vm205, %v708, 0
  %v746 = vsel %vm205, %v709, 0
  %v749 = vsel %vm205, %v710, 0
  %v752 = vsel %vm205, %v711, 0
  %v755 = vsel %vm205, %v712, 0
  %v758 = vsel %vm205, %v713, 0
  %v761 = vsel %vm205, %v714, 0
  %v764 = vsel %vm205, %v715, 0
  %v767 = vsel %vm205, %v716, 0
  %v770 = vsel %vm205, %v717, 0
  %v773 = vsel %vm205, %v718, 0
  %v776 = vsel %vm205, %v719, 0
  %v779 = vsel %vm205, %v720, 0
  %v782 = vsel %vm205, %v721, 0
  %v785 = vsel %vm205, %v722, 0
  %v788 = vsel %vm205, %v723, 0
  %v791 = vsel %vm205, %v724, 0
  %v794 = vsel %vm205, %v725, 0
  %v797 = vsel %vm205, %v726, 0
  %799 = vmatprep.subr.bf16.mxu0 0
  %800 = vmatpush1.bf16.msra.mxu0 %v202
  %801 = vmatprep.subr.bf16.mxu0 0
  %802 = vmatpush1.bf16.msra.mxu0 %v283
  %803 = vmatprep.subr.bf16.mxu0 0
  %804 = vmatpush1.bf16.msra.mxu0 0
  %805 = vmatprep.subr.bf16.mxu0 0
  %806 = vmatpush1.bf16.msra.mxu0 0
  %807 = vmatprep.subr.bf16.mxu0 0
  %808 = vmatpush1.bf16.msra.mxu0 0
  %809 = vmatprep.subr.bf16.mxu0 0
  %810 = vmatpush1.bf16.msra.mxu0 0
  %811 = vmatprep.subr.bf16.mxu0 0
  %812 = vmatpush1.bf16.msra.mxu0 0
  %813 = vmatprep.subr.bf16.mxu0 0
  %814 = vmatpush1.bf16.msra.mxu0 0
  %815 = vmatprep.subr.bf16.mxu0 0
  %816 = vmatpush1.bf16.msra.mxu0 0
  %817 = vmatprep.subr.bf16.mxu0 0
  %818 = vmatpush1.bf16.msra.mxu0 0
  %819 = vmatprep.subr.bf16.mxu0 0
  %820 = vmatpush1.bf16.msra.mxu0 0
  %821 = vmatprep.subr.bf16.mxu0 0
  %822 = vmatpush1.bf16.msra.mxu0 0
  %823 = vmatprep.subr.bf16.mxu0 0
  %824 = vmatpush1.bf16.msra.mxu0 0
  %825 = vmatprep.subr.bf16.mxu0 0
  %826 = vmatpush1.bf16.msra.mxu0 0
  %827 = vmatprep.subr.bf16.mxu0 0
  %828 = vmatpush1.bf16.msra.mxu0 0
  %829 = vmatprep.subr.bf16.mxu0 0
  %830 = vmatpush1.bf16.msra.mxu0 0
  %831 = vmatprep.mubr.bf16.mxu0 0
  %832 = vmatmul.mubr.bf16.gmra.mrb[0].mxu0 %v728
  %v833 = vpop.f32.mrb[0].mxu0
  %v834 = vadd.f32 %v72, %v833
  %v835 = vpop.f32.mrb[0].mxu0
  %v836 = vpop.f32.mrb[0].mxu0
  %v837 = vadd.f32 %v72, %v836
  %v838 = vpop.f32.mrb[0].mxu0
  %839 = vmatprep.mubr.bf16.mxu0 0
  %840 = vmatmul.mubr.bf16.gmra.mrb[0].mxu0 %v731
  %v841 = vpop.f32.mrb[0].mxu0
  %v842 = vadd.f32 %v72, %v841
  %v843 = vpop.f32.mrb[0].mxu0
  %v844 = vpop.f32.mrb[0].mxu0
  %v845 = vadd.f32 %v72, %v844
  %v846 = vpop.f32.mrb[0].mxu0
  %847 = vmatprep.mubr.bf16.mxu0 0
  %848 = vmatmul.mubr.bf16.gmra.mrb[0].mxu0 %v734
  %v849 = vpop.f32.mrb[0].mxu0
  %v850 = vadd.f32 %v72, %v849
  %v851 = vpop.f32.mrb[0].mxu0
  %v852 = vpop.f32.mrb[0].mxu0
  %v853 = vadd.f32 %v72, %v852
  %v854 = vpop.f32.mrb[0].mxu0
  %855 = vmatprep.mubr.bf16.mxu0 0
  %856 = vmatmul.mubr.bf16.gmra.mrb[0].mxu0 %v737
  %v857 = vpop.f32.mrb[0].mxu0
  %v858 = vadd.f32 %v72, %v857
  %v859 = vpop.f32.mrb[0].mxu0
  %v860 = vpop.f32.mrb[0].mxu0
  %v861 = vadd.f32 %v72, %v860
  %v862 = vpop.f32.mrb[0].mxu0
  %863 = vmatprep.mubr.bf16.mxu0 0
  %864 = vmatmul.mubr.bf16.gmra.mrb[0].mxu0 %v740
  %v865 = vpop.f32.mrb[0].mxu0
  %v866 = vadd.f32 %v72, %v865
  %v867 = vpop.f32.mrb[0].mxu0
  %v868 = vpop.f32.mrb[0].mxu0
  %v869 = vadd.f32 %v72, %v868
  %v870 = vpop.f32.mrb[0].mxu0
  %871 = vmatprep.mubr.bf16.mxu0 0
  %872 = vmatmul.mubr.bf16.gmra.mrb[0].mxu0 %v743
  %v873 = vpop.f32.mrb[0].mxu0
  %v874 = vadd.f32 %v72, %v873
  %v875 = vpop.f32.mrb[0].mxu0
  %v876 = vpop.f32.mrb[0].mxu0
  %v877 = vadd.f32 %v72, %v876
  %v878 = vpop.f32.mrb[0].mxu0
  %879 = vmatprep.mubr.bf16.mxu0 0
  %880 = vmatmul.mubr.bf16.gmra.mrb[0].mxu0 %v746
  %v881 = vpop.f32.mrb[0].mxu0
  %v882 = vadd.f32 %v72, %v881
  %v883 = vpop.f32.mrb[0].mxu0
  %v884 = vpop.f32.mrb[0].mxu0
  %v885 = vadd.f32 %v72, %v884
  %v886 = vpop.f32.mrb[0].mxu0
  %887 = vmatprep.mubr.bf16.mxu0 0
  %888 = vmatmul.mubr.bf16.gmra.mrb[0].mxu0 %v749
  %v889 = vpop.f32.mrb[0].mxu0
  %v890 = vadd.f32 %v72, %v889
  %v891 = vpop.f32.mrb[0].mxu0
  %v892 = vpop.f32.mrb[0].mxu0
  %v893 = vadd.f32 %v72, %v892
  %v894 = vpop.f32.mrb[0].mxu0
  %895 = vmatprep.mubr.bf16.mxu0 0
  %896 = vmatmul.mubr.bf16.gmra.mrb[0].mxu0 %v752
  %v897 = vpop.f32.mrb[0].mxu0
  %v898 = vadd.f32 %v72, %v897
  %v899 = vpop.f32.mrb[0].mxu0
  %v900 = vpop.f32.mrb[0].mxu0
  %v901 = vadd.f32 %v72, %v900
  %v902 = vpop.f32.mrb[0].mxu0
  %903 = vmatprep.mubr.bf16.mxu0 0
  %904 = vmatmul.mubr.bf16.gmra.mrb[0].mxu0 %v755
  %v905 = vpop.f32.mrb[0].mxu0
  %v906 = vadd.f32 %v72, %v905
  %v907 = vpop.f32.mrb[0].mxu0
  %v908 = vpop.f32.mrb[0].mxu0
  %v909 = vadd.f32 %v72, %v908
  %v910 = vpop.f32.mrb[0].mxu0
  %911 = vmatprep.mubr.bf16.mxu0 0
  %912 = vmatmul.mubr.bf16.gmra.mrb[0].mxu0 %v758
  %v913 = vpop.f32.mrb[0].mxu0
  %v914 = vadd.f32 %v72, %v913
  %v915 = vpop.f32.mrb[0].mxu0
  %v916 = vpop.f32.mrb[0].mxu0
  %v917 = vadd.f32 %v72, %v916
  %v918 = vpop.f32.mrb[0].mxu0
  %919 = vmatprep.mubr.bf16.mxu0 0
  %920 = vmatmul.mubr.bf16.gmra.mrb[0].mxu0 %v761
  %v921 = vpop.f32.mrb[0].mxu0
  %v922 = vadd.f32 %v72, %v921
  %v923 = vpop.f32.mrb[0].mxu0
  %v924 = vpop.f32.mrb[0].mxu0
  %v925 = vadd.f32 %v72, %v924
  %v926 = vpop.f32.mrb[0].mxu0
  %927 = vmatprep.mubr.bf16.mxu0 0
  %928 = vmatmul.mubr.bf16.gmra.mrb[0].mxu0 %v764
  %v929 = vpop.f32.mrb[0].mxu0
  %v930 = vadd.f32 %v72, %v929
  %v931 = vpop.f32.mrb[0].mxu0
  %v932 = vpop.f32.mrb[0].mxu0
  %v933 = vadd.f32 %v72, %v932
  %v934 = vpop.f32.mrb[0].mxu0
  %935 = vmatprep.mubr.bf16.mxu0 0
  %936 = vmatmul.mubr.bf16.gmra.mrb[0].mxu0 %v767
  %v937 = vpop.f32.mrb[0].mxu0
  %v938 = vadd.f32 %v72, %v937
  %v939 = vpop.f32.mrb[0].mxu0
  %v940 = vpop.f32.mrb[0].mxu0
  %v941 = vadd.f32 %v72, %v940
  %v942 = vpop.f32.mrb[0].mxu0
  %943 = vmatprep.mubr.bf16.mxu0 0
  %944 = vmatmul.mubr.bf16.gmra.mrb[0].mxu0 %v770
  %v945 = vpop.f32.mrb[0].mxu0
  %v946 = vadd.f32 %v72, %v945
  %v947 = vpop.f32.mrb[0].mxu0
  %v948 = vpop.f32.mrb[0].mxu0
  %v949 = vadd.f32 %v72, %v948
  %v950 = vpop.f32.mrb[0].mxu0
  %951 = vmatprep.mubr.bf16.mxu0 0
  %952 = vmatmul.mubr.bf16.gmra.mrb[0].mxu0 %v773
  %v953 = vpop.f32.mrb[0].mxu0
  %v954 = vadd.f32 %v72, %v953
  %v955 = vpop.f32.mrb[0].mxu0
  %v956 = vpop.f32.mrb[0].mxu0
  %v957 = vadd.f32 %v72, %v956
  %v958 = vpop.f32.mrb[0].mxu0
  %959 = vmatprep.mubr.bf16.mxu0 0
  %960 = vmatmul.mubr.bf16.gmra.mrb[0].mxu0 %v776
  %v961 = vpop.f32.mrb[0].mxu0
  %v962 = vadd.f32 %v72, %v961
  %v963 = vpop.f32.mrb[0].mxu0
  %v964 = vpop.f32.mrb[0].mxu0
  %v965 = vadd.f32 %v72, %v964
  %v966 = vpop.f32.mrb[0].mxu0
  %967 = vmatprep.mubr.bf16.mxu0 0
  %968 = vmatmul.mubr.bf16.gmra.mrb[0].mxu0 %v779
  %v969 = vpop.f32.mrb[0].mxu0
  %v970 = vadd.f32 %v72, %v969
  %v971 = vpop.f32.mrb[0].mxu0
  %v972 = vpop.f32.mrb[0].mxu0
  %v973 = vadd.f32 %v72, %v972
  %v974 = vpop.f32.mrb[0].mxu0
  %975 = vmatprep.mubr.bf16.mxu0 0
  %976 = vmatmul.mubr.bf16.gmra.mrb[0].mxu0 %v782
  %v977 = vpop.f32.mrb[0].mxu0
  %v978 = vadd.f32 %v72, %v977
  %v979 = vpop.f32.mrb[0].mxu0
  %v980 = vpop.f32.mrb[0].mxu0
  %v981 = vadd.f32 %v72, %v980
  %v982 = vpop.f32.mrb[0].mxu0
  %983 = vmatprep.mubr.bf16.mxu0 0
  %984 = vmatmul.mubr.bf16.gmra.mrb[0].mxu0 %v785
  %v985 = vpop.f32.mrb[0].mxu0
  %v986 = vadd.f32 %v72, %v985
  %v987 = vpop.f32.mrb[0].mxu0
  %v988 = vpop.f32.mrb[0].mxu0
  %v989 = vadd.f32 %v72, %v988
  %v990 = vpop.f32.mrb[0].mxu0
  %991 = vmatprep.mubr.bf16.mxu0 0
  %992 = vmatmul.mubr.bf16.gmra.mrb[0].mxu0 %v788
  %v993 = vpop.f32.mrb[0].mxu0
  %v994 = vadd.f32 %v72, %v993
  %v995 = vpop.f32.mrb[0].mxu0
  %v996 = vpop.f32.mrb[0].mxu0
  %v997 = vadd.f32 %v72, %v996
  %v998 = vpop.f32.mrb[0].mxu0
  %999 = vmatprep.mubr.bf16.mxu0 0
  %1000 = vmatmul.mubr.bf16.gmra.mrb[0].mxu0 %v791
  %v1001 = vpop.f32.mrb[0].mxu0
  %v1002 = vadd.f32 %v72, %v1001
  %v1003 = vpop.f32.mrb[0].mxu0
  %v1004 = vpop.f32.mrb[0].mxu0
  %v1005 = vadd.f32 %v72, %v1004
  %v1006 = vpop.f32.mrb[0].mxu0
  %1007 = vmatprep.mubr.bf16.mxu0 0
  %1008 = vmatmul.mubr.bf16.gmra.mrb[0].mxu0 %v794
  %v1009 = vpop.f32.mrb[0].mxu0
  %v1010 = vadd.f32 %v72, %v1009
  %v1011 = vpop.f32.mrb[0].mxu0
  %v1012 = vpop.f32.mrb[0].mxu0
  %v1013 = vadd.f32 %v72, %v1012
  %v1014 = vpop.f32.mrb[0].mxu0
  %1015 = vmatprep.mubr.bf16.mxu0 0
  %1016 = vmatmul.mubr.bf16.gmra.mrb[0].mxu0 %v797
  %v1017 = vpop.f32.mrb[0].mxu0
  %v1018 = vadd.f32 %v72, %v1017
  %v1019 = vpop.f32.mrb[0].mxu0
  %v1020 = vpop.f32.mrb[0].mxu0
  %v1021 = vadd.f32 %v72, %v1020
  %v1022 = vpop.f32.mrb[0].mxu0
  %1023 = vdwg.mxu0
  %v1024 = vmax.f32 %v834, 0.0
  %v1025 = vmax.f32 %v837, 0.0
  %v1026 = vmax.f32 %v842, 0.0
  %v1027 = vmax.f32 %v845, 0.0
  %v1028 = vmax.f32 %v850, 0.0
  %v1029 = vmax.f32 %v853, 0.0
  %v1030 = vmax.f32 %v858, 0.0
  %v1031 = vmax.f32 %v861, 0.0
  %v1032 = vmax.f32 %v866, 0.0
  %v1033 = vmax.f32 %v869, 0.0
  %v1034 = vmax.f32 %v874, 0.0
  %v1035 = vmax.f32 %v877, 0.0
  %v1036 = vmax.f32 %v882, 0.0
  %v1037 = vmax.f32 %v885, 0.0
  %v1038 = vmax.f32 %v890, 0.0
  %v1039 = vmax.f32 %v893, 0.0
  %v1040 = vmax.f32 %v898, 0.0
  %v1041 = vmax.f32 %v901, 0.0
  %v1042 = vmax.f32 %v906, 0.0
  %v1043 = vmax.f32 %v909, 0.0
  %v1044 = vmax.f32 %v914, 0.0
  %v1045 = vmax.f32 %v917, 0.0
  %v1046 = vmax.f32 %v922, 0.0
  %v1047 = vmax.f32 %v925, 0.0
  %v1048 = vmax.f32 %v930, 0.0
  %v1049 = vmax.f32 %v933, 0.0
  %v1050 = vmax.f32 %v938, 0.0
  %v1051 = vmax.f32 %v941, 0.0
  %v1052 = vmax.f32 %v946, 0.0
  %v1053 = vmax.f32 %v949, 0.0
  %v1054 = vmax.f32 %v954, 0.0
  %v1055 = vmax.f32 %v957, 0.0
  %v1056 = vmax.f32 %v962, 0.0
  %v1057 = vmax.f32 %v965, 0.0
  %v1058 = vmax.f32 %v970, 0.0
  %v1059 = vmax.f32 %v973, 0.0
  %v1060 = vmax.f32 %v978, 0.0
  %v1061 = vmax.f32 %v981, 0.0
  %v1062 = vmax.f32 %v986, 0.0
  %v1063 = vmax.f32 %v989, 0.0
  %v1064 = vmax.f32 %v994, 0.0
  %v1065 = vmax.f32 %v997, 0.0
  %v1066 = vmax.f32 %v1002, 0.0
  %v1067 = vmax.f32 %v1005, 0.0
  %v1068 = vmax.f32 %v1010, 0.0
  %v1069 = vmax.f32 %v1013, 0.0
  %v1070 = vmax.f32 %v1018, 0.0
  %v1071 = vmax.f32 %v1021, 0.0
  %v1072 = vmax.f32 %v510, %v1024
  %v1073 = vmax.f32 %v511, %v1025
  %v1074 = vmax.f32 %v512, %v1026
  %v1075 = vmax.f32 %v513, %v1027
  %v1076 = vmax.f32 %v514, %v1028
  %v1077 = vmax.f32 %v515, %v1029
  %v1078 = vmax.f32 %v516, %v1030
  %v1079 = vmax.f32 %v517, %v1031
  %v1080 = vmax.f32 %v518, %v1032
  %v1081 = vmax.f32 %v519, %v1033
  %v1082 = vmax.f32 %v520, %v1034
  %v1083 = vmax.f32 %v521, %v1035
  %v1084 = vmax.f32 %v522, %v1036
  %v1085 = vmax.f32 %v523, %v1037
  %v1086 = vmax.f32 %v524, %v1038
  %v1087 = vmax.f32 %v525, %v1039
  %v1088 = vmax.f32 %v526, %v1040
  %v1089 = vmax.f32 %v527, %v1041
  %v1090 = vmax.f32 %v528, %v1042
  %v1091 = vmax.f32 %v529, %v1043
  %v1092 = vmax.f32 %v530, %v1044
  %v1093 = vmax.f32 %v531, %v1045
  %v1094 = vmax.f32 %v532, %v1046
  %v1095 = vmax.f32 %v533, %v1047
  %v1096 = vmax.f32 %v534, %v1048
  %v1097 = vmax.f32 %v535, %v1049
  %v1098 = vmax.f32 %v536, %v1050
  %v1099 = vmax.f32 %v537, %v1051
  %v1100 = vmax.f32 %v538, %v1052
  %v1101 = vmax.f32 %v539, %v1053
  %v1102 = vmax.f32 %v540, %v1054
  %v1103 = vmax.f32 %v541, %v1055
  %v1104 = vmax.f32 %v542, %v1056
  %v1105 = vmax.f32 %v543, %v1057
  %v1106 = vmax.f32 %v544, %v1058
  %v1107 = vmax.f32 %v545, %v1059
  %v1108 = vmax.f32 %v546, %v1060
  %v1109 = vmax.f32 %v547, %v1061
  %v1110 = vmax.f32 %v548, %v1062
  %v1111 = vmax.f32 %v549, %v1063
  %v1112 = vmax.f32 %v550, %v1064
  %v1113 = vmax.f32 %v551, %v1065
  %v1114 = vmax.f32 %v552, %v1066
  %v1115 = vmax.f32 %v553, %v1067
  %v1116 = vmax.f32 %v554, %v1068
  %v1117 = vmax.f32 %v555, %v1069
  %v1118 = vmax.f32 %v556, %v1070
  %v1119 = vmax.f32 %v557, %v1071
  %s1120 = scalar_lea.vmem %s0, 384
  %v1121 = vld [vmem:[%s1120] sm:$0xf]
  %v1122 = vld [vmem:[%s1120 + $0x4] sm:$0xf]
  %v1123 = vld [vmem:[%s1120 + $0x8] sm:$0xf]
  %v1124 = vld [vmem:[%s1120 + $0xc] sm:$0xf]
  %v1125 = vld [vmem:[%s1120 + $0x10] sm:$0xf]
  %v1126 = vld [vmem:[%s1120 + $0x14] sm:$0xf]
  %v1127 = vld [vmem:[%s1120 + $0x18] sm:$0xf]
  %v1128 = vld [vmem:[%s1120 + $0x1c] sm:$0xf]
  %v1129 = vld [vmem:[%s1120 + $0x20] sm:$0xf]
  %v1130 = vld [vmem:[%s1120 + $0x24] sm:$0xf]
  %v1131 = vld [vmem:[%s1120 + $0x28] sm:$0xf]
  %v1132 = vld [vmem:[%s1120 + $0x2c] sm:$0xf]
  %v1133 = vld [vmem:[%s1120 + $0x30] sm:$0xf]
  %v1134 = vld [vmem:[%s1120 + $0x34] sm:$0xf]
  %v1135 = vld [vmem:[%s1120 + $0x38] sm:$0xf]
  %v1136 = vld [vmem:[%s1120 + $0x3c] sm:$0xf]
  %v1137 = vld [vmem:[%s1120 + $0x40] sm:$0xf]
  %v1138 = vld [vmem:[%s1120 + $0x44] sm:$0xf]
  %v1139 = vld [vmem:[%s1120 + $0x48] sm:$0xf]
  %v1140 = vld [vmem:[%s1120 + $0x4c] sm:$0xf]
  %v1141 = vld [vmem:[%s1120 + $0x50] sm:$0xf]
  %v1142 = vld [vmem:[%s1120 + $0x54] sm:$0xf]
  %v1143 = vld [vmem:[%s1120 + $0x58] sm:$0xf]
  %v1144 = vld [vmem:[%s1120 + $0x5c] sm:$0xf]
  %v1145 = vld [vmem:[%s1120 + $0x60] sm:$0xf]
  %v1146 = vld [vmem:[%s1120 + $0x64] sm:$0xf]
  %v1147 = vld [vmem:[%s1120 + $0x68] sm:$0xf]
  %v1148 = vld [vmem:[%s1120 + $0x6c] sm:$0xf]
  %v1149 = vld [vmem:[%s1120 + $0x70] sm:$0xf]
  %v1150 = vld [vmem:[%s1120 + $0x74] sm:$0xf]
  %v1151 = vld [vmem:[%s1120 + $0x78] sm:$0xf]
  %v1152 = vld [vmem:[%s1120 + $0x7c] sm:$0xf]
  %v1153 = vld [vmem:[%s1120 + $0x80] sm:$0xf]
  %v1154 = vld [vmem:[%s1120 + $0x84] sm:$0xf]
  %v1155 = vld [vmem:[%s1120 + $0x88] sm:$0xf]
  %v1156 = vld [vmem:[%s1120 + $0x8c] sm:$0xf]
  %v1157 = vld [vmem:[%s1120 + $0x90] sm:$0xf]
  %v1158 = vld [vmem:[%s1120 + $0x94] sm:$0xf]
  %v1159 = vld [vmem:[%s1120 + $0x98] sm:$0xf]
  %v1160 = vld [vmem:[%s1120 + $0x9c] sm:$0xf]
  %v1161 = vld [vmem:[%s1120 + $0xa0] sm:$0xf]
  %v1162 = vld [vmem:[%s1120 + $0xa4] sm:$0xf]
  %v1163 = vld [vmem:[%s1120 + $0xa8] sm:$0xf]
  %v1164 = vld [vmem:[%s1120 + $0xac] sm:$0xf]
  %v1165 = vld [vmem:[%s1120 + $0xb0] sm:$0xf]
  %v1166 = vld [vmem:[%s1120 + $0xb4] sm:$0xf]
  %v1167 = vld [vmem:[%s1120 + $0xb8] sm:$0xf]
  %v1168 = vld [vmem:[%s1120 + $0xbc] sm:$0xf]
  %v1217 = vunpack.c.l.b16 %v1121
  %v1218 = vunpack.c.l.b16 %v1122
  %v1219 = vunpack.c.l.b16 %v1123
  %v1220 = vunpack.c.l.b16 %v1124
  %v1221 = vunpack.c.l.b16 %v1125
  %v1222 = vunpack.c.l.b16 %v1126
  %v1223 = vunpack.c.l.b16 %v1127
  %v1224 = vunpack.c.l.b16 %v1128
  %v1225 = vunpack.c.l.b16 %v1129
  %v1226 = vunpack.c.l.b16 %v1130
  %v1227 = vunpack.c.l.b16 %v1131
  %v1228 = vunpack.c.l.b16 %v1132
  %v1229 = vunpack.c.l.b16 %v1133
  %v1230 = vunpack.c.l.b16 %v1134
  %v1231 = vunpack.c.l.b16 %v1135
  %v1232 = vunpack.c.l.b16 %v1136
  %v1233 = vunpack.c.l.b16 %v1137
  %v1234 = vunpack.c.l.b16 %v1138
  %v1235 = vunpack.c.l.b16 %v1139
  %v1236 = vunpack.c.l.b16 %v1140
  %v1237 = vunpack.c.l.b16 %v1141
  %v1238 = vunpack.c.l.b16 %v1142
  %v1239 = vunpack.c.l.b16 %v1143
  %v1240 = vunpack.c.l.b16 %v1144
  %v1241 = vunpack.c.l.b16 %v1145
  %v1242 = vunpack.c.l.b16 %v1146
  %v1243 = vunpack.c.l.b16 %v1147
  %v1244 = vunpack.c.l.b16 %v1148
  %v1245 = vunpack.c.l.b16 %v1149
  %v1246 = vunpack.c.l.b16 %v1150
  %v1247 = vunpack.c.l.b16 %v1151
  %v1248 = vunpack.c.l.b16 %v1152
  %v1249 = vunpack.c.l.b16 %v1153
  %v1250 = vunpack.c.l.b16 %v1154
  %v1251 = vunpack.c.l.b16 %v1155
  %v1252 = vunpack.c.l.b16 %v1156
  %v1253 = vunpack.c.l.b16 %v1157
  %v1254 = vunpack.c.l.b16 %v1158
  %v1255 = vunpack.c.l.b16 %v1159
  %v1256 = vunpack.c.l.b16 %v1160
  %v1257 = vunpack.c.l.b16 %v1161
  %v1258 = vunpack.c.l.b16 %v1162
  %v1259 = vunpack.c.l.b16 %v1163
  %v1260 = vunpack.c.l.b16 %v1164
  %v1261 = vunpack.c.l.b16 %v1165
  %v1262 = vunpack.c.l.b16 %v1166
  %v1263 = vunpack.c.l.b16 %v1167
  %v1264 = vunpack.c.l.b16 %v1168
  %v1265 = vpack.c.b16 %v1218, %v1217
  %v1266 = vpack.c.b16 %v1220, %v1219
  %v1267 = vpack.c.b16 %v1222, %v1221
  %v1268 = vpack.c.b16 %v1224, %v1223
  %v1269 = vpack.c.b16 %v1226, %v1225
  %v1270 = vpack.c.b16 %v1228, %v1227
  %v1271 = vpack.c.b16 %v1230, %v1229
  %v1272 = vpack.c.b16 %v1232, %v1231
  %v1273 = vpack.c.b16 %v1234, %v1233
  %v1274 = vpack.c.b16 %v1236, %v1235
  %v1275 = vpack.c.b16 %v1238, %v1237
  %v1276 = vpack.c.b16 %v1240, %v1239
  %v1277 = vpack.c.b16 %v1242, %v1241
  %v1278 = vpack.c.b16 %v1244, %v1243
  %v1279 = vpack.c.b16 %v1246, %v1245
  %v1280 = vpack.c.b16 %v1248, %v1247
  %v1281 = vpack.c.b16 %v1250, %v1249
  %v1282 = vpack.c.b16 %v1252, %v1251
  %v1283 = vpack.c.b16 %v1254, %v1253
  %v1284 = vpack.c.b16 %v1256, %v1255
  %v1285 = vpack.c.b16 %v1258, %v1257
  %v1286 = vpack.c.b16 %v1260, %v1259
  %v1287 = vpack.c.b16 %v1262, %v1261
  %v1288 = vpack.c.b16 %v1264, %v1263
  %v1290 = vsel %vm205, %v1265, 0
  %v1293 = vsel %vm205, %v1266, 0
  %v1296 = vsel %vm205, %v1267, 0
  %v1299 = vsel %vm205, %v1268, 0
  %v1302 = vsel %vm205, %v1269, 0
  %v1305 = vsel %vm205, %v1270, 0
  %v1308 = vsel %vm205, %v1271, 0
  %v1311 = vsel %vm205, %v1272, 0
  %v1314 = vsel %vm205, %v1273, 0
  %v1317 = vsel %vm205, %v1274, 0
  %v1320 = vsel %vm205, %v1275, 0
  %v1323 = vsel %vm205, %v1276, 0
  %v1326 = vsel %vm205, %v1277, 0
  %v1329 = vsel %vm205, %v1278, 0
  %v1332 = vsel %vm205, %v1279, 0
  %v1335 = vsel %vm205, %v1280, 0
  %v1338 = vsel %vm205, %v1281, 0
  %v1341 = vsel %vm205, %v1282, 0
  %v1344 = vsel %vm205, %v1283, 0
  %v1347 = vsel %vm205, %v1284, 0
  %v1350 = vsel %vm205, %v1285, 0
  %v1353 = vsel %vm205, %v1286, 0
  %v1356 = vsel %vm205, %v1287, 0
  %v1359 = vsel %vm205, %v1288, 0
  %1361 = vmatprep.subr.bf16.mxu0 0
  %1362 = vmatpush1.bf16.msra.mxu0 %v202
  %1363 = vmatprep.subr.bf16.mxu0 0
  %1364 = vmatpush1.bf16.msra.mxu0 %v283
  %1365 = vmatprep.subr.bf16.mxu0 0
  %1366 = vmatpush1.bf16.msra.mxu0 0
  %1367 = vmatprep.subr.bf16.mxu0 0
  %1368 = vmatpush1.bf16.msra.mxu0 0
  %1369 = vmatprep.subr.bf16.mxu0 0
  %1370 = vmatpush1.bf16.msra.mxu0 0
  %1371 = vmatprep.subr.bf16.mxu0 0
  %1372 = vmatpush1.bf16.msra.mxu0 0
  %1373 = vmatprep.subr.bf16.mxu0 0
  %1374 = vmatpush1.bf16.msra.mxu0 0
  %1375 = vmatprep.subr.bf16.mxu0 0
  %1376 = vmatpush1.bf16.msra.mxu0 0
  %1377 = vmatprep.subr.bf16.mxu0 0
  %1378 = vmatpush1.bf16.msra.mxu0 0
  %1379 = vmatprep.subr.bf16.mxu0 0
  %1380 = vmatpush1.bf16.msra.mxu0 0
  %1381 = vmatprep.subr.bf16.mxu0 0
  %1382 = vmatpush1.bf16.msra.mxu0 0
  %1383 = vmatprep.subr.bf16.mxu0 0
  %1384 = vmatpush1.bf16.msra.mxu0 0
  %1385 = vmatprep.subr.bf16.mxu0 0
  %1386 = vmatpush1.bf16.msra.mxu0 0
  %1387 = vmatprep.subr.bf16.mxu0 0
  %1388 = vmatpush1.bf16.msra.mxu0 0
  %1389 = vmatprep.subr.bf16.mxu0 0
  %1390 = vmatpush1.bf16.msra.mxu0 0
  %1391 = vmatprep.subr.bf16.mxu0 0
  %1392 = vmatpush1.bf16.msra.mxu0 0
  %1393 = vmatprep.mubr.bf16.mxu0 0
  %1394 = vmatmul.mubr.bf16.gmra.mrb[0].mxu0 %v1290
  %v1395 = vpop.f32.mrb[0].mxu0
  %v1396 = vadd.f32 %v72, %v1395
  %v1397 = vpop.f32.mrb[0].mxu0
  %v1398 = vpop.f32.mrb[0].mxu0
  %v1399 = vadd.f32 %v72, %v1398
  %v1400 = vpop.f32.mrb[0].mxu0
  %1401 = vmatprep.mubr.bf16.mxu0 0
  %1402 = vmatmul.mubr.bf16.gmra.mrb[0].mxu0 %v1293
  %v1403 = vpop.f32.mrb[0].mxu0
  %v1404 = vadd.f32 %v72, %v1403
  %v1405 = vpop.f32.mrb[0].mxu0
  %v1406 = vpop.f32.mrb[0].mxu0
  %v1407 = vadd.f32 %v72, %v1406
  %v1408 = vpop.f32.mrb[0].mxu0
  %1409 = vmatprep.mubr.bf16.mxu0 0
  %1410 = vmatmul.mubr.bf16.gmra.mrb[0].mxu0 %v1296
  %v1411 = vpop.f32.mrb[0].mxu0
  %v1412 = vadd.f32 %v72, %v1411
  %v1413 = vpop.f32.mrb[0].mxu0
  %v1414 = vpop.f32.mrb[0].mxu0
  %v1415 = vadd.f32 %v72, %v1414
  %v1416 = vpop.f32.mrb[0].mxu0
  %1417 = vmatprep.mubr.bf16.mxu0 0
  %1418 = vmatmul.mubr.bf16.gmra.mrb[0].mxu0 %v1299
  %v1419 = vpop.f32.mrb[0].mxu0
  %v1420 = vadd.f32 %v72, %v1419
  %v1421 = vpop.f32.mrb[0].mxu0
  %v1422 = vpop.f32.mrb[0].mxu0
  %v1423 = vadd.f32 %v72, %v1422
  %v1424 = vpop.f32.mrb[0].mxu0
  %1425 = vmatprep.mubr.bf16.mxu0 0
  %1426 = vmatmul.mubr.bf16.gmra.mrb[0].mxu0 %v1302
  %v1427 = vpop.f32.mrb[0].mxu0
  %v1428 = vadd.f32 %v72, %v1427
  %v1429 = vpop.f32.mrb[0].mxu0
  %v1430 = vpop.f32.mrb[0].mxu0
  %v1431 = vadd.f32 %v72, %v1430
  %v1432 = vpop.f32.mrb[0].mxu0
  %1433 = vmatprep.mubr.bf16.mxu0 0
  %1434 = vmatmul.mubr.bf16.gmra.mrb[0].mxu0 %v1305
  %v1435 = vpop.f32.mrb[0].mxu0
  %v1436 = vadd.f32 %v72, %v1435
  %v1437 = vpop.f32.mrb[0].mxu0
  %v1438 = vpop.f32.mrb[0].mxu0
  %v1439 = vadd.f32 %v72, %v1438
  %v1440 = vpop.f32.mrb[0].mxu0
  %1441 = vmatprep.mubr.bf16.mxu0 0
  %1442 = vmatmul.mubr.bf16.gmra.mrb[0].mxu0 %v1308
  %v1443 = vpop.f32.mrb[0].mxu0
  %v1444 = vadd.f32 %v72, %v1443
  %v1445 = vpop.f32.mrb[0].mxu0
  %v1446 = vpop.f32.mrb[0].mxu0
  %v1447 = vadd.f32 %v72, %v1446
  %v1448 = vpop.f32.mrb[0].mxu0
  %1449 = vmatprep.mubr.bf16.mxu0 0
  %1450 = vmatmul.mubr.bf16.gmra.mrb[0].mxu0 %v1311
  %v1451 = vpop.f32.mrb[0].mxu0
  %v1452 = vadd.f32 %v72, %v1451
  %v1453 = vpop.f32.mrb[0].mxu0
  %v1454 = vpop.f32.mrb[0].mxu0
  %v1455 = vadd.f32 %v72, %v1454
  %v1456 = vpop.f32.mrb[0].mxu0
  %1457 = vmatprep.mubr.bf16.mxu0 0
  %1458 = vmatmul.mubr.bf16.gmra.mrb[0].mxu0 %v1314
  %v1459 = vpop.f32.mrb[0].mxu0
  %v1460 = vadd.f32 %v72, %v1459
  %v1461 = vpop.f32.mrb[0].mxu0
  %v1462 = vpop.f32.mrb[0].mxu0
  %v1463 = vadd.f32 %v72, %v1462
  %v1464 = vpop.f32.mrb[0].mxu0
  %1465 = vmatprep.mubr.bf16.mxu0 0
  %1466 = vmatmul.mubr.bf16.gmra.mrb[0].mxu0 %v1317
  %v1467 = vpop.f32.mrb[0].mxu0
  %v1468 = vadd.f32 %v72, %v1467
  %v1469 = vpop.f32.mrb[0].mxu0
  %v1470 = vpop.f32.mrb[0].mxu0
  %v1471 = vadd.f32 %v72, %v1470
  %v1472 = vpop.f32.mrb[0].mxu0
  %1473 = vmatprep.mubr.bf16.mxu0 0
  %1474 = vmatmul.mubr.bf16.gmra.mrb[0].mxu0 %v1320
  %v1475 = vpop.f32.mrb[0].mxu0
  %v1476 = vadd.f32 %v72, %v1475
  %v1477 = vpop.f32.mrb[0].mxu0
  %v1478 = vpop.f32.mrb[0].mxu0
  %v1479 = vadd.f32 %v72, %v1478
  %v1480 = vpop.f32.mrb[0].mxu0
  %1481 = vmatprep.mubr.bf16.mxu0 0
  %1482 = vmatmul.mubr.bf16.gmra.mrb[0].mxu0 %v1323
  %v1483 = vpop.f32.mrb[0].mxu0
  %v1484 = vadd.f32 %v72, %v1483
  %v1485 = vpop.f32.mrb[0].mxu0
  %v1486 = vpop.f32.mrb[0].mxu0
  %v1487 = vadd.f32 %v72, %v1486
  %v1488 = vpop.f32.mrb[0].mxu0
  %1489 = vmatprep.mubr.bf16.mxu0 0
  %1490 = vmatmul.mubr.bf16.gmra.mrb[0].mxu0 %v1326
  %v1491 = vpop.f32.mrb[0].mxu0
  %v1492 = vadd.f32 %v72, %v1491
  %v1493 = vpop.f32.mrb[0].mxu0
  %v1494 = vpop.f32.mrb[0].mxu0
  %v1495 = vadd.f32 %v72, %v1494
  %v1496 = vpop.f32.mrb[0].mxu0
  %1497 = vmatprep.mubr.bf16.mxu0 0
  %1498 = vmatmul.mubr.bf16.gmra.mrb[0].mxu0 %v1329
  %v1499 = vpop.f32.mrb[0].mxu0
  %v1500 = vadd.f32 %v72, %v1499
  %v1501 = vpop.f32.mrb[0].mxu0
  %v1502 = vpop.f32.mrb[0].mxu0
  %v1503 = vadd.f32 %v72, %v1502
  %v1504 = vpop.f32.mrb[0].mxu0
  %1505 = vmatprep.mubr.bf16.mxu0 0
  %1506 = vmatmul.mubr.bf16.gmra.mrb[0].mxu0 %v1332
  %v1507 = vpop.f32.mrb[0].mxu0
  %v1508 = vadd.f32 %v72, %v1507
  %v1509 = vpop.f32.mrb[0].mxu0
  %v1510 = vpop.f32.mrb[0].mxu0
  %v1511 = vadd.f32 %v72, %v1510
  %v1512 = vpop.f32.mrb[0].mxu0
  %1513 = vmatprep.mubr.bf16.mxu0 0
  %1514 = vmatmul.mubr.bf16.gmra.mrb[0].mxu0 %v1335
  %v1515 = vpop.f32.mrb[0].mxu0
  %v1516 = vadd.f32 %v72, %v1515
  %v1517 = vpop.f32.mrb[0].mxu0
  %v1518 = vpop.f32.mrb[0].mxu0
  %v1519 = vadd.f32 %v72, %v1518
  %v1520 = vpop.f32.mrb[0].mxu0
  %1521 = vmatprep.mubr.bf16.mxu0 0
  %1522 = vmatmul.mubr.bf16.gmra.mrb[0].mxu0 %v1338
  %v1523 = vpop.f32.mrb[0].mxu0
  %v1524 = vadd.f32 %v72, %v1523
  %v1525 = vpop.f32.mrb[0].mxu0
  %v1526 = vpop.f32.mrb[0].mxu0
  %v1527 = vadd.f32 %v72, %v1526
  %v1528 = vpop.f32.mrb[0].mxu0
  %1529 = vmatprep.mubr.bf16.mxu0 0
  %1530 = vmatmul.mubr.bf16.gmra.mrb[0].mxu0 %v1341
  %v1531 = vpop.f32.mrb[0].mxu0
  %v1532 = vadd.f32 %v72, %v1531
  %v1533 = vpop.f32.mrb[0].mxu0
  %v1534 = vpop.f32.mrb[0].mxu0
  %v1535 = vadd.f32 %v72, %v1534
  %v1536 = vpop.f32.mrb[0].mxu0
  %1537 = vmatprep.mubr.bf16.mxu0 0
  %1538 = vmatmul.mubr.bf16.gmra.mrb[0].mxu0 %v1344
  %v1539 = vpop.f32.mrb[0].mxu0
  %v1540 = vadd.f32 %v72, %v1539
  %v1541 = vpop.f32.mrb[0].mxu0
  %v1542 = vpop.f32.mrb[0].mxu0
  %v1543 = vadd.f32 %v72, %v1542
  %v1544 = vpop.f32.mrb[0].mxu0
  %1545 = vmatprep.mubr.bf16.mxu0 0
  %1546 = vmatmul.mubr.bf16.gmra.mrb[0].mxu0 %v1347
  %v1547 = vpop.f32.mrb[0].mxu0
  %v1548 = vadd.f32 %v72, %v1547
  %v1549 = vpop.f32.mrb[0].mxu0
  %v1550 = vpop.f32.mrb[0].mxu0
  %v1551 = vadd.f32 %v72, %v1550
  %v1552 = vpop.f32.mrb[0].mxu0
  %1553 = vmatprep.mubr.bf16.mxu0 0
  %1554 = vmatmul.mubr.bf16.gmra.mrb[0].mxu0 %v1350
  %v1555 = vpop.f32.mrb[0].mxu0
  %v1556 = vadd.f32 %v72, %v1555
  %v1557 = vpop.f32.mrb[0].mxu0
  %v1558 = vpop.f32.mrb[0].mxu0
  %v1559 = vadd.f32 %v72, %v1558
  %v1560 = vpop.f32.mrb[0].mxu0
  %1561 = vmatprep.mubr.bf16.mxu0 0
  %1562 = vmatmul.mubr.bf16.gmra.mrb[0].mxu0 %v1353
  %v1563 = vpop.f32.mrb[0].mxu0
  %v1564 = vadd.f32 %v72, %v1563
  %v1565 = vpop.f32.mrb[0].mxu0
  %v1566 = vpop.f32.mrb[0].mxu0
  %v1567 = vadd.f32 %v72, %v1566
  %v1568 = vpop.f32.mrb[0].mxu0
  %1569 = vmatprep.mubr.bf16.mxu0 0
  %1570 = vmatmul.mubr.bf16.gmra.mrb[0].mxu0 %v1356
  %v1571 = vpop.f32.mrb[0].mxu0
  %v1572 = vadd.f32 %v72, %v1571
  %v1573 = vpop.f32.mrb[0].mxu0
  %v1574 = vpop.f32.mrb[0].mxu0
  %v1575 = vadd.f32 %v72, %v1574
  %v1576 = vpop.f32.mrb[0].mxu0
  %1577 = vmatprep.mubr.bf16.mxu0 0
  %1578 = vmatmul.mubr.bf16.gmra.mrb[0].mxu0 %v1359
  %v1579 = vpop.f32.mrb[0].mxu0
  %v1580 = vadd.f32 %v72, %v1579
  %v1581 = vpop.f32.mrb[0].mxu0
  %v1582 = vpop.f32.mrb[0].mxu0
  %v1583 = vadd.f32 %v72, %v1582
  %v1584 = vpop.f32.mrb[0].mxu0
  %1585 = vdwg.mxu0
  %v1586 = vmax.f32 %v1396, 0.0
  %v1587 = vmax.f32 %v1399, 0.0
  %v1588 = vmax.f32 %v1404, 0.0
  %v1589 = vmax.f32 %v1407, 0.0
  %v1590 = vmax.f32 %v1412, 0.0
  %v1591 = vmax.f32 %v1415, 0.0
  %v1592 = vmax.f32 %v1420, 0.0
  %v1593 = vmax.f32 %v1423, 0.0
  %v1594 = vmax.f32 %v1428, 0.0
  %v1595 = vmax.f32 %v1431, 0.0
  %v1596 = vmax.f32 %v1436, 0.0
  %v1597 = vmax.f32 %v1439, 0.0
  %v1598 = vmax.f32 %v1444, 0.0
  %v1599 = vmax.f32 %v1447, 0.0
  %v1600 = vmax.f32 %v1452, 0.0
  %v1601 = vmax.f32 %v1455, 0.0
  %v1602 = vmax.f32 %v1460, 0.0
  %v1603 = vmax.f32 %v1463, 0.0
  %v1604 = vmax.f32 %v1468, 0.0
  %v1605 = vmax.f32 %v1471, 0.0
  %v1606 = vmax.f32 %v1476, 0.0
  %v1607 = vmax.f32 %v1479, 0.0
  %v1608 = vmax.f32 %v1484, 0.0
  %v1609 = vmax.f32 %v1487, 0.0
  %v1610 = vmax.f32 %v1492, 0.0
  %v1611 = vmax.f32 %v1495, 0.0
  %v1612 = vmax.f32 %v1500, 0.0
  %v1613 = vmax.f32 %v1503, 0.0
  %v1614 = vmax.f32 %v1508, 0.0
  %v1615 = vmax.f32 %v1511, 0.0
  %v1616 = vmax.f32 %v1516, 0.0
  %v1617 = vmax.f32 %v1519, 0.0
  %v1618 = vmax.f32 %v1524, 0.0
  %v1619 = vmax.f32 %v1527, 0.0
  %v1620 = vmax.f32 %v1532, 0.0
  %v1621 = vmax.f32 %v1535, 0.0
  %v1622 = vmax.f32 %v1540, 0.0
  %v1623 = vmax.f32 %v1543, 0.0
  %v1624 = vmax.f32 %v1548, 0.0
  %v1625 = vmax.f32 %v1551, 0.0
  %v1626 = vmax.f32 %v1556, 0.0
  %v1627 = vmax.f32 %v1559, 0.0
  %v1628 = vmax.f32 %v1564, 0.0
  %v1629 = vmax.f32 %v1567, 0.0
  %v1630 = vmax.f32 %v1572, 0.0
  %v1631 = vmax.f32 %v1575, 0.0
  %v1632 = vmax.f32 %v1580, 0.0
  %v1633 = vmax.f32 %v1583, 0.0
  %s1634 = scalar_lea.vmem %s0, 576
  %v1635 = vld [vmem:[%s1634] sm:$0xf]
  %v1636 = vld [vmem:[%s1634 + $0x4] sm:$0xf]
  %v1637 = vld [vmem:[%s1634 + $0x8] sm:$0xf]
  %v1638 = vld [vmem:[%s1634 + $0xc] sm:$0xf]
  %v1639 = vld [vmem:[%s1634 + $0x10] sm:$0xf]
  %v1640 = vld [vmem:[%s1634 + $0x14] sm:$0xf]
  %v1641 = vld [vmem:[%s1634 + $0x18] sm:$0xf]
  %v1642 = vld [vmem:[%s1634 + $0x1c] sm:$0xf]
  %v1643 = vld [vmem:[%s1634 + $0x20] sm:$0xf]
  %v1644 = vld [vmem:[%s1634 + $0x24] sm:$0xf]
  %v1645 = vld [vmem:[%s1634 + $0x28] sm:$0xf]
  %v1646 = vld [vmem:[%s1634 + $0x2c] sm:$0xf]
  %v1647 = vld [vmem:[%s1634 + $0x30] sm:$0xf]
  %v1648 = vld [vmem:[%s1634 + $0x34] sm:$0xf]
  %v1649 = vld [vmem:[%s1634 + $0x38] sm:$0xf]
  %v1650 = vld [vmem:[%s1634 + $0x3c] sm:$0xf]
  %v1651 = vld [vmem:[%s1634 + $0x40] sm:$0xf]
  %v1652 = vld [vmem:[%s1634 + $0x44] sm:$0xf]
  %v1653 = vld [vmem:[%s1634 + $0x48] sm:$0xf]
  %v1654 = vld [vmem:[%s1634 + $0x4c] sm:$0xf]
  %v1655 = vld [vmem:[%s1634 + $0x50] sm:$0xf]
  %v1656 = vld [vmem:[%s1634 + $0x54] sm:$0xf]
  %v1657 = vld [vmem:[%s1634 + $0x58] sm:$0xf]
  %v1658 = vld [vmem:[%s1634 + $0x5c] sm:$0xf]
  %v1659 = vld [vmem:[%s1634 + $0x60] sm:$0xf]
  %v1660 = vld [vmem:[%s1634 + $0x64] sm:$0xf]
  %v1661 = vld [vmem:[%s1634 + $0x68] sm:$0xf]
  %v1662 = vld [vmem:[%s1634 + $0x6c] sm:$0xf]
  %v1663 = vld [vmem:[%s1634 + $0x70] sm:$0xf]
  %v1664 = vld [vmem:[%s1634 + $0x74] sm:$0xf]
  %v1665 = vld [vmem:[%s1634 + $0x78] sm:$0xf]
  %v1666 = vld [vmem:[%s1634 + $0x7c] sm:$0xf]
  %v1667 = vld [vmem:[%s1634 + $0x80] sm:$0xf]
  %v1668 = vld [vmem:[%s1634 + $0x84] sm:$0xf]
  %v1669 = vld [vmem:[%s1634 + $0x88] sm:$0xf]
  %v1670 = vld [vmem:[%s1634 + $0x8c] sm:$0xf]
  %v1671 = vld [vmem:[%s1634 + $0x90] sm:$0xf]
  %v1672 = vld [vmem:[%s1634 + $0x94] sm:$0xf]
  %v1673 = vld [vmem:[%s1634 + $0x98] sm:$0xf]
  %v1674 = vld [vmem:[%s1634 + $0x9c] sm:$0xf]
  %v1675 = vld [vmem:[%s1634 + $0xa0] sm:$0xf]
  %v1676 = vld [vmem:[%s1634 + $0xa4] sm:$0xf]
  %v1677 = vld [vmem:[%s1634 + $0xa8] sm:$0xf]
  %v1678 = vld [vmem:[%s1634 + $0xac] sm:$0xf]
  %v1679 = vld [vmem:[%s1634 + $0xb0] sm:$0xf]
  %v1680 = vld [vmem:[%s1634 + $0xb4] sm:$0xf]
  %v1681 = vld [vmem:[%s1634 + $0xb8] sm:$0xf]
  %v1682 = vld [vmem:[%s1634 + $0xbc] sm:$0xf]
  %v1731 = vunpack.c.l.b16 %v1635
  %v1732 = vunpack.c.l.b16 %v1636
  %v1733 = vunpack.c.l.b16 %v1637
  %v1734 = vunpack.c.l.b16 %v1638
  %v1735 = vunpack.c.l.b16 %v1639
  %v1736 = vunpack.c.l.b16 %v1640
  %v1737 = vunpack.c.l.b16 %v1641
  %v1738 = vunpack.c.l.b16 %v1642
  %v1739 = vunpack.c.l.b16 %v1643
  %v1740 = vunpack.c.l.b16 %v1644
  %v1741 = vunpack.c.l.b16 %v1645
  %v1742 = vunpack.c.l.b16 %v1646
  %v1743 = vunpack.c.l.b16 %v1647
  %v1744 = vunpack.c.l.b16 %v1648
  %v1745 = vunpack.c.l.b16 %v1649
  %v1746 = vunpack.c.l.b16 %v1650
  %v1747 = vunpack.c.l.b16 %v1651
  %v1748 = vunpack.c.l.b16 %v1652
  %v1749 = vunpack.c.l.b16 %v1653
  %v1750 = vunpack.c.l.b16 %v1654
  %v1751 = vunpack.c.l.b16 %v1655
  %v1752 = vunpack.c.l.b16 %v1656
  %v1753 = vunpack.c.l.b16 %v1657
  %v1754 = vunpack.c.l.b16 %v1658
  %v1755 = vunpack.c.l.b16 %v1659
  %v1756 = vunpack.c.l.b16 %v1660
  %v1757 = vunpack.c.l.b16 %v1661
  %v1758 = vunpack.c.l.b16 %v1662
  %v1759 = vunpack.c.l.b16 %v1663
  %v1760 = vunpack.c.l.b16 %v1664
  %v1761 = vunpack.c.l.b16 %v1665
  %v1762 = vunpack.c.l.b16 %v1666
  %v1763 = vunpack.c.l.b16 %v1667
  %v1764 = vunpack.c.l.b16 %v1668
  %v1765 = vunpack.c.l.b16 %v1669
  %v1766 = vunpack.c.l.b16 %v1670
  %v1767 = vunpack.c.l.b16 %v1671
  %v1768 = vunpack.c.l.b16 %v1672
  %v1769 = vunpack.c.l.b16 %v1673
  %v1770 = vunpack.c.l.b16 %v1674
  %v1771 = vunpack.c.l.b16 %v1675
  %v1772 = vunpack.c.l.b16 %v1676
  %v1773 = vunpack.c.l.b16 %v1677
  %v1774 = vunpack.c.l.b16 %v1678
  %v1775 = vunpack.c.l.b16 %v1679
  %v1776 = vunpack.c.l.b16 %v1680
  %v1777 = vunpack.c.l.b16 %v1681
  %v1778 = vunpack.c.l.b16 %v1682
  %v1779 = vpack.c.b16 %v1732, %v1731
  %v1780 = vpack.c.b16 %v1734, %v1733
  %v1781 = vpack.c.b16 %v1736, %v1735
  %v1782 = vpack.c.b16 %v1738, %v1737
  %v1783 = vpack.c.b16 %v1740, %v1739
  %v1784 = vpack.c.b16 %v1742, %v1741
  %v1785 = vpack.c.b16 %v1744, %v1743
  %v1786 = vpack.c.b16 %v1746, %v1745
  %v1787 = vpack.c.b16 %v1748, %v1747
  %v1788 = vpack.c.b16 %v1750, %v1749
  %v1789 = vpack.c.b16 %v1752, %v1751
  %v1790 = vpack.c.b16 %v1754, %v1753
  %v1791 = vpack.c.b16 %v1756, %v1755
  %v1792 = vpack.c.b16 %v1758, %v1757
  %v1793 = vpack.c.b16 %v1760, %v1759
  %v1794 = vpack.c.b16 %v1762, %v1761
  %v1795 = vpack.c.b16 %v1764, %v1763
  %v1796 = vpack.c.b16 %v1766, %v1765
  %v1797 = vpack.c.b16 %v1768, %v1767
  %v1798 = vpack.c.b16 %v1770, %v1769
  %v1799 = vpack.c.b16 %v1772, %v1771
  %v1800 = vpack.c.b16 %v1774, %v1773
  %v1801 = vpack.c.b16 %v1776, %v1775
  %v1802 = vpack.c.b16 %v1778, %v1777
  %v1804 = vsel %vm205, %v1779, 0
  %v1807 = vsel %vm205, %v1780, 0
  %v1810 = vsel %vm205, %v1781, 0
  %v1813 = vsel %vm205, %v1782, 0
  %v1816 = vsel %vm205, %v1783, 0
  %v1819 = vsel %vm205, %v1784, 0
  %v1822 = vsel %vm205, %v1785, 0
  %v1825 = vsel %vm205, %v1786, 0
  %v1828 = vsel %vm205, %v1787, 0
  %v1831 = vsel %vm205, %v1788, 0
  %v1834 = vsel %vm205, %v1789, 0
  %v1837 = vsel %vm205, %v1790, 0
  %v1840 = vsel %vm205, %v1791, 0
  %v1843 = vsel %vm205, %v1792, 0
  %v1846 = vsel %vm205, %v1793, 0
  %v1849 = vsel %vm205, %v1794, 0
  %v1852 = vsel %vm205, %v1795, 0
  %v1855 = vsel %vm205, %v1796, 0
  %v1858 = vsel %vm205, %v1797, 0
  %v1861 = vsel %vm205, %v1798, 0
  %v1864 = vsel %vm205, %v1799, 0
  %v1867 = vsel %vm205, %v1800, 0
  %v1870 = vsel %vm205, %v1801, 0
  %v1873 = vsel %vm205, %v1802, 0
  %1875 = vmatprep.subr.bf16.mxu0 0
  %1876 = vmatpush1.bf16.msra.mxu0 %v202
  %1877 = vmatprep.subr.bf16.mxu0 0
  %1878 = vmatpush1.bf16.msra.mxu0 %v283
  %1879 = vmatprep.subr.bf16.mxu0 0
  %1880 = vmatpush1.bf16.msra.mxu0 0
  %1881 = vmatprep.subr.bf16.mxu0 0
  %1882 = vmatpush1.bf16.msra.mxu0 0
  %1883 = vmatprep.subr.bf16.mxu0 0
  %1884 = vmatpush1.bf16.msra.mxu0 0
  %1885 = vmatprep.subr.bf16.mxu0 0
  %1886 = vmatpush1.bf16.msra.mxu0 0
  %1887 = vmatprep.subr.bf16.mxu0 0
  %1888 = vmatpush1.bf16.msra.mxu0 0
  %1889 = vmatprep.subr.bf16.mxu0 0
  %1890 = vmatpush1.bf16.msra.mxu0 0
  %1891 = vmatprep.subr.bf16.mxu0 0
  %1892 = vmatpush1.bf16.msra.mxu0 0
  %1893 = vmatprep.subr.bf16.mxu0 0
  %1894 = vmatpush1.bf16.msra.mxu0 0
  %1895 = vmatprep.subr.bf16.mxu0 0
  %1896 = vmatpush1.bf16.msra.mxu0 0
  %1897 = vmatprep.subr.bf16.mxu0 0
  %1898 = vmatpush1.bf16.msra.mxu0 0
  %1899 = vmatprep.subr.bf16.mxu0 0
  %1900 = vmatpush1.bf16.msra.mxu0 0
  %1901 = vmatprep.subr.bf16.mxu0 0
  %1902 = vmatpush1.bf16.msra.mxu0 0
  %1903 = vmatprep.subr.bf16.mxu0 0
  %1904 = vmatpush1.bf16.msra.mxu0 0
  %1905 = vmatprep.subr.bf16.mxu0 0
  %1906 = vmatpush1.bf16.msra.mxu0 0
  %1907 = vmatprep.mubr.bf16.mxu0 0
  %1908 = vmatmul.mubr.bf16.gmra.mrb[0].mxu0 %v1804
  %v1909 = vpop.f32.mrb[0].mxu0
  %v1910 = vadd.f32 %v72, %v1909
  %v1911 = vpop.f32.mrb[0].mxu0
  %v1912 = vpop.f32.mrb[0].mxu0
  %v1913 = vadd.f32 %v72, %v1912
  %v1914 = vpop.f32.mrb[0].mxu0
  %1915 = vmatprep.mubr.bf16.mxu0 0
  %1916 = vmatmul.mubr.bf16.gmra.mrb[0].mxu0 %v1807
  %v1917 = vpop.f32.mrb[0].mxu0
  %v1918 = vadd.f32 %v72, %v1917
  %v1919 = vpop.f32.mrb[0].mxu0
  %v1920 = vpop.f32.mrb[0].mxu0
  %v1921 = vadd.f32 %v72, %v1920
  %v1922 = vpop.f32.mrb[0].mxu0
  %1923 = vmatprep.mubr.bf16.mxu0 0
  %1924 = vmatmul.mubr.bf16.gmra.mrb[0].mxu0 %v1810
  %v1925 = vpop.f32.mrb[0].mxu0
  %v1926 = vadd.f32 %v72, %v1925
  %v1927 = vpop.f32.mrb[0].mxu0
  %v1928 = vpop.f32.mrb[0].mxu0
  %v1929 = vadd.f32 %v72, %v1928
  %v1930 = vpop.f32.mrb[0].mxu0
  %1931 = vmatprep.mubr.bf16.mxu0 0
  %1932 = vmatmul.mubr.bf16.gmra.mrb[0].mxu0 %v1813
  %v1933 = vpop.f32.mrb[0].mxu0
  %v1934 = vadd.f32 %v72, %v1933
  %v1935 = vpop.f32.mrb[0].mxu0
  %v1936 = vpop.f32.mrb[0].mxu0
  %v1937 = vadd.f32 %v72, %v1936
  %v1938 = vpop.f32.mrb[0].mxu0
  %1939 = vmatprep.mubr.bf16.mxu0 0
  %1940 = vmatmul.mubr.bf16.gmra.mrb[0].mxu0 %v1816
  %v1941 = vpop.f32.mrb[0].mxu0
  %v1942 = vadd.f32 %v72, %v1941
  %v1943 = vpop.f32.mrb[0].mxu0
  %v1944 = vpop.f32.mrb[0].mxu0
  %v1945 = vadd.f32 %v72, %v1944
  %v1946 = vpop.f32.mrb[0].mxu0
  %1947 = vmatprep.mubr.bf16.mxu0 0
  %1948 = vmatmul.mubr.bf16.gmra.mrb[0].mxu0 %v1819
  %v1949 = vpop.f32.mrb[0].mxu0
  %v1950 = vadd.f32 %v72, %v1949
  %v1951 = vpop.f32.mrb[0].mxu0
  %v1952 = vpop.f32.mrb[0].mxu0
  %v1953 = vadd.f32 %v72, %v1952
  %v1954 = vpop.f32.mrb[0].mxu0
  %1955 = vmatprep.mubr.bf16.mxu0 0
  %1956 = vmatmul.mubr.bf16.gmra.mrb[0].mxu0 %v1822
  %v1957 = vpop.f32.mrb[0].mxu0
  %v1958 = vadd.f32 %v72, %v1957
  %v1959 = vpop.f32.mrb[0].mxu0
  %v1960 = vpop.f32.mrb[0].mxu0
  %v1961 = vadd.f32 %v72, %v1960
  %v1962 = vpop.f32.mrb[0].mxu0
  %1963 = vmatprep.mubr.bf16.mxu0 0
  %1964 = vmatmul.mubr.bf16.gmra.mrb[0].mxu0 %v1825
  %v1965 = vpop.f32.mrb[0].mxu0
  %v1966 = vadd.f32 %v72, %v1965
  %v1967 = vpop.f32.mrb[0].mxu0
  %v1968 = vpop.f32.mrb[0].mxu0
  %v1969 = vadd.f32 %v72, %v1968
  %v1970 = vpop.f32.mrb[0].mxu0
  %1971 = vmatprep.mubr.bf16.mxu0 0
  %1972 = vmatmul.mubr.bf16.gmra.mrb[0].mxu0 %v1828
  %v1973 = vpop.f32.mrb[0].mxu0
  %v1974 = vadd.f32 %v72, %v1973
  %v1975 = vpop.f32.mrb[0].mxu0
  %v1976 = vpop.f32.mrb[0].mxu0
  %v1977 = vadd.f32 %v72, %v1976
  %v1978 = vpop.f32.mrb[0].mxu0
  %1979 = vmatprep.mubr.bf16.mxu0 0
  %1980 = vmatmul.mubr.bf16.gmra.mrb[0].mxu0 %v1831
  %v1981 = vpop.f32.mrb[0].mxu0
  %v1982 = vadd.f32 %v72, %v1981
  %v1983 = vpop.f32.mrb[0].mxu0
  %v1984 = vpop.f32.mrb[0].mxu0
  %v1985 = vadd.f32 %v72, %v1984
  %v1986 = vpop.f32.mrb[0].mxu0
  %1987 = vmatprep.mubr.bf16.mxu0 0
  %1988 = vmatmul.mubr.bf16.gmra.mrb[0].mxu0 %v1834
  %v1989 = vpop.f32.mrb[0].mxu0
  %v1990 = vadd.f32 %v72, %v1989
  %v1991 = vpop.f32.mrb[0].mxu0
  %v1992 = vpop.f32.mrb[0].mxu0
  %v1993 = vadd.f32 %v72, %v1992
  %v1994 = vpop.f32.mrb[0].mxu0
  %1995 = vmatprep.mubr.bf16.mxu0 0
  %1996 = vmatmul.mubr.bf16.gmra.mrb[0].mxu0 %v1837
  %v1997 = vpop.f32.mrb[0].mxu0
  %v1998 = vadd.f32 %v72, %v1997
  %v1999 = vpop.f32.mrb[0].mxu0
  %v2000 = vpop.f32.mrb[0].mxu0
  %v2001 = vadd.f32 %v72, %v2000
  %v2002 = vpop.f32.mrb[0].mxu0
  %2003 = vmatprep.mubr.bf16.mxu0 0
  %2004 = vmatmul.mubr.bf16.gmra.mrb[0].mxu0 %v1840
  %v2005 = vpop.f32.mrb[0].mxu0
  %v2006 = vadd.f32 %v72, %v2005
  %v2007 = vpop.f32.mrb[0].mxu0
  %v2008 = vpop.f32.mrb[0].mxu0
  %v2009 = vadd.f32 %v72, %v2008
  %v2010 = vpop.f32.mrb[0].mxu0
  %2011 = vmatprep.mubr.bf16.mxu0 0
  %2012 = vmatmul.mubr.bf16.gmra.mrb[0].mxu0 %v1843
  %v2013 = vpop.f32.mrb[0].mxu0
  %v2014 = vadd.f32 %v72, %v2013
  %v2015 = vpop.f32.mrb[0].mxu0
  %v2016 = vpop.f32.mrb[0].mxu0
  %v2017 = vadd.f32 %v72, %v2016
  %v2018 = vpop.f32.mrb[0].mxu0
  %2019 = vmatprep.mubr.bf16.mxu0 0
  %2020 = vmatmul.mubr.bf16.gmra.mrb[0].mxu0 %v1846
  %v2021 = vpop.f32.mrb[0].mxu0
  %v2022 = vadd.f32 %v72, %v2021
  %v2023 = vpop.f32.mrb[0].mxu0
  %v2024 = vpop.f32.mrb[0].mxu0
  %v2025 = vadd.f32 %v72, %v2024
  %v2026 = vpop.f32.mrb[0].mxu0
  %2027 = vmatprep.mubr.bf16.mxu0 0
  %2028 = vmatmul.mubr.bf16.gmra.mrb[0].mxu0 %v1849
  %v2029 = vpop.f32.mrb[0].mxu0
  %v2030 = vadd.f32 %v72, %v2029
  %v2031 = vpop.f32.mrb[0].mxu0
  %v2032 = vpop.f32.mrb[0].mxu0
  %v2033 = vadd.f32 %v72, %v2032
  %v2034 = vpop.f32.mrb[0].mxu0
  %2035 = vmatprep.mubr.bf16.mxu0 0
  %2036 = vmatmul.mubr.bf16.gmra.mrb[0].mxu0 %v1852
  %v2037 = vpop.f32.mrb[0].mxu0
  %v2038 = vadd.f32 %v72, %v2037
  %v2039 = vpop.f32.mrb[0].mxu0
  %v2040 = vpop.f32.mrb[0].mxu0
  %v2041 = vadd.f32 %v72, %v2040
  %v2042 = vpop.f32.mrb[0].mxu0
  %2043 = vmatprep.mubr.bf16.mxu0 0
  %2044 = vmatmul.mubr.bf16.gmra.mrb[0].mxu0 %v1855
  %v2045 = vpop.f32.mrb[0].mxu0
  %v2046 = vadd.f32 %v72, %v2045
  %v2047 = vpop.f32.mrb[0].mxu0
  %v2048 = vpop.f32.mrb[0].mxu0
  %v2049 = vadd.f32 %v72, %v2048
  %v2050 = vpop.f32.mrb[0].mxu0
  %2051 = vmatprep.mubr.bf16.mxu0 0
  %2052 = vmatmul.mubr.bf16.gmra.mrb[0].mxu0 %v1858
  %v2053 = vpop.f32.mrb[0].mxu0
  %v2054 = vadd.f32 %v72, %v2053
  %v2055 = vpop.f32.mrb[0].mxu0
  %v2056 = vpop.f32.mrb[0].mxu0
  %v2057 = vadd.f32 %v72, %v2056
  %v2058 = vpop.f32.mrb[0].mxu0
  %2059 = vmatprep.mubr.bf16.mxu0 0
  %2060 = vmatmul.mubr.bf16.gmra.mrb[0].mxu0 %v1861
  %v2061 = vpop.f32.mrb[0].mxu0
  %v2062 = vadd.f32 %v72, %v2061
  %v2063 = vpop.f32.mrb[0].mxu0
  %v2064 = vpop.f32.mrb[0].mxu0
  %v2065 = vadd.f32 %v72, %v2064
  %v2066 = vpop.f32.mrb[0].mxu0
  %2067 = vmatprep.mubr.bf16.mxu0 0
  %2068 = vmatmul.mubr.bf16.gmra.mrb[0].mxu0 %v1864
  %v2069 = vpop.f32.mrb[0].mxu0
  %v2070 = vadd.f32 %v72, %v2069
  %v2071 = vpop.f32.mrb[0].mxu0
  %v2072 = vpop.f32.mrb[0].mxu0
  %v2073 = vadd.f32 %v72, %v2072
  %v2074 = vpop.f32.mrb[0].mxu0
  %2075 = vmatprep.mubr.bf16.mxu0 0
  %2076 = vmatmul.mubr.bf16.gmra.mrb[0].mxu0 %v1867
  %v2077 = vpop.f32.mrb[0].mxu0
  %v2078 = vadd.f32 %v72, %v2077
  %v2079 = vpop.f32.mrb[0].mxu0
  %v2080 = vpop.f32.mrb[0].mxu0
  %v2081 = vadd.f32 %v72, %v2080
  %v2082 = vpop.f32.mrb[0].mxu0
  %2083 = vmatprep.mubr.bf16.mxu0 0
  %2084 = vmatmul.mubr.bf16.gmra.mrb[0].mxu0 %v1870
  %v2085 = vpop.f32.mrb[0].mxu0
  %v2086 = vadd.f32 %v72, %v2085
  %v2087 = vpop.f32.mrb[0].mxu0
  %v2088 = vpop.f32.mrb[0].mxu0
  %v2089 = vadd.f32 %v72, %v2088
  %v2090 = vpop.f32.mrb[0].mxu0
  %2091 = vmatprep.mubr.bf16.mxu0 0
  %2092 = vmatmul.mubr.bf16.gmra.mrb[0].mxu0 %v1873
  %v2093 = vpop.f32.mrb[0].mxu0
  %v2094 = vadd.f32 %v72, %v2093
  %v2095 = vpop.f32.mrb[0].mxu0
  %v2096 = vpop.f32.mrb[0].mxu0
  %v2097 = vadd.f32 %v72, %v2096
  %v2098 = vpop.f32.mrb[0].mxu0
  %2099 = vdwg.mxu0
  %v2100 = vmax.f32 %v1910, 0.0
  %v2101 = vmax.f32 %v1913, 0.0
  %v2102 = vmax.f32 %v1918, 0.0
  %v2103 = vmax.f32 %v1921, 0.0
  %v2104 = vmax.f32 %v1926, 0.0
  %v2105 = vmax.f32 %v1929, 0.0
  %v2106 = vmax.f32 %v1934, 0.0
  %v2107 = vmax.f32 %v1937, 0.0
  %v2108 = vmax.f32 %v1942, 0.0
  %v2109 = vmax.f32 %v1945, 0.0
  %v2110 = vmax.f32 %v1950, 0.0
  %v2111 = vmax.f32 %v1953, 0.0
  %v2112 = vmax.f32 %v1958, 0.0
  %v2113 = vmax.f32 %v1961, 0.0
  %v2114 = vmax.f32 %v1966, 0.0
  %v2115 = vmax.f32 %v1969, 0.0
  %v2116 = vmax.f32 %v1974, 0.0
  %v2117 = vmax.f32 %v1977, 0.0
  %v2118 = vmax.f32 %v1982, 0.0
  %v2119 = vmax.f32 %v1985, 0.0
  %v2120 = vmax.f32 %v1990, 0.0
  %v2121 = vmax.f32 %v1993, 0.0
  %v2122 = vmax.f32 %v1998, 0.0
  %v2123 = vmax.f32 %v2001, 0.0
  %v2124 = vmax.f32 %v2006, 0.0
  %v2125 = vmax.f32 %v2009, 0.0
  %v2126 = vmax.f32 %v2014, 0.0
  %v2127 = vmax.f32 %v2017, 0.0
  %v2128 = vmax.f32 %v2022, 0.0
  %v2129 = vmax.f32 %v2025, 0.0
  %v2130 = vmax.f32 %v2030, 0.0
  %v2131 = vmax.f32 %v2033, 0.0
  %v2132 = vmax.f32 %v2038, 0.0
  %v2133 = vmax.f32 %v2041, 0.0
  %v2134 = vmax.f32 %v2046, 0.0
  %v2135 = vmax.f32 %v2049, 0.0
  %v2136 = vmax.f32 %v2054, 0.0
  %v2137 = vmax.f32 %v2057, 0.0
  %v2138 = vmax.f32 %v2062, 0.0
  %v2139 = vmax.f32 %v2065, 0.0
  %v2140 = vmax.f32 %v2070, 0.0
  %v2141 = vmax.f32 %v2073, 0.0
  %v2142 = vmax.f32 %v2078, 0.0
  %v2143 = vmax.f32 %v2081, 0.0
  %v2144 = vmax.f32 %v2086, 0.0
  %v2145 = vmax.f32 %v2089, 0.0
  %v2146 = vmax.f32 %v2094, 0.0
  %v2147 = vmax.f32 %v2097, 0.0
  %v2148 = vmax.f32 %v1586, %v2100
  %v2149 = vmax.f32 %v1587, %v2101
  %v2150 = vmax.f32 %v1588, %v2102
  %v2151 = vmax.f32 %v1589, %v2103
  %v2152 = vmax.f32 %v1590, %v2104
  %v2153 = vmax.f32 %v1591, %v2105
  %v2154 = vmax.f32 %v1592, %v2106
  %v2155 = vmax.f32 %v1593, %v2107
  %v2156 = vmax.f32 %v1594, %v2108
  %v2157 = vmax.f32 %v1595, %v2109
  %v2158 = vmax.f32 %v1596, %v2110
  %v2159 = vmax.f32 %v1597, %v2111
  %v2160 = vmax.f32 %v1598, %v2112
  %v2161 = vmax.f32 %v1599, %v2113
  %v2162 = vmax.f32 %v1600, %v2114
  %v2163 = vmax.f32 %v1601, %v2115
  %v2164 = vmax.f32 %v1602, %v2116
  %v2165 = vmax.f32 %v1603, %v2117
  %v2166 = vmax.f32 %v1604, %v2118
  %v2167 = vmax.f32 %v1605, %v2119
  %v2168 = vmax.f32 %v1606, %v2120
  %v2169 = vmax.f32 %v1607, %v2121
  %v2170 = vmax.f32 %v1608, %v2122
  %v2171 = vmax.f32 %v1609, %v2123
  %v2172 = vmax.f32 %v1610, %v2124
  %v2173 = vmax.f32 %v1611, %v2125
  %v2174 = vmax.f32 %v1612, %v2126
  %v2175 = vmax.f32 %v1613, %v2127
  %v2176 = vmax.f32 %v1614, %v2128
  %v2177 = vmax.f32 %v1615, %v2129
  %v2178 = vmax.f32 %v1616, %v2130
  %v2179 = vmax.f32 %v1617, %v2131
  %v2180 = vmax.f32 %v1618, %v2132
  %v2181 = vmax.f32 %v1619, %v2133
  %v2182 = vmax.f32 %v1620, %v2134
  %v2183 = vmax.f32 %v1621, %v2135
  %v2184 = vmax.f32 %v1622, %v2136
  %v2185 = vmax.f32 %v1623, %v2137
  %v2186 = vmax.f32 %v1624, %v2138
  %v2187 = vmax.f32 %v1625, %v2139
  %v2188 = vmax.f32 %v1626, %v2140
  %v2189 = vmax.f32 %v1627, %v2141
  %v2190 = vmax.f32 %v1628, %v2142
  %v2191 = vmax.f32 %v1629, %v2143
  %v2192 = vmax.f32 %v1630, %v2144
  %v2193 = vmax.f32 %v1631, %v2145
  %v2194 = vmax.f32 %v1632, %v2146
  %v2195 = vmax.f32 %v1633, %v2147
  %v2196 = vmax.f32 %v1072, %v2148
  %v2197 = vmax.f32 %v1073, %v2149
  %v2198 = vmax.f32 %v1074, %v2150
  %v2199 = vmax.f32 %v1075, %v2151
  %v2200 = vmax.f32 %v1076, %v2152
  %v2201 = vmax.f32 %v1077, %v2153
  %v2202 = vmax.f32 %v1078, %v2154
  %v2203 = vmax.f32 %v1079, %v2155
  %v2204 = vmax.f32 %v1080, %v2156
  %v2205 = vmax.f32 %v1081, %v2157
  %v2206 = vmax.f32 %v1082, %v2158
  %v2207 = vmax.f32 %v1083, %v2159
  %v2208 = vmax.f32 %v1084, %v2160
  %v2209 = vmax.f32 %v1085, %v2161
  %v2210 = vmax.f32 %v1086, %v2162
  %v2211 = vmax.f32 %v1087, %v2163
  %v2212 = vmax.f32 %v1088, %v2164
  %v2213 = vmax.f32 %v1089, %v2165
  %v2214 = vmax.f32 %v1090, %v2166
  %v2215 = vmax.f32 %v1091, %v2167
  %v2216 = vmax.f32 %v1092, %v2168
  %v2217 = vmax.f32 %v1093, %v2169
  %v2218 = vmax.f32 %v1094, %v2170
  %v2219 = vmax.f32 %v1095, %v2171
  %v2220 = vmax.f32 %v1096, %v2172
  %v2221 = vmax.f32 %v1097, %v2173
  %v2222 = vmax.f32 %v1098, %v2174
  %v2223 = vmax.f32 %v1099, %v2175
  %v2224 = vmax.f32 %v1100, %v2176
  %v2225 = vmax.f32 %v1101, %v2177
  %v2226 = vmax.f32 %v1102, %v2178
  %v2227 = vmax.f32 %v1103, %v2179
  %v2228 = vmax.f32 %v1104, %v2180
  %v2229 = vmax.f32 %v1105, %v2181
  %v2230 = vmax.f32 %v1106, %v2182
  %v2231 = vmax.f32 %v1107, %v2183
  %v2232 = vmax.f32 %v1108, %v2184
  %v2233 = vmax.f32 %v1109, %v2185
  %v2234 = vmax.f32 %v1110, %v2186
  %v2235 = vmax.f32 %v1111, %v2187
  %v2236 = vmax.f32 %v1112, %v2188
  %v2237 = vmax.f32 %v1113, %v2189
  %v2238 = vmax.f32 %v1114, %v2190
  %v2239 = vmax.f32 %v1115, %v2191
  %v2240 = vmax.f32 %v1116, %v2192
  %v2241 = vmax.f32 %v1117, %v2193
  %v2242 = vmax.f32 %v1118, %v2194
  %v2243 = vmax.f32 %v1119, %v2195
  %v2244 = vpack.c.bf16 %v2197, %v2196
  %v2245 = vpack.c.bf16 %v2199, %v2198
  %v2246 = vpack.c.bf16 %v2201, %v2200
  %v2247 = vpack.c.bf16 %v2203, %v2202
  %v2248 = vpack.c.bf16 %v2205, %v2204
  %v2249 = vpack.c.bf16 %v2207, %v2206
  %v2250 = vpack.c.bf16 %v2209, %v2208
  %v2251 = vpack.c.bf16 %v2211, %v2210
  %v2252 = vpack.c.bf16 %v2213, %v2212
  %v2253 = vpack.c.bf16 %v2215, %v2214
  %v2254 = vpack.c.bf16 %v2217, %v2216
  %v2255 = vpack.c.bf16 %v2219, %v2218
  %v2256 = vpack.c.bf16 %v2221, %v2220
  %v2257 = vpack.c.bf16 %v2223, %v2222
  %v2258 = vpack.c.bf16 %v2225, %v2224
  %v2259 = vpack.c.bf16 %v2227, %v2226
  %v2260 = vpack.c.bf16 %v2229, %v2228
  %v2261 = vpack.c.bf16 %v2231, %v2230
  %v2262 = vpack.c.bf16 %v2233, %v2232
  %v2263 = vpack.c.bf16 %v2235, %v2234
  %v2264 = vpack.c.bf16 %v2237, %v2236
  %v2265 = vpack.c.bf16 %v2239, %v2238
  %v2266 = vpack.c.bf16 %v2241, %v2240
  %v2267 = vpack.c.bf16 %v2243, %v2242
  %v2292 = vunpack.c.l.b16 %v2244
  %v2293 = vunpack.c.h.b16 %v2244
  %v2294 = vunpack.c.l.b16 %v2245
  %v2295 = vunpack.c.h.b16 %v2245
  %v2296 = vunpack.c.l.b16 %v2246
  %v2297 = vunpack.c.h.b16 %v2246
  %v2298 = vunpack.c.l.b16 %v2247
  %v2299 = vunpack.c.h.b16 %v2247
  %v2300 = vunpack.c.l.b16 %v2248
  %v2301 = vunpack.c.h.b16 %v2248
  %v2302 = vunpack.c.l.b16 %v2249
  %v2303 = vunpack.c.h.b16 %v2249
  %v2304 = vunpack.c.l.b16 %v2250
  %v2305 = vunpack.c.h.b16 %v2250
  %v2306 = vunpack.c.l.b16 %v2251
  %v2307 = vunpack.c.h.b16 %v2251
  %v2308 = vunpack.c.l.b16 %v2252
  %v2309 = vunpack.c.h.b16 %v2252
  %v2310 = vunpack.c.l.b16 %v2253
  %v2311 = vunpack.c.h.b16 %v2253
  %v2312 = vunpack.c.l.b16 %v2254
  %v2313 = vunpack.c.h.b16 %v2254
  %v2314 = vunpack.c.l.b16 %v2255
  %v2315 = vunpack.c.h.b16 %v2255
  %v2316 = vunpack.c.l.b16 %v2256
  %v2317 = vunpack.c.h.b16 %v2256
  %v2318 = vunpack.c.l.b16 %v2257
  %v2319 = vunpack.c.h.b16 %v2257
  %v2320 = vunpack.c.l.b16 %v2258
  %v2321 = vunpack.c.h.b16 %v2258
  %v2322 = vunpack.c.l.b16 %v2259
  %v2323 = vunpack.c.h.b16 %v2259
  %v2324 = vunpack.c.l.b16 %v2260
  %v2325 = vunpack.c.h.b16 %v2260
  %v2326 = vunpack.c.l.b16 %v2261
  %v2327 = vunpack.c.h.b16 %v2261
  %v2328 = vunpack.c.l.b16 %v2262
  %v2329 = vunpack.c.h.b16 %v2262
  %v2330 = vunpack.c.l.b16 %v2263
  %v2331 = vunpack.c.h.b16 %v2263
  %v2332 = vunpack.c.l.b16 %v2264
  %v2333 = vunpack.c.h.b16 %v2264
  %v2334 = vunpack.c.l.b16 %v2265
  %v2335 = vunpack.c.h.b16 %v2265
  %v2336 = vunpack.c.l.b16 %v2266
  %v2337 = vunpack.c.h.b16 %v2266
  %v2338 = vunpack.c.l.b16 %v2267
  %v2339 = vunpack.c.h.b16 %v2267
  %v2340 = vpack.c.b16 %v2292, %v2292
  %v2341 = vpack.c.b16 %v2293, %v2293
  %v2342 = vpack.c.b16 %v2294, %v2294
  %v2343 = vpack.c.b16 %v2295, %v2295
  %v2344 = vpack.c.b16 %v2296, %v2296
  %v2345 = vpack.c.b16 %v2297, %v2297
  %v2346 = vpack.c.b16 %v2298, %v2298
  %v2347 = vpack.c.b16 %v2299, %v2299
  %v2348 = vpack.c.b16 %v2300, %v2300
  %v2349 = vpack.c.b16 %v2301, %v2301
  %v2350 = vpack.c.b16 %v2302, %v2302
  %v2351 = vpack.c.b16 %v2303, %v2303
  %v2352 = vpack.c.b16 %v2304, %v2304
  %v2353 = vpack.c.b16 %v2305, %v2305
  %v2354 = vpack.c.b16 %v2306, %v2306
  %v2355 = vpack.c.b16 %v2307, %v2307
  %v2356 = vpack.c.b16 %v2308, %v2308
  %v2357 = vpack.c.b16 %v2309, %v2309
  %v2358 = vpack.c.b16 %v2310, %v2310
  %v2359 = vpack.c.b16 %v2311, %v2311
  %v2360 = vpack.c.b16 %v2312, %v2312
  %v2361 = vpack.c.b16 %v2313, %v2313
  %v2362 = vpack.c.b16 %v2314, %v2314
  %v2363 = vpack.c.b16 %v2315, %v2315
  %v2364 = vpack.c.b16 %v2316, %v2316
  %v2365 = vpack.c.b16 %v2317, %v2317
  %v2366 = vpack.c.b16 %v2318, %v2318
  %v2367 = vpack.c.b16 %v2319, %v2319
  %v2368 = vpack.c.b16 %v2320, %v2320
  %v2369 = vpack.c.b16 %v2321, %v2321
  %v2370 = vpack.c.b16 %v2322, %v2322
  %v2371 = vpack.c.b16 %v2323, %v2323
  %v2372 = vpack.c.b16 %v2324, %v2324
  %v2373 = vpack.c.b16 %v2325, %v2325
  %v2374 = vpack.c.b16 %v2326, %v2326
  %v2375 = vpack.c.b16 %v2327, %v2327
  %v2376 = vpack.c.b16 %v2328, %v2328
  %v2377 = vpack.c.b16 %v2329, %v2329
  %v2378 = vpack.c.b16 %v2330, %v2330
  %v2379 = vpack.c.b16 %v2331, %v2331
  %v2380 = vpack.c.b16 %v2332, %v2332
  %v2381 = vpack.c.b16 %v2333, %v2333
  %v2382 = vpack.c.b16 %v2334, %v2334
  %v2383 = vpack.c.b16 %v2335, %v2335
  %v2384 = vpack.c.b16 %v2336, %v2336
  %v2385 = vpack.c.b16 %v2337, %v2337
  %v2386 = vpack.c.b16 %v2338, %v2338
  %v2387 = vpack.c.b16 %v2339, %v2339
  %vm2436 = vcmask 257024
  %2437 = vst.msk [vmem:[%s3] sm:$0xf] %vm2436, %v2340
  %2438 = vst.msk [vmem:[%s3 + $0x4] sm:$0xf] %vm2436, %v2341
  %2439 = vst.msk [vmem:[%s3 + $0x8] sm:$0xf] %vm2436, %v2342
  %2440 = vst.msk [vmem:[%s3 + $0xc] sm:$0xf] %vm2436, %v2343
  %2441 = vst.msk [vmem:[%s3 + $0x10] sm:$0xf] %vm2436, %v2344
  %2442 = vst.msk [vmem:[%s3 + $0x14] sm:$0xf] %vm2436, %v2345
  %2443 = vst.msk [vmem:[%s3 + $0x18] sm:$0xf] %vm2436, %v2346
  %2444 = vst.msk [vmem:[%s3 + $0x1c] sm:$0xf] %vm2436, %v2347
  %2445 = vst.msk [vmem:[%s3 + $0x20] sm:$0xf] %vm2436, %v2348
  %2446 = vst.msk [vmem:[%s3 + $0x24] sm:$0xf] %vm2436, %v2349
  %2447 = vst.msk [vmem:[%s3 + $0x28] sm:$0xf] %vm2436, %v2350
  %2448 = vst.msk [vmem:[%s3 + $0x2c] sm:$0xf] %vm2436, %v2351
  %2449 = vst.msk [vmem:[%s3 + $0x30] sm:$0xf] %vm2436, %v2352
  %2450 = vst.msk [vmem:[%s3 + $0x34] sm:$0xf] %vm2436, %v2353
  %2451 = vst.msk [vmem:[%s3 + $0x38] sm:$0xf] %vm2436, %v2354
  %2452 = vst.msk [vmem:[%s3 + $0x3c] sm:$0xf] %vm2436, %v2355
  %2453 = vst.msk [vmem:[%s3 + $0x40] sm:$0xf] %vm2436, %v2356
  %2454 = vst.msk [vmem:[%s3 + $0x44] sm:$0xf] %vm2436, %v2357
  %2455 = vst.msk [vmem:[%s3 + $0x48] sm:$0xf] %vm2436, %v2358
  %2456 = vst.msk [vmem:[%s3 + $0x4c] sm:$0xf] %vm2436, %v2359
  %2457 = vst.msk [vmem:[%s3 + $0x50] sm:$0xf] %vm2436, %v2360
  %2458 = vst.msk [vmem:[%s3 + $0x54] sm:$0xf] %vm2436, %v2361
  %2459 = vst.msk [vmem:[%s3 + $0x58] sm:$0xf] %vm2436, %v2362
  %2460 = vst.msk [vmem:[%s3 + $0x5c] sm:$0xf] %vm2436, %v2363
  %2461 = vst.msk [vmem:[%s3 + $0x60] sm:$0xf] %vm2436, %v2364
  %2462 = vst.msk [vmem:[%s3 + $0x64] sm:$0xf] %vm2436, %v2365
  %2463 = vst.msk [vmem:[%s3 + $0x68] sm:$0xf] %vm2436, %v2366
  %2464 = vst.msk [vmem:[%s3 + $0x6c] sm:$0xf] %vm2436, %v2367
  %2465 = vst.msk [vmem:[%s3 + $0x70] sm:$0xf] %vm2436, %v2368
  %2466 = vst.msk [vmem:[%s3 + $0x74] sm:$0xf] %vm2436, %v2369
  %2467 = vst.msk [vmem:[%s3 + $0x78] sm:$0xf] %vm2436, %v2370
  %2468 = vst.msk [vmem:[%s3 + $0x7c] sm:$0xf] %vm2436, %v2371
  %2469 = vst.msk [vmem:[%s3 + $0x80] sm:$0xf] %vm2436, %v2372
  %2470 = vst.msk [vmem:[%s3 + $0x84] sm:$0xf] %vm2436, %v2373
  %2471 = vst.msk [vmem:[%s3 + $0x88] sm:$0xf] %vm2436, %v2374
  %2472 = vst.msk [vmem:[%s3 + $0x8c] sm:$0xf] %vm2436, %v2375
  %2473 = vst.msk [vmem:[%s3 + $0x90] sm:$0xf] %vm2436, %v2376
  %2474 = vst.msk [vmem:[%s3 + $0x94] sm:$0xf] %vm2436, %v2377
  %2475 = vst.msk [vmem:[%s3 + $0x98] sm:$0xf] %vm2436, %v2378
  %2476 = vst.msk [vmem:[%s3 + $0x9c] sm:$0xf] %vm2436, %v2379
  %2477 = vst.msk [vmem:[%s3 + $0xa0] sm:$0xf] %vm2436, %v2380
  %2478 = vst.msk [vmem:[%s3 + $0xa4] sm:$0xf] %vm2436, %v2381
  %2479 = vst.msk [vmem:[%s3 + $0xa8] sm:$0xf] %vm2436, %v2382
  %2480 = vst.msk [vmem:[%s3 + $0xac] sm:$0xf] %vm2436, %v2383
  %2481 = vst.msk [vmem:[%s3 + $0xb0] sm:$0xf] %vm2436, %v2384
  %2482 = vst.msk [vmem:[%s3 + $0xb4] sm:$0xf] %vm2436, %v2385
  %2483 = vst.msk [vmem:[%s3 + $0xb8] sm:$0xf] %vm2436, %v2386
  %2484 = vst.msk [vmem:[%s3 + $0xbc] sm:$0xf] %vm2436, %v2387
  // Predicated region
  $region14: #{crnn_forward.4} parent=0 // pred_check
    _
  $region15: #{crnn_forward.4} parent=0 // pred_check_branch
    %2486 = sbr.rel (0) target = $region17
  $region16: #{crnn_forward.4} parent=0 // pred_region
    _
  $region17: #{crnn_forward.4} parent=0 // pred_fallthru
    _
  // Predicated region
  $region18: #{crnn_forward.4} parent=0 // pred_check
    _
  $region19: #{crnn_forward.4} parent=0 // pred_check_branch
    %2488 = sbr.rel (0) target = $region21
  $region20: #{crnn_forward.4} parent=0 // pred_region
    _
  $region21: #{crnn_forward.4} parent=0 // pred_fallthru
    _

// kernel: crnn_forward.5
$region0: #{crnn_forward.5}
  #allocation0 [shape = 'u32[]', space=smem, size = 0x4, offset = 0x4, fixed_abs, tag = 'smem constant byte address 0x4 - core index']
  #allocation1 [shape = 'u32[144,128]{1,0:T(1,128)}', space=vmem, size = 0x12000, scoped, tag = 'internal scratch']
  %s0 = inlined_call_operand.vmem [shape: bf16[4,96,288], index: 0, kind: input, shape index: {}]
  %s1 = inlined_call_operand.vmem [shape: bf16[288,64], index: 1, kind: input, shape index: {}]
  %s2 = inlined_call_operand.vmem [shape: f32[1,64], index: 2, kind: input, shape index: {}]
  %s3 = inlined_call_operand.vmem [shape: bf16[96,64], index: 3, kind: output, shape index: {}]
  %s4 = sld [smem:[#allocation0]]
  $region22: #{crnn_forward.5} parent=0
    _
  %s6 = ssub.s32 1, %s4
  %s7 = scalar_select 0, %s6, %s4
  // Predicated region
  $region2: #{crnn_forward.5} parent=0 // pred_check
    _
  $region3: #{crnn_forward.5} parent=0 // pred_check_branch
    %9 = sbr.rel (0) target = $region5
  $region4: #{crnn_forward.5} parent=0 // pred_region
    _
  $region5: #{crnn_forward.5} parent=0 // pred_fallthru
    _
  // Predicated region
  $region6: #{crnn_forward.5} parent=0 // pred_check
    _
  $region7: #{crnn_forward.5} parent=0 // pred_check_branch
    %11 = sbr.rel (0) target = $region9
  $region8: #{crnn_forward.5} parent=0 // pred_region
    _
  $region9: #{crnn_forward.5} parent=0 // pred_fallthru
    _
  // Predicated region
  $region10: #{crnn_forward.5} parent=0 // pred_check
    _
  $region11: #{crnn_forward.5} parent=0 // pred_check_branch
    %13 = sbr.rel (0) target = $region13
  $region12: #{crnn_forward.5} parent=0 // pred_region
    _
  $region13: #{crnn_forward.5} parent=0 // pred_fallthru
    _
  %v15 = vld [vmem:[%s1] sm:$0xf]
  %v16 = vld [vmem:[%s1 + $0x4] sm:$0xf]
  %v17 = vld [vmem:[%s1 + $0x8] sm:$0xf]
  %v18 = vld [vmem:[%s1 + $0xc] sm:$0xf]
  %v19 = vld [vmem:[%s1 + $0x10] sm:$0xf]
  %v20 = vld [vmem:[%s1 + $0x14] sm:$0xf]
  %v21 = vld [vmem:[%s1 + $0x18] sm:$0xf]
  %v22 = vld [vmem:[%s1 + $0x1c] sm:$0xf]
  %v23 = vld [vmem:[%s1 + $0x20] sm:$0xf]
  %v24 = vld [vmem:[%s1 + $0x24] sm:$0xf]
  %v25 = vld [vmem:[%s1 + $0x28] sm:$0xf]
  %v26 = vld [vmem:[%s1 + $0x2c] sm:$0xf]
  %v27 = vld [vmem:[%s1 + $0x30] sm:$0xf]
  %v28 = vld [vmem:[%s1 + $0x34] sm:$0xf]
  %v29 = vld [vmem:[%s1 + $0x38] sm:$0xf]
  %v30 = vld [vmem:[%s1 + $0x3c] sm:$0xf]
  %v31 = vld [vmem:[%s1 + $0x40] sm:$0xf]
  %v32 = vld [vmem:[%s1 + $0x44] sm:$0xf]
  %v33 = vld [vmem:[%s1 + $0x48] sm:$0xf]
  %v34 = vld [vmem:[%s1 + $0x4c] sm:$0xf]
  %v35 = vld [vmem:[%s1 + $0x50] sm:$0xf]
  %v36 = vld [vmem:[%s1 + $0x54] sm:$0xf]
  %v37 = vld [vmem:[%s1 + $0x58] sm:$0xf]
  %v38 = vld [vmem:[%s1 + $0x5c] sm:$0xf]
  %v39 = vld [vmem:[%s1 + $0x60] sm:$0xf]
  %v40 = vld [vmem:[%s1 + $0x64] sm:$0xf]
  %v41 = vld [vmem:[%s1 + $0x68] sm:$0xf]
  %v42 = vld [vmem:[%s1 + $0x6c] sm:$0xf]
  %v43 = vld [vmem:[%s1 + $0x70] sm:$0xf]
  %v44 = vld [vmem:[%s1 + $0x74] sm:$0xf]
  %v45 = vld [vmem:[%s1 + $0x78] sm:$0xf]
  %v46 = vld [vmem:[%s1 + $0x7c] sm:$0xf]
  %v47 = vld [vmem:[%s1 + $0x80] sm:$0xf]
  %v48 = vld [vmem:[%s1 + $0x84] sm:$0xf]
  %v49 = vld [vmem:[%s1 + $0x88] sm:$0xf]
  %v50 = vld [vmem:[%s1 + $0x8c] sm:$0xf]
  %v51 = vld [vmem:[%s2] sm:$0x1]
  %v52 = vld [vmem:[%s0] sm:$0xff]
  %v53 = vld [vmem:[%s0 + $0x8] sm:$0xf]
  %v54 = vld [vmem:[%s0 + $0xc] sm:$0xff]
  %v55 = vld [vmem:[%s0 + $0x14] sm:$0xf]
  %v56 = vld [vmem:[%s0 + $0x18] sm:$0xff]
  %v57 = vld [vmem:[%s0 + $0x20] sm:$0xf]
  %v58 = vld [vmem:[%s0 + $0x24] sm:$0xff]
  %v59 = vld [vmem:[%s0 + $0x2c] sm:$0xf]
  %v60 = vld [vmem:[%s0 + $0x30] sm:$0xff]
  %v61 = vld [vmem:[%s0 + $0x38] sm:$0xf]
  %v62 = vld [vmem:[%s0 + $0x3c] sm:$0xff]
  %v63 = vld [vmem:[%s0 + $0x44] sm:$0xf]
  %v64 = vld [vmem:[%s0 + $0x48] sm:$0xff]
  %v65 = vld [vmem:[%s0 + $0x50] sm:$0xf]
  %v66 = vld [vmem:[%s0 + $0x54] sm:$0xff]
  %v67 = vld [vmem:[%s0 + $0x5c] sm:$0xf]
  %v68 = vld [vmem:[%s0 + $0x60] sm:$0xff]
  %v69 = vld [vmem:[%s0 + $0x68] sm:$0xf]
  %v70 = vld [vmem:[%s0 + $0x6c] sm:$0xff]
  %v71 = vld [vmem:[%s0 + $0x74] sm:$0xf]
  %v72 = vld [vmem:[%s0 + $0x78] sm:$0xff]
  %v73 = vld [vmem:[%s0 + $0x80] sm:$0xf]
  %v74 = vld [vmem:[%s0 + $0x84] sm:$0xff]
  %v75 = vld [vmem:[%s0 + $0x8c] sm:$0xf]
  %v77 = vlaneseq
  %v78 = vshrl.u32 %v77, 7
  %v79 = vsub.s32 0, %v78
  %v80 = vrot.slane %v51, %v79
  %v106 = vunpack.c.l.b16 %v52
  %v107 = vunpack.c.h.b16 %v52
  %v108 = vunpack.c.l.b16 %v53
  %v109 = vunpack.c.l.b16 %v54
  %v110 = vunpack.c.h.b16 %v54
  %v111 = vunpack.c.l.b16 %v55
  %v112 = vunpack.c.l.b16 %v56
  %v113 = vunpack.c.h.b16 %v56
  %v114 = vunpack.c.l.b16 %v57
  %v115 = vunpack.c.l.b16 %v58
  %v116 = vunpack.c.h.b16 %v58
  %v117 = vunpack.c.l.b16 %v59
  %v118 = vunpack.c.l.b16 %v60
  %v119 = vunpack.c.h.b16 %v60
  %v120 = vunpack.c.l.b16 %v61
  %v121 = vunpack.c.l.b16 %v62
  %v122 = vunpack.c.h.b16 %v62
  %v123 = vunpack.c.l.b16 %v63
  %v124 = vunpack.c.l.b16 %v64
  %v125 = vunpack.c.h.b16 %v64
  %v126 = vunpack.c.l.b16 %v65
  %v127 = vunpack.c.l.b16 %v66
  %v128 = vunpack.c.h.b16 %v66
  %v129 = vunpack.c.l.b16 %v67
  %v130 = vunpack.c.l.b16 %v68
  %v131 = vunpack.c.h.b16 %v68
  %v132 = vunpack.c.l.b16 %v69
  %v133 = vunpack.c.l.b16 %v70
  %v134 = vunpack.c.h.b16 %v70
  %v135 = vunpack.c.l.b16 %v71
  %v136 = vunpack.c.l.b16 %v72
  %v137 = vunpack.c.h.b16 %v72
  %v138 = vunpack.c.l.b16 %v73
  %v139 = vunpack.c.l.b16 %v74
  %v140 = vunpack.c.h.b16 %v74
  %v141 = vunpack.c.l.b16 %v75
  %v142 = vpack.c.b16 %v109, %v106
  %v143 = vpack.c.b16 %v110, %v107
  %v144 = vpack.c.b16 %v111, %v108
  %v145 = vpack.c.b16 %v115, %v112
  %v146 = vpack.c.b16 %v116, %v113
  %v147 = vpack.c.b16 %v117, %v114
  %v148 = vpack.c.b16 %v121, %v118
  %v149 = vpack.c.b16 %v122, %v119
  %v150 = vpack.c.b16 %v123, %v120
  %v151 = vpack.c.b16 %v127, %v124
  %v152 = vpack.c.b16 %v128, %v125
  %v153 = vpack.c.b16 %v129, %v126
  %v154 = vpack.c.b16 %v133, %v130
  %v155 = vpack.c.b16 %v134, %v131
  %v156 = vpack.c.b16 %v135, %v132
  %v157 = vpack.c.b16 %v139, %v136
  %v158 = vpack.c.b16 %v140, %v137
  %v159 = vpack.c.b16 %v141, %v138
  %v208 = vunpack.c.l.b16 %v15
  %v209 = vunpack.c.l.b16 %v16
  %v210 = vunpack.c.l.b16 %v17
  %v211 = vunpack.c.l.b16 %v18
  %v212 = vunpack.c.l.b16 %v19
  %v213 = vunpack.c.l.b16 %v20
  %v214 = vunpack.c.l.b16 %v21
  %v215 = vunpack.c.l.b16 %v22
  %v216 = vunpack.c.l.b16 %v23
  %v217 = vunpack.c.l.b16 %v24
  %v218 = vunpack.c.l.b16 %v25
  %v219 = vunpack.c.l.b16 %v26
  %v220 = vunpack.c.l.b16 %v27
  %v221 = vunpack.c.l.b16 %v28
  %v222 = vunpack.c.l.b16 %v29
  %v223 = vunpack.c.l.b16 %v30
  %v224 = vunpack.c.l.b16 %v31
  %v225 = vunpack.c.l.b16 %v32
  %v226 = vunpack.c.l.b16 %v33
  %v227 = vunpack.c.l.b16 %v34
  %v228 = vunpack.c.l.b16 %v35
  %v229 = vunpack.c.l.b16 %v36
  %v230 = vunpack.c.l.b16 %v37
  %v231 = vunpack.c.l.b16 %v38
  %v232 = vunpack.c.l.b16 %v39
  %v233 = vunpack.c.l.b16 %v40
  %v234 = vunpack.c.l.b16 %v41
  %v235 = vunpack.c.l.b16 %v42
  %v236 = vunpack.c.l.b16 %v43
  %v237 = vunpack.c.l.b16 %v44
  %v238 = vunpack.c.l.b16 %v45
  %v239 = vunpack.c.l.b16 %v46
  %v240 = vunpack.c.l.b16 %v47
  %v241 = vunpack.c.l.b16 %v48
  %v242 = vunpack.c.l.b16 %v49
  %v243 = vunpack.c.l.b16 %v50
  %v244 = vpack.c.b16 %v209, %v208
  %v245 = vpack.c.b16 %v211, %v210
  %v246 = vpack.c.b16 %v213, %v212
  %v247 = vpack.c.b16 %v215, %v214
  %v248 = vpack.c.b16 %v217, %v216
  %v249 = vpack.c.b16 %v219, %v218
  %v250 = vpack.c.b16 %v221, %v220
  %v251 = vpack.c.b16 %v223, %v222
  %v252 = vpack.c.b16 %v225, %v224
  %v253 = vpack.c.b16 %v227, %v226
  %v254 = vpack.c.b16 %v229, %v228
  %v255 = vpack.c.b16 %v231, %v230
  %v256 = vpack.c.b16 %v233, %v232
  %v257 = vpack.c.b16 %v235, %v234
  %v258 = vpack.c.b16 %v237, %v236
  %v259 = vpack.c.b16 %v239, %v238
  %v260 = vpack.c.b16 %v241, %v240
  %v261 = vpack.c.b16 %v243, %v242
  %vm280 = vcmask 261120
  %v282 = vsel %vm280, %v144, 0
  %v285 = vsel %vm280, %v147, 0
  %v288 = vsel %vm280, %v150, 0
  %v291 = vsel %vm280, %v153, 0
  %v294 = vsel %vm280, %v156, 0
  %v297 = vsel %vm280, %v159, 0
  %299 = vmatprep.subr.bf16.mxu0 0
  %300 = vmatpush1.bf16.msra.mxu0 %v244
  %301 = vmatprep.subr.bf16.mxu0 0
  %302 = vmatpush1.bf16.msra.mxu0 %v245
  %303 = vmatprep.subr.bf16.mxu0 0
  %304 = vmatpush1.bf16.msra.mxu0 %v246
  %305 = vmatprep.subr.bf16.mxu0 0
  %306 = vmatpush1.bf16.msra.mxu0 %v247
  %307 = vmatprep.subr.bf16.mxu0 0
  %308 = vmatpush1.bf16.msra.mxu0 %v248
  %309 = vmatprep.subr.bf16.mxu0 0
  %310 = vmatpush1.bf16.msra.mxu0 %v249
  %311 = vmatprep.subr.bf16.mxu0 0
  %312 = vmatpush1.bf16.msra.mxu0 %v250
  %313 = vmatprep.subr.bf16.mxu0 0
  %314 = vmatpush1.bf16.msra.mxu0 %v251
  %315 = vmatprep.subr.bf16.mxu0 0
  %316 = vmatpush1.bf16.msra.mxu0 %v252
  %317 = vmatprep.subr.bf16.mxu0 0
  %318 = vmatpush1.bf16.msra.mxu0 %v253
  %319 = vmatprep.subr.bf16.mxu0 0
  %320 = vmatpush1.bf16.msra.mxu0 %v254
  %321 = vmatprep.subr.bf16.mxu0 0
  %322 = vmatpush1.bf16.msra.mxu0 %v255
  %323 = vmatprep.subr.bf16.mxu0 0
  %324 = vmatpush1.bf16.msra.mxu0 %v256
  %325 = vmatprep.subr.bf16.mxu0 0
  %326 = vmatpush1.bf16.msra.mxu0 %v257
  %327 = vmatprep.subr.bf16.mxu0 0
  %328 = vmatpush1.bf16.msra.mxu0 %v258
  %329 = vmatprep.subr.bf16.mxu0 0
  %330 = vmatpush1.bf16.msra.mxu0 %v259
  %331 = vmatprep.mubr.bf16.mxu0 %v143
  %332 = vmatmul.mubr.bf16.gmra.mrb[0].mxu0 %v142
  %v333 = vpop.f32.mrb[0].mxu0
  %v334 = vadd.f32 %v80, %v333
  %v335 = vpop.f32.mrb[0].mxu0
  %v336 = vpop.f32.mrb[0].mxu0
  %v337 = vadd.f32 %v80, %v336
  %v338 = vpop.f32.mrb[0].mxu0
  %339 = vmatprep.mubr.bf16.mxu0 %v146
  %340 = vmatmul.mubr.bf16.gmra.mrb[0].mxu0 %v145
  %v341 = vpop.f32.mrb[0].mxu0
  %v342 = vadd.f32 %v80, %v341
  %v343 = vpop.f32.mrb[0].mxu0
  %v344 = vpop.f32.mrb[0].mxu0
  %v345 = vadd.f32 %v80, %v344
  %v346 = vpop.f32.mrb[0].mxu0
  %347 = vmatprep.mubr.bf16.mxu0 %v149
  %348 = vmatmul.mubr.bf16.gmra.mrb[0].mxu0 %v148
  %v349 = vpop.f32.mrb[0].mxu0
  %v350 = vadd.f32 %v80, %v349
  %v351 = vpop.f32.mrb[0].mxu0
  %v352 = vpop.f32.mrb[0].mxu0
  %v353 = vadd.f32 %v80, %v352
  %v354 = vpop.f32.mrb[0].mxu0
  %355 = vmatprep.mubr.bf16.mxu0 %v152
  %356 = vmatmul.mubr.bf16.gmra.mrb[0].mxu0 %v151
  %v357 = vpop.f32.mrb[0].mxu0
  %v358 = vadd.f32 %v80, %v357
  %v359 = vpop.f32.mrb[0].mxu0
  %v360 = vpop.f32.mrb[0].mxu0
  %v361 = vadd.f32 %v80, %v360
  %v362 = vpop.f32.mrb[0].mxu0
  %363 = vmatprep.mubr.bf16.mxu0 %v155
  %364 = vmatmul.mubr.bf16.gmra.mrb[0].mxu0 %v154
  %v365 = vpop.f32.mrb[0].mxu0
  %v366 = vadd.f32 %v80, %v365
  %v367 = vpop.f32.mrb[0].mxu0
  %v368 = vpop.f32.mrb[0].mxu0
  %v369 = vadd.f32 %v80, %v368
  %v370 = vpop.f32.mrb[0].mxu0
  %371 = vmatprep.mubr.bf16.mxu0 %v158
  %372 = vmatmul.mubr.bf16.gmra.mrb[0].mxu0 %v157
  %v373 = vpop.f32.mrb[0].mxu0
  %v374 = vadd.f32 %v80, %v373
  %v375 = vpop.f32.mrb[0].mxu0
  %v376 = vpop.f32.mrb[0].mxu0
  %v377 = vadd.f32 %v80, %v376
  %v378 = vpop.f32.mrb[0].mxu0
  %379 = vdwg.mxu0
  %380 = vmatprep.subr.bf16.mxu0 0
  %381 = vmatpush1.bf16.msra.mxu0 %v260
  %382 = vmatprep.subr.bf16.mxu0 0
  %383 = vmatpush1.bf16.msra.mxu0 %v261
  %384 = vmatprep.subr.bf16.mxu0 0
  %385 = vmatpush1.bf16.msra.mxu0 0
  %386 = vmatprep.subr.bf16.mxu0 0
  %387 = vmatpush1.bf16.msra.mxu0 0
  %388 = vmatprep.subr.bf16.mxu0 0
  %389 = vmatpush1.bf16.msra.mxu0 0
  %390 = vmatprep.subr.bf16.mxu0 0
  %391 = vmatpush1.bf16.msra.mxu0 0
  %392 = vmatprep.subr.bf16.mxu0 0
  %393 = vmatpush1.bf16.msra.mxu0 0
  %394 = vmatprep.subr.bf16.mxu0 0
  %395 = vmatpush1.bf16.msra.mxu0 0
  %396 = vmatprep.subr.bf16.mxu0 0
  %397 = vmatpush1.bf16.msra.mxu0 0
  %398 = vmatprep.subr.bf16.mxu0 0
  %399 = vmatpush1.bf16.msra.mxu0 0
  %400 = vmatprep.subr.bf16.mxu0 0
  %401 = vmatpush1.bf16.msra.mxu0 0
  %402 = vmatprep.subr.bf16.mxu0 0
  %403 = vmatpush1.bf16.msra.mxu0 0
  %404 = vmatprep.subr.bf16.mxu0 0
  %405 = vmatpush1.bf16.msra.mxu0 0
  %406 = vmatprep.subr.bf16.mxu0 0
  %407 = vmatpush1.bf16.msra.mxu0 0
  %408 = vmatprep.subr.bf16.mxu0 0
  %409 = vmatpush1.bf16.msra.mxu0 0
  %410 = vmatprep.subr.bf16.mxu0 0
  %411 = vmatpush1.bf16.msra.mxu0 0
  %412 = vmatprep.mubr.bf16.mxu0 0
  %413 = vmatmul.mubr.bf16.gmra.mrb[0].mxu0 %v282
  %v414 = vpop.f32.mrb[0].mxu0
  %v415 = vadd.f32 %v334, %v414
  %v416 = vpop.f32.mrb[0].mxu0
  %v417 = vpop.f32.mrb[0].mxu0
  %v418 = vadd.f32 %v337, %v417
  %v419 = vpop.f32.mrb[0].mxu0
  %420 = vmatprep.mubr.bf16.mxu0 0
  %421 = vmatmul.mubr.bf16.gmra.mrb[0].mxu0 %v285
  %v422 = vpop.f32.mrb[0].mxu0
  %v423 = vadd.f32 %v342, %v422
  %v424 = vpop.f32.mrb[0].mxu0
  %v425 = vpop.f32.mrb[0].mxu0
  %v426 = vadd.f32 %v345, %v425
  %v427 = vpop.f32.mrb[0].mxu0
  %428 = vmatprep.mubr.bf16.mxu0 0
  %429 = vmatmul.mubr.bf16.gmra.mrb[0].mxu0 %v288
  %v430 = vpop.f32.mrb[0].mxu0
  %v431 = vadd.f32 %v350, %v430
  %v432 = vpop.f32.mrb[0].mxu0
  %v433 = vpop.f32.mrb[0].mxu0
  %v434 = vadd.f32 %v353, %v433
  %v435 = vpop.f32.mrb[0].mxu0
  %436 = vmatprep.mubr.bf16.mxu0 0
  %437 = vmatmul.mubr.bf16.gmra.mrb[0].mxu0 %v291
  %v438 = vpop.f32.mrb[0].mxu0
  %v439 = vadd.f32 %v358, %v438
  %v440 = vpop.f32.mrb[0].mxu0
  %v441 = vpop.f32.mrb[0].mxu0
  %v442 = vadd.f32 %v361, %v441
  %v443 = vpop.f32.mrb[0].mxu0
  %444 = vmatprep.mubr.bf16.mxu0 0
  %445 = vmatmul.mubr.bf16.gmra.mrb[0].mxu0 %v294
  %v446 = vpop.f32.mrb[0].mxu0
  %v447 = vadd.f32 %v366, %v446
  %v448 = vpop.f32.mrb[0].mxu0
  %v449 = vpop.f32.mrb[0].mxu0
  %v450 = vadd.f32 %v369, %v449
  %v451 = vpop.f32.mrb[0].mxu0
  %452 = vmatprep.mubr.bf16.mxu0 0
  %453 = vmatmul.mubr.bf16.gmra.mrb[0].mxu0 %v297
  %v454 = vpop.f32.mrb[0].mxu0
  %v455 = vadd.f32 %v374, %v454
  %v456 = vpop.f32.mrb[0].mxu0
  %v457 = vpop.f32.mrb[0].mxu0
  %v458 = vadd.f32 %v377, %v457
  %v459 = vpop.f32.mrb[0].mxu0
  %460 = vdwg.mxu0
  %v461 = vmax.f32 %v415, 0.0
  %v462 = vmax.f32 %v418, 0.0
  %v463 = vmax.f32 %v423, 0.0
  %v464 = vmax.f32 %v426, 0.0
  %v465 = vmax.f32 %v431, 0.0
  %v466 = vmax.f32 %v434, 0.0
  %v467 = vmax.f32 %v439, 0.0
  %v468 = vmax.f32 %v442, 0.0
  %v469 = vmax.f32 %v447, 0.0
  %v470 = vmax.f32 %v450, 0.0
  %v471 = vmax.f32 %v455, 0.0
  %v472 = vmax.f32 %v458, 0.0
  %s473 = scalar_lea.vmem %s0, 144
  %v474 = vld [vmem:[%s473] sm:$0xff]
  %v475 = vld [vmem:[%s473 + $0x8] sm:$0xf]
  %v476 = vld [vmem:[%s473 + $0xc] sm:$0xff]
  %v477 = vld [vmem:[%s473 + $0x14] sm:$0xf]
  %v478 = vld [vmem:[%s473 + $0x18] sm:$0xff]
  %v479 = vld [vmem:[%s473 + $0x20] sm:$0xf]
  %v480 = vld [vmem:[%s473 + $0x24] sm:$0xff]
  %v481 = vld [vmem:[%s473 + $0x2c] sm:$0xf]
  %v482 = vld [vmem:[%s473 + $0x30] sm:$0xff]
  %v483 = vld [vmem:[%s473 + $0x38] sm:$0xf]
  %v484 = vld [vmem:[%s473 + $0x3c] sm:$0xff]
  %v485 = vld [vmem:[%s473 + $0x44] sm:$0xf]
  %v486 = vld [vmem:[%s473 + $0x48] sm:$0xff]
  %v487 = vld [vmem:[%s473 + $0x50] sm:$0xf]
  %v488 = vld [vmem:[%s473 + $0x54] sm:$0xff]
  %v489 = vld [vmem:[%s473 + $0x5c] sm:$0xf]
  %v490 = vld [vmem:[%s473 + $0x60] sm:$0xff]
  %v491 = vld [vmem:[%s473 + $0x68] sm:$0xf]
  %v492 = vld [vmem:[%s473 + $0x6c] sm:$0xff]
  %v493 = vld [vmem:[%s473 + $0x74] sm:$0xf]
  %v494 = vld [vmem:[%s473 + $0x78] sm:$0xff]
  %v495 = vld [vmem:[%s473 + $0x80] sm:$0xf]
  %v496 = vld [vmem:[%s473 + $0x84] sm:$0xff]
  %v497 = vld [vmem:[%s473 + $0x8c] sm:$0xf]
  %v522 = vunpack.c.l.b16 %v474
  %v523 = vunpack.c.h.b16 %v474
  %v524 = vunpack.c.l.b16 %v475
  %v525 = vunpack.c.l.b16 %v476
  %v526 = vunpack.c.h.b16 %v476
  %v527 = vunpack.c.l.b16 %v477
  %v528 = vunpack.c.l.b16 %v478
  %v529 = vunpack.c.h.b16 %v478
  %v530 = vunpack.c.l.b16 %v479
  %v531 = vunpack.c.l.b16 %v480
  %v532 = vunpack.c.h.b16 %v480
  %v533 = vunpack.c.l.b16 %v481
  %v534 = vunpack.c.l.b16 %v482
  %v535 = vunpack.c.h.b16 %v482
  %v536 = vunpack.c.l.b16 %v483
  %v537 = vunpack.c.l.b16 %v484
  %v538 = vunpack.c.h.b16 %v484
  %v539 = vunpack.c.l.b16 %v485
  %v540 = vunpack.c.l.b16 %v486
  %v541 = vunpack.c.h.b16 %v486
  %v542 = vunpack.c.l.b16 %v487
  %v543 = vunpack.c.l.b16 %v488
  %v544 = vunpack.c.h.b16 %v488
  %v545 = vunpack.c.l.b16 %v489
  %v546 = vunpack.c.l.b16 %v490
  %v547 = vunpack.c.h.b16 %v490
  %v548 = vunpack.c.l.b16 %v491
  %v549 = vunpack.c.l.b16 %v492
  %v550 = vunpack.c.h.b16 %v492
  %v551 = vunpack.c.l.b16 %v493
  %v552 = vunpack.c.l.b16 %v494
  %v553 = vunpack.c.h.b16 %v494
  %v554 = vunpack.c.l.b16 %v495
  %v555 = vunpack.c.l.b16 %v496
  %v556 = vunpack.c.h.b16 %v496
  %v557 = vunpack.c.l.b16 %v497
  %v558 = vpack.c.b16 %v525, %v522
  %v559 = vpack.c.b16 %v526, %v523
  %v560 = vpack.c.b16 %v527, %v524
  %v561 = vpack.c.b16 %v531, %v528
  %v562 = vpack.c.b16 %v532, %v529
  %v563 = vpack.c.b16 %v533, %v530
  %v564 = vpack.c.b16 %v537, %v534
  %v565 = vpack.c.b16 %v538, %v535
  %v566 = vpack.c.b16 %v539, %v536
  %v567 = vpack.c.b16 %v543, %v540
  %v568 = vpack.c.b16 %v544, %v541
  %v569 = vpack.c.b16 %v545, %v542
  %v570 = vpack.c.b16 %v549, %v546
  %v571 = vpack.c.b16 %v550, %v547
  %v572 = vpack.c.b16 %v551, %v548
  %v573 = vpack.c.b16 %v555, %v552
  %v574 = vpack.c.b16 %v556, %v553
  %v575 = vpack.c.b16 %v557, %v554
  %v589 = vsel %vm280, %v560, 0
  %v592 = vsel %vm280, %v563, 0
  %v595 = vsel %vm280, %v566, 0
  %v598 = vsel %vm280, %v569, 0
  %v601 = vsel %vm280, %v572, 0
  %v604 = vsel %vm280, %v575, 0
  %606 = vmatprep.subr.bf16.mxu0 0
  %607 = vmatpush1.bf16.msra.mxu0 %v244
  %608 = vmatprep.subr.bf16.mxu0 0
  %609 = vmatpush1.bf16.msra.mxu0 %v245
  %610 = vmatprep.subr.bf16.mxu0 0
  %611 = vmatpush1.bf16.msra.mxu0 %v246
  %612 = vmatprep.subr.bf16.mxu0 0
  %613 = vmatpush1.bf16.msra.mxu0 %v247
  %614 = vmatprep.subr.bf16.mxu0 0
  %615 = vmatpush1.bf16.msra.mxu0 %v248
  %616 = vmatprep.subr.bf16.mxu0 0
  %617 = vmatpush1.bf16.msra.mxu0 %v249
  %618 = vmatprep.subr.bf16.mxu0 0
  %619 = vmatpush1.bf16.msra.mxu0 %v250
  %620 = vmatprep.subr.bf16.mxu0 0
  %621 = vmatpush1.bf16.msra.mxu0 %v251
  %622 = vmatprep.subr.bf16.mxu0 0
  %623 = vmatpush1.bf16.msra.mxu0 %v252
  %624 = vmatprep.subr.bf16.mxu0 0
  %625 = vmatpush1.bf16.msra.mxu0 %v253
  %626 = vmatprep.subr.bf16.mxu0 0
  %627 = vmatpush1.bf16.msra.mxu0 %v254
  %628 = vmatprep.subr.bf16.mxu0 0
  %629 = vmatpush1.bf16.msra.mxu0 %v255
  %630 = vmatprep.subr.bf16.mxu0 0
  %631 = vmatpush1.bf16.msra.mxu0 %v256
  %632 = vmatprep.subr.bf16.mxu0 0
  %633 = vmatpush1.bf16.msra.mxu0 %v257
  %634 = vmatprep.subr.bf16.mxu0 0
  %635 = vmatpush1.bf16.msra.mxu0 %v258
  %636 = vmatprep.subr.bf16.mxu0 0
  %637 = vmatpush1.bf16.msra.mxu0 %v259
  %638 = vmatprep.mubr.bf16.mxu0 %v559
  %639 = vmatmul.mubr.bf16.gmra.mrb[0].mxu0 %v558
  %v640 = vpop.f32.mrb[0].mxu0
  %v641 = vadd.f32 %v80, %v640
  %v642 = vpop.f32.mrb[0].mxu0
  %v643 = vpop.f32.mrb[0].mxu0
  %v644 = vadd.f32 %v80, %v643
  %v645 = vpop.f32.mrb[0].mxu0
  %646 = vmatprep.mubr.bf16.mxu0 %v562
  %647 = vmatmul.mubr.bf16.gmra.mrb[0].mxu0 %v561
  %v648 = vpop.f32.mrb[0].mxu0
  %v649 = vadd.f32 %v80, %v648
  %v650 = vpop.f32.mrb[0].mxu0
  %v651 = vpop.f32.mrb[0].mxu0
  %v652 = vadd.f32 %v80, %v651
  %v653 = vpop.f32.mrb[0].mxu0
  %654 = vmatprep.mubr.bf16.mxu0 %v565
  %655 = vmatmul.mubr.bf16.gmra.mrb[0].mxu0 %v564
  %v656 = vpop.f32.mrb[0].mxu0
  %v657 = vadd.f32 %v80, %v656
  %v658 = vpop.f32.mrb[0].mxu0
  %v659 = vpop.f32.mrb[0].mxu0
  %v660 = vadd.f32 %v80, %v659
  %v661 = vpop.f32.mrb[0].mxu0
  %662 = vmatprep.mubr.bf16.mxu0 %v568
  %663 = vmatmul.mubr.bf16.gmra.mrb[0].mxu0 %v567
  %v664 = vpop.f32.mrb[0].mxu0
  %v665 = vadd.f32 %v80, %v664
  %v666 = vpop.f32.mrb[0].mxu0
  %v667 = vpop.f32.mrb[0].mxu0
  %v668 = vadd.f32 %v80, %v667
  %v669 = vpop.f32.mrb[0].mxu0
  %670 = vmatprep.mubr.bf16.mxu0 %v571
  %671 = vmatmul.mubr.bf16.gmra.mrb[0].mxu0 %v570
  %v672 = vpop.f32.mrb[0].mxu0
  %v673 = vadd.f32 %v80, %v672
  %v674 = vpop.f32.mrb[0].mxu0
  %v675 = vpop.f32.mrb[0].mxu0
  %v676 = vadd.f32 %v80, %v675
  %v677 = vpop.f32.mrb[0].mxu0
  %678 = vmatprep.mubr.bf16.mxu0 %v574
  %679 = vmatmul.mubr.bf16.gmra.mrb[0].mxu0 %v573
  %v680 = vpop.f32.mrb[0].mxu0
  %v681 = vadd.f32 %v80, %v680
  %v682 = vpop.f32.mrb[0].mxu0
  %v683 = vpop.f32.mrb[0].mxu0
  %v684 = vadd.f32 %v80, %v683
  %v685 = vpop.f32.mrb[0].mxu0
  %686 = vdwg.mxu0
  %687 = vmatprep.subr.bf16.mxu0 0
  %688 = vmatpush1.bf16.msra.mxu0 %v260
  %689 = vmatprep.subr.bf16.mxu0 0
  %690 = vmatpush1.bf16.msra.mxu0 %v261
  %691 = vmatprep.subr.bf16.mxu0 0
  %692 = vmatpush1.bf16.msra.mxu0 0
  %693 = vmatprep.subr.bf16.mxu0 0
  %694 = vmatpush1.bf16.msra.mxu0 0
  %695 = vmatprep.subr.bf16.mxu0 0
  %696 = vmatpush1.bf16.msra.mxu0 0
  %697 = vmatprep.subr.bf16.mxu0 0
  %698 = vmatpush1.bf16.msra.mxu0 0
  %699 = vmatprep.subr.bf16.mxu0 0
  %700 = vmatpush1.bf16.msra.mxu0 0
  %701 = vmatprep.subr.bf16.mxu0 0
  %702 = vmatpush1.bf16.msra.mxu0 0
  %703 = vmatprep.subr.bf16.mxu0 0
  %704 = vmatpush1.bf16.msra.mxu0 0
  %705 = vmatprep.subr.bf16.mxu0 0
  %706 = vmatpush1.bf16.msra.mxu0 0
  %707 = vmatprep.subr.bf16.mxu0 0
  %708 = vmatpush1.bf16.msra.mxu0 0
  %709 = vmatprep.subr.bf16.mxu0 0
  %710 = vmatpush1.bf16.msra.mxu0 0
  %711 = vmatprep.subr.bf16.mxu0 0
  %712 = vmatpush1.bf16.msra.mxu0 0
  %713 = vmatprep.subr.bf16.mxu0 0
  %714 = vmatpush1.bf16.msra.mxu0 0
  %715 = vmatprep.subr.bf16.mxu0 0
  %716 = vmatpush1.bf16.msra.mxu0 0
  %717 = vmatprep.subr.bf16.mxu0 0
  %718 = vmatpush1.bf16.msra.mxu0 0
  %719 = vmatprep.mubr.bf16.mxu0 0
  %720 = vmatmul.mubr.bf16.gmra.mrb[0].mxu0 %v589
  %v721 = vpop.f32.mrb[0].mxu0
  %v722 = vadd.f32 %v641, %v721
  %v723 = vpop.f32.mrb[0].mxu0
  %v724 = vpop.f32.mrb[0].mxu0
  %v725 = vadd.f32 %v644, %v724
  %v726 = vpop.f32.mrb[0].mxu0
  %727 = vmatprep.mubr.bf16.mxu0 0
  %728 = vmatmul.mubr.bf16.gmra.mrb[0].mxu0 %v592
  %v729 = vpop.f32.mrb[0].mxu0
  %v730 = vadd.f32 %v649, %v729
  %v731 = vpop.f32.mrb[0].mxu0
  %v732 = vpop.f32.mrb[0].mxu0
  %v733 = vadd.f32 %v652, %v732
  %v734 = vpop.f32.mrb[0].mxu0
  %735 = vmatprep.mubr.bf16.mxu0 0
  %736 = vmatmul.mubr.bf16.gmra.mrb[0].mxu0 %v595
  %v737 = vpop.f32.mrb[0].mxu0
  %v738 = vadd.f32 %v657, %v737
  %v739 = vpop.f32.mrb[0].mxu0
  %v740 = vpop.f32.mrb[0].mxu0
  %v741 = vadd.f32 %v660, %v740
  %v742 = vpop.f32.mrb[0].mxu0
  %743 = vmatprep.mubr.bf16.mxu0 0
  %744 = vmatmul.mubr.bf16.gmra.mrb[0].mxu0 %v598
  %v745 = vpop.f32.mrb[0].mxu0
  %v746 = vadd.f32 %v665, %v745
  %v747 = vpop.f32.mrb[0].mxu0
  %v748 = vpop.f32.mrb[0].mxu0
  %v749 = vadd.f32 %v668, %v748
  %v750 = vpop.f32.mrb[0].mxu0
  %751 = vmatprep.mubr.bf16.mxu0 0
  %752 = vmatmul.mubr.bf16.gmra.mrb[0].mxu0 %v601
  %v753 = vpop.f32.mrb[0].mxu0
  %v754 = vadd.f32 %v673, %v753
  %v755 = vpop.f32.mrb[0].mxu0
  %v756 = vpop.f32.mrb[0].mxu0
  %v757 = vadd.f32 %v676, %v756
  %v758 = vpop.f32.mrb[0].mxu0
  %759 = vmatprep.mubr.bf16.mxu0 0
  %760 = vmatmul.mubr.bf16.gmra.mrb[0].mxu0 %v604
  %v761 = vpop.f32.mrb[0].mxu0
  %v762 = vadd.f32 %v681, %v761
  %v763 = vpop.f32.mrb[0].mxu0
  %v764 = vpop.f32.mrb[0].mxu0
  %v765 = vadd.f32 %v684, %v764
  %v766 = vpop.f32.mrb[0].mxu0
  %767 = vdwg.mxu0
  %v768 = vmax.f32 %v722, 0.0
  %v769 = vmax.f32 %v725, 0.0
  %v770 = vmax.f32 %v730, 0.0
  %v771 = vmax.f32 %v733, 0.0
  %v772 = vmax.f32 %v738, 0.0
  %v773 = vmax.f32 %v741, 0.0
  %v774 = vmax.f32 %v746, 0.0
  %v775 = vmax.f32 %v749, 0.0
  %v776 = vmax.f32 %v754, 0.0
  %v777 = vmax.f32 %v757, 0.0
  %v778 = vmax.f32 %v762, 0.0
  %v779 = vmax.f32 %v765, 0.0
  %v780 = vmax.f32 %v461, %v768
  %v781 = vmax.f32 %v462, %v769
  %v782 = vmax.f32 %v463, %v770
  %v783 = vmax.f32 %v464, %v771
  %v784 = vmax.f32 %v465, %v772
  %v785 = vmax.f32 %v466, %v773
  %v786 = vmax.f32 %v467, %v774
  %v787 = vmax.f32 %v468, %v775
  %v788 = vmax.f32 %v469, %v776
  %v789 = vmax.f32 %v470, %v777
  %v790 = vmax.f32 %v471, %v778
  %v791 = vmax.f32 %v472, %v779
  %s792 = scalar_lea.vmem %s0, 288
  %v793 = vld [vmem:[%s792] sm:$0xff]
  %v794 = vld [vmem:[%s792 + $0x8] sm:$0xf]
  %v795 = vld [vmem:[%s792 + $0xc] sm:$0xff]
  %v796 = vld [vmem:[%s792 + $0x14] sm:$0xf]
  %v797 = vld [vmem:[%s792 + $0x18] sm:$0xff]
  %v798 = vld [vmem:[%s792 + $0x20] sm:$0xf]
  %v799 = vld [vmem:[%s792 + $0x24] sm:$0xff]
  %v800 = vld [vmem:[%s792 + $0x2c] sm:$0xf]
  %v801 = vld [vmem:[%s792 + $0x30] sm:$0xff]
  %v802 = vld [vmem:[%s792 + $0x38] sm:$0xf]
  %v803 = vld [vmem:[%s792 + $0x3c] sm:$0xff]
  %v804 = vld [vmem:[%s792 + $0x44] sm:$0xf]
  %v805 = vld [vmem:[%s792 + $0x48] sm:$0xff]
  %v806 = vld [vmem:[%s792 + $0x50] sm:$0xf]
  %v807 = vld [vmem:[%s792 + $0x54] sm:$0xff]
  %v808 = vld [vmem:[%s792 + $0x5c] sm:$0xf]
  %v809 = vld [vmem:[%s792 + $0x60] sm:$0xff]
  %v810 = vld [vmem:[%s792 + $0x68] sm:$0xf]
  %v811 = vld [vmem:[%s792 + $0x6c] sm:$0xff]
  %v812 = vld [vmem:[%s792 + $0x74] sm:$0xf]
  %v813 = vld [vmem:[%s792 + $0x78] sm:$0xff]
  %v814 = vld [vmem:[%s792 + $0x80] sm:$0xf]
  %v815 = vld [vmem:[%s792 + $0x84] sm:$0xff]
  %v816 = vld [vmem:[%s792 + $0x8c] sm:$0xf]
  %v841 = vunpack.c.l.b16 %v793
  %v842 = vunpack.c.h.b16 %v793
  %v843 = vunpack.c.l.b16 %v794
  %v844 = vunpack.c.l.b16 %v795
  %v845 = vunpack.c.h.b16 %v795
  %v846 = vunpack.c.l.b16 %v796
  %v847 = vunpack.c.l.b16 %v797
  %v848 = vunpack.c.h.b16 %v797
  %v849 = vunpack.c.l.b16 %v798
  %v850 = vunpack.c.l.b16 %v799
  %v851 = vunpack.c.h.b16 %v799
  %v852 = vunpack.c.l.b16 %v800
  %v853 = vunpack.c.l.b16 %v801
  %v854 = vunpack.c.h.b16 %v801
  %v855 = vunpack.c.l.b16 %v802
  %v856 = vunpack.c.l.b16 %v803
  %v857 = vunpack.c.h.b16 %v803
  %v858 = vunpack.c.l.b16 %v804
  %v859 = vunpack.c.l.b16 %v805
  %v860 = vunpack.c.h.b16 %v805
  %v861 = vunpack.c.l.b16 %v806
  %v862 = vunpack.c.l.b16 %v807
  %v863 = vunpack.c.h.b16 %v807
  %v864 = vunpack.c.l.b16 %v808
  %v865 = vunpack.c.l.b16 %v809
  %v866 = vunpack.c.h.b16 %v809
  %v867 = vunpack.c.l.b16 %v810
  %v868 = vunpack.c.l.b16 %v811
  %v869 = vunpack.c.h.b16 %v811
  %v870 = vunpack.c.l.b16 %v812
  %v871 = vunpack.c.l.b16 %v813
  %v872 = vunpack.c.h.b16 %v813
  %v873 = vunpack.c.l.b16 %v814
  %v874 = vunpack.c.l.b16 %v815
  %v875 = vunpack.c.h.b16 %v815
  %v876 = vunpack.c.l.b16 %v816
  %v877 = vpack.c.b16 %v844, %v841
  %v878 = vpack.c.b16 %v845, %v842
  %v879 = vpack.c.b16 %v846, %v843
  %v880 = vpack.c.b16 %v850, %v847
  %v881 = vpack.c.b16 %v851, %v848
  %v882 = vpack.c.b16 %v852, %v849
  %v883 = vpack.c.b16 %v856, %v853
  %v884 = vpack.c.b16 %v857, %v854
  %v885 = vpack.c.b16 %v858, %v855
  %v886 = vpack.c.b16 %v862, %v859
  %v887 = vpack.c.b16 %v863, %v860
  %v888 = vpack.c.b16 %v864, %v861
  %v889 = vpack.c.b16 %v868, %v865
  %v890 = vpack.c.b16 %v869, %v866
  %v891 = vpack.c.b16 %v870, %v867
  %v892 = vpack.c.b16 %v874, %v871
  %v893 = vpack.c.b16 %v875, %v872
  %v894 = vpack.c.b16 %v876, %v873
  %v908 = vsel %vm280, %v879, 0
  %v911 = vsel %vm280, %v882, 0
  %v914 = vsel %vm280, %v885, 0
  %v917 = vsel %vm280, %v888, 0
  %v920 = vsel %vm280, %v891, 0
  %v923 = vsel %vm280, %v894, 0
  %925 = vmatprep.subr.bf16.mxu0 0
  %926 = vmatpush1.bf16.msra.mxu0 %v244
  %927 = vmatprep.subr.bf16.mxu0 0
  %928 = vmatpush1.bf16.msra.mxu0 %v245
  %929 = vmatprep.subr.bf16.mxu0 0
  %930 = vmatpush1.bf16.msra.mxu0 %v246
  %931 = vmatprep.subr.bf16.mxu0 0
  %932 = vmatpush1.bf16.msra.mxu0 %v247
  %933 = vmatprep.subr.bf16.mxu0 0
  %934 = vmatpush1.bf16.msra.mxu0 %v248
  %935 = vmatprep.subr.bf16.mxu0 0
  %936 = vmatpush1.bf16.msra.mxu0 %v249
  %937 = vmatprep.subr.bf16.mxu0 0
  %938 = vmatpush1.bf16.msra.mxu0 %v250
  %939 = vmatprep.subr.bf16.mxu0 0
  %940 = vmatpush1.bf16.msra.mxu0 %v251
  %941 = vmatprep.subr.bf16.mxu0 0
  %942 = vmatpush1.bf16.msra.mxu0 %v252
  %943 = vmatprep.subr.bf16.mxu0 0
  %944 = vmatpush1.bf16.msra.mxu0 %v253
  %945 = vmatprep.subr.bf16.mxu0 0
  %946 = vmatpush1.bf16.msra.mxu0 %v254
  %947 = vmatprep.subr.bf16.mxu0 0
  %948 = vmatpush1.bf16.msra.mxu0 %v255
  %949 = vmatprep.subr.bf16.mxu0 0
  %950 = vmatpush1.bf16.msra.mxu0 %v256
  %951 = vmatprep.subr.bf16.mxu0 0
  %952 = vmatpush1.bf16.msra.mxu0 %v257
  %953 = vmatprep.subr.bf16.mxu0 0
  %954 = vmatpush1.bf16.msra.mxu0 %v258
  %955 = vmatprep.subr.bf16.mxu0 0
  %956 = vmatpush1.bf16.msra.mxu0 %v259
  %957 = vmatprep.mubr.bf16.mxu0 %v878
  %958 = vmatmul.mubr.bf16.gmra.mrb[0].mxu0 %v877
  %v959 = vpop.f32.mrb[0].mxu0
  %v960 = vadd.f32 %v80, %v959
  %v961 = vpop.f32.mrb[0].mxu0
  %v962 = vpop.f32.mrb[0].mxu0
  %v963 = vadd.f32 %v80, %v962
  %v964 = vpop.f32.mrb[0].mxu0
  %965 = vmatprep.mubr.bf16.mxu0 %v881
  %966 = vmatmul.mubr.bf16.gmra.mrb[0].mxu0 %v880
  %v967 = vpop.f32.mrb[0].mxu0
  %v968 = vadd.f32 %v80, %v967
  %v969 = vpop.f32.mrb[0].mxu0
  %v970 = vpop.f32.mrb[0].mxu0
  %v971 = vadd.f32 %v80, %v970
  %v972 = vpop.f32.mrb[0].mxu0
  %973 = vmatprep.mubr.bf16.mxu0 %v884
  %974 = vmatmul.mubr.bf16.gmra.mrb[0].mxu0 %v883
  %v975 = vpop.f32.mrb[0].mxu0
  %v976 = vadd.f32 %v80, %v975
  %v977 = vpop.f32.mrb[0].mxu0
  %v978 = vpop.f32.mrb[0].mxu0
  %v979 = vadd.f32 %v80, %v978
  %v980 = vpop.f32.mrb[0].mxu0
  %981 = vmatprep.mubr.bf16.mxu0 %v887
  %982 = vmatmul.mubr.bf16.gmra.mrb[0].mxu0 %v886
  %v983 = vpop.f32.mrb[0].mxu0
  %v984 = vadd.f32 %v80, %v983
  %v985 = vpop.f32.mrb[0].mxu0
  %v986 = vpop.f32.mrb[0].mxu0
  %v987 = vadd.f32 %v80, %v986
  %v988 = vpop.f32.mrb[0].mxu0
  %989 = vmatprep.mubr.bf16.mxu0 %v890
  %990 = vmatmul.mubr.bf16.gmra.mrb[0].mxu0 %v889
  %v991 = vpop.f32.mrb[0].mxu0
  %v992 = vadd.f32 %v80, %v991
  %v993 = vpop.f32.mrb[0].mxu0
  %v994 = vpop.f32.mrb[0].mxu0
  %v995 = vadd.f32 %v80, %v994
  %v996 = vpop.f32.mrb[0].mxu0
  %997 = vmatprep.mubr.bf16.mxu0 %v893
  %998 = vmatmul.mubr.bf16.gmra.mrb[0].mxu0 %v892
  %v999 = vpop.f32.mrb[0].mxu0
  %v1000 = vadd.f32 %v80, %v999
  %v1001 = vpop.f32.mrb[0].mxu0
  %v1002 = vpop.f32.mrb[0].mxu0
  %v1003 = vadd.f32 %v80, %v1002
  %v1004 = vpop.f32.mrb[0].mxu0
  %1005 = vdwg.mxu0
  %1006 = vmatprep.subr.bf16.mxu0 0
  %1007 = vmatpush1.bf16.msra.mxu0 %v260
  %1008 = vmatprep.subr.bf16.mxu0 0
  %1009 = vmatpush1.bf16.msra.mxu0 %v261
  %1010 = vmatprep.subr.bf16.mxu0 0
  %1011 = vmatpush1.bf16.msra.mxu0 0
  %1012 = vmatprep.subr.bf16.mxu0 0
  %1013 = vmatpush1.bf16.msra.mxu0 0
  %1014 = vmatprep.subr.bf16.mxu0 0
  %1015 = vmatpush1.bf16.msra.mxu0 0
  %1016 = vmatprep.subr.bf16.mxu0 0
  %1017 = vmatpush1.bf16.msra.mxu0 0
  %1018 = vmatprep.subr.bf16.mxu0 0
  %1019 = vmatpush1.bf16.msra.mxu0 0
  %1020 = vmatprep.subr.bf16.mxu0 0
  %1021 = vmatpush1.bf16.msra.mxu0 0
  %1022 = vmatprep.subr.bf16.mxu0 0
  %1023 = vmatpush1.bf16.msra.mxu0 0
  %1024 = vmatprep.subr.bf16.mxu0 0
  %1025 = vmatpush1.bf16.msra.mxu0 0
  %1026 = vmatprep.subr.bf16.mxu0 0
  %1027 = vmatpush1.bf16.msra.mxu0 0
  %1028 = vmatprep.subr.bf16.mxu0 0
  %1029 = vmatpush1.bf16.msra.mxu0 0
  %1030 = vmatprep.subr.bf16.mxu0 0
  %1031 = vmatpush1.bf16.msra.mxu0 0
  %1032 = vmatprep.subr.bf16.mxu0 0
  %1033 = vmatpush1.bf16.msra.mxu0 0
  %1034 = vmatprep.subr.bf16.mxu0 0
  %1035 = vmatpush1.bf16.msra.mxu0 0
  %1036 = vmatprep.subr.bf16.mxu0 0
  %1037 = vmatpush1.bf16.msra.mxu0 0
  %1038 = vmatprep.mubr.bf16.mxu0 0
  %1039 = vmatmul.mubr.bf16.gmra.mrb[0].mxu0 %v908
  %v1040 = vpop.f32.mrb[0].mxu0
  %v1041 = vadd.f32 %v960, %v1040
  %v1042 = vpop.f32.mrb[0].mxu0
  %v1043 = vpop.f32.mrb[0].mxu0
  %v1044 = vadd.f32 %v963, %v1043
  %v1045 = vpop.f32.mrb[0].mxu0
  %1046 = vmatprep.mubr.bf16.mxu0 0
  %1047 = vmatmul.mubr.bf16.gmra.mrb[0].mxu0 %v911
  %v1048 = vpop.f32.mrb[0].mxu0
  %v1049 = vadd.f32 %v968, %v1048
  %v1050 = vpop.f32.mrb[0].mxu0
  %v1051 = vpop.f32.mrb[0].mxu0
  %v1052 = vadd.f32 %v971, %v1051
  %v1053 = vpop.f32.mrb[0].mxu0
  %1054 = vmatprep.mubr.bf16.mxu0 0
  %1055 = vmatmul.mubr.bf16.gmra.mrb[0].mxu0 %v914
  %v1056 = vpop.f32.mrb[0].mxu0
  %v1057 = vadd.f32 %v976, %v1056
  %v1058 = vpop.f32.mrb[0].mxu0
  %v1059 = vpop.f32.mrb[0].mxu0
  %v1060 = vadd.f32 %v979, %v1059
  %v1061 = vpop.f32.mrb[0].mxu0
  %1062 = vmatprep.mubr.bf16.mxu0 0
  %1063 = vmatmul.mubr.bf16.gmra.mrb[0].mxu0 %v917
  %v1064 = vpop.f32.mrb[0].mxu0
  %v1065 = vadd.f32 %v984, %v1064
  %v1066 = vpop.f32.mrb[0].mxu0
  %v1067 = vpop.f32.mrb[0].mxu0
  %v1068 = vadd.f32 %v987, %v1067
  %v1069 = vpop.f32.mrb[0].mxu0
  %1070 = vmatprep.mubr.bf16.mxu0 0
  %1071 = vmatmul.mubr.bf16.gmra.mrb[0].mxu0 %v920
  %v1072 = vpop.f32.mrb[0].mxu0
  %v1073 = vadd.f32 %v992, %v1072
  %v1074 = vpop.f32.mrb[0].mxu0
  %v1075 = vpop.f32.mrb[0].mxu0
  %v1076 = vadd.f32 %v995, %v1075
  %v1077 = vpop.f32.mrb[0].mxu0
  %1078 = vmatprep.mubr.bf16.mxu0 0
  %1079 = vmatmul.mubr.bf16.gmra.mrb[0].mxu0 %v923
  %v1080 = vpop.f32.mrb[0].mxu0
  %v1081 = vadd.f32 %v1000, %v1080
  %v1082 = vpop.f32.mrb[0].mxu0
  %v1083 = vpop.f32.mrb[0].mxu0
  %v1084 = vadd.f32 %v1003, %v1083
  %v1085 = vpop.f32.mrb[0].mxu0
  %1086 = vdwg.mxu0
  %v1087 = vmax.f32 %v1041, 0.0
  %v1088 = vmax.f32 %v1044, 0.0
  %v1089 = vmax.f32 %v1049, 0.0
  %v1090 = vmax.f32 %v1052, 0.0
  %v1091 = vmax.f32 %v1057, 0.0
  %v1092 = vmax.f32 %v1060, 0.0
  %v1093 = vmax.f32 %v1065, 0.0
  %v1094 = vmax.f32 %v1068, 0.0
  %v1095 = vmax.f32 %v1073, 0.0
  %v1096 = vmax.f32 %v1076, 0.0
  %v1097 = vmax.f32 %v1081, 0.0
  %v1098 = vmax.f32 %v1084, 0.0
  %s1099 = scalar_lea.vmem %s0, 432
  %v1100 = vld [vmem:[%s1099] sm:$0xff]
  %v1101 = vld [vmem:[%s1099 + $0x8] sm:$0xf]
  %v1102 = vld [vmem:[%s1099 + $0xc] sm:$0xff]
  %v1103 = vld [vmem:[%s1099 + $0x14] sm:$0xf]
  %v1104 = vld [vmem:[%s1099 + $0x18] sm:$0xff]
  %v1105 = vld [vmem:[%s1099 + $0x20] sm:$0xf]
  %v1106 = vld [vmem:[%s1099 + $0x24] sm:$0xff]
  %v1107 = vld [vmem:[%s1099 + $0x2c] sm:$0xf]
  %v1108 = vld [vmem:[%s1099 + $0x30] sm:$0xff]
  %v1109 = vld [vmem:[%s1099 + $0x38] sm:$0xf]
  %v1110 = vld [vmem:[%s1099 + $0x3c] sm:$0xff]
  %v1111 = vld [vmem:[%s1099 + $0x44] sm:$0xf]
  %v1112 = vld [vmem:[%s1099 + $0x48] sm:$0xff]
  %v1113 = vld [vmem:[%s1099 + $0x50] sm:$0xf]
  %v1114 = vld [vmem:[%s1099 + $0x54] sm:$0xff]
  %v1115 = vld [vmem:[%s1099 + $0x5c] sm:$0xf]
  %v1116 = vld [vmem:[%s1099 + $0x60] sm:$0xff]
  %v1117 = vld [vmem:[%s1099 + $0x68] sm:$0xf]
  %v1118 = vld [vmem:[%s1099 + $0x6c] sm:$0xff]
  %v1119 = vld [vmem:[%s1099 + $0x74] sm:$0xf]
  %v1120 = vld [vmem:[%s1099 + $0x78] sm:$0xff]
  %v1121 = vld [vmem:[%s1099 + $0x80] sm:$0xf]
  %v1122 = vld [vmem:[%s1099 + $0x84] sm:$0xff]
  %v1123 = vld [vmem:[%s1099 + $0x8c] sm:$0xf]
  %v1148 = vunpack.c.l.b16 %v1100
  %v1149 = vunpack.c.h.b16 %v1100
  %v1150 = vunpack.c.l.b16 %v1101
  %v1151 = vunpack.c.l.b16 %v1102
  %v1152 = vunpack.c.h.b16 %v1102
  %v1153 = vunpack.c.l.b16 %v1103
  %v1154 = vunpack.c.l.b16 %v1104
  %v1155 = vunpack.c.h.b16 %v1104
  %v1156 = vunpack.c.l.b16 %v1105
  %v1157 = vunpack.c.l.b16 %v1106
  %v1158 = vunpack.c.h.b16 %v1106
  %v1159 = vunpack.c.l.b16 %v1107
  %v1160 = vunpack.c.l.b16 %v1108
  %v1161 = vunpack.c.h.b16 %v1108
  %v1162 = vunpack.c.l.b16 %v1109
  %v1163 = vunpack.c.l.b16 %v1110
  %v1164 = vunpack.c.h.b16 %v1110
  %v1165 = vunpack.c.l.b16 %v1111
  %v1166 = vunpack.c.l.b16 %v1112
  %v1167 = vunpack.c.h.b16 %v1112
  %v1168 = vunpack.c.l.b16 %v1113
  %v1169 = vunpack.c.l.b16 %v1114
  %v1170 = vunpack.c.h.b16 %v1114
  %v1171 = vunpack.c.l.b16 %v1115
  %v1172 = vunpack.c.l.b16 %v1116
  %v1173 = vunpack.c.h.b16 %v1116
  %v1174 = vunpack.c.l.b16 %v1117
  %v1175 = vunpack.c.l.b16 %v1118
  %v1176 = vunpack.c.h.b16 %v1118
  %v1177 = vunpack.c.l.b16 %v1119
  %v1178 = vunpack.c.l.b16 %v1120
  %v1179 = vunpack.c.h.b16 %v1120
  %v1180 = vunpack.c.l.b16 %v1121
  %v1181 = vunpack.c.l.b16 %v1122
  %v1182 = vunpack.c.h.b16 %v1122
  %v1183 = vunpack.c.l.b16 %v1123
  %v1184 = vpack.c.b16 %v1151, %v1148
  %v1185 = vpack.c.b16 %v1152, %v1149
  %v1186 = vpack.c.b16 %v1153, %v1150
  %v1187 = vpack.c.b16 %v1157, %v1154
  %v1188 = vpack.c.b16 %v1158, %v1155
  %v1189 = vpack.c.b16 %v1159, %v1156
  %v1190 = vpack.c.b16 %v1163, %v1160
  %v1191 = vpack.c.b16 %v1164, %v1161
  %v1192 = vpack.c.b16 %v1165, %v1162
  %v1193 = vpack.c.b16 %v1169, %v1166
  %v1194 = vpack.c.b16 %v1170, %v1167
  %v1195 = vpack.c.b16 %v1171, %v1168
  %v1196 = vpack.c.b16 %v1175, %v1172
  %v1197 = vpack.c.b16 %v1176, %v1173
  %v1198 = vpack.c.b16 %v1177, %v1174
  %v1199 = vpack.c.b16 %v1181, %v1178
  %v1200 = vpack.c.b16 %v1182, %v1179
  %v1201 = vpack.c.b16 %v1183, %v1180
  %v1215 = vsel %vm280, %v1186, 0
  %v1218 = vsel %vm280, %v1189, 0
  %v1221 = vsel %vm280, %v1192, 0
  %v1224 = vsel %vm280, %v1195, 0
  %v1227 = vsel %vm280, %v1198, 0
  %v1230 = vsel %vm280, %v1201, 0
  %1232 = vmatprep.subr.bf16.mxu0 0
  %1233 = vmatpush1.bf16.msra.mxu0 %v244
  %1234 = vmatprep.subr.bf16.mxu0 0
  %1235 = vmatpush1.bf16.msra.mxu0 %v245
  %1236 = vmatprep.subr.bf16.mxu0 0
  %1237 = vmatpush1.bf16.msra.mxu0 %v246
  %1238 = vmatprep.subr.bf16.mxu0 0
  %1239 = vmatpush1.bf16.msra.mxu0 %v247
  %1240 = vmatprep.subr.bf16.mxu0 0
  %1241 = vmatpush1.bf16.msra.mxu0 %v248
  %1242 = vmatprep.subr.bf16.mxu0 0
  %1243 = vmatpush1.bf16.msra.mxu0 %v249
  %1244 = vmatprep.subr.bf16.mxu0 0
  %1245 = vmatpush1.bf16.msra.mxu0 %v250
  %1246 = vmatprep.subr.bf16.mxu0 0
  %1247 = vmatpush1.bf16.msra.mxu0 %v251
  %1248 = vmatprep.subr.bf16.mxu0 0
  %1249 = vmatpush1.bf16.msra.mxu0 %v252
  %1250 = vmatprep.subr.bf16.mxu0 0
  %1251 = vmatpush1.bf16.msra.mxu0 %v253
  %1252 = vmatprep.subr.bf16.mxu0 0
  %1253 = vmatpush1.bf16.msra.mxu0 %v254
  %1254 = vmatprep.subr.bf16.mxu0 0
  %1255 = vmatpush1.bf16.msra.mxu0 %v255
  %1256 = vmatprep.subr.bf16.mxu0 0
  %1257 = vmatpush1.bf16.msra.mxu0 %v256
  %1258 = vmatprep.subr.bf16.mxu0 0
  %1259 = vmatpush1.bf16.msra.mxu0 %v257
  %1260 = vmatprep.subr.bf16.mxu0 0
  %1261 = vmatpush1.bf16.msra.mxu0 %v258
  %1262 = vmatprep.subr.bf16.mxu0 0
  %1263 = vmatpush1.bf16.msra.mxu0 %v259
  %1264 = vmatprep.mubr.bf16.mxu0 %v1185
  %1265 = vmatmul.mubr.bf16.gmra.mrb[0].mxu0 %v1184
  %v1266 = vpop.f32.mrb[0].mxu0
  %v1267 = vadd.f32 %v80, %v1266
  %v1268 = vpop.f32.mrb[0].mxu0
  %v1269 = vpop.f32.mrb[0].mxu0
  %v1270 = vadd.f32 %v80, %v1269
  %v1271 = vpop.f32.mrb[0].mxu0
  %1272 = vmatprep.mubr.bf16.mxu0 %v1188
  %1273 = vmatmul.mubr.bf16.gmra.mrb[0].mxu0 %v1187
  %v1274 = vpop.f32.mrb[0].mxu0
  %v1275 = vadd.f32 %v80, %v1274
  %v1276 = vpop.f32.mrb[0].mxu0
  %v1277 = vpop.f32.mrb[0].mxu0
  %v1278 = vadd.f32 %v80, %v1277
  %v1279 = vpop.f32.mrb[0].mxu0
  %1280 = vmatprep.mubr.bf16.mxu0 %v1191
  %1281 = vmatmul.mubr.bf16.gmra.mrb[0].mxu0 %v1190
  %v1282 = vpop.f32.mrb[0].mxu0
  %v1283 = vadd.f32 %v80, %v1282
  %v1284 = vpop.f32.mrb[0].mxu0
  %v1285 = vpop.f32.mrb[0].mxu0
  %v1286 = vadd.f32 %v80, %v1285
  %v1287 = vpop.f32.mrb[0].mxu0
  %1288 = vmatprep.mubr.bf16.mxu0 %v1194
  %1289 = vmatmul.mubr.bf16.gmra.mrb[0].mxu0 %v1193
  %v1290 = vpop.f32.mrb[0].mxu0
  %v1291 = vadd.f32 %v80, %v1290
  %v1292 = vpop.f32.mrb[0].mxu0
  %v1293 = vpop.f32.mrb[0].mxu0
  %v1294 = vadd.f32 %v80, %v1293
  %v1295 = vpop.f32.mrb[0].mxu0
  %1296 = vmatprep.mubr.bf16.mxu0 %v1197
  %1297 = vmatmul.mubr.bf16.gmra.mrb[0].mxu0 %v1196
  %v1298 = vpop.f32.mrb[0].mxu0
  %v1299 = vadd.f32 %v80, %v1298
  %v1300 = vpop.f32.mrb[0].mxu0
  %v1301 = vpop.f32.mrb[0].mxu0
  %v1302 = vadd.f32 %v80, %v1301
  %v1303 = vpop.f32.mrb[0].mxu0
  %1304 = vmatprep.mubr.bf16.mxu0 %v1200
  %1305 = vmatmul.mubr.bf16.gmra.mrb[0].mxu0 %v1199
  %v1306 = vpop.f32.mrb[0].mxu0
  %v1307 = vadd.f32 %v80, %v1306
  %v1308 = vpop.f32.mrb[0].mxu0
  %v1309 = vpop.f32.mrb[0].mxu0
  %v1310 = vadd.f32 %v80, %v1309
  %v1311 = vpop.f32.mrb[0].mxu0
  %1312 = vdwg.mxu0
  %1313 = vmatprep.subr.bf16.mxu0 0
  %1314 = vmatpush1.bf16.msra.mxu0 %v260
  %1315 = vmatprep.subr.bf16.mxu0 0
  %1316 = vmatpush1.bf16.msra.mxu0 %v261
  %1317 = vmatprep.subr.bf16.mxu0 0
  %1318 = vmatpush1.bf16.msra.mxu0 0
  %1319 = vmatprep.subr.bf16.mxu0 0
  %1320 = vmatpush1.bf16.msra.mxu0 0
  %1321 = vmatprep.subr.bf16.mxu0 0
  %1322 = vmatpush1.bf16.msra.mxu0 0
  %1323 = vmatprep.subr.bf16.mxu0 0
  %1324 = vmatpush1.bf16.msra.mxu0 0
  %1325 = vmatprep.subr.bf16.mxu0 0
  %1326 = vmatpush1.bf16.msra.mxu0 0
  %1327 = vmatprep.subr.bf16.mxu0 0
  %1328 = vmatpush1.bf16.msra.mxu0 0
  %1329 = vmatprep.subr.bf16.mxu0 0
  %1330 = vmatpush1.bf16.msra.mxu0 0
  %1331 = vmatprep.subr.bf16.mxu0 0
  %1332 = vmatpush1.bf16.msra.mxu0 0
  %1333 = vmatprep.subr.bf16.mxu0 0
  %1334 = vmatpush1.bf16.msra.mxu0 0
  %1335 = vmatprep.subr.bf16.mxu0 0
  %1336 = vmatpush1.bf16.msra.mxu0 0
  %1337 = vmatprep.subr.bf16.mxu0 0
  %1338 = vmatpush1.bf16.msra.mxu0 0
  %1339 = vmatprep.subr.bf16.mxu0 0
  %1340 = vmatpush1.bf16.msra.mxu0 0
  %1341 = vmatprep.subr.bf16.mxu0 0
  %1342 = vmatpush1.bf16.msra.mxu0 0
  %1343 = vmatprep.subr.bf16.mxu0 0
  %1344 = vmatpush1.bf16.msra.mxu0 0
  %1345 = vmatprep.mubr.bf16.mxu0 0
  %1346 = vmatmul.mubr.bf16.gmra.mrb[0].mxu0 %v1215
  %v1347 = vpop.f32.mrb[0].mxu0
  %v1348 = vadd.f32 %v1267, %v1347
  %v1349 = vpop.f32.mrb[0].mxu0
  %v1350 = vpop.f32.mrb[0].mxu0
  %v1351 = vadd.f32 %v1270, %v1350
  %v1352 = vpop.f32.mrb[0].mxu0
  %1353 = vmatprep.mubr.bf16.mxu0 0
  %1354 = vmatmul.mubr.bf16.gmra.mrb[0].mxu0 %v1218
  %v1355 = vpop.f32.mrb[0].mxu0
  %v1356 = vadd.f32 %v1275, %v1355
  %v1357 = vpop.f32.mrb[0].mxu0
  %v1358 = vpop.f32.mrb[0].mxu0
  %v1359 = vadd.f32 %v1278, %v1358
  %v1360 = vpop.f32.mrb[0].mxu0
  %1361 = vmatprep.mubr.bf16.mxu0 0
  %1362 = vmatmul.mubr.bf16.gmra.mrb[0].mxu0 %v1221
  %v1363 = vpop.f32.mrb[0].mxu0
  %v1364 = vadd.f32 %v1283, %v1363
  %v1365 = vpop.f32.mrb[0].mxu0
  %v1366 = vpop.f32.mrb[0].mxu0
  %v1367 = vadd.f32 %v1286, %v1366
  %v1368 = vpop.f32.mrb[0].mxu0
  %1369 = vmatprep.mubr.bf16.mxu0 0
  %1370 = vmatmul.mubr.bf16.gmra.mrb[0].mxu0 %v1224
  %v1371 = vpop.f32.mrb[0].mxu0
  %v1372 = vadd.f32 %v1291, %v1371
  %v1373 = vpop.f32.mrb[0].mxu0
  %v1374 = vpop.f32.mrb[0].mxu0
  %v1375 = vadd.f32 %v1294, %v1374
  %v1376 = vpop.f32.mrb[0].mxu0
  %1377 = vmatprep.mubr.bf16.mxu0 0
  %1378 = vmatmul.mubr.bf16.gmra.mrb[0].mxu0 %v1227
  %v1379 = vpop.f32.mrb[0].mxu0
  %v1380 = vadd.f32 %v1299, %v1379
  %v1381 = vpop.f32.mrb[0].mxu0
  %v1382 = vpop.f32.mrb[0].mxu0
  %v1383 = vadd.f32 %v1302, %v1382
  %v1384 = vpop.f32.mrb[0].mxu0
  %1385 = vmatprep.mubr.bf16.mxu0 0
  %1386 = vmatmul.mubr.bf16.gmra.mrb[0].mxu0 %v1230
  %v1387 = vpop.f32.mrb[0].mxu0
  %v1388 = vadd.f32 %v1307, %v1387
  %v1389 = vpop.f32.mrb[0].mxu0
  %v1390 = vpop.f32.mrb[0].mxu0
  %v1391 = vadd.f32 %v1310, %v1390
  %v1392 = vpop.f32.mrb[0].mxu0
  %1393 = vdwg.mxu0
  %v1394 = vmax.f32 %v1348, 0.0
  %v1395 = vmax.f32 %v1351, 0.0
  %v1396 = vmax.f32 %v1356, 0.0
  %v1397 = vmax.f32 %v1359, 0.0
  %v1398 = vmax.f32 %v1364, 0.0
  %v1399 = vmax.f32 %v1367, 0.0
  %v1400 = vmax.f32 %v1372, 0.0
  %v1401 = vmax.f32 %v1375, 0.0
  %v1402 = vmax.f32 %v1380, 0.0
  %v1403 = vmax.f32 %v1383, 0.0
  %v1404 = vmax.f32 %v1388, 0.0
  %v1405 = vmax.f32 %v1391, 0.0
  %v1406 = vmax.f32 %v1087, %v1394
  %v1407 = vmax.f32 %v1088, %v1395
  %v1408 = vmax.f32 %v1089, %v1396
  %v1409 = vmax.f32 %v1090, %v1397
  %v1410 = vmax.f32 %v1091, %v1398
  %v1411 = vmax.f32 %v1092, %v1399
  %v1412 = vmax.f32 %v1093, %v1400
  %v1413 = vmax.f32 %v1094, %v1401
  %v1414 = vmax.f32 %v1095, %v1402
  %v1415 = vmax.f32 %v1096, %v1403
  %v1416 = vmax.f32 %v1097, %v1404
  %v1417 = vmax.f32 %v1098, %v1405
  %v1418 = vmax.f32 %v780, %v1406
  %v1419 = vmax.f32 %v781, %v1407
  %v1420 = vmax.f32 %v782, %v1408
  %v1421 = vmax.f32 %v783, %v1409
  %v1422 = vmax.f32 %v784, %v1410
  %v1423 = vmax.f32 %v785, %v1411
  %v1424 = vmax.f32 %v786, %v1412
  %v1425 = vmax.f32 %v787, %v1413
  %v1426 = vmax.f32 %v788, %v1414
  %v1427 = vmax.f32 %v789, %v1415
  %v1428 = vmax.f32 %v790, %v1416
  %v1429 = vmax.f32 %v791, %v1417
  %v1430 = vpack.c.bf16 %v1419, %v1418
  %v1431 = vpack.c.bf16 %v1421, %v1420
  %v1432 = vpack.c.bf16 %v1423, %v1422
  %v1433 = vpack.c.bf16 %v1425, %v1424
  %v1434 = vpack.c.bf16 %v1427, %v1426
  %v1435 = vpack.c.bf16 %v1429, %v1428
  %v1442 = vunpack.c.l.b16 %v1430
  %v1443 = vunpack.c.h.b16 %v1430
  %v1444 = vunpack.c.l.b16 %v1431
  %v1445 = vunpack.c.h.b16 %v1431
  %v1446 = vunpack.c.l.b16 %v1432
  %v1447 = vunpack.c.h.b16 %v1432
  %v1448 = vunpack.c.l.b16 %v1433
  %v1449 = vunpack.c.h.b16 %v1433
  %v1450 = vunpack.c.l.b16 %v1434
  %v1451 = vunpack.c.h.b16 %v1434
  %v1452 = vunpack.c.l.b16 %v1435
  %v1453 = vunpack.c.h.b16 %v1435
  %v1454 = vpack.c.b16 %v1442, %v1442
  %v1455 = vpack.c.b16 %v1443, %v1443
  %v1456 = vpack.c.b16 %v1444, %v1444
  %v1457 = vpack.c.b16 %v1445, %v1445
  %v1458 = vpack.c.b16 %v1446, %v1446
  %v1459 = vpack.c.b16 %v1447, %v1447
  %v1460 = vpack.c.b16 %v1448, %v1448
  %v1461 = vpack.c.b16 %v1449, %v1449
  %v1462 = vpack.c.b16 %v1450, %v1450
  %v1463 = vpack.c.b16 %v1451, %v1451
  %v1464 = vpack.c.b16 %v1452, %v1452
  %v1465 = vpack.c.b16 %v1453, %v1453
  %vm1478 = vcmask 519168
  %1479 = vst.msk [vmem:[%s3] sm:$0xf] %vm1478, %v1454
  %1480 = vst.msk [vmem:[%s3 + $0x4] sm:$0xf] %vm1478, %v1455
  %1481 = vst.msk [vmem:[%s3 + $0x8] sm:$0xf] %vm1478, %v1456
  %1482 = vst.msk [vmem:[%s3 + $0xc] sm:$0xf] %vm1478, %v1457
  %1483 = vst.msk [vmem:[%s3 + $0x10] sm:$0xf] %vm1478, %v1458
  %1484 = vst.msk [vmem:[%s3 + $0x14] sm:$0xf] %vm1478, %v1459
  %1485 = vst.msk [vmem:[%s3 + $0x18] sm:$0xf] %vm1478, %v1460
  %1486 = vst.msk [vmem:[%s3 + $0x1c] sm:$0xf] %vm1478, %v1461
  %1487 = vst.msk [vmem:[%s3 + $0x20] sm:$0xf] %vm1478, %v1462
  %1488 = vst.msk [vmem:[%s3 + $0x24] sm:$0xf] %vm1478, %v1463
  %1489 = vst.msk [vmem:[%s3 + $0x28] sm:$0xf] %vm1478, %v1464
  %1490 = vst.msk [vmem:[%s3 + $0x2c] sm:$0xf] %vm1478, %v1465
  // Predicated region
  $region14: #{crnn_forward.5} parent=0 // pred_check
    _
  $region15: #{crnn_forward.5} parent=0 // pred_check_branch
    %1492 = sbr.rel (0) target = $region17
  $region16: #{crnn_forward.5} parent=0 // pred_region
    _
  $region17: #{crnn_forward.5} parent=0 // pred_fallthru
    _
  // Predicated region
  $region18: #{crnn_forward.5} parent=0 // pred_check
    _
  $region19: #{crnn_forward.5} parent=0 // pred_check_branch
    %1494 = sbr.rel (0) target = $region21
  $region20: #{crnn_forward.5} parent=0 // pred_region
    _
  $region21: #{crnn_forward.5} parent=0 // pred_fallthru
    _

// kernel: crnn_forward.6
$region0: #{crnn_forward.6}
  #allocation0 [shape = 'u32[]', space=smem, size = 0x4, offset = 0x4, fixed_abs, tag = 'smem constant byte address 0x4 - core index']
  #allocation1 [shape = 'u32[144,128]{1,0:T(1,128)}', space=vmem, size = 0x12000, scoped, tag = 'internal scratch']
  %s0 = inlined_call_operand.vmem [shape: bf16[96,576], index: 0, kind: input, shape index: {}]
  %s1 = inlined_call_operand.vmem [shape: bf16[576,128], index: 1, kind: input, shape index: {}]
  %s2 = inlined_call_operand.vmem [shape: f32[1,128], index: 2, kind: input, shape index: {}]
  %s3 = inlined_call_operand.vmem [shape: bf16[96,128], index: 3, kind: output, shape index: {}]
  %s4 = sld [smem:[#allocation0]]
  $region22: #{crnn_forward.6} parent=0
    _
  %s6 = ssub.s32 1, %s4
  %s7 = scalar_select 0, %s6, %s4
  // Predicated region
  $region2: #{crnn_forward.6} parent=0 // pred_check
    _
  $region3: #{crnn_forward.6} parent=0 // pred_check_branch
    %9 = sbr.rel (0) target = $region5
  $region4: #{crnn_forward.6} parent=0 // pred_region
    _
  $region5: #{crnn_forward.6} parent=0 // pred_fallthru
    _
  // Predicated region
  $region6: #{crnn_forward.6} parent=0 // pred_check
    _
  $region7: #{crnn_forward.6} parent=0 // pred_check_branch
    %11 = sbr.rel (0) target = $region9
  $region8: #{crnn_forward.6} parent=0 // pred_region
    _
  $region9: #{crnn_forward.6} parent=0 // pred_fallthru
    _
  // Predicated region
  $region10: #{crnn_forward.6} parent=0 // pred_check
    _
  $region11: #{crnn_forward.6} parent=0 // pred_check_branch
    %13 = sbr.rel (0) target = $region13
  $region12: #{crnn_forward.6} parent=0 // pred_region
    _
  $region13: #{crnn_forward.6} parent=0 // pred_fallthru
    _
  %v15 = vld [vmem:[%s0] sm:$0xff]
  %v16 = vld [vmem:[%s0 + $0x8] sm:$0xff]
  %v17 = vld [vmem:[%s0 + $0x10] sm:$0xf]
  %v18 = vld [vmem:[%s0 + $0x14] sm:$0xff]
  %v19 = vld [vmem:[%s0 + $0x1c] sm:$0xff]
  %v20 = vld [vmem:[%s0 + $0x24] sm:$0xf]
  %v21 = vld [vmem:[%s0 + $0x28] sm:$0xff]
  %v22 = vld [vmem:[%s0 + $0x30] sm:$0xff]
  %v23 = vld [vmem:[%s0 + $0x38] sm:$0xf]
  %v24 = vld [vmem:[%s0 + $0x3c] sm:$0xff]
  %v25 = vld [vmem:[%s0 + $0x44] sm:$0xff]
  %v26 = vld [vmem:[%s0 + $0x4c] sm:$0xf]
  %v27 = vld [vmem:[%s0 + $0x50] sm:$0xff]
  %v28 = vld [vmem:[%s0 + $0x58] sm:$0xff]
  %v29 = vld [vmem:[%s0 + $0x60] sm:$0xf]
  %v30 = vld [vmem:[%s0 + $0x64] sm:$0xff]
  %v31 = vld [vmem:[%s0 + $0x6c] sm:$0xff]
  %v32 = vld [vmem:[%s0 + $0x74] sm:$0xf]
  %v33 = vld [vmem:[%s0 + $0x78] sm:$0xff]
  %v34 = vld [vmem:[%s0 + $0x80] sm:$0xff]
  %v35 = vld [vmem:[%s0 + $0x88] sm:$0xf]
  %v36 = vld [vmem:[%s0 + $0x8c] sm:$0xff]
  %v37 = vld [vmem:[%s0 + $0x94] sm:$0xff]
  %v38 = vld [vmem:[%s0 + $0x9c] sm:$0xf]
  %v39 = vld [vmem:[%s0 + $0xa0] sm:$0xff]
  %v40 = vld [vmem:[%s0 + $0xa8] sm:$0xff]
  %v41 = vld [vmem:[%s0 + $0xb0] sm:$0xf]
  %v42 = vld [vmem:[%s0 + $0xb4] sm:$0xff]
  %v43 = vld [vmem:[%s0 + $0xbc] sm:$0xff]
  %v44 = vld [vmem:[%s0 + $0xc4] sm:$0xf]
  %v45 = vld [vmem:[%s0 + $0xc8] sm:$0xff]
  %v46 = vld [vmem:[%s0 + $0xd0] sm:$0xff]
  %v47 = vld [vmem:[%s0 + $0xd8] sm:$0xf]
  %v48 = vld [vmem:[%s0 + $0xdc] sm:$0xff]
  %v49 = vld [vmem:[%s0 + $0xe4] sm:$0xff]
  %v50 = vld [vmem:[%s0 + $0xec] sm:$0xf]
  %v51 = vld [vmem:[%s1] sm:$0xf]
  %v52 = vld [vmem:[%s1 + $0x4] sm:$0xf]
  %v53 = vld [vmem:[%s1 + $0x8] sm:$0xf]
  %v54 = vld [vmem:[%s1 + $0xc] sm:$0xf]
  %v55 = vld [vmem:[%s1 + $0x10] sm:$0xf]
  %v56 = vld [vmem:[%s1 + $0x14] sm:$0xf]
  %v57 = vld [vmem:[%s1 + $0x18] sm:$0xf]
  %v58 = vld [vmem:[%s1 + $0x1c] sm:$0xf]
  %v59 = vld [vmem:[%s1 + $0x20] sm:$0xf]
  %v60 = vld [vmem:[%s1 + $0x24] sm:$0xf]
  %v61 = vld [vmem:[%s1 + $0x28] sm:$0xf]
  %v62 = vld [vmem:[%s1 + $0x2c] sm:$0xf]
  %v63 = vld [vmem:[%s1 + $0x30] sm:$0xf]
  %v64 = vld [vmem:[%s1 + $0x34] sm:$0xf]
  %v65 = vld [vmem:[%s1 + $0x38] sm:$0xf]
  %v66 = vld [vmem:[%s1 + $0x3c] sm:$0xf]
  %v67 = vld [vmem:[%s1 + $0x40] sm:$0xf]
  %v68 = vld [vmem:[%s1 + $0x44] sm:$0xf]
  %v69 = vld [vmem:[%s1 + $0x48] sm:$0xf]
  %v70 = vld [vmem:[%s1 + $0x4c] sm:$0xf]
  %v71 = vld [vmem:[%s1 + $0x50] sm:$0xf]
  %v72 = vld [vmem:[%s1 + $0x54] sm:$0xf]
  %v73 = vld [vmem:[%s1 + $0x58] sm:$0xf]
  %v74 = vld [vmem:[%s1 + $0x5c] sm:$0xf]
  %v75 = vld [vmem:[%s1 + $0x60] sm:$0xf]
  %v76 = vld [vmem:[%s1 + $0x64] sm:$0xf]
  %v77 = vld [vmem:[%s1 + $0x68] sm:$0xf]
  %v78 = vld [vmem:[%s1 + $0x6c] sm:$0xf]
  %v79 = vld [vmem:[%s1 + $0x70] sm:$0xf]
  %v80 = vld [vmem:[%s1 + $0x74] sm:$0xf]
  %v81 = vld [vmem:[%s1 + $0x78] sm:$0xf]
  %v82 = vld [vmem:[%s1 + $0x7c] sm:$0xf]
  %v83 = vld [vmem:[%s1 + $0x80] sm:$0xf]
  %v84 = vld [vmem:[%s1 + $0x84] sm:$0xf]
  %v85 = vld [vmem:[%s1 + $0x88] sm:$0xf]
  %v86 = vld [vmem:[%s1 + $0x8c] sm:$0xf]
  %v87 = vld [vmem:[%s1 + $0x90] sm:$0xf]
  %v88 = vld [vmem:[%s1 + $0x94] sm:$0xf]
  %v89 = vld [vmem:[%s1 + $0x98] sm:$0xf]
  %v90 = vld [vmem:[%s1 + $0x9c] sm:$0xf]
  %v91 = vld [vmem:[%s1 + $0xa0] sm:$0xf]
  %v92 = vld [vmem:[%s1 + $0xa4] sm:$0xf]
  %v93 = vld [vmem:[%s1 + $0xa8] sm:$0xf]
  %v94 = vld [vmem:[%s1 + $0xac] sm:$0xf]
  %v95 = vld [vmem:[%s1 + $0xb0] sm:$0xf]
  %v96 = vld [vmem:[%s1 + $0xb4] sm:$0xf]
  %v97 = vld [vmem:[%s1 + $0xb8] sm:$0xf]
  %v98 = vld [vmem:[%s1 + $0xbc] sm:$0xf]
  %v99 = vld [vmem:[%s1 + $0xc0] sm:$0xf]
  %v100 = vld [vmem:[%s1 + $0xc4] sm:$0xf]
  %v101 = vld [vmem:[%s1 + $0xc8] sm:$0xf]
  %v102 = vld [vmem:[%s1 + $0xcc] sm:$0xf]
  %v103 = vld [vmem:[%s1 + $0xd0] sm:$0xf]
  %v104 = vld [vmem:[%s1 + $0xd4] sm:$0xf]
  %v105 = vld [vmem:[%s1 + $0xd8] sm:$0xf]
  %v106 = vld [vmem:[%s1 + $0xdc] sm:$0xf]
  %v107 = vld [vmem:[%s1 + $0xe0] sm:$0xf]
  %v108 = vld [vmem:[%s1 + $0xe4] sm:$0xf]
  %v109 = vld [vmem:[%s1 + $0xe8] sm:$0xf]
  %v110 = vld [vmem:[%s1 + $0xec] sm:$0xf]
  %v111 = vld [vmem:[%s1 + $0xf0] sm:$0xf]
  %v112 = vld [vmem:[%s1 + $0xf4] sm:$0xf]
  %v113 = vld [vmem:[%s1 + $0xf8] sm:$0xf]
  %v114 = vld [vmem:[%s1 + $0xfc] sm:$0xf]
  %v115 = vld [vmem:[%s1 + $0x100] sm:$0xf]
  %v116 = vld [vmem:[%s1 + $0x104] sm:$0xf]
  %v117 = vld [vmem:[%s1 + $0x108] sm:$0xf]
  %v118 = vld [vmem:[%s1 + $0x10c] sm:$0xf]
  %v119 = vld [vmem:[%s1 + $0x110] sm:$0xf]
  %v120 = vld [vmem:[%s1 + $0x114] sm:$0xf]
  %v121 = vld [vmem:[%s1 + $0x118] sm:$0xf]
  %v122 = vld [vmem:[%s1 + $0x11c] sm:$0xf]
  %v123 = vld [vmem:[%s2] sm:$0x1]
  %v125 = vlaneseq
  %v126 = vshrl.u32 %v125, 7
  %v127 = vsub.s32 0, %v126
  %v128 = vrot.slane %v123, %v127
  %v166 = vunpack.c.l.b16 %v15
  %v167 = vunpack.c.h.b16 %v15
  %v168 = vunpack.c.l.b16 %v16
  %v169 = vunpack.c.h.b16 %v16
  %v170 = vunpack.c.l.b16 %v17
  %v171 = vunpack.c.l.b16 %v18
  %v172 = vunpack.c.h.b16 %v18
  %v173 = vunpack.c.l.b16 %v19
  %v174 = vunpack.c.h.b16 %v19
  %v175 = vunpack.c.l.b16 %v20
  %v176 = vunpack.c.l.b16 %v21
  %v177 = vunpack.c.h.b16 %v21
  %v178 = vunpack.c.l.b16 %v22
  %v179 = vunpack.c.h.b16 %v22
  %v180 = vunpack.c.l.b16 %v23
  %v181 = vunpack.c.l.b16 %v24
  %v182 = vunpack.c.h.b16 %v24
  %v183 = vunpack.c.l.b16 %v25
  %v184 = vunpack.c.h.b16 %v25
  %v185 = vunpack.c.l.b16 %v26
  %v186 = vunpack.c.l.b16 %v27
  %v187 = vunpack.c.h.b16 %v27
  %v188 = vunpack.c.l.b16 %v28
  %v189 = vunpack.c.h.b16 %v28
  %v190 = vunpack.c.l.b16 %v29
  %v191 = vunpack.c.l.b16 %v30
  %v192 = vunpack.c.h.b16 %v30
  %v193 = vunpack.c.l.b16 %v31
  %v194 = vunpack.c.h.b16 %v31
  %v195 = vunpack.c.l.b16 %v32
  %v196 = vunpack.c.l.b16 %v33
  %v197 = vunpack.c.h.b16 %v33
  %v198 = vunpack.c.l.b16 %v34
  %v199 = vunpack.c.h.b16 %v34
  %v200 = vunpack.c.l.b16 %v35
  %v201 = vunpack.c.l.b16 %v36
  %v202 = vunpack.c.h.b16 %v36
  %v203 = vunpack.c.l.b16 %v37
  %v204 = vunpack.c.h.b16 %v37
  %v205 = vunpack.c.l.b16 %v38
  %v206 = vunpack.c.l.b16 %v39
  %v207 = vunpack.c.h.b16 %v39
  %v208 = vunpack.c.l.b16 %v40
  %v209 = vunpack.c.h.b16 %v40
  %v210 = vunpack.c.l.b16 %v41
  %v211 = vunpack.c.l.b16 %v42
  %v212 = vunpack.c.h.b16 %v42
  %v213 = vunpack.c.l.b16 %v43
  %v214 = vunpack.c.h.b16 %v43
  %v215 = vunpack.c.l.b16 %v44
  %v216 = vunpack.c.l.b16 %v45
  %v217 = vunpack.c.h.b16 %v45
  %v218 = vunpack.c.l.b16 %v46
  %v219 = vunpack.c.h.b16 %v46
  %v220 = vunpack.c.l.b16 %v47
  %v221 = vunpack.c.l.b16 %v48
  %v222 = vunpack.c.h.b16 %v48
  %v223 = vunpack.c.l.b16 %v49
  %v224 = vunpack.c.h.b16 %v49
  %v225 = vunpack.c.l.b16 %v50
  %v226 = vpack.c.b16 %v171, %v166
  %v227 = vpack.c.b16 %v172, %v167
  %v228 = vpack.c.b16 %v173, %v168
  %v229 = vpack.c.b16 %v174, %v169
  %v230 = vpack.c.b16 %v175, %v170
  %v231 = vpack.c.b16 %v181, %v176
  %v232 = vpack.c.b16 %v182, %v177
  %v233 = vpack.c.b16 %v183, %v178
  %v234 = vpack.c.b16 %v184, %v179
  %v235 = vpack.c.b16 %v185, %v180
  %v236 = vpack.c.b16 %v191, %v186
  %v237 = vpack.c.b16 %v192, %v187
  %v238 = vpack.c.b16 %v193, %v188
  %v239 = vpack.c.b16 %v194, %v189
  %v240 = vpack.c.b16 %v195, %v190
  %v241 = vpack.c.b16 %v201, %v196
  %v242 = vpack.c.b16 %v202, %v197
  %v243 = vpack.c.b16 %v203, %v198
  %v244 = vpack.c.b16 %v204, %v199
  %v245 = vpack.c.b16 %v205, %v200
  %v246 = vpack.c.b16 %v211, %v206
  %v247 = vpack.c.b16 %v212, %v207
  %v248 = vpack.c.b16 %v213, %v208
  %v249 = vpack.c.b16 %v214, %v209
  %v250 = vpack.c.b16 %v215, %v210
  %v251 = vpack.c.b16 %v221, %v216
  %v252 = vpack.c.b16 %v222, %v217
  %v253 = vpack.c.b16 %v223, %v218
  %v254 = vpack.c.b16 %v224, %v219
  %v255 = vpack.c.b16 %v225, %v220
  %v352 = vunpack.c.l.b16 %v51
  %v353 = vunpack.c.l.b16 %v52
  %v354 = vunpack.c.l.b16 %v53
  %v355 = vunpack.c.l.b16 %v54
  %v356 = vunpack.c.l.b16 %v55
  %v357 = vunpack.c.l.b16 %v56
  %v358 = vunpack.c.l.b16 %v57
  %v359 = vunpack.c.l.b16 %v58
  %v360 = vunpack.c.l.b16 %v59
  %v361 = vunpack.c.l.b16 %v60
  %v362 = vunpack.c.l.b16 %v61
  %v363 = vunpack.c.l.b16 %v62
  %v364 = vunpack.c.l.b16 %v63
  %v365 = vunpack.c.l.b16 %v64
  %v366 = vunpack.c.l.b16 %v65
  %v367 = vunpack.c.l.b16 %v66
  %v368 = vunpack.c.l.b16 %v67
  %v369 = vunpack.c.l.b16 %v68
  %v370 = vunpack.c.l.b16 %v69
  %v371 = vunpack.c.l.b16 %v70
  %v372 = vunpack.c.l.b16 %v71
  %v373 = vunpack.c.l.b16 %v72
  %v374 = vunpack.c.l.b16 %v73
  %v375 = vunpack.c.l.b16 %v74
  %v376 = vunpack.c.l.b16 %v75
  %v377 = vunpack.c.l.b16 %v76
  %v378 = vunpack.c.l.b16 %v77
  %v379 = vunpack.c.l.b16 %v78
  %v380 = vunpack.c.l.b16 %v79
  %v381 = vunpack.c.l.b16 %v80
  %v382 = vunpack.c.l.b16 %v81
  %v383 = vunpack.c.l.b16 %v82
  %v384 = vunpack.c.l.b16 %v83
  %v385 = vunpack.c.l.b16 %v84
  %v386 = vunpack.c.l.b16 %v85
  %v387 = vunpack.c.l.b16 %v86
  %v388 = vunpack.c.l.b16 %v87
  %v389 = vunpack.c.l.b16 %v88
  %v390 = vunpack.c.l.b16 %v89
  %v391 = vunpack.c.l.b16 %v90
  %v392 = vunpack.c.l.b16 %v91
  %v393 = vunpack.c.l.b16 %v92
  %v394 = vunpack.c.l.b16 %v93
  %v395 = vunpack.c.l.b16 %v94
  %v396 = vunpack.c.l.b16 %v95
  %v397 = vunpack.c.l.b16 %v96
  %v398 = vunpack.c.l.b16 %v97
  %v399 = vunpack.c.l.b16 %v98
  %v400 = vunpack.c.l.b16 %v99
  %v401 = vunpack.c.l.b16 %v100
  %v402 = vunpack.c.l.b16 %v101
  %v403 = vunpack.c.l.b16 %v102
  %v404 = vunpack.c.l.b16 %v103
  %v405 = vunpack.c.l.b16 %v104
  %v406 = vunpack.c.l.b16 %v105
  %v407 = vunpack.c.l.b16 %v106
  %v408 = vunpack.c.l.b16 %v107
  %v409 = vunpack.c.l.b16 %v108
  %v410 = vunpack.c.l.b16 %v109
  %v411 = vunpack.c.l.b16 %v110
  %v412 = vunpack.c.l.b16 %v111
  %v413 = vunpack.c.l.b16 %v112
  %v414 = vunpack.c.l.b16 %v113
  %v415 = vunpack.c.l.b16 %v114
  %v416 = vunpack.c.l.b16 %v115
  %v417 = vunpack.c.l.b16 %v116
  %v418 = vunpack.c.l.b16 %v117
  %v419 = vunpack.c.l.b16 %v118
  %v420 = vunpack.c.l.b16 %v119
  %v421 = vunpack.c.l.b16 %v120
  %v422 = vunpack.c.l.b16 %v121
  %v423 = vunpack.c.l.b16 %v122
  %v424 = vpack.c.b16 %v353, %v352
  %v425 = vpack.c.b16 %v355, %v354
  %v426 = vpack.c.b16 %v357, %v356
  %v427 = vpack.c.b16 %v359, %v358
  %v428 = vpack.c.b16 %v361, %v360
  %v429 = vpack.c.b16 %v363, %v362
  %v430 = vpack.c.b16 %v365, %v364
  %v431 = vpack.c.b16 %v367, %v366
  %v432 = vpack.c.b16 %v369, %v368
  %v433 = vpack.c.b16 %v371, %v370
  %v434 = vpack.c.b16 %v373, %v372
  %v435 = vpack.c.b16 %v375, %v374
  %v436 = vpack.c.b16 %v377, %v376
  %v437 = vpack.c.b16 %v379, %v378
  %v438 = vpack.c.b16 %v381, %v380
  %v439 = vpack.c.b16 %v383, %v382
  %v440 = vpack.c.b16 %v385, %v384
  %v441 = vpack.c.b16 %v387, %v386
  %v442 = vpack.c.b16 %v389, %v388
  %v443 = vpack.c.b16 %v391, %v390
  %v444 = vpack.c.b16 %v393, %v392
  %v445 = vpack.c.b16 %v395, %v394
  %v446 = vpack.c.b16 %v397, %v396
  %v447 = vpack.c.b16 %v399, %v398
  %v448 = vpack.c.b16 %v401, %v400
  %v449 = vpack.c.b16 %v403, %v402
  %v450 = vpack.c.b16 %v405, %v404
  %v451 = vpack.c.b16 %v407, %v406
  %v452 = vpack.c.b16 %v409, %v408
  %v453 = vpack.c.b16 %v411, %v410
  %v454 = vpack.c.b16 %v413, %v412
  %v455 = vpack.c.b16 %v415, %v414
  %v456 = vpack.c.b16 %v417, %v416
  %v457 = vpack.c.b16 %v419, %v418
  %v458 = vpack.c.b16 %v421, %v420
  %v459 = vpack.c.b16 %v423, %v422
  %vm496 = vcmask 523264
  %v498 = vsel %vm496, %v230, 0
  %v501 = vsel %vm496, %v235, 0
  %v504 = vsel %vm496, %v240, 0
  %v507 = vsel %vm496, %v245, 0
  %v510 = vsel %vm496, %v250, 0
  %v513 = vsel %vm496, %v255, 0
  %515 = vmatprep.subr.bf16.mxu0 0
  %516 = vmatpush1.bf16.msra.mxu0 %v424
  %517 = vmatprep.subr.bf16.mxu0 0
  %518 = vmatpush1.bf16.msra.mxu0 %v425
  %519 = vmatprep.subr.bf16.mxu0 0
  %520 = vmatpush1.bf16.msra.mxu0 %v426
  %521 = vmatprep.subr.bf16.mxu0 0
  %522 = vmatpush1.bf16.msra.mxu0 %v427
  %523 = vmatprep.subr.bf16.mxu0 0
  %524 = vmatpush1.bf16.msra.mxu0 %v428
  %525 = vmatprep.subr.bf16.mxu0 0
  %526 = vmatpush1.bf16.msra.mxu0 %v429
  %527 = vmatprep.subr.bf16.mxu0 0
  %528 = vmatpush1.bf16.msra.mxu0 %v430
  %529 = vmatprep.subr.bf16.mxu0 0
  %530 = vmatpush1.bf16.msra.mxu0 %v431
  %531 = vmatprep.subr.bf16.mxu0 0
  %532 = vmatpush1.bf16.msra.mxu0 %v432
  %533 = vmatprep.subr.bf16.mxu0 0
  %534 = vmatpush1.bf16.msra.mxu0 %v433
  %535 = vmatprep.subr.bf16.mxu0 0
  %536 = vmatpush1.bf16.msra.mxu0 %v434
  %537 = vmatprep.subr.bf16.mxu0 0
  %538 = vmatpush1.bf16.msra.mxu0 %v435
  %539 = vmatprep.subr.bf16.mxu0 0
  %540 = vmatpush1.bf16.msra.mxu0 %v436
  %541 = vmatprep.subr.bf16.mxu0 0
  %542 = vmatpush1.bf16.msra.mxu0 %v437
  %543 = vmatprep.subr.bf16.mxu0 0
  %544 = vmatpush1.bf16.msra.mxu0 %v438
  %545 = vmatprep.subr.bf16.mxu0 0
  %546 = vmatpush1.bf16.msra.mxu0 %v439
  %547 = vmatprep.mubr.bf16.mxu0 %v227
  %548 = vmatmul.mubr.bf16.gmra.mrb[0].mxu0 %v226
  %v549 = vpop.f32.mrb[0].mxu0
  %v550 = vadd.f32 %v128, %v549
  %v551 = vpop.f32.mrb[0].mxu0
  %v552 = vpop.f32.mrb[0].mxu0
  %v553 = vadd.f32 %v128, %v552
  %v554 = vpop.f32.mrb[0].mxu0
  %555 = vmatprep.mubr.bf16.mxu0 %v232
  %556 = vmatmul.mubr.bf16.gmra.mrb[0].mxu0 %v231
  %v557 = vpop.f32.mrb[0].mxu0
  %v558 = vadd.f32 %v128, %v557
  %v559 = vpop.f32.mrb[0].mxu0
  %v560 = vpop.f32.mrb[0].mxu0
  %v561 = vadd.f32 %v128, %v560
  %v562 = vpop.f32.mrb[0].mxu0
  %563 = vmatprep.mubr.bf16.mxu0 %v237
  %564 = vmatmul.mubr.bf16.gmra.mrb[0].mxu0 %v236
  %v565 = vpop.f32.mrb[0].mxu0
  %v566 = vadd.f32 %v128, %v565
  %v567 = vpop.f32.mrb[0].mxu0
  %v568 = vpop.f32.mrb[0].mxu0
  %v569 = vadd.f32 %v128, %v568
  %v570 = vpop.f32.mrb[0].mxu0
  %571 = vmatprep.mubr.bf16.mxu0 %v242
  %572 = vmatmul.mubr.bf16.gmra.mrb[0].mxu0 %v241
  %v573 = vpop.f32.mrb[0].mxu0
  %v574 = vadd.f32 %v128, %v573
  %v575 = vpop.f32.mrb[0].mxu0
  %v576 = vpop.f32.mrb[0].mxu0
  %v577 = vadd.f32 %v128, %v576
  %v578 = vpop.f32.mrb[0].mxu0
  %579 = vmatprep.mubr.bf16.mxu0 %v247
  %580 = vmatmul.mubr.bf16.gmra.mrb[0].mxu0 %v246
  %v581 = vpop.f32.mrb[0].mxu0
  %v582 = vadd.f32 %v128, %v581
  %v583 = vpop.f32.mrb[0].mxu0
  %v584 = vpop.f32.mrb[0].mxu0
  %v585 = vadd.f32 %v128, %v584
  %v586 = vpop.f32.mrb[0].mxu0
  %587 = vmatprep.mubr.bf16.mxu0 %v252
  %588 = vmatmul.mubr.bf16.gmra.mrb[0].mxu0 %v251
  %v589 = vpop.f32.mrb[0].mxu0
  %v590 = vadd.f32 %v128, %v589
  %v591 = vpop.f32.mrb[0].mxu0
  %v592 = vpop.f32.mrb[0].mxu0
  %v593 = vadd.f32 %v128, %v592
  %v594 = vpop.f32.mrb[0].mxu0
  %595 = vdwg.mxu0
  %596 = vmatprep.subr.bf16.mxu0 0
  %597 = vmatpush1.bf16.msra.mxu0 %v440
  %598 = vmatprep.subr.bf16.mxu0 0
  %599 = vmatpush1.bf16.msra.mxu0 %v441
  %600 = vmatprep.subr.bf16.mxu0 0
  %601 = vmatpush1.bf16.msra.mxu0 %v442
  %602 = vmatprep.subr.bf16.mxu0 0
  %603 = vmatpush1.bf16.msra.mxu0 %v443
  %604 = vmatprep.subr.bf16.mxu0 0
  %605 = vmatpush1.bf16.msra.mxu0 %v444
  %606 = vmatprep.subr.bf16.mxu0 0
  %607 = vmatpush1.bf16.msra.mxu0 %v445
  %608 = vmatprep.subr.bf16.mxu0 0
  %609 = vmatpush1.bf16.msra.mxu0 %v446
  %610 = vmatprep.subr.bf16.mxu0 0
  %611 = vmatpush1.bf16.msra.mxu0 %v447
  %612 = vmatprep.subr.bf16.mxu0 0
  %613 = vmatpush1.bf16.msra.mxu0 %v448
  %614 = vmatprep.subr.bf16.mxu0 0
  %615 = vmatpush1.bf16.msra.mxu0 %v449
  %616 = vmatprep.subr.bf16.mxu0 0
  %617 = vmatpush1.bf16.msra.mxu0 %v450
  %618 = vmatprep.subr.bf16.mxu0 0
  %619 = vmatpush1.bf16.msra.mxu0 %v451
  %620 = vmatprep.subr.bf16.mxu0 0
  %621 = vmatpush1.bf16.msra.mxu0 %v452
  %622 = vmatprep.subr.bf16.mxu0 0
  %623 = vmatpush1.bf16.msra.mxu0 %v453
  %624 = vmatprep.subr.bf16.mxu0 0
  %625 = vmatpush1.bf16.msra.mxu0 %v454
  %626 = vmatprep.subr.bf16.mxu0 0
  %627 = vmatpush1.bf16.msra.mxu0 %v455
  %628 = vmatprep.mubr.bf16.mxu0 %v229
  %629 = vmatmul.mubr.bf16.gmra.mrb[0].mxu0 %v228
  %v630 = vpop.f32.mrb[0].mxu0
  %v631 = vadd.f32 %v550, %v630
  %v632 = vpop.f32.mrb[0].mxu0
  %v633 = vpop.f32.mrb[0].mxu0
  %v634 = vadd.f32 %v553, %v633
  %v635 = vpop.f32.mrb[0].mxu0
  %636 = vmatprep.mubr.bf16.mxu0 %v234
  %637 = vmatmul.mubr.bf16.gmra.mrb[0].mxu0 %v233
  %v638 = vpop.f32.mrb[0].mxu0
  %v639 = vadd.f32 %v558, %v638
  %v640 = vpop.f32.mrb[0].mxu0
  %v641 = vpop.f32.mrb[0].mxu0
  %v642 = vadd.f32 %v561, %v641
  %v643 = vpop.f32.mrb[0].mxu0
  %644 = vmatprep.mubr.bf16.mxu0 %v239
  %645 = vmatmul.mubr.bf16.gmra.mrb[0].mxu0 %v238
  %v646 = vpop.f32.mrb[0].mxu0
  %v647 = vadd.f32 %v566, %v646
  %v648 = vpop.f32.mrb[0].mxu0
  %v649 = vpop.f32.mrb[0].mxu0
  %v650 = vadd.f32 %v569, %v649
  %v651 = vpop.f32.mrb[0].mxu0
  %652 = vmatprep.mubr.bf16.mxu0 %v244
  %653 = vmatmul.mubr.bf16.gmra.mrb[0].mxu0 %v243
  %v654 = vpop.f32.mrb[0].mxu0
  %v655 = vadd.f32 %v574, %v654
  %v656 = vpop.f32.mrb[0].mxu0
  %v657 = vpop.f32.mrb[0].mxu0
  %v658 = vadd.f32 %v577, %v657
  %v659 = vpop.f32.mrb[0].mxu0
  %660 = vmatprep.mubr.bf16.mxu0 %v249
  %661 = vmatmul.mubr.bf16.gmra.mrb[0].mxu0 %v248
  %v662 = vpop.f32.mrb[0].mxu0
  %v663 = vadd.f32 %v582, %v662
  %v664 = vpop.f32.mrb[0].mxu0
  %v665 = vpop.f32.mrb[0].mxu0
  %v666 = vadd.f32 %v585, %v665
  %v667 = vpop.f32.mrb[0].mxu0
  %668 = vmatprep.mubr.bf16.mxu0 %v254
  %669 = vmatmul.mubr.bf16.gmra.mrb[0].mxu0 %v253
  %v670 = vpop.f32.mrb[0].mxu0
  %v671 = vadd.f32 %v590, %v670
  %v672 = vpop.f32.mrb[0].mxu0
  %v673 = vpop.f32.mrb[0].mxu0
  %v674 = vadd.f32 %v593, %v673
  %v675 = vpop.f32.mrb[0].mxu0
  %676 = vdwg.mxu0
  %677 = vmatprep.subr.bf16.mxu0 0
  %678 = vmatpush1.bf16.msra.mxu0 %v456
  %679 = vmatprep.subr.bf16.mxu0 0
  %680 = vmatpush1.bf16.msra.mxu0 %v457
  %681 = vmatprep.subr.bf16.mxu0 0
  %682 = vmatpush1.bf16.msra.mxu0 %v458
  %683 = vmatprep.subr.bf16.mxu0 0
  %684 = vmatpush1.bf16.msra.mxu0 %v459
  %685 = vmatprep.subr.bf16.mxu0 0
  %686 = vmatpush1.bf16.msra.mxu0 0
  %687 = vmatprep.subr.bf16.mxu0 0
  %688 = vmatpush1.bf16.msra.mxu0 0
  %689 = vmatprep.subr.bf16.mxu0 0
  %690 = vmatpush1.bf16.msra.mxu0 0
  %691 = vmatprep.subr.bf16.mxu0 0
  %692 = vmatpush1.bf16.msra.mxu0 0
  %693 = vmatprep.subr.bf16.mxu0 0
  %694 = vmatpush1.bf16.msra.mxu0 0
  %695 = vmatprep.subr.bf16.mxu0 0
  %696 = vmatpush1.bf16.msra.mxu0 0
  %697 = vmatprep.subr.bf16.mxu0 0
  %698 = vmatpush1.bf16.msra.mxu0 0
  %699 = vmatprep.subr.bf16.mxu0 0
  %700 = vmatpush1.bf16.msra.mxu0 0
  %701 = vmatprep.subr.bf16.mxu0 0
  %702 = vmatpush1.bf16.msra.mxu0 0
  %703 = vmatprep.subr.bf16.mxu0 0
  %704 = vmatpush1.bf16.msra.mxu0 0
  %705 = vmatprep.subr.bf16.mxu0 0
  %706 = vmatpush1.bf16.msra.mxu0 0
  %707 = vmatprep.subr.bf16.mxu0 0
  %708 = vmatpush1.bf16.msra.mxu0 0
  %709 = vmatprep.mubr.bf16.mxu0 0
  %710 = vmatmul.mubr.bf16.gmra.mrb[0].mxu0 %v498
  %v711 = vpop.f32.mrb[0].mxu0
  %v712 = vadd.f32 %v631, %v711
  %v713 = vpop.f32.mrb[0].mxu0
  %v714 = vpop.f32.mrb[0].mxu0
  %v715 = vadd.f32 %v634, %v714
  %v716 = vpop.f32.mrb[0].mxu0
  %717 = vmatprep.mubr.bf16.mxu0 0
  %718 = vmatmul.mubr.bf16.gmra.mrb[0].mxu0 %v501
  %v719 = vpop.f32.mrb[0].mxu0
  %v720 = vadd.f32 %v639, %v719
  %v721 = vpop.f32.mrb[0].mxu0
  %v722 = vpop.f32.mrb[0].mxu0
  %v723 = vadd.f32 %v642, %v722
  %v724 = vpop.f32.mrb[0].mxu0
  %725 = vmatprep.mubr.bf16.mxu0 0
  %726 = vmatmul.mubr.bf16.gmra.mrb[0].mxu0 %v504
  %v727 = vpop.f32.mrb[0].mxu0
  %v728 = vadd.f32 %v647, %v727
  %v729 = vpop.f32.mrb[0].mxu0
  %v730 = vpop.f32.mrb[0].mxu0
  %v731 = vadd.f32 %v650, %v730
  %v732 = vpop.f32.mrb[0].mxu0
  %733 = vmatprep.mubr.bf16.mxu0 0
  %734 = vmatmul.mubr.bf16.gmra.mrb[0].mxu0 %v507
  %v735 = vpop.f32.mrb[0].mxu0
  %v736 = vadd.f32 %v655, %v735
  %v737 = vpop.f32.mrb[0].mxu0
  %v738 = vpop.f32.mrb[0].mxu0
  %v739 = vadd.f32 %v658, %v738
  %v740 = vpop.f32.mrb[0].mxu0
  %741 = vmatprep.mubr.bf16.mxu0 0
  %742 = vmatmul.mubr.bf16.gmra.mrb[0].mxu0 %v510
  %v743 = vpop.f32.mrb[0].mxu0
  %v744 = vadd.f32 %v663, %v743
  %v745 = vpop.f32.mrb[0].mxu0
  %v746 = vpop.f32.mrb[0].mxu0
  %v747 = vadd.f32 %v666, %v746
  %v748 = vpop.f32.mrb[0].mxu0
  %749 = vmatprep.mubr.bf16.mxu0 0
  %750 = vmatmul.mubr.bf16.gmra.mrb[0].mxu0 %v513
  %v751 = vpop.f32.mrb[0].mxu0
  %v752 = vadd.f32 %v671, %v751
  %v753 = vpop.f32.mrb[0].mxu0
  %v754 = vpop.f32.mrb[0].mxu0
  %v755 = vadd.f32 %v674, %v754
  %v756 = vpop.f32.mrb[0].mxu0
  %757 = vdwg.mxu0
  %v758 = vmax.f32 %v712, 0.0
  %v759 = vmax.f32 %v715, 0.0
  %v760 = vmax.f32 %v720, 0.0
  %v761 = vmax.f32 %v723, 0.0
  %v762 = vmax.f32 %v728, 0.0
  %v763 = vmax.f32 %v731, 0.0
  %v764 = vmax.f32 %v736, 0.0
  %v765 = vmax.f32 %v739, 0.0
  %v766 = vmax.f32 %v744, 0.0
  %v767 = vmax.f32 %v747, 0.0
  %v768 = vmax.f32 %v752, 0.0
  %v769 = vmax.f32 %v755, 0.0
  %v770 = vpack.c.bf16 %v759, %v758
  %v771 = vpack.c.bf16 %v761, %v760
  %v772 = vpack.c.bf16 %v763, %v762
  %v773 = vpack.c.bf16 %v765, %v764
  %v774 = vpack.c.bf16 %v767, %v766
  %v775 = vpack.c.bf16 %v769, %v768
  %v782 = vunpack.c.l.b16 %v770
  %v783 = vunpack.c.h.b16 %v770
  %v784 = vunpack.c.l.b16 %v771
  %v785 = vunpack.c.h.b16 %v771
  %v786 = vunpack.c.l.b16 %v772
  %v787 = vunpack.c.h.b16 %v772
  %v788 = vunpack.c.l.b16 %v773
  %v789 = vunpack.c.h.b16 %v773
  %v790 = vunpack.c.l.b16 %v774
  %v791 = vunpack.c.h.b16 %v774
  %v792 = vunpack.c.l.b16 %v775
  %v793 = vunpack.c.h.b16 %v775
  %v794 = vpack.c.b16 %v782, %v782
  %v795 = vpack.c.b16 %v783, %v783
  %v796 = vpack.c.b16 %v784, %v784
  %v797 = vpack.c.b16 %v785, %v785
  %v798 = vpack.c.b16 %v786, %v786
  %v799 = vpack.c.b16 %v787, %v787
  %v800 = vpack.c.b16 %v788, %v788
  %v801 = vpack.c.b16 %v789, %v789
  %v802 = vpack.c.b16 %v790, %v790
  %v803 = vpack.c.b16 %v791, %v791
  %v804 = vpack.c.b16 %v792, %v792
  %v805 = vpack.c.b16 %v793, %v793
  %818 = vst [vmem:[%s3] sm:$0xf] %v794
  %819 = vst [vmem:[%s3 + $0x4] sm:$0xf] %v795
  %820 = vst [vmem:[%s3 + $0x8] sm:$0xf] %v796
  %821 = vst [vmem:[%s3 + $0xc] sm:$0xf] %v797
  %822 = vst [vmem:[%s3 + $0x10] sm:$0xf] %v798
  %823 = vst [vmem:[%s3 + $0x14] sm:$0xf] %v799
  %824 = vst [vmem:[%s3 + $0x18] sm:$0xf] %v800
  %825 = vst [vmem:[%s3 + $0x1c] sm:$0xf] %v801
  %826 = vst [vmem:[%s3 + $0x20] sm:$0xf] %v802
  %827 = vst [vmem:[%s3 + $0x24] sm:$0xf] %v803
  %828 = vst [vmem:[%s3 + $0x28] sm:$0xf] %v804
  %829 = vst [vmem:[%s3 + $0x2c] sm:$0xf] %v805
  // Predicated region
  $region14: #{crnn_forward.6} parent=0 // pred_check
    _
  $region15: #{crnn_forward.6} parent=0 // pred_check_branch
    %831 = sbr.rel (0) target = $region17
  $region16: #{crnn_forward.6} parent=0 // pred_region
    _
  $region17: #{crnn_forward.6} parent=0 // pred_fallthru
    _
  // Predicated region
  $region18: #{crnn_forward.6} parent=0 // pred_check
    _
  $region19: #{crnn_forward.6} parent=0 // pred_check_branch
    %833 = sbr.rel (0) target = $region21
  $region20: #{crnn_forward.6} parent=0 // pred_region
    _
  $region21: #{crnn_forward.6} parent=0 // pred_fallthru
    _

// kernel: crnn_forward.7
$region0: #{crnn_forward.7}
  #allocation0 [shape = 'u32[]', space=smem, size = 0x4, offset = 0x4, fixed_abs, tag = 'smem constant byte address 0x4 - core index']
  #allocation1 [shape = 'u32[144,128]{1,0:T(1,128)}', space=vmem, size = 0x12000, scoped, tag = 'internal scratch']
  #allocation2 [shape = 'f32[64,192]{1,0:T(8,128)}', space=vmem, size = 0x10000, scoped, tag = 'scratch operand']
  #allocation3 [shape = 'f32[64,192]{1,0:T(8,128)}', space=vmem, size = 0x10000, scoped, tag = 'scratch operand']
  #allocation4 [shape = 'f32[64,64]{1,0:T(8,128)}', space=vmem, size = 0x8000, scoped, tag = 'scratch operand']
  #allocation5 [shape = 'f32[64,64]{1,0:T(8,128)}', space=vmem, size = 0x8000, scoped, tag = 'scratch operand']
  %s0 = inlined_call_operand.vmem [shape: bf16[64,768], index: 0, kind: input, shape index: {}]
  %s1 = inlined_call_operand.vmem [shape: bf16[2,768,192], index: 1, kind: input, shape index: {}]
  %s2 = inlined_call_operand.vmem [shape: f32[2,1,192], index: 2, kind: input, shape index: {}]
  %s3 = inlined_call_operand.vmem [shape: bf16[2,64,192], index: 3, kind: input, shape index: {}]
  %s4 = inlined_call_operand.vmem [shape: f32[2,1,192], index: 4, kind: input, shape index: {}]
  %s5 = inlined_call_operand.vmem [shape: bf16[2,64,192], index: 5, kind: input, shape index: {}]
  %s6 = inlined_call_operand.vmem [shape: f32[2,1,192], index: 6, kind: input, shape index: {}]
  %s7 = inlined_call_operand.vmem [shape: bf16[2,64,192], index: 7, kind: input, shape index: {}]
  %s8 = inlined_call_operand.vmem [shape: f32[2,1,192], index: 8, kind: input, shape index: {}]
  %s9 = inlined_call_operand.vmem [shape: bf16[64,128], index: 9, kind: input, shape index: {}]
  %s10 = inlined_call_operand.vmem [shape: bf16[64,128], index: 10, kind: input, shape index: {}]
  %s11 = inlined_call_operand.vmem [shape: f32[1,128], index: 11, kind: input, shape index: {}]
  %s12 = inlined_call_operand.vmem [shape: f32[64,128], index: 12, kind: output, shape index: {}]
  %s13 = sld [smem:[#allocation0]]
  $region58: #{crnn_forward.7} parent=0
    _
  %s15 = ssub.s32 1, %s13
  %s16 = scalar_select 0, %s15, %s13
  // Predicated region
  $region2: #{crnn_forward.7} parent=0 // pred_check
    _
  $region3: #{crnn_forward.7} parent=0 // pred_check_branch
    %18 = sbr.rel (0) target = $region5
  $region4: #{crnn_forward.7} parent=0 // pred_region
    _
  $region5: #{crnn_forward.7} parent=0 // pred_fallthru
    _
  // Predicated region
  $region6: #{crnn_forward.7} parent=0 // pred_check
    _
  $region7: #{crnn_forward.7} parent=0 // pred_check_branch
    %20 = sbr.rel (0) target = $region9
  $region8: #{crnn_forward.7} parent=0 // pred_region
    _
  $region9: #{crnn_forward.7} parent=0 // pred_fallthru
    _
  // Predicated region
  $region10: #{crnn_forward.7} parent=0 // pred_check
    _
  $region11: #{crnn_forward.7} parent=0 // pred_check_branch
    %22 = sbr.rel (0) target = $region13
  $region12: #{crnn_forward.7} parent=0 // pred_region
    _
  $region13: #{crnn_forward.7} parent=0 // pred_fallthru
    _
  // Predicated region
  $region14: #{crnn_forward.7} parent=0 // pred_check
    _
  $region15: #{crnn_forward.7} parent=0 // pred_check_branch
    %24 = sbr.rel (0) target = $region17
  $region16: #{crnn_forward.7} parent=0 // pred_region
    _
  $region17: #{crnn_forward.7} parent=0 // pred_fallthru
    _
  // Predicated region
  $region18: #{crnn_forward.7} parent=0 // pred_check
    _
  $region19: #{crnn_forward.7} parent=0 // pred_check_branch
    %26 = sbr.rel (0) target = $region21
  $region20: #{crnn_forward.7} parent=0 // pred_region
    _
  $region21: #{crnn_forward.7} parent=0 // pred_fallthru
    _
  // Predicated region
  $region22: #{crnn_forward.7} parent=0 // pred_check
    _
  $region23: #{crnn_forward.7} parent=0 // pred_check_branch
    %28 = sbr.rel (0) target = $region25
  $region24: #{crnn_forward.7} parent=0 // pred_region
    _
  $region25: #{crnn_forward.7} parent=0 // pred_fallthru
    _
  // Predicated region
  $region26: #{crnn_forward.7} parent=0 // pred_check
    _
  $region27: #{crnn_forward.7} parent=0 // pred_check_branch
    %30 = sbr.rel (0) target = $region29
  $region28: #{crnn_forward.7} parent=0 // pred_region
    _
  $region29: #{crnn_forward.7} parent=0 // pred_fallthru
    _
  // Predicated region
  $region30: #{crnn_forward.7} parent=0 // pred_check
    _
  $region31: #{crnn_forward.7} parent=0 // pred_check_branch
    %32 = sbr.rel (0) target = $region33
  $region32: #{crnn_forward.7} parent=0 // pred_region
    _
  $region33: #{crnn_forward.7} parent=0 // pred_fallthru
    _
  // Predicated region
  $region34: #{crnn_forward.7} parent=0 // pred_check
    _
  $region35: #{crnn_forward.7} parent=0 // pred_check_branch
    %34 = sbr.rel (0) target = $region37
  $region36: #{crnn_forward.7} parent=0 // pred_region
    _
  $region37: #{crnn_forward.7} parent=0 // pred_fallthru
    _
  // Predicated region
  $region38: #{crnn_forward.7} parent=0 // pred_check
    _
  $region39: #{crnn_forward.7} parent=0 // pred_check_branch
    %36 = sbr.rel (0) target = $region41
  $region40: #{crnn_forward.7} parent=0 // pred_region
    _
  $region41: #{crnn_forward.7} parent=0 // pred_fallthru
    _
  // Predicated region
  $region42: #{crnn_forward.7} parent=0 // pred_check
    _
  $region43: #{crnn_forward.7} parent=0 // pred_check_branch
    %38 = sbr.rel (0) target = $region45
  $region44: #{crnn_forward.7} parent=0 // pred_region
    _
  $region45: #{crnn_forward.7} parent=0 // pred_fallthru
    _
  // Predicated region
  $region46: #{crnn_forward.7} parent=0 // pred_check
    _
  $region47: #{crnn_forward.7} parent=0 // pred_check_branch
    %40 = sbr.rel (0) target = $region49
  $region48: #{crnn_forward.7} parent=0 // pred_region
    _
  $region49: #{crnn_forward.7} parent=0 // pred_fallthru
    _
  %v42 = vld [vmem:[%s0] sm:$0xff]
  %v43 = vld [vmem:[%s0 + $0x8] sm:$0xff]
  %v44 = vld [vmem:[%s0 + $0x10] sm:$0xff]
  %v45 = vld [vmem:[%s0 + $0x18] sm:$0xff]
  %v46 = vld [vmem:[%s0 + $0x20] sm:$0xff]
  %v47 = vld [vmem:[%s0 + $0x28] sm:$0xff]
  %v48 = vld [vmem:[%s0 + $0x30] sm:$0xff]
  %v49 = vld [vmem:[%s0 + $0x38] sm:$0xff]
  %v50 = vld [vmem:[%s0 + $0x40] sm:$0xff]
  %v51 = vld [vmem:[%s0 + $0x48] sm:$0xff]
  %v52 = vld [vmem:[%s0 + $0x50] sm:$0xff]
  %v53 = vld [vmem:[%s0 + $0x58] sm:$0xff]
  %v54 = vld [vmem:[%s0 + $0x60] sm:$0xff]
  %v55 = vld [vmem:[%s0 + $0x68] sm:$0xff]
  %v56 = vld [vmem:[%s0 + $0x70] sm:$0xff]
  %v57 = vld [vmem:[%s0 + $0x78] sm:$0xff]
  %v58 = vld [vmem:[%s0 + $0x80] sm:$0xff]
  %v59 = vld [vmem:[%s0 + $0x88] sm:$0xff]
  %v60 = vld [vmem:[%s0 + $0x90] sm:$0xff]
  %v61 = vld [vmem:[%s0 + $0x98] sm:$0xff]
  %v62 = vld [vmem:[%s0 + $0xa0] sm:$0xff]
  %v63 = vld [vmem:[%s0 + $0xa8] sm:$0xff]
  %v64 = vld [vmem:[%s0 + $0xb0] sm:$0xff]
  %v65 = vld [vmem:[%s0 + $0xb8] sm:$0xff]
  %v66 = vld [vmem:[%s1] sm:$0xff]
  %v67 = vld [vmem:[%s1 + $0x8] sm:$0xff]
  %v68 = vld [vmem:[%s1 + $0x10] sm:$0xff]
  %v69 = vld [vmem:[%s1 + $0x18] sm:$0xff]
  %v70 = vld [vmem:[%s1 + $0x20] sm:$0xff]
  %v71 = vld [vmem:[%s1 + $0x28] sm:$0xff]
  %v72 = vld [vmem:[%s1 + $0x30] sm:$0xff]
  %v73 = vld [vmem:[%s1 + $0x38] sm:$0xff]
  %v74 = vld [vmem:[%s1 + $0x40] sm:$0xff]
  %v75 = vld [vmem:[%s1 + $0x48] sm:$0xff]
  %v76 = vld [vmem:[%s1 + $0x50] sm:$0xff]
  %v77 = vld [vmem:[%s1 + $0x58] sm:$0xff]
  %v78 = vld [vmem:[%s1 + $0x60] sm:$0xff]
  %v79 = vld [vmem:[%s1 + $0x68] sm:$0xff]
  %v80 = vld [vmem:[%s1 + $0x70] sm:$0xff]
  %v81 = vld [vmem:[%s1 + $0x78] sm:$0xff]
  %v82 = vld [vmem:[%s1 + $0x80] sm:$0xff]
  %v83 = vld [vmem:[%s1 + $0x88] sm:$0xff]
  %v84 = vld [vmem:[%s1 + $0x90] sm:$0xff]
  %v85 = vld [vmem:[%s1 + $0x98] sm:$0xff]
  %v86 = vld [vmem:[%s1 + $0xa0] sm:$0xff]
  %v87 = vld [vmem:[%s1 + $0xa8] sm:$0xff]
  %v88 = vld [vmem:[%s1 + $0xb0] sm:$0xff]
  %v89 = vld [vmem:[%s1 + $0xb8] sm:$0xff]
  %v90 = vld [vmem:[%s1 + $0xc0] sm:$0xff]
  %v91 = vld [vmem:[%s1 + $0xc8] sm:$0xff]
  %v92 = vld [vmem:[%s1 + $0xd0] sm:$0xff]
  %v93 = vld [vmem:[%s1 + $0xd8] sm:$0xff]
  %v94 = vld [vmem:[%s1 + $0xe0] sm:$0xff]
  %v95 = vld [vmem:[%s1 + $0xe8] sm:$0xff]
  %v96 = vld [vmem:[%s1 + $0xf0] sm:$0xff]
  %v97 = vld [vmem:[%s1 + $0xf8] sm:$0xff]
  %v98 = vld [vmem:[%s1 + $0x100] sm:$0xff]
  %v99 = vld [vmem:[%s1 + $0x108] sm:$0xff]
  %v100 = vld [vmem:[%s1 + $0x110] sm:$0xff]
  %v101 = vld [vmem:[%s1 + $0x118] sm:$0xff]
  %v102 = vld [vmem:[%s1 + $0x120] sm:$0xff]
  %v103 = vld [vmem:[%s1 + $0x128] sm:$0xff]
  %v104 = vld [vmem:[%s1 + $0x130] sm:$0xff]
  %v105 = vld [vmem:[%s1 + $0x138] sm:$0xff]
  %v106 = vld [vmem:[%s1 + $0x140] sm:$0xff]
  %v107 = vld [vmem:[%s1 + $0x148] sm:$0xff]
  %v108 = vld [vmem:[%s1 + $0x150] sm:$0xff]
  %v109 = vld [vmem:[%s1 + $0x158] sm:$0xff]
  %v110 = vld [vmem:[%s1 + $0x160] sm:$0xff]
  %v111 = vld [vmem:[%s1 + $0x168] sm:$0xff]
  %v112 = vld [vmem:[%s1 + $0x170] sm:$0xff]
  %v113 = vld [vmem:[%s1 + $0x178] sm:$0xff]
  %v114 = vld [vmem:[%s1 + $0x180] sm:$0xff]
  %v115 = vld [vmem:[%s1 + $0x188] sm:$0xff]
  %v116 = vld [vmem:[%s1 + $0x190] sm:$0xff]
  %v117 = vld [vmem:[%s1 + $0x198] sm:$0xff]
  %v118 = vld [vmem:[%s1 + $0x1a0] sm:$0xff]
  %v119 = vld [vmem:[%s1 + $0x1a8] sm:$0xff]
  %v120 = vld [vmem:[%s1 + $0x1b0] sm:$0xff]
  %v121 = vld [vmem:[%s1 + $0x1b8] sm:$0xff]
  %v122 = vld [vmem:[%s1 + $0x1c0] sm:$0xff]
  %v123 = vld [vmem:[%s1 + $0x1c8] sm:$0xff]
  %v124 = vld [vmem:[%s1 + $0x1d0] sm:$0xff]
  %v125 = vld [vmem:[%s1 + $0x1d8] sm:$0xff]
  %v126 = vld [vmem:[%s1 + $0x1e0] sm:$0xff]
  %v127 = vld [vmem:[%s1 + $0x1e8] sm:$0xff]
  %v128 = vld [vmem:[%s1 + $0x1f0] sm:$0xff]
  %v129 = vld [vmem:[%s1 + $0x1f8] sm:$0xff]
  %v130 = vld [vmem:[%s1 + $0x200] sm:$0xff]
  %v131 = vld [vmem:[%s1 + $0x208] sm:$0xff]
  %v132 = vld [vmem:[%s1 + $0x210] sm:$0xff]
  %v133 = vld [vmem:[%s1 + $0x218] sm:$0xff]
  %v134 = vld [vmem:[%s1 + $0x220] sm:$0xff]
  %v135 = vld [vmem:[%s1 + $0x228] sm:$0xff]
  %v136 = vld [vmem:[%s1 + $0x230] sm:$0xff]
  %v137 = vld [vmem:[%s1 + $0x238] sm:$0xff]
  %v138 = vld [vmem:[%s1 + $0x240] sm:$0xff]
  %v139 = vld [vmem:[%s1 + $0x248] sm:$0xff]
  %v140 = vld [vmem:[%s1 + $0x250] sm:$0xff]
  %v141 = vld [vmem:[%s1 + $0x258] sm:$0xff]
  %v142 = vld [vmem:[%s1 + $0x260] sm:$0xff]
  %v143 = vld [vmem:[%s1 + $0x268] sm:$0xff]
  %v144 = vld [vmem:[%s1 + $0x270] sm:$0xff]
  %v145 = vld [vmem:[%s1 + $0x278] sm:$0xff]
  %v146 = vld [vmem:[%s1 + $0x280] sm:$0xff]
  %v147 = vld [vmem:[%s1 + $0x288] sm:$0xff]
  %v148 = vld [vmem:[%s1 + $0x290] sm:$0xff]
  %v149 = vld [vmem:[%s1 + $0x298] sm:$0xff]
  %v150 = vld [vmem:[%s1 + $0x2a0] sm:$0xff]
  %v151 = vld [vmem:[%s1 + $0x2a8] sm:$0xff]
  %v152 = vld [vmem:[%s1 + $0x2b0] sm:$0xff]
  %v153 = vld [vmem:[%s1 + $0x2b8] sm:$0xff]
  %v154 = vld [vmem:[%s1 + $0x2c0] sm:$0xff]
  %v155 = vld [vmem:[%s1 + $0x2c8] sm:$0xff]
  %v156 = vld [vmem:[%s1 + $0x2d0] sm:$0xff]
  %v157 = vld [vmem:[%s1 + $0x2d8] sm:$0xff]
  %v158 = vld [vmem:[%s1 + $0x2e0] sm:$0xff]
  %v159 = vld [vmem:[%s1 + $0x2e8] sm:$0xff]
  %v160 = vld [vmem:[%s1 + $0x2f0] sm:$0xff]
  %v161 = vld [vmem:[%s1 + $0x2f8] sm:$0xff]
  %v162 = vld [vmem:[%s2] sm:$0x3]
  %v164 = vlaneseq
  %v165 = vshrl.u32 %v164, 7
  %v166 = vsub.s32 0, %v165
  %v167 = vrot.slane %v162, %v166
  %v168 = vlaneseq
  %v169 = vshrl.u32 %v168, 7
  %v170 = vsub.s32 1, %v169
  %v171 = vrot.slane %v162, %v170
  %v198 = vunpack.c.l.b16 %v42
  %v199 = vunpack.c.h.b16 %v42
  %v200 = vunpack.c.l.b16 %v43
  %v201 = vunpack.c.h.b16 %v43
  %v202 = vunpack.c.l.b16 %v44
  %v203 = vunpack.c.h.b16 %v44
  %v204 = vunpack.c.l.b16 %v45
  %v205 = vunpack.c.h.b16 %v45
  %v206 = vunpack.c.l.b16 %v46
  %v207 = vunpack.c.h.b16 %v46
  %v208 = vunpack.c.l.b16 %v47
  %v209 = vunpack.c.h.b16 %v47
  %v210 = vunpack.c.l.b16 %v48
  %v211 = vunpack.c.h.b16 %v48
  %v212 = vunpack.c.l.b16 %v49
  %v213 = vunpack.c.h.b16 %v49
  %v214 = vunpack.c.l.b16 %v50
  %v215 = vunpack.c.h.b16 %v50
  %v216 = vunpack.c.l.b16 %v51
  %v217 = vunpack.c.h.b16 %v51
  %v218 = vunpack.c.l.b16 %v52
  %v219 = vunpack.c.h.b16 %v52
  %v220 = vunpack.c.l.b16 %v53
  %v221 = vunpack.c.h.b16 %v53
  %v222 = vunpack.c.l.b16 %v54
  %v223 = vunpack.c.h.b16 %v54
  %v224 = vunpack.c.l.b16 %v55
  %v225 = vunpack.c.h.b16 %v55
  %v226 = vunpack.c.l.b16 %v56
  %v227 = vunpack.c.h.b16 %v56
  %v228 = vunpack.c.l.b16 %v57
  %v229 = vunpack.c.h.b16 %v57
  %v230 = vunpack.c.l.b16 %v58
  %v231 = vunpack.c.h.b16 %v58
  %v232 = vunpack.c.l.b16 %v59
  %v233 = vunpack.c.h.b16 %v59
  %v234 = vunpack.c.l.b16 %v60
  %v235 = vunpack.c.h.b16 %v60
  %v236 = vunpack.c.l.b16 %v61
  %v237 = vunpack.c.h.b16 %v61
  %v238 = vunpack.c.l.b16 %v62
  %v239 = vunpack.c.h.b16 %v62
  %v240 = vunpack.c.l.b16 %v63
  %v241 = vunpack.c.h.b16 %v63
  %v242 = vunpack.c.l.b16 %v64
  %v243 = vunpack.c.h.b16 %v64
  %v244 = vunpack.c.l.b16 %v65
  %v245 = vunpack.c.h.b16 %v65
  %v246 = vpack.c.b16 %v204, %v198
  %v247 = vpack.c.b16 %v205, %v199
  %v248 = vpack.c.b16 %v206, %v200
  %v249 = vpack.c.b16 %v207, %v201
  %v250 = vpack.c.b16 %v208, %v202
  %v251 = vpack.c.b16 %v209, %v203
  %v252 = vpack.c.b16 %v216, %v210
  %v253 = vpack.c.b16 %v217, %v211
  %v254 = vpack.c.b16 %v218, %v212
  %v255 = vpack.c.b16 %v219, %v213
  %v256 = vpack.c.b16 %v220, %v214
  %v257 = vpack.c.b16 %v221, %v215
  %v258 = vpack.c.b16 %v228, %v222
  %v259 = vpack.c.b16 %v229, %v223
  %v260 = vpack.c.b16 %v230, %v224
  %v261 = vpack.c.b16 %v231, %v225
  %v262 = vpack.c.b16 %v232, %v226
  %v263 = vpack.c.b16 %v233, %v227
  %v264 = vpack.c.b16 %v240, %v234
  %v265 = vpack.c.b16 %v241, %v235
  %v266 = vpack.c.b16 %v242, %v236
  %v267 = vpack.c.b16 %v243, %v237
  %v268 = vpack.c.b16 %v244, %v238
  %v269 = vpack.c.b16 %v245, %v239
  %v390 = vunpack.c.l.b16 %v66
  %v391 = vunpack.c.h.b16 %v66
  %v392 = vunpack.c.l.b16 %v67
  %v393 = vunpack.c.h.b16 %v67
  %v394 = vunpack.c.l.b16 %v68
  %v395 = vunpack.c.h.b16 %v68
  %v396 = vunpack.c.l.b16 %v69
  %v397 = vunpack.c.h.b16 %v69
  %v398 = vunpack.c.l.b16 %v70
  %v399 = vunpack.c.h.b16 %v70
  %v400 = vunpack.c.l.b16 %v71
  %v401 = vunpack.c.h.b16 %v71
  %v402 = vunpack.c.l.b16 %v72
  %v403 = vunpack.c.h.b16 %v72
  %v404 = vunpack.c.l.b16 %v73
  %v405 = vunpack.c.h.b16 %v73
  %v406 = vunpack.c.l.b16 %v74
  %v407 = vunpack.c.h.b16 %v74
  %v408 = vunpack.c.l.b16 %v75
  %v409 = vunpack.c.h.b16 %v75
  %v410 = vunpack.c.l.b16 %v76
  %v411 = vunpack.c.h.b16 %v76
  %v412 = vunpack.c.l.b16 %v77
  %v413 = vunpack.c.h.b16 %v77
  %v414 = vunpack.c.l.b16 %v78
  %v415 = vunpack.c.h.b16 %v78
  %v416 = vunpack.c.l.b16 %v79
  %v417 = vunpack.c.h.b16 %v79
  %v418 = vunpack.c.l.b16 %v80
  %v419 = vunpack.c.h.b16 %v80
  %v420 = vunpack.c.l.b16 %v81
  %v421 = vunpack.c.h.b16 %v81
  %v422 = vunpack.c.l.b16 %v82
  %v423 = vunpack.c.h.b16 %v82
  %v424 = vunpack.c.l.b16 %v83
  %v425 = vunpack.c.h.b16 %v83
  %v426 = vunpack.c.l.b16 %v84
  %v427 = vunpack.c.h.b16 %v84
  %v428 = vunpack.c.l.b16 %v85
  %v429 = vunpack.c.h.b16 %v85
  %v430 = vunpack.c.l.b16 %v86
  %v431 = vunpack.c.h.b16 %v86
  %v432 = vunpack.c.l.b16 %v87
  %v433 = vunpack.c.h.b16 %v87
  %v434 = vunpack.c.l.b16 %v88
  %v435 = vunpack.c.h.b16 %v88
  %v436 = vunpack.c.l.b16 %v89
  %v437 = vunpack.c.h.b16 %v89
  %v438 = vunpack.c.l.b16 %v90
  %v439 = vunpack.c.h.b16 %v90
  %v440 = vunpack.c.l.b16 %v91
  %v441 = vunpack.c.h.b16 %v91
  %v442 = vunpack.c.l.b16 %v92
  %v443 = vunpack.c.h.b16 %v92
  %v444 = vunpack.c.l.b16 %v93
  %v445 = vunpack.c.h.b16 %v93
  %v446 = vunpack.c.l.b16 %v94
  %v447 = vunpack.c.h.b16 %v94
  %v448 = vunpack.c.l.b16 %v95
  %v449 = vunpack.c.h.b16 %v95
  %v450 = vunpack.c.l.b16 %v96
  %v451 = vunpack.c.h.b16 %v96
  %v452 = vunpack.c.l.b16 %v97
  %v453 = vunpack.c.h.b16 %v97
  %v454 = vunpack.c.l.b16 %v98
  %v455 = vunpack.c.h.b16 %v98
  %v456 = vunpack.c.l.b16 %v99
  %v457 = vunpack.c.h.b16 %v99
  %v458 = vunpack.c.l.b16 %v100
  %v459 = vunpack.c.h.b16 %v100
  %v460 = vunpack.c.l.b16 %v101
  %v461 = vunpack.c.h.b16 %v101
  %v462 = vunpack.c.l.b16 %v102
  %v463 = vunpack.c.h.b16 %v102
  %v464 = vunpack.c.l.b16 %v103
  %v465 = vunpack.c.h.b16 %v103
  %v466 = vunpack.c.l.b16 %v104
  %v467 = vunpack.c.h.b16 %v104
  %v468 = vunpack.c.l.b16 %v105
  %v469 = vunpack.c.h.b16 %v105
  %v470 = vunpack.c.l.b16 %v106
  %v471 = vunpack.c.h.b16 %v106
  %v472 = vunpack.c.l.b16 %v107
  %v473 = vunpack.c.h.b16 %v107
  %v474 = vunpack.c.l.b16 %v108
  %v475 = vunpack.c.h.b16 %v108
  %v476 = vunpack.c.l.b16 %v109
  %v477 = vunpack.c.h.b16 %v109
  %v478 = vunpack.c.l.b16 %v110
  %v479 = vunpack.c.h.b16 %v110
  %v480 = vunpack.c.l.b16 %v111
  %v481 = vunpack.c.h.b16 %v111
  %v482 = vunpack.c.l.b16 %v112
  %v483 = vunpack.c.h.b16 %v112
  %v484 = vunpack.c.l.b16 %v113
  %v485 = vunpack.c.h.b16 %v113
  %v486 = vunpack.c.l.b16 %v114
  %v487 = vunpack.c.h.b16 %v114
  %v488 = vunpack.c.l.b16 %v115
  %v489 = vunpack.c.h.b16 %v115
  %v490 = vunpack.c.l.b16 %v116
  %v491 = vunpack.c.h.b16 %v116
  %v492 = vunpack.c.l.b16 %v117
  %v493 = vunpack.c.h.b16 %v117
  %v494 = vunpack.c.l.b16 %v118
  %v495 = vunpack.c.h.b16 %v118
  %v496 = vunpack.c.l.b16 %v119
  %v497 = vunpack.c.h.b16 %v119
  %v498 = vunpack.c.l.b16 %v120
  %v499 = vunpack.c.h.b16 %v120
  %v500 = vunpack.c.l.b16 %v121
  %v501 = vunpack.c.h.b16 %v121
  %v502 = vunpack.c.l.b16 %v122
  %v503 = vunpack.c.h.b16 %v122
  %v504 = vunpack.c.l.b16 %v123
  %v505 = vunpack.c.h.b16 %v123
  %v506 = vunpack.c.l.b16 %v124
  %v507 = vunpack.c.h.b16 %v124
  %v508 = vunpack.c.l.b16 %v125
  %v509 = vunpack.c.h.b16 %v125
  %v510 = vunpack.c.l.b16 %v126
  %v511 = vunpack.c.h.b16 %v126
  %v512 = vunpack.c.l.b16 %v127
  %v513 = vunpack.c.h.b16 %v127
  %v514 = vunpack.c.l.b16 %v128
  %v515 = vunpack.c.h.b16 %v128
  %v516 = vunpack.c.l.b16 %v129
  %v517 = vunpack.c.h.b16 %v129
  %v518 = vunpack.c.l.b16 %v130
  %v519 = vunpack.c.h.b16 %v130
  %v520 = vunpack.c.l.b16 %v131
  %v521 = vunpack.c.h.b16 %v131
  %v522 = vunpack.c.l.b16 %v132
  %v523 = vunpack.c.h.b16 %v132
  %v524 = vunpack.c.l.b16 %v133
  %v525 = vunpack.c.h.b16 %v133
  %v526 = vunpack.c.l.b16 %v134
  %v527 = vunpack.c.h.b16 %v134
  %v528 = vunpack.c.l.b16 %v135
  %v529 = vunpack.c.h.b16 %v135
  %v530 = vunpack.c.l.b16 %v136
  %v531 = vunpack.c.h.b16 %v136
  %v532 = vunpack.c.l.b16 %v137
  %v533 = vunpack.c.h.b16 %v137
  %v534 = vunpack.c.l.b16 %v138
  %v535 = vunpack.c.h.b16 %v138
  %v536 = vunpack.c.l.b16 %v139
  %v537 = vunpack.c.h.b16 %v139
  %v538 = vunpack.c.l.b16 %v140
  %v539 = vunpack.c.h.b16 %v140
  %v540 = vunpack.c.l.b16 %v141
  %v541 = vunpack.c.h.b16 %v141
  %v542 = vunpack.c.l.b16 %v142
  %v543 = vunpack.c.h.b16 %v142
  %v544 = vunpack.c.l.b16 %v143
  %v545 = vunpack.c.h.b16 %v143
  %v546 = vunpack.c.l.b16 %v144
  %v547 = vunpack.c.h.b16 %v144
  %v548 = vunpack.c.l.b16 %v145
  %v549 = vunpack.c.h.b16 %v145
  %v550 = vunpack.c.l.b16 %v146
  %v551 = vunpack.c.h.b16 %v146
  %v552 = vunpack.c.l.b16 %v147
  %v553 = vunpack.c.h.b16 %v147
  %v554 = vunpack.c.l.b16 %v148
  %v555 = vunpack.c.h.b16 %v148
  %v556 = vunpack.c.l.b16 %v149
  %v557 = vunpack.c.h.b16 %v149
  %v558 = vunpack.c.l.b16 %v150
  %v559 = vunpack.c.h.b16 %v150
  %v560 = vunpack.c.l.b16 %v151
  %v561 = vunpack.c.h.b16 %v151
  %v562 = vunpack.c.l.b16 %v152
  %v563 = vunpack.c.h.b16 %v152
  %v564 = vunpack.c.l.b16 %v153
  %v565 = vunpack.c.h.b16 %v153
  %v566 = vunpack.c.l.b16 %v154
  %v567 = vunpack.c.h.b16 %v154
  %v568 = vunpack.c.l.b16 %v155
  %v569 = vunpack.c.h.b16 %v155
  %v570 = vunpack.c.l.b16 %v156
  %v571 = vunpack.c.h.b16 %v156
  %v572 = vunpack.c.l.b16 %v157
  %v573 = vunpack.c.h.b16 %v157
  %v574 = vunpack.c.l.b16 %v158
  %v575 = vunpack.c.h.b16 %v158
  %v576 = vunpack.c.l.b16 %v159
  %v577 = vunpack.c.h.b16 %v159
  %v578 = vunpack.c.l.b16 %v160
  %v579 = vunpack.c.h.b16 %v160
  %v580 = vunpack.c.l.b16 %v161
  %v581 = vunpack.c.h.b16 %v161
  %v582 = vpack.c.b16 %v392, %v390
  %v583 = vpack.c.b16 %v393, %v391
  %v584 = vpack.c.b16 %v396, %v394
  %v585 = vpack.c.b16 %v397, %v395
  %v586 = vpack.c.b16 %v400, %v398
  %v587 = vpack.c.b16 %v401, %v399
  %v588 = vpack.c.b16 %v404, %v402
  %v589 = vpack.c.b16 %v405, %v403
  %v590 = vpack.c.b16 %v408, %v406
  %v591 = vpack.c.b16 %v409, %v407
  %v592 = vpack.c.b16 %v412, %v410
  %v593 = vpack.c.b16 %v413, %v411
  %v594 = vpack.c.b16 %v416, %v414
  %v595 = vpack.c.b16 %v417, %v415
  %v596 = vpack.c.b16 %v420, %v418
  %v597 = vpack.c.b16 %v421, %v419
  %v598 = vpack.c.b16 %v424, %v422
  %v599 = vpack.c.b16 %v425, %v423
  %v600 = vpack.c.b16 %v428, %v426
  %v601 = vpack.c.b16 %v429, %v427
  %v602 = vpack.c.b16 %v432, %v430
  %v603 = vpack.c.b16 %v433, %v431
  %v604 = vpack.c.b16 %v436, %v434
  %v605 = vpack.c.b16 %v437, %v435
  %v606 = vpack.c.b16 %v440, %v438
  %v607 = vpack.c.b16 %v441, %v439
  %v608 = vpack.c.b16 %v444, %v442
  %v609 = vpack.c.b16 %v445, %v443
  %v610 = vpack.c.b16 %v448, %v446
  %v611 = vpack.c.b16 %v449, %v447
  %v612 = vpack.c.b16 %v452, %v450
  %v613 = vpack.c.b16 %v453, %v451
  %v614 = vpack.c.b16 %v456, %v454
  %v615 = vpack.c.b16 %v457, %v455
  %v616 = vpack.c.b16 %v460, %v458
  %v617 = vpack.c.b16 %v461, %v459
  %v618 = vpack.c.b16 %v464, %v462
  %v619 = vpack.c.b16 %v465, %v463
  %v620 = vpack.c.b16 %v468, %v466
  %v621 = vpack.c.b16 %v469, %v467
  %v622 = vpack.c.b16 %v472, %v470
  %v623 = vpack.c.b16 %v473, %v471
  %v624 = vpack.c.b16 %v476, %v474
  %v625 = vpack.c.b16 %v477, %v475
  %v626 = vpack.c.b16 %v480, %v478
  %v627 = vpack.c.b16 %v481, %v479
  %v628 = vpack.c.b16 %v484, %v482
  %v629 = vpack.c.b16 %v485, %v483
  %v630 = vpack.c.b16 %v488, %v486
  %v631 = vpack.c.b16 %v489, %v487
  %v632 = vpack.c.b16 %v492, %v490
  %v633 = vpack.c.b16 %v493, %v491
  %v634 = vpack.c.b16 %v496, %v494
  %v635 = vpack.c.b16 %v497, %v495
  %v636 = vpack.c.b16 %v500, %v498
  %v637 = vpack.c.b16 %v501, %v499
  %v638 = vpack.c.b16 %v504, %v502
  %v639 = vpack.c.b16 %v505, %v503
  %v640 = vpack.c.b16 %v508, %v506
  %v641 = vpack.c.b16 %v509, %v507
  %v642 = vpack.c.b16 %v512, %v510
  %v643 = vpack.c.b16 %v513, %v511
  %v644 = vpack.c.b16 %v516, %v514
  %v645 = vpack.c.b16 %v517, %v515
  %v646 = vpack.c.b16 %v520, %v518
  %v647 = vpack.c.b16 %v521, %v519
  %v648 = vpack.c.b16 %v524, %v522
  %v649 = vpack.c.b16 %v525, %v523
  %v650 = vpack.c.b16 %v528, %v526
  %v651 = vpack.c.b16 %v529, %v527
  %v652 = vpack.c.b16 %v532, %v530
  %v653 = vpack.c.b16 %v533, %v531
  %v654 = vpack.c.b16 %v536, %v534
  %v655 = vpack.c.b16 %v537, %v535
  %v656 = vpack.c.b16 %v540, %v538
  %v657 = vpack.c.b16 %v541, %v539
  %v658 = vpack.c.b16 %v544, %v542
  %v659 = vpack.c.b16 %v545, %v543
  %v660 = vpack.c.b16 %v548, %v546
  %v661 = vpack.c.b16 %v549, %v547
  %v662 = vpack.c.b16 %v552, %v550
  %v663 = vpack.c.b16 %v553, %v551
  %v664 = vpack.c.b16 %v556, %v554
  %v665 = vpack.c.b16 %v557, %v555
  %v666 = vpack.c.b16 %v560, %v558
  %v667 = vpack.c.b16 %v561, %v559
  %v668 = vpack.c.b16 %v564, %v562
  %v669 = vpack.c.b16 %v565, %v563
  %v670 = vpack.c.b16 %v568, %v566
  %v671 = vpack.c.b16 %v569, %v567
  %v672 = vpack.c.b16 %v572, %v570
  %v673 = vpack.c.b16 %v573, %v571
  %v674 = vpack.c.b16 %v576, %v574
  %v675 = vpack.c.b16 %v577, %v575
  %v676 = vpack.c.b16 %v580, %v578
  %v677 = vpack.c.b16 %v581, %v579
  %774 = vmatprep.subr.bf16.mxu0 %v583
  %775 = vmatpush1.bf16.msra.mxu0 %v582
  %776 = vmatprep.subr.bf16.mxu0 %v585
  %777 = vmatpush1.bf16.msra.mxu0 %v584
  %778 = vmatprep.subr.bf16.mxu0 %v587
  %779 = vmatpush1.bf16.msra.mxu0 %v586
  %780 = vmatprep.subr.bf16.mxu0 %v589
  %781 = vmatpush1.bf16.msra.mxu0 %v588
  %782 = vmatprep.subr.bf16.mxu0 %v591
  %783 = vmatpush1.bf16.msra.mxu0 %v590
  %784 = vmatprep.subr.bf16.mxu0 %v593
  %785 = vmatpush1.bf16.msra.mxu0 %v592
  %786 = vmatprep.subr.bf16.mxu0 %v595
  %787 = vmatpush1.bf16.msra.mxu0 %v594
  %788 = vmatprep.subr.bf16.mxu0 %v597
  %789 = vmatpush1.bf16.msra.mxu0 %v596
  %790 = vmatprep.subr.bf16.mxu0 %v599
  %791 = vmatpush1.bf16.msra.mxu0 %v598
  %792 = vmatprep.subr.bf16.mxu0 %v601
  %793 = vmatpush1.bf16.msra.mxu0 %v600
  %794 = vmatprep.subr.bf16.mxu0 %v603
  %795 = vmatpush1.bf16.msra.mxu0 %v602
  %796 = vmatprep.subr.bf16.mxu0 %v605
  %797 = vmatpush1.bf16.msra.mxu0 %v604
  %798 = vmatprep.subr.bf16.mxu0 %v607
  %799 = vmatpush1.bf16.msra.mxu0 %v606
  %800 = vmatprep.subr.bf16.mxu0 %v609
  %801 = vmatpush1.bf16.msra.mxu0 %v608
  %802 = vmatprep.subr.bf16.mxu0 %v611
  %803 = vmatpush1.bf16.msra.mxu0 %v610
  %804 = vmatprep.subr.bf16.mxu0 %v613
  %805 = vmatpush1.bf16.msra.mxu0 %v612
  %806 = vmatprep.mubr.bf16.mxu0 %v247
  %807 = vmatmul.mubr.bf16.gmra.mrb[0].mxu0 %v246
  %v808 = vpop.f32.mrb[0].mxu0
  %v809 = vadd.f32 %v167, %v808
  %v810 = vpop.f32.mrb[0].mxu0
  %v811 = vadd.f32 %v171, %v810
  %v812 = vpop.f32.mrb[0].mxu0
  %v813 = vadd.f32 %v167, %v812
  %v814 = vpop.f32.mrb[0].mxu0
  %v815 = vadd.f32 %v171, %v814
  %816 = vmatprep.mubr.bf16.mxu0 %v253
  %817 = vmatmul.mubr.bf16.gmra.mrb[0].mxu0 %v252
  %v818 = vpop.f32.mrb[0].mxu0
  %v819 = vadd.f32 %v167, %v818
  %v820 = vpop.f32.mrb[0].mxu0
  %v821 = vadd.f32 %v171, %v820
  %v822 = vpop.f32.mrb[0].mxu0
  %v823 = vadd.f32 %v167, %v822
  %v824 = vpop.f32.mrb[0].mxu0
  %v825 = vadd.f32 %v171, %v824
  %826 = vmatprep.mubr.bf16.mxu0 %v259
  %827 = vmatmul.mubr.bf16.gmra.mrb[0].mxu0 %v258
  %v828 = vpop.f32.mrb[0].mxu0
  %v829 = vadd.f32 %v167, %v828
  %v830 = vpop.f32.mrb[0].mxu0
  %v831 = vadd.f32 %v171, %v830
  %v832 = vpop.f32.mrb[0].mxu0
  %v833 = vadd.f32 %v167, %v832
  %v834 = vpop.f32.mrb[0].mxu0
  %v835 = vadd.f32 %v171, %v834
  %836 = vmatprep.mubr.bf16.mxu0 %v265
  %837 = vmatmul.mubr.bf16.gmra.mrb[0].mxu0 %v264
  %v838 = vpop.f32.mrb[0].mxu0
  %v839 = vadd.f32 %v167, %v838
  %v840 = vpop.f32.mrb[0].mxu0
  %v841 = vadd.f32 %v171, %v840
  %v842 = vpop.f32.mrb[0].mxu0
  %v843 = vadd.f32 %v167, %v842
  %v844 = vpop.f32.mrb[0].mxu0
  %v845 = vadd.f32 %v171, %v844
  %846 = vdwg.mxu0
  %847 = vmatprep.subr.bf16.mxu0 %v615
  %848 = vmatpush1.bf16.msra.mxu0 %v614
  %849 = vmatprep.subr.bf16.mxu0 %v617
  %850 = vmatpush1.bf16.msra.mxu0 %v616
  %851 = vmatprep.subr.bf16.mxu0 %v619
  %852 = vmatpush1.bf16.msra.mxu0 %v618
  %853 = vmatprep.subr.bf16.mxu0 %v621
  %854 = vmatpush1.bf16.msra.mxu0 %v620
  %855 = vmatprep.subr.bf16.mxu0 %v623
  %856 = vmatpush1.bf16.msra.mxu0 %v622
  %857 = vmatprep.subr.bf16.mxu0 %v625
  %858 = vmatpush1.bf16.msra.mxu0 %v624
  %859 = vmatprep.subr.bf16.mxu0 %v627
  %860 = vmatpush1.bf16.msra.mxu0 %v626
  %861 = vmatprep.subr.bf16.mxu0 %v629
  %862 = vmatpush1.bf16.msra.mxu0 %v628
  %863 = vmatprep.subr.bf16.mxu0 %v631
  %864 = vmatpush1.bf16.msra.mxu0 %v630
  %865 = vmatprep.subr.bf16.mxu0 %v633
  %866 = vmatpush1.bf16.msra.mxu0 %v632
  %867 = vmatprep.subr.bf16.mxu0 %v635
  %868 = vmatpush1.bf16.msra.mxu0 %v634
  %869 = vmatprep.subr.bf16.mxu0 %v637
  %870 = vmatpush1.bf16.msra.mxu0 %v636
  %871 = vmatprep.subr.bf16.mxu0 %v639
  %872 = vmatpush1.bf16.msra.mxu0 %v638
  %873 = vmatprep.subr.bf16.mxu0 %v641
  %874 = vmatpush1.bf16.msra.mxu0 %v640
  %875 = vmatprep.subr.bf16.mxu0 %v643
  %876 = vmatpush1.bf16.msra.mxu0 %v642
  %877 = vmatprep.subr.bf16.mxu0 %v645
  %878 = vmatpush1.bf16.msra.mxu0 %v644
  %879 = vmatprep.mubr.bf16.mxu0 %v249
  %880 = vmatmul.mubr.bf16.gmra.mrb[0].mxu0 %v248
  %v881 = vpop.f32.mrb[0].mxu0
  %v882 = vadd.f32 %v809, %v881
  %v883 = vpop.f32.mrb[0].mxu0
  %v884 = vadd.f32 %v811, %v883
  %v885 = vpop.f32.mrb[0].mxu0
  %v886 = vadd.f32 %v813, %v885
  %v887 = vpop.f32.mrb[0].mxu0
  %v888 = vadd.f32 %v815, %v887
  %889 = vmatprep.mubr.bf16.mxu0 %v255
  %890 = vmatmul.mubr.bf16.gmra.mrb[0].mxu0 %v254
  %v891 = vpop.f32.mrb[0].mxu0
  %v892 = vadd.f32 %v819, %v891
  %v893 = vpop.f32.mrb[0].mxu0
  %v894 = vadd.f32 %v821, %v893
  %v895 = vpop.f32.mrb[0].mxu0
  %v896 = vadd.f32 %v823, %v895
  %v897 = vpop.f32.mrb[0].mxu0
  %v898 = vadd.f32 %v825, %v897
  %899 = vmatprep.mubr.bf16.mxu0 %v261
  %900 = vmatmul.mubr.bf16.gmra.mrb[0].mxu0 %v260
  %v901 = vpop.f32.mrb[0].mxu0
  %v902 = vadd.f32 %v829, %v901
  %v903 = vpop.f32.mrb[0].mxu0
  %v904 = vadd.f32 %v831, %v903
  %v905 = vpop.f32.mrb[0].mxu0
  %v906 = vadd.f32 %v833, %v905
  %v907 = vpop.f32.mrb[0].mxu0
  %v908 = vadd.f32 %v835, %v907
  %909 = vmatprep.mubr.bf16.mxu0 %v267
  %910 = vmatmul.mubr.bf16.gmra.mrb[0].mxu0 %v266
  %v911 = vpop.f32.mrb[0].mxu0
  %v912 = vadd.f32 %v839, %v911
  %v913 = vpop.f32.mrb[0].mxu0
  %v914 = vadd.f32 %v841, %v913
  %v915 = vpop.f32.mrb[0].mxu0
  %v916 = vadd.f32 %v843, %v915
  %v917 = vpop.f32.mrb[0].mxu0
  %v918 = vadd.f32 %v845, %v917
  %919 = vdwg.mxu0
  %920 = vmatprep.subr.bf16.mxu0 %v647
  %921 = vmatpush1.bf16.msra.mxu0 %v646
  %922 = vmatprep.subr.bf16.mxu0 %v649
  %923 = vmatpush1.bf16.msra.mxu0 %v648
  %924 = vmatprep.subr.bf16.mxu0 %v651
  %925 = vmatpush1.bf16.msra.mxu0 %v650
  %926 = vmatprep.subr.bf16.mxu0 %v653
  %927 = vmatpush1.bf16.msra.mxu0 %v652
  %928 = vmatprep.subr.bf16.mxu0 %v655
  %929 = vmatpush1.bf16.msra.mxu0 %v654
  %930 = vmatprep.subr.bf16.mxu0 %v657
  %931 = vmatpush1.bf16.msra.mxu0 %v656
  %932 = vmatprep.subr.bf16.mxu0 %v659
  %933 = vmatpush1.bf16.msra.mxu0 %v658
  %934 = vmatprep.subr.bf16.mxu0 %v661
  %935 = vmatpush1.bf16.msra.mxu0 %v660
  %936 = vmatprep.subr.bf16.mxu0 %v663
  %937 = vmatpush1.bf16.msra.mxu0 %v662
  %938 = vmatprep.subr.bf16.mxu0 %v665
  %939 = vmatpush1.bf16.msra.mxu0 %v664
  %940 = vmatprep.subr.bf16.mxu0 %v667
  %941 = vmatpush1.bf16.msra.mxu0 %v666
  %942 = vmatprep.subr.bf16.mxu0 %v669
  %943 = vmatpush1.bf16.msra.mxu0 %v668
  %944 = vmatprep.subr.bf16.mxu0 %v671
  %945 = vmatpush1.bf16.msra.mxu0 %v670
  %946 = vmatprep.subr.bf16.mxu0 %v673
  %947 = vmatpush1.bf16.msra.mxu0 %v672
  %948 = vmatprep.subr.bf16.mxu0 %v675
  %949 = vmatpush1.bf16.msra.mxu0 %v674
  %950 = vmatprep.subr.bf16.mxu0 %v677
  %951 = vmatpush1.bf16.msra.mxu0 %v676
  %952 = vmatprep.mubr.bf16.mxu0 %v251
  %953 = vmatmul.mubr.bf16.gmra.mrb[0].mxu0 %v250
  %v954 = vpop.f32.mrb[0].mxu0
  %v955 = vadd.f32 %v882, %v954
  %v956 = vpop.f32.mrb[0].mxu0
  %v957 = vadd.f32 %v884, %v956
  %v958 = vpop.f32.mrb[0].mxu0
  %v959 = vadd.f32 %v886, %v958
  %v960 = vpop.f32.mrb[0].mxu0
  %v961 = vadd.f32 %v888, %v960
  %962 = vmatprep.mubr.bf16.mxu0 %v257
  %963 = vmatmul.mubr.bf16.gmra.mrb[0].mxu0 %v256
  %v964 = vpop.f32.mrb[0].mxu0
  %v965 = vadd.f32 %v892, %v964
  %v966 = vpop.f32.mrb[0].mxu0
  %v967 = vadd.f32 %v894, %v966
  %v968 = vpop.f32.mrb[0].mxu0
  %v969 = vadd.f32 %v896, %v968
  %v970 = vpop.f32.mrb[0].mxu0
  %v971 = vadd.f32 %v898, %v970
  %972 = vmatprep.mubr.bf16.mxu0 %v263
  %973 = vmatmul.mubr.bf16.gmra.mrb[0].mxu0 %v262
  %v974 = vpop.f32.mrb[0].mxu0
  %v975 = vadd.f32 %v902, %v974
  %v976 = vpop.f32.mrb[0].mxu0
  %v977 = vadd.f32 %v904, %v976
  %v978 = vpop.f32.mrb[0].mxu0
  %v979 = vadd.f32 %v906, %v978
  %v980 = vpop.f32.mrb[0].mxu0
  %v981 = vadd.f32 %v908, %v980
  %982 = vmatprep.mubr.bf16.mxu0 %v269
  %983 = vmatmul.mubr.bf16.gmra.mrb[0].mxu0 %v268
  %v984 = vpop.f32.mrb[0].mxu0
  %v985 = vadd.f32 %v912, %v984
  %v986 = vpop.f32.mrb[0].mxu0
  %v987 = vadd.f32 %v914, %v986
  %v988 = vpop.f32.mrb[0].mxu0
  %v989 = vadd.f32 %v916, %v988
  %v990 = vpop.f32.mrb[0].mxu0
  %v991 = vadd.f32 %v918, %v990
  %992 = vdwg.mxu0
  %993 = vst [vmem:[#allocation2] sm:$0xff] %v955
  %vm994 = vcmask 523264
  %995 = vst.msk [vmem:[#allocation2 + $0x8] sm:$0xff] %vm994, %v957
  %996 = vst [vmem:[#allocation2 + $0x10] sm:$0xff] %v959
  %997 = vst.msk [vmem:[#allocation2 + $0x18] sm:$0xff] %vm994, %v961
  %998 = vst [vmem:[#allocation2 + $0x20] sm:$0xff] %v965
  %999 = vst.msk [vmem:[#allocation2 + $0x28] sm:$0xff] %vm994, %v967
  %1000 = vst [vmem:[#allocation2 + $0x30] sm:$0xff] %v969
  %1001 = vst.msk [vmem:[#allocation2 + $0x38] sm:$0xff] %vm994, %v971
  %1002 = vst [vmem:[#allocation2 + $0x40] sm:$0xff] %v975
  %1003 = vst.msk [vmem:[#allocation2 + $0x48] sm:$0xff] %vm994, %v977
  %1004 = vst [vmem:[#allocation2 + $0x50] sm:$0xff] %v979
  %1005 = vst.msk [vmem:[#allocation2 + $0x58] sm:$0xff] %vm994, %v981
  %1006 = vst [vmem:[#allocation2 + $0x60] sm:$0xff] %v985
  %1007 = vst.msk [vmem:[#allocation2 + $0x68] sm:$0xff] %vm994, %v987
  %1008 = vst [vmem:[#allocation2 + $0x70] sm:$0xff] %v989
  %1009 = vst.msk [vmem:[#allocation2 + $0x78] sm:$0xff] %vm994, %v991
  %s1010 = scalar_lea.vmem %s1, 768
  %v1011 = vld [vmem:[%s1010] sm:$0xff]
  %v1012 = vld [vmem:[%s1010 + $0x8] sm:$0xff]
  %v1013 = vld [vmem:[%s1010 + $0x10] sm:$0xff]
  %v1014 = vld [vmem:[%s1010 + $0x18] sm:$0xff]
  %v1015 = vld [vmem:[%s1010 + $0x20] sm:$0xff]
  %v1016 = vld [vmem:[%s1010 + $0x28] sm:$0xff]
  %v1017 = vld [vmem:[%s1010 + $0x30] sm:$0xff]
  %v1018 = vld [vmem:[%s1010 + $0x38] sm:$0xff]
  %v1019 = vld [vmem:[%s1010 + $0x40] sm:$0xff]
  %v1020 = vld [vmem:[%s1010 + $0x48] sm:$0xff]
  %v1021 = vld [vmem:[%s1010 + $0x50] sm:$0xff]
  %v1022 = vld [vmem:[%s1010 + $0x58] sm:$0xff]
  %v1023 = vld [vmem:[%s1010 + $0x60] sm:$0xff]
  %v1024 = vld [vmem:[%s1010 + $0x68] sm:$0xff]
  %v1025 = vld [vmem:[%s1010 + $0x70] sm:$0xff]
  %v1026 = vld [vmem:[%s1010 + $0x78] sm:$0xff]
  %v1027 = vld [vmem:[%s1010 + $0x80] sm:$0xff]
  %v1028 = vld [vmem:[%s1010 + $0x88] sm:$0xff]
  %v1029 = vld [vmem:[%s1010 + $0x90] sm:$0xff]
  %v1030 = vld [vmem:[%s1010 + $0x98] sm:$0xff]
  %v1031 = vld [vmem:[%s1010 + $0xa0] sm:$0xff]
  %v1032 = vld [vmem:[%s1010 + $0xa8] sm:$0xff]
  %v1033 = vld [vmem:[%s1010 + $0xb0] sm:$0xff]
  %v1034 = vld [vmem:[%s1010 + $0xb8] sm:$0xff]
  %v1035 = vld [vmem:[%s1010 + $0xc0] sm:$0xff]
  %v1036 = vld [vmem:[%s1010 + $0xc8] sm:$0xff]
  %v1037 = vld [vmem:[%s1010 + $0xd0] sm:$0xff]
  %v1038 = vld [vmem:[%s1010 + $0xd8] sm:$0xff]
  %v1039 = vld [vmem:[%s1010 + $0xe0] sm:$0xff]
  %v1040 = vld [vmem:[%s1010 + $0xe8] sm:$0xff]
  %v1041 = vld [vmem:[%s1010 + $0xf0] sm:$0xff]
  %v1042 = vld [vmem:[%s1010 + $0xf8] sm:$0xff]
  %v1043 = vld [vmem:[%s1010 + $0x100] sm:$0xff]
  %v1044 = vld [vmem:[%s1010 + $0x108] sm:$0xff]
  %v1045 = vld [vmem:[%s1010 + $0x110] sm:$0xff]
  %v1046 = vld [vmem:[%s1010 + $0x118] sm:$0xff]
  %v1047 = vld [vmem:[%s1010 + $0x120] sm:$0xff]
  %v1048 = vld [vmem:[%s1010 + $0x128] sm:$0xff]
  %v1049 = vld [vmem:[%s1010 + $0x130] sm:$0xff]
  %v1050 = vld [vmem:[%s1010 + $0x138] sm:$0xff]
  %v1051 = vld [vmem:[%s1010 + $0x140] sm:$0xff]
  %v1052 = vld [vmem:[%s1010 + $0x148] sm:$0xff]
  %v1053 = vld [vmem:[%s1010 + $0x150] sm:$0xff]
  %v1054 = vld [vmem:[%s1010 + $0x158] sm:$0xff]
  %v1055 = vld [vmem:[%s1010 + $0x160] sm:$0xff]
  %v1056 = vld [vmem:[%s1010 + $0x168] sm:$0xff]
  %v1057 = vld [vmem:[%s1010 + $0x170] sm:$0xff]
  %v1058 = vld [vmem:[%s1010 + $0x178] sm:$0xff]
  %v1059 = vld [vmem:[%s1010 + $0x180] sm:$0xff]
  %v1060 = vld [vmem:[%s1010 + $0x188] sm:$0xff]
  %v1061 = vld [vmem:[%s1010 + $0x190] sm:$0xff]
  %v1062 = vld [vmem:[%s1010 + $0x198] sm:$0xff]
  %v1063 = vld [vmem:[%s1010 + $0x1a0] sm:$0xff]
  %v1064 = vld [vmem:[%s1010 + $0x1a8] sm:$0xff]
  %v1065 = vld [vmem:[%s1010 + $0x1b0] sm:$0xff]
  %v1066 = vld [vmem:[%s1010 + $0x1b8] sm:$0xff]
  %v1067 = vld [vmem:[%s1010 + $0x1c0] sm:$0xff]
  %v1068 = vld [vmem:[%s1010 + $0x1c8] sm:$0xff]
  %v1069 = vld [vmem:[%s1010 + $0x1d0] sm:$0xff]
  %v1070 = vld [vmem:[%s1010 + $0x1d8] sm:$0xff]
  %v1071 = vld [vmem:[%s1010 + $0x1e0] sm:$0xff]
  %v1072 = vld [vmem:[%s1010 + $0x1e8] sm:$0xff]
  %v1073 = vld [vmem:[%s1010 + $0x1f0] sm:$0xff]
  %v1074 = vld [vmem:[%s1010 + $0x1f8] sm:$0xff]
  %v1075 = vld [vmem:[%s1010 + $0x200] sm:$0xff]
  %v1076 = vld [vmem:[%s1010 + $0x208] sm:$0xff]
  %v1077 = vld [vmem:[%s1010 + $0x210] sm:$0xff]
  %v1078 = vld [vmem:[%s1010 + $0x218] sm:$0xff]
  %v1079 = vld [vmem:[%s1010 + $0x220] sm:$0xff]
  %v1080 = vld [vmem:[%s1010 + $0x228] sm:$0xff]
  %v1081 = vld [vmem:[%s1010 + $0x230] sm:$0xff]
  %v1082 = vld [vmem:[%s1010 + $0x238] sm:$0xff]
  %v1083 = vld [vmem:[%s1010 + $0x240] sm:$0xff]
  %v1084 = vld [vmem:[%s1010 + $0x248] sm:$0xff]
  %v1085 = vld [vmem:[%s1010 + $0x250] sm:$0xff]
  %v1086 = vld [vmem:[%s1010 + $0x258] sm:$0xff]
  %v1087 = vld [vmem:[%s1010 + $0x260] sm:$0xff]
  %v1088 = vld [vmem:[%s1010 + $0x268] sm:$0xff]
  %v1089 = vld [vmem:[%s1010 + $0x270] sm:$0xff]
  %v1090 = vld [vmem:[%s1010 + $0x278] sm:$0xff]
  %v1091 = vld [vmem:[%s1010 + $0x280] sm:$0xff]
  %v1092 = vld [vmem:[%s1010 + $0x288] sm:$0xff]
  %v1093 = vld [vmem:[%s1010 + $0x290] sm:$0xff]
  %v1094 = vld [vmem:[%s1010 + $0x298] sm:$0xff]
  %v1095 = vld [vmem:[%s1010 + $0x2a0] sm:$0xff]
  %v1096 = vld [vmem:[%s1010 + $0x2a8] sm:$0xff]
  %v1097 = vld [vmem:[%s1010 + $0x2b0] sm:$0xff]
  %v1098 = vld [vmem:[%s1010 + $0x2b8] sm:$0xff]
  %v1099 = vld [vmem:[%s1010 + $0x2c0] sm:$0xff]
  %v1100 = vld [vmem:[%s1010 + $0x2c8] sm:$0xff]
  %v1101 = vld [vmem:[%s1010 + $0x2d0] sm:$0xff]
  %v1102 = vld [vmem:[%s1010 + $0x2d8] sm:$0xff]
  %v1103 = vld [vmem:[%s1010 + $0x2e0] sm:$0xff]
  %v1104 = vld [vmem:[%s1010 + $0x2e8] sm:$0xff]
  %v1105 = vld [vmem:[%s1010 + $0x2f0] sm:$0xff]
  %v1106 = vld [vmem:[%s1010 + $0x2f8] sm:$0xff]
  %s1107 = scalar_lea.vmem %s2, 2
  %v1108 = vld [vmem:[%s1107] sm:$0x3]
  %v1110 = vlaneseq
  %v1111 = vshrl.u32 %v1110, 7
  %v1112 = vsub.s32 0, %v1111
  %v1113 = vrot.slane %v1108, %v1112
  %v1114 = vlaneseq
  %v1115 = vshrl.u32 %v1114, 7
  %v1116 = vsub.s32 1, %v1115
  %v1117 = vrot.slane %v1108, %v1116
  %v1216 = vunpack.c.l.b16 %v1011
  %v1217 = vunpack.c.h.b16 %v1011
  %v1218 = vunpack.c.l.b16 %v1012
  %v1219 = vunpack.c.h.b16 %v1012
  %v1220 = vunpack.c.l.b16 %v1013
  %v1221 = vunpack.c.h.b16 %v1013
  %v1222 = vunpack.c.l.b16 %v1014
  %v1223 = vunpack.c.h.b16 %v1014
  %v1224 = vunpack.c.l.b16 %v1015
  %v1225 = vunpack.c.h.b16 %v1015
  %v1226 = vunpack.c.l.b16 %v1016
  %v1227 = vunpack.c.h.b16 %v1016
  %v1228 = vunpack.c.l.b16 %v1017
  %v1229 = vunpack.c.h.b16 %v1017
  %v1230 = vunpack.c.l.b16 %v1018
  %v1231 = vunpack.c.h.b16 %v1018
  %v1232 = vunpack.c.l.b16 %v1019
  %v1233 = vunpack.c.h.b16 %v1019
  %v1234 = vunpack.c.l.b16 %v1020
  %v1235 = vunpack.c.h.b16 %v1020
  %v1236 = vunpack.c.l.b16 %v1021
  %v1237 = vunpack.c.h.b16 %v1021
  %v1238 = vunpack.c.l.b16 %v1022
  %v1239 = vunpack.c.h.b16 %v1022
  %v1240 = vunpack.c.l.b16 %v1023
  %v1241 = vunpack.c.h.b16 %v1023
  %v1242 = vunpack.c.l.b16 %v1024
  %v1243 = vunpack.c.h.b16 %v1024
  %v1244 = vunpack.c.l.b16 %v1025
  %v1245 = vunpack.c.h.b16 %v1025
  %v1246 = vunpack.c.l.b16 %v1026
  %v1247 = vunpack.c.h.b16 %v1026
  %v1248 = vunpack.c.l.b16 %v1027
  %v1249 = vunpack.c.h.b16 %v1027
  %v1250 = vunpack.c.l.b16 %v1028
  %v1251 = vunpack.c.h.b16 %v1028
  %v1252 = vunpack.c.l.b16 %v1029
  %v1253 = vunpack.c.h.b16 %v1029
  %v1254 = vunpack.c.l.b16 %v1030
  %v1255 = vunpack.c.h.b16 %v1030
  %v1256 = vunpack.c.l.b16 %v1031
  %v1257 = vunpack.c.h.b16 %v1031
  %v1258 = vunpack.c.l.b16 %v1032
  %v1259 = vunpack.c.h.b16 %v1032
  %v1260 = vunpack.c.l.b16 %v1033
  %v1261 = vunpack.c.h.b16 %v1033
  %v1262 = vunpack.c.l.b16 %v1034
  %v1263 = vunpack.c.h.b16 %v1034
  %v1264 = vunpack.c.l.b16 %v1035
  %v1265 = vunpack.c.h.b16 %v1035
  %v1266 = vunpack.c.l.b16 %v1036
  %v1267 = vunpack.c.h.b16 %v1036
  %v1268 = vunpack.c.l.b16 %v1037
  %v1269 = vunpack.c.h.b16 %v1037
  %v1270 = vunpack.c.l.b16 %v1038
  %v1271 = vunpack.c.h.b16 %v1038
  %v1272 = vunpack.c.l.b16 %v1039
  %v1273 = vunpack.c.h.b16 %v1039
  %v1274 = vunpack.c.l.b16 %v1040
  %v1275 = vunpack.c.h.b16 %v1040
  %v1276 = vunpack.c.l.b16 %v1041
  %v1277 = vunpack.c.h.b16 %v1041
  %v1278 = vunpack.c.l.b16 %v1042
  %v1279 = vunpack.c.h.b16 %v1042
  %v1280 = vunpack.c.l.b16 %v1043
  %v1281 = vunpack.c.h.b16 %v1043
  %v1282 = vunpack.c.l.b16 %v1044
  %v1283 = vunpack.c.h.b16 %v1044
  %v1284 = vunpack.c.l.b16 %v1045
  %v1285 = vunpack.c.h.b16 %v1045
  %v1286 = vunpack.c.l.b16 %v1046
  %v1287 = vunpack.c.h.b16 %v1046
  %v1288 = vunpack.c.l.b16 %v1047
  %v1289 = vunpack.c.h.b16 %v1047
  %v1290 = vunpack.c.l.b16 %v1048
  %v1291 = vunpack.c.h.b16 %v1048
  %v1292 = vunpack.c.l.b16 %v1049
  %v1293 = vunpack.c.h.b16 %v1049
  %v1294 = vunpack.c.l.b16 %v1050
  %v1295 = vunpack.c.h.b16 %v1050
  %v1296 = vunpack.c.l.b16 %v1051
  %v1297 = vunpack.c.h.b16 %v1051
  %v1298 = vunpack.c.l.b16 %v1052
  %v1299 = vunpack.c.h.b16 %v1052
  %v1300 = vunpack.c.l.b16 %v1053
  %v1301 = vunpack.c.h.b16 %v1053
  %v1302 = vunpack.c.l.b16 %v1054
  %v1303 = vunpack.c.h.b16 %v1054
  %v1304 = vunpack.c.l.b16 %v1055
  %v1305 = vunpack.c.h.b16 %v1055
  %v1306 = vunpack.c.l.b16 %v1056
  %v1307 = vunpack.c.h.b16 %v1056
  %v1308 = vunpack.c.l.b16 %v1057
  %v1309 = vunpack.c.h.b16 %v1057
  %v1310 = vunpack.c.l.b16 %v1058
  %v1311 = vunpack.c.h.b16 %v1058
  %v1312 = vunpack.c.l.b16 %v1059
  %v1313 = vunpack.c.h.b16 %v1059
  %v1314 = vunpack.c.l.b16 %v1060
  %v1315 = vunpack.c.h.b16 %v1060
  %v1316 = vunpack.c.l.b16 %v1061
  %v1317 = vunpack.c.h.b16 %v1061
  %v1318 = vunpack.c.l.b16 %v1062
  %v1319 = vunpack.c.h.b16 %v1062
  %v1320 = vunpack.c.l.b16 %v1063
  %v1321 = vunpack.c.h.b16 %v1063
  %v1322 = vunpack.c.l.b16 %v1064
  %v1323 = vunpack.c.h.b16 %v1064
  %v1324 = vunpack.c.l.b16 %v1065
  %v1325 = vunpack.c.h.b16 %v1065
  %v1326 = vunpack.c.l.b16 %v1066
  %v1327 = vunpack.c.h.b16 %v1066
  %v1328 = vunpack.c.l.b16 %v1067
  %v1329 = vunpack.c.h.b16 %v1067
  %v1330 = vunpack.c.l.b16 %v1068
  %v1331 = vunpack.c.h.b16 %v1068
  %v1332 = vunpack.c.l.b16 %v1069
  %v1333 = vunpack.c.h.b16 %v1069
  %v1334 = vunpack.c.l.b16 %v1070
  %v1335 = vunpack.c.h.b16 %v1070
  %v1336 = vunpack.c.l.b16 %v1071
  %v1337 = vunpack.c.h.b16 %v1071
  %v1338 = vunpack.c.l.b16 %v1072
  %v1339 = vunpack.c.h.b16 %v1072
  %v1340 = vunpack.c.l.b16 %v1073
  %v1341 = vunpack.c.h.b16 %v1073
  %v1342 = vunpack.c.l.b16 %v1074
  %v1343 = vunpack.c.h.b16 %v1074
  %v1344 = vunpack.c.l.b16 %v1075
  %v1345 = vunpack.c.h.b16 %v1075
  %v1346 = vunpack.c.l.b16 %v1076
  %v1347 = vunpack.c.h.b16 %v1076
  %v1348 = vunpack.c.l.b16 %v1077
  %v1349 = vunpack.c.h.b16 %v1077
  %v1350 = vunpack.c.l.b16 %v1078
  %v1351 = vunpack.c.h.b16 %v1078
  %v1352 = vunpack.c.l.b16 %v1079
  %v1353 = vunpack.c.h.b16 %v1079
  %v1354 = vunpack.c.l.b16 %v1080
  %v1355 = vunpack.c.h.b16 %v1080
  %v1356 = vunpack.c.l.b16 %v1081
  %v1357 = vunpack.c.h.b16 %v1081
  %v1358 = vunpack.c.l.b16 %v1082
  %v1359 = vunpack.c.h.b16 %v1082
  %v1360 = vunpack.c.l.b16 %v1083
  %v1361 = vunpack.c.h.b16 %v1083
  %v1362 = vunpack.c.l.b16 %v1084
  %v1363 = vunpack.c.h.b16 %v1084
  %v1364 = vunpack.c.l.b16 %v1085
  %v1365 = vunpack.c.h.b16 %v1085
  %v1366 = vunpack.c.l.b16 %v1086
  %v1367 = vunpack.c.h.b16 %v1086
  %v1368 = vunpack.c.l.b16 %v1087
  %v1369 = vunpack.c.h.b16 %v1087
  %v1370 = vunpack.c.l.b16 %v1088
  %v1371 = vunpack.c.h.b16 %v1088
  %v1372 = vunpack.c.l.b16 %v1089
  %v1373 = vunpack.c.h.b16 %v1089
  %v1374 = vunpack.c.l.b16 %v1090
  %v1375 = vunpack.c.h.b16 %v1090
  %v1376 = vunpack.c.l.b16 %v1091
  %v1377 = vunpack.c.h.b16 %v1091
  %v1378 = vunpack.c.l.b16 %v1092
  %v1379 = vunpack.c.h.b16 %v1092
  %v1380 = vunpack.c.l.b16 %v1093
  %v1381 = vunpack.c.h.b16 %v1093
  %v1382 = vunpack.c.l.b16 %v1094
  %v1383 = vunpack.c.h.b16 %v1094
  %v1384 = vunpack.c.l.b16 %v1095
  %v1385 = vunpack.c.h.b16 %v1095
  %v1386 = vunpack.c.l.b16 %v1096
  %v1387 = vunpack.c.h.b16 %v1096
  %v1388 = vunpack.c.l.b16 %v1097
  %v1389 = vunpack.c.h.b16 %v1097
  %v1390 = vunpack.c.l.b16 %v1098
  %v1391 = vunpack.c.h.b16 %v1098
  %v1392 = vunpack.c.l.b16 %v1099
  %v1393 = vunpack.c.h.b16 %v1099
  %v1394 = vunpack.c.l.b16 %v1100
  %v1395 = vunpack.c.h.b16 %v1100
  %v1396 = vunpack.c.l.b16 %v1101
  %v1397 = vunpack.c.h.b16 %v1101
  %v1398 = vunpack.c.l.b16 %v1102
  %v1399 = vunpack.c.h.b16 %v1102
  %v1400 = vunpack.c.l.b16 %v1103
  %v1401 = vunpack.c.h.b16 %v1103
  %v1402 = vunpack.c.l.b16 %v1104
  %v1403 = vunpack.c.h.b16 %v1104
  %v1404 = vunpack.c.l.b16 %v1105
  %v1405 = vunpack.c.h.b16 %v1105
  %v1406 = vunpack.c.l.b16 %v1106
  %v1407 = vunpack.c.h.b16 %v1106
  %v1408 = vpack.c.b16 %v1218, %v1216
  %v1409 = vpack.c.b16 %v1219, %v1217
  %v1410 = vpack.c.b16 %v1222, %v1220
  %v1411 = vpack.c.b16 %v1223, %v1221
  %v1412 = vpack.c.b16 %v1226, %v1224
  %v1413 = vpack.c.b16 %v1227, %v1225
  %v1414 = vpack.c.b16 %v1230, %v1228
  %v1415 = vpack.c.b16 %v1231, %v1229
  %v1416 = vpack.c.b16 %v1234, %v1232
  %v1417 = vpack.c.b16 %v1235, %v1233
  %v1418 = vpack.c.b16 %v1238, %v1236
  %v1419 = vpack.c.b16 %v1239, %v1237
  %v1420 = vpack.c.b16 %v1242, %v1240
  %v1421 = vpack.c.b16 %v1243, %v1241
  %v1422 = vpack.c.b16 %v1246, %v1244
  %v1423 = vpack.c.b16 %v1247, %v1245
  %v1424 = vpack.c.b16 %v1250, %v1248
  %v1425 = vpack.c.b16 %v1251, %v1249
  %v1426 = vpack.c.b16 %v1254, %v1252
  %v1427 = vpack.c.b16 %v1255, %v1253
  %v1428 = vpack.c.b16 %v1258, %v1256
  %v1429 = vpack.c.b16 %v1259, %v1257
  %v1430 = vpack.c.b16 %v1262, %v1260
  %v1431 = vpack.c.b16 %v1263, %v1261
  %v1432 = vpack.c.b16 %v1266, %v1264
  %v1433 = vpack.c.b16 %v1267, %v1265
  %v1434 = vpack.c.b16 %v1270, %v1268
  %v1435 = vpack.c.b16 %v1271, %v1269
  %v1436 = vpack.c.b16 %v1274, %v1272
  %v1437 = vpack.c.b16 %v1275, %v1273
  %v1438 = vpack.c.b16 %v1278, %v1276
  %v1439 = vpack.c.b16 %v1279, %v1277
  %v1440 = vpack.c.b16 %v1282, %v1280
  %v1441 = vpack.c.b16 %v1283, %v1281
  %v1442 = vpack.c.b16 %v1286, %v1284
  %v1443 = vpack.c.b16 %v1287, %v1285
  %v1444 = vpack.c.b16 %v1290, %v1288
  %v1445 = vpack.c.b16 %v1291, %v1289
  %v1446 = vpack.c.b16 %v1294, %v1292
  %v1447 = vpack.c.b16 %v1295, %v1293
  %v1448 = vpack.c.b16 %v1298, %v1296
  %v1449 = vpack.c.b16 %v1299, %v1297
  %v1450 = vpack.c.b16 %v1302, %v1300
  %v1451 = vpack.c.b16 %v1303, %v1301
  %v1452 = vpack.c.b16 %v1306, %v1304
  %v1453 = vpack.c.b16 %v1307, %v1305
  %v1454 = vpack.c.b16 %v1310, %v1308
  %v1455 = vpack.c.b16 %v1311, %v1309
  %v1456 = vpack.c.b16 %v1314, %v1312
  %v1457 = vpack.c.b16 %v1315, %v1313
  %v1458 = vpack.c.b16 %v1318, %v1316
  %v1459 = vpack.c.b16 %v1319, %v1317
  %v1460 = vpack.c.b16 %v1322, %v1320
  %v1461 = vpack.c.b16 %v1323, %v1321
  %v1462 = vpack.c.b16 %v1326, %v1324
  %v1463 = vpack.c.b16 %v1327, %v1325
  %v1464 = vpack.c.b16 %v1330, %v1328
  %v1465 = vpack.c.b16 %v1331, %v1329
  %v1466 = vpack.c.b16 %v1334, %v1332
  %v1467 = vpack.c.b16 %v1335, %v1333
  %v1468 = vpack.c.b16 %v1338, %v1336
  %v1469 = vpack.c.b16 %v1339, %v1337
  %v1470 = vpack.c.b16 %v1342, %v1340
  %v1471 = vpack.c.b16 %v1343, %v1341
  %v1472 = vpack.c.b16 %v1346, %v1344
  %v1473 = vpack.c.b16 %v1347, %v1345
  %v1474 = vpack.c.b16 %v1350, %v1348
  %v1475 = vpack.c.b16 %v1351, %v1349
  %v1476 = vpack.c.b16 %v1354, %v1352
  %v1477 = vpack.c.b16 %v1355, %v1353
  %v1478 = vpack.c.b16 %v1358, %v1356
  %v1479 = vpack.c.b16 %v1359, %v1357
  %v1480 = vpack.c.b16 %v1362, %v1360
  %v1481 = vpack.c.b16 %v1363, %v1361
  %v1482 = vpack.c.b16 %v1366, %v1364
  %v1483 = vpack.c.b16 %v1367, %v1365
  %v1484 = vpack.c.b16 %v1370, %v1368
  %v1485 = vpack.c.b16 %v1371, %v1369
  %v1486 = vpack.c.b16 %v1374, %v1372
  %v1487 = vpack.c.b16 %v1375, %v1373
  %v1488 = vpack.c.b16 %v1378, %v1376
  %v1489 = vpack.c.b16 %v1379, %v1377
  %v1490 = vpack.c.b16 %v1382, %v1380
  %v1491 = vpack.c.b16 %v1383, %v1381
  %v1492 = vpack.c.b16 %v1386, %v1384
  %v1493 = vpack.c.b16 %v1387, %v1385
  %v1494 = vpack.c.b16 %v1390, %v1388
  %v1495 = vpack.c.b16 %v1391, %v1389
  %v1496 = vpack.c.b16 %v1394, %v1392
  %v1497 = vpack.c.b16 %v1395, %v1393
  %v1498 = vpack.c.b16 %v1398, %v1396
  %v1499 = vpack.c.b16 %v1399, %v1397
  %v1500 = vpack.c.b16 %v1402, %v1400
  %v1501 = vpack.c.b16 %v1403, %v1401
  %v1502 = vpack.c.b16 %v1406, %v1404
  %v1503 = vpack.c.b16 %v1407, %v1405
  %1600 = vmatprep.subr.bf16.mxu0 %v1409
  %1601 = vmatpush1.bf16.msra.mxu0 %v1408
  %1602 = vmatprep.subr.bf16.mxu0 %v1411
  %1603 = vmatpush1.bf16.msra.mxu0 %v1410
  %1604 = vmatprep.subr.bf16.mxu0 %v1413
  %1605 = vmatpush1.bf16.msra.mxu0 %v1412
  %1606 = vmatprep.subr.bf16.mxu0 %v1415
  %1607 = vmatpush1.bf16.msra.mxu0 %v1414
  %1608 = vmatprep.subr.bf16.mxu0 %v1417
  %1609 = vmatpush1.bf16.msra.mxu0 %v1416
  %1610 = vmatprep.subr.bf16.mxu0 %v1419
  %1611 = vmatpush1.bf16.msra.mxu0 %v1418
  %1612 = vmatprep.subr.bf16.mxu0 %v1421
  %1613 = vmatpush1.bf16.msra.mxu0 %v1420
  %1614 = vmatprep.subr.bf16.mxu0 %v1423
  %1615 = vmatpush1.bf16.msra.mxu0 %v1422
  %1616 = vmatprep.subr.bf16.mxu0 %v1425
  %1617 = vmatpush1.bf16.msra.mxu0 %v1424
  %1618 = vmatprep.subr.bf16.mxu0 %v1427
  %1619 = vmatpush1.bf16.msra.mxu0 %v1426
  %1620 = vmatprep.subr.bf16.mxu0 %v1429
  %1621 = vmatpush1.bf16.msra.mxu0 %v1428
  %1622 = vmatprep.subr.bf16.mxu0 %v1431
  %1623 = vmatpush1.bf16.msra.mxu0 %v1430
  %1624 = vmatprep.subr.bf16.mxu0 %v1433
  %1625 = vmatpush1.bf16.msra.mxu0 %v1432
  %1626 = vmatprep.subr.bf16.mxu0 %v1435
  %1627 = vmatpush1.bf16.msra.mxu0 %v1434
  %1628 = vmatprep.subr.bf16.mxu0 %v1437
  %1629 = vmatpush1.bf16.msra.mxu0 %v1436
  %1630 = vmatprep.subr.bf16.mxu0 %v1439
  %1631 = vmatpush1.bf16.msra.mxu0 %v1438
  %1632 = vmatprep.mubr.bf16.mxu0 %v247
  %1633 = vmatmul.mubr.bf16.gmra.mrb[0].mxu0 %v246
  %v1634 = vpop.f32.mrb[0].mxu0
  %v1635 = vadd.f32 %v1113, %v1634
  %v1636 = vpop.f32.mrb[0].mxu0
  %v1637 = vadd.f32 %v1117, %v1636
  %v1638 = vpop.f32.mrb[0].mxu0
  %v1639 = vadd.f32 %v1113, %v1638
  %v1640 = vpop.f32.mrb[0].mxu0
  %v1641 = vadd.f32 %v1117, %v1640
  %1642 = vmatprep.mubr.bf16.mxu0 %v253
  %1643 = vmatmul.mubr.bf16.gmra.mrb[0].mxu0 %v252
  %v1644 = vpop.f32.mrb[0].mxu0
  %v1645 = vadd.f32 %v1113, %v1644
  %v1646 = vpop.f32.mrb[0].mxu0
  %v1647 = vadd.f32 %v1117, %v1646
  %v1648 = vpop.f32.mrb[0].mxu0
  %v1649 = vadd.f32 %v1113, %v1648
  %v1650 = vpop.f32.mrb[0].mxu0
  %v1651 = vadd.f32 %v1117, %v1650
  %1652 = vmatprep.mubr.bf16.mxu0 %v259
  %1653 = vmatmul.mubr.bf16.gmra.mrb[0].mxu0 %v258
  %v1654 = vpop.f32.mrb[0].mxu0
  %v1655 = vadd.f32 %v1113, %v1654
  %v1656 = vpop.f32.mrb[0].mxu0
  %v1657 = vadd.f32 %v1117, %v1656
  %v1658 = vpop.f32.mrb[0].mxu0
  %v1659 = vadd.f32 %v1113, %v1658
  %v1660 = vpop.f32.mrb[0].mxu0
  %v1661 = vadd.f32 %v1117, %v1660
  %1662 = vmatprep.mubr.bf16.mxu0 %v265
  %1663 = vmatmul.mubr.bf16.gmra.mrb[0].mxu0 %v264
  %v1664 = vpop.f32.mrb[0].mxu0
  %v1665 = vadd.f32 %v1113, %v1664
  %v1666 = vpop.f32.mrb[0].mxu0
  %v1667 = vadd.f32 %v1117, %v1666
  %v1668 = vpop.f32.mrb[0].mxu0
  %v1669 = vadd.f32 %v1113, %v1668
  %v1670 = vpop.f32.mrb[0].mxu0
  %v1671 = vadd.f32 %v1117, %v1670
  %1672 = vdwg.mxu0
  %1673 = vmatprep.subr.bf16.mxu0 %v1441
  %1674 = vmatpush1.bf16.msra.mxu0 %v1440
  %1675 = vmatprep.subr.bf16.mxu0 %v1443
  %1676 = vmatpush1.bf16.msra.mxu0 %v1442
  %1677 = vmatprep.subr.bf16.mxu0 %v1445
  %1678 = vmatpush1.bf16.msra.mxu0 %v1444
  %1679 = vmatprep.subr.bf16.mxu0 %v1447
  %1680 = vmatpush1.bf16.msra.mxu0 %v1446
  %1681 = vmatprep.subr.bf16.mxu0 %v1449
  %1682 = vmatpush1.bf16.msra.mxu0 %v1448
  %1683 = vmatprep.subr.bf16.mxu0 %v1451
  %1684 = vmatpush1.bf16.msra.mxu0 %v1450
  %1685 = vmatprep.subr.bf16.mxu0 %v1453
  %1686 = vmatpush1.bf16.msra.mxu0 %v1452
  %1687 = vmatprep.subr.bf16.mxu0 %v1455
  %1688 = vmatpush1.bf16.msra.mxu0 %v1454
  %1689 = vmatprep.subr.bf16.mxu0 %v1457
  %1690 = vmatpush1.bf16.msra.mxu0 %v1456
  %1691 = vmatprep.subr.bf16.mxu0 %v1459
  %1692 = vmatpush1.bf16.msra.mxu0 %v1458
  %1693 = vmatprep.subr.bf16.mxu0 %v1461
  %1694 = vmatpush1.bf16.msra.mxu0 %v1460
  %1695 = vmatprep.subr.bf16.mxu0 %v1463
  %1696 = vmatpush1.bf16.msra.mxu0 %v1462
  %1697 = vmatprep.subr.bf16.mxu0 %v1465
  %1698 = vmatpush1.bf16.msra.mxu0 %v1464
  %1699 = vmatprep.subr.bf16.mxu0 %v1467
  %1700 = vmatpush1.bf16.msra.mxu0 %v1466
  %1701 = vmatprep.subr.bf16.mxu0 %v1469
  %1702 = vmatpush1.bf16.msra.mxu0 %v1468
  %1703 = vmatprep.subr.bf16.mxu0 %v1471
  %1704 = vmatpush1.bf16.msra.mxu0 %v1470
  %1705 = vmatprep.mubr.bf16.mxu0 %v249
  %1706 = vmatmul.mubr.bf16.gmra.mrb[0].mxu0 %v248
  %v1707 = vpop.f32.mrb[0].mxu0
  %v1708 = vadd.f32 %v1635, %v1707
  %v1709 = vpop.f32.mrb[0].mxu0
  %v1710 = vadd.f32 %v1637, %v1709
  %v1711 = vpop.f32.mrb[0].mxu0
  %v1712 = vadd.f32 %v1639, %v1711
  %v1713 = vpop.f32.mrb[0].mxu0
  %v1714 = vadd.f32 %v1641, %v1713
  %1715 = vmatprep.mubr.bf16.mxu0 %v255
  %1716 = vmatmul.mubr.bf16.gmra.mrb[0].mxu0 %v254
  %v1717 = vpop.f32.mrb[0].mxu0
  %v1718 = vadd.f32 %v1645, %v1717
  %v1719 = vpop.f32.mrb[0].mxu0
  %v1720 = vadd.f32 %v1647, %v1719
  %v1721 = vpop.f32.mrb[0].mxu0
  %v1722 = vadd.f32 %v1649, %v1721
  %v1723 = vpop.f32.mrb[0].mxu0
  %v1724 = vadd.f32 %v1651, %v1723
  %1725 = vmatprep.mubr.bf16.mxu0 %v261
  %1726 = vmatmul.mubr.bf16.gmra.mrb[0].mxu0 %v260
  %v1727 = vpop.f32.mrb[0].mxu0
  %v1728 = vadd.f32 %v1655, %v1727
  %v1729 = vpop.f32.mrb[0].mxu0
  %v1730 = vadd.f32 %v1657, %v1729
  %v1731 = vpop.f32.mrb[0].mxu0
  %v1732 = vadd.f32 %v1659, %v1731
  %v1733 = vpop.f32.mrb[0].mxu0
  %v1734 = vadd.f32 %v1661, %v1733
  %1735 = vmatprep.mubr.bf16.mxu0 %v267
  %1736 = vmatmul.mubr.bf16.gmra.mrb[0].mxu0 %v266
  %v1737 = vpop.f32.mrb[0].mxu0
  %v1738 = vadd.f32 %v1665, %v1737
  %v1739 = vpop.f32.mrb[0].mxu0
  %v1740 = vadd.f32 %v1667, %v1739
  %v1741 = vpop.f32.mrb[0].mxu0
  %v1742 = vadd.f32 %v1669, %v1741
  %v1743 = vpop.f32.mrb[0].mxu0
  %v1744 = vadd.f32 %v1671, %v1743
  %1745 = vdwg.mxu0
  %1746 = vmatprep.subr.bf16.mxu0 %v1473
  %1747 = vmatpush1.bf16.msra.mxu0 %v1472
  %1748 = vmatprep.subr.bf16.mxu0 %v1475
  %1749 = vmatpush1.bf16.msra.mxu0 %v1474
  %1750 = vmatprep.subr.bf16.mxu0 %v1477
  %1751 = vmatpush1.bf16.msra.mxu0 %v1476
  %1752 = vmatprep.subr.bf16.mxu0 %v1479
  %1753 = vmatpush1.bf16.msra.mxu0 %v1478
  %1754 = vmatprep.subr.bf16.mxu0 %v1481
  %1755 = vmatpush1.bf16.msra.mxu0 %v1480
  %1756 = vmatprep.subr.bf16.mxu0 %v1483
  %1757 = vmatpush1.bf16.msra.mxu0 %v1482
  %1758 = vmatprep.subr.bf16.mxu0 %v1485
  %1759 = vmatpush1.bf16.msra.mxu0 %v1484
  %1760 = vmatprep.subr.bf16.mxu0 %v1487
  %1761 = vmatpush1.bf16.msra.mxu0 %v1486
  %1762 = vmatprep.subr.bf16.mxu0 %v1489
  %1763 = vmatpush1.bf16.msra.mxu0 %v1488
  %1764 = vmatprep.subr.bf16.mxu0 %v1491
  %1765 = vmatpush1.bf16.msra.mxu0 %v1490
  %1766 = vmatprep.subr.bf16.mxu0 %v1493
  %1767 = vmatpush1.bf16.msra.mxu0 %v1492
  %1768 = vmatprep.subr.bf16.mxu0 %v1495
  %1769 = vmatpush1.bf16.msra.mxu0 %v1494
  %1770 = vmatprep.subr.bf16.mxu0 %v1497
  %1771 = vmatpush1.bf16.msra.mxu0 %v1496
  %1772 = vmatprep.subr.bf16.mxu0 %v1499
  %1773 = vmatpush1.bf16.msra.mxu0 %v1498
  %1774 = vmatprep.subr.bf16.mxu0 %v1501
  %1775 = vmatpush1.bf16.msra.mxu0 %v1500
  %1776 = vmatprep.subr.bf16.mxu0 %v1503
  %1777 = vmatpush1.bf16.msra.mxu0 %v1502
  %1778 = vmatprep.mubr.bf16.mxu0 %v251
  %1779 = vmatmul.mubr.bf16.gmra.mrb[0].mxu0 %v250
  %v1780 = vpop.f32.mrb[0].mxu0
  %v1781 = vadd.f32 %v1708, %v1780
  %v1782 = vpop.f32.mrb[0].mxu0
  %v1783 = vadd.f32 %v1710, %v1782
  %v1784 = vpop.f32.mrb[0].mxu0
  %v1785 = vadd.f32 %v1712, %v1784
  %v1786 = vpop.f32.mrb[0].mxu0
  %v1787 = vadd.f32 %v1714, %v1786
  %1788 = vmatprep.mubr.bf16.mxu0 %v257
  %1789 = vmatmul.mubr.bf16.gmra.mrb[0].mxu0 %v256
  %v1790 = vpop.f32.mrb[0].mxu0
  %v1791 = vadd.f32 %v1718, %v1790
  %v1792 = vpop.f32.mrb[0].mxu0
  %v1793 = vadd.f32 %v1720, %v1792
  %v1794 = vpop.f32.mrb[0].mxu0
  %v1795 = vadd.f32 %v1722, %v1794
  %v1796 = vpop.f32.mrb[0].mxu0
  %v1797 = vadd.f32 %v1724, %v1796
  %1798 = vmatprep.mubr.bf16.mxu0 %v263
  %1799 = vmatmul.mubr.bf16.gmra.mrb[0].mxu0 %v262
  %v1800 = vpop.f32.mrb[0].mxu0
  %v1801 = vadd.f32 %v1728, %v1800
  %v1802 = vpop.f32.mrb[0].mxu0
  %v1803 = vadd.f32 %v1730, %v1802
  %v1804 = vpop.f32.mrb[0].mxu0
  %v1805 = vadd.f32 %v1732, %v1804
  %v1806 = vpop.f32.mrb[0].mxu0
  %v1807 = vadd.f32 %v1734, %v1806
  %1808 = vmatprep.mubr.bf16.mxu0 %v269
  %1809 = vmatmul.mubr.bf16.gmra.mrb[0].mxu0 %v268
  %v1810 = vpop.f32.mrb[0].mxu0
  %v1811 = vadd.f32 %v1738, %v1810
  %v1812 = vpop.f32.mrb[0].mxu0
  %v1813 = vadd.f32 %v1740, %v1812
  %v1814 = vpop.f32.mrb[0].mxu0
  %v1815 = vadd.f32 %v1742, %v1814
  %v1816 = vpop.f32.mrb[0].mxu0
  %v1817 = vadd.f32 %v1744, %v1816
  %1818 = vdwg.mxu0
  %1819 = vst [vmem:[#allocation3] sm:$0xff] %v1781
  %1820 = vst.msk [vmem:[#allocation3 + $0x8] sm:$0xff] %vm994, %v1783
  %1821 = vst [vmem:[#allocation3 + $0x10] sm:$0xff] %v1785
  %1822 = vst.msk [vmem:[#allocation3 + $0x18] sm:$0xff] %vm994, %v1787
  %1823 = vst [vmem:[#allocation3 + $0x20] sm:$0xff] %v1791
  %1824 = vst.msk [vmem:[#allocation3 + $0x28] sm:$0xff] %vm994, %v1793
  %1825 = vst [vmem:[#allocation3 + $0x30] sm:$0xff] %v1795
  %1826 = vst.msk [vmem:[#allocation3 + $0x38] sm:$0xff] %vm994, %v1797
  %1827 = vst [vmem:[#allocation3 + $0x40] sm:$0xff] %v1801
  %1828 = vst.msk [vmem:[#allocation3 + $0x48] sm:$0xff] %vm994, %v1803
  %1829 = vst [vmem:[#allocation3 + $0x50] sm:$0xff] %v1805
  %1830 = vst.msk [vmem:[#allocation3 + $0x58] sm:$0xff] %vm994, %v1807
  %1831 = vst [vmem:[#allocation3 + $0x60] sm:$0xff] %v1811
  %1832 = vst.msk [vmem:[#allocation3 + $0x68] sm:$0xff] %vm994, %v1813
  %1833 = vst [vmem:[#allocation3 + $0x70] sm:$0xff] %v1815
  %1834 = vst.msk [vmem:[#allocation3 + $0x78] sm:$0xff] %vm994, %v1817
  %v1835 = vld [vmem:[%s3] sm:$0xff]
  %v1836 = vld [vmem:[%s3 + $0x8] sm:$0xff]
  %v1837 = vld [vmem:[%s3 + $0x10] sm:$0xff]
  %v1838 = vld [vmem:[%s3 + $0x18] sm:$0xff]
  %v1839 = vld [vmem:[%s3 + $0x20] sm:$0xff]
  %v1840 = vld [vmem:[%s3 + $0x28] sm:$0xff]
  %v1841 = vld [vmem:[%s3 + $0x30] sm:$0xff]
  %v1842 = vld [vmem:[%s3 + $0x38] sm:$0xff]
  %s1843 = scalar_lea.vmem %s3, 64
  %v1844 = vld [vmem:[%s1843] sm:$0xff]
  %v1845 = vld [vmem:[%s1843 + $0x8] sm:$0xff]
  %v1846 = vld [vmem:[%s1843 + $0x10] sm:$0xff]
  %v1847 = vld [vmem:[%s1843 + $0x18] sm:$0xff]
  %v1848 = vld [vmem:[%s1843 + $0x20] sm:$0xff]
  %v1849 = vld [vmem:[%s1843 + $0x28] sm:$0xff]
  %v1850 = vld [vmem:[%s1843 + $0x30] sm:$0xff]
  %v1851 = vld [vmem:[%s1843 + $0x38] sm:$0xff]
  %v1852 = vld [vmem:[%s4] sm:$0x3]
  %s1853 = scalar_lea.vmem %s4, 2
  %v1854 = vld [vmem:[%s1853] sm:$0x3]
  %v1855 = vld [vmem:[#allocation2] sm:$0xff]
  %v1856 = vld [vmem:[#allocation2 + $0x8] sm:$0xff]
  %v1858 = vlaneseq
  %v1859 = vshrl.u32 %v1858, 7
  %v1860 = vsub.s32 0, %v1859
  %v1861 = vrot.slane %v1852, %v1860
  %v1862 = vlaneseq
  %v1863 = vshrl.u32 %v1862, 7
  %v1864 = vsub.s32 1, %v1863
  %v1865 = vrot.slane %v1852, %v1864
  %v1876 = vunpack.c.l.b16 %v1835
  %v1877 = vunpack.c.h.b16 %v1835
  %v1878 = vunpack.c.l.b16 %v1836
  %v1879 = vunpack.c.h.b16 %v1836
  %v1880 = vunpack.c.l.b16 %v1837
  %v1881 = vunpack.c.h.b16 %v1837
  %v1882 = vunpack.c.l.b16 %v1838
  %v1883 = vunpack.c.h.b16 %v1838
  %v1884 = vunpack.c.l.b16 %v1839
  %v1885 = vunpack.c.h.b16 %v1839
  %v1886 = vunpack.c.l.b16 %v1840
  %v1887 = vunpack.c.h.b16 %v1840
  %v1888 = vunpack.c.l.b16 %v1841
  %v1889 = vunpack.c.h.b16 %v1841
  %v1890 = vunpack.c.l.b16 %v1842
  %v1891 = vunpack.c.h.b16 %v1842
  %v1892 = vpack.c.b16 %v1878, %v1876
  %v1893 = vpack.c.b16 %v1879, %v1877
  %v1894 = vpack.c.b16 %v1882, %v1880
  %v1895 = vpack.c.b16 %v1883, %v1881
  %v1896 = vpack.c.b16 %v1886, %v1884
  %v1897 = vpack.c.b16 %v1887, %v1885
  %v1898 = vpack.c.b16 %v1890, %v1888
  %v1899 = vpack.c.b16 %v1891, %v1889
  %v1909 = vsel %vm994, 0, 0
  %1911 = vmatprep.subr.bf16.mxu0 %v1893
  %1912 = vmatpush1.bf16.msra.mxu0 %v1892
  %1913 = vmatprep.subr.bf16.mxu0 %v1895
  %1914 = vmatpush1.bf16.msra.mxu0 %v1894
  %1915 = vmatprep.subr.bf16.mxu0 %v1897
  %1916 = vmatpush1.bf16.msra.mxu0 %v1896
  %1917 = vmatprep.subr.bf16.mxu0 %v1899
  %1918 = vmatpush1.bf16.msra.mxu0 %v1898
  %1919 = vmatprep.subr.bf16.mxu0 0
  %1920 = vmatpush1.bf16.msra.mxu0 0
  %1921 = vmatprep.subr.bf16.mxu0 0
  %1922 = vmatpush1.bf16.msra.mxu0 0
  %1923 = vmatprep.subr.bf16.mxu0 0
  %1924 = vmatpush1.bf16.msra.mxu0 0
  %1925 = vmatprep.subr.bf16.mxu0 0
  %1926 = vmatpush1.bf16.msra.mxu0 0
  %1927 = vmatprep.subr.bf16.mxu0 0
  %1928 = vmatpush1.bf16.msra.mxu0 0
  %1929 = vmatprep.subr.bf16.mxu0 0
  %1930 = vmatpush1.bf16.msra.mxu0 0
  %1931 = vmatprep.subr.bf16.mxu0 0
  %1932 = vmatpush1.bf16.msra.mxu0 0
  %1933 = vmatprep.subr.bf16.mxu0 0
  %1934 = vmatpush1.bf16.msra.mxu0 0
  %1935 = vmatprep.subr.bf16.mxu0 0
  %1936 = vmatpush1.bf16.msra.mxu0 0
  %1937 = vmatprep.subr.bf16.mxu0 0
  %1938 = vmatpush1.bf16.msra.mxu0 0
  %1939 = vmatprep.subr.bf16.mxu0 0
  %1940 = vmatpush1.bf16.msra.mxu0 0
  %1941 = vmatprep.subr.bf16.mxu0 0
  %1942 = vmatpush1.bf16.msra.mxu0 0
  %1943 = vmatprep.mubr.bf16.mxu0 0
  %1944 = vmatmul.mubr.bf16.gmra.mrb[0].mxu0 %v1909
  %v1945 = vpop.f32.mrb[0].mxu0
  %v1946 = vadd.f32 %v1861, %v1945
  %v1947 = vpop.f32.mrb[0].mxu0
  %v1948 = vadd.f32 %v1865, %v1947
  %v1949 = vpop.f32.mrb[0].mxu0
  %v1950 = vpop.f32.mrb[0].mxu0
  %1951 = vdwg.mxu0
  %v1952 = vadd.f32 %v1855, %v1946
  %v1953 = vxor.u32 %v1952, 2147483648
  %v1954 = vmul.f32 %v1953, 1.442695
  %v1955 = vpow.pop %v1954
  %v1956 = vadd.f32 %v1955, 1.0
  %v1957 = vrcp.pop %v1956
  %v1958 = vmul.f32 1.0, %v1957
  %v1959 = vmul.f32 %v1958, %v1948
  %v1960 = vadd.f32 %v1856, %v1959
  %v1961 = vtanh.pop %v1960
  %v1962 = vsub.f32 1.0, %v1958
  %1964 = vrot.lane.b32.xlu0 %v1961, 64
  %v1965 = vpop.permute.xlu0 %1964
  %v1967 = vmul.f32 %v1962, %v1965
  %v1968 = vmul.f32 %v1958, 0.0
  %v1969 = vadd.f32 %v1967, %v1968
  %v1970 = vld [vmem:[#allocation3 + $0x70] sm:$0xff]
  %v1971 = vld [vmem:[#allocation3 + $0x78] sm:$0xff]
  %v1973 = vlaneseq
  %v1974 = vshrl.u32 %v1973, 7
  %v1975 = vsub.s32 0, %v1974
  %v1976 = vrot.slane %v1854, %v1975
  %v1977 = vlaneseq
  %v1978 = vshrl.u32 %v1977, 7
  %v1979 = vsub.s32 1, %v1978
  %v1980 = vrot.slane %v1854, %v1979
  %v1991 = vunpack.c.l.b16 %v1844
  %v1992 = vunpack.c.h.b16 %v1844
  %v1993 = vunpack.c.l.b16 %v1845
  %v1994 = vunpack.c.h.b16 %v1845
  %v1995 = vunpack.c.l.b16 %v1846
  %v1996 = vunpack.c.h.b16 %v1846
  %v1997 = vunpack.c.l.b16 %v1847
  %v1998 = vunpack.c.h.b16 %v1847
  %v1999 = vunpack.c.l.b16 %v1848
  %v2000 = vunpack.c.h.b16 %v1848
  %v2001 = vunpack.c.l.b16 %v1849
  %v2002 = vunpack.c.h.b16 %v1849
  %v2003 = vunpack.c.l.b16 %v1850
  %v2004 = vunpack.c.h.b16 %v1850
  %v2005 = vunpack.c.l.b16 %v1851
  %v2006 = vunpack.c.h.b16 %v1851
  %v2007 = vpack.c.b16 %v1993, %v1991
  %v2008 = vpack.c.b16 %v1994, %v1992
  %v2009 = vpack.c.b16 %v1997, %v1995
  %v2010 = vpack.c.b16 %v1998, %v1996
  %v2011 = vpack.c.b16 %v2001, %v1999
  %v2012 = vpack.c.b16 %v2002, %v2000
  %v2013 = vpack.c.b16 %v2005, %v2003
  %v2014 = vpack.c.b16 %v2006, %v2004
  %2023 = vmatprep.subr.bf16.mxu0 %v2008
  %2024 = vmatpush1.bf16.msra.mxu0 %v2007
  %2025 = vmatprep.subr.bf16.mxu0 %v2010
  %2026 = vmatpush1.bf16.msra.mxu0 %v2009
  %2027 = vmatprep.subr.bf16.mxu0 %v2012
  %2028 = vmatpush1.bf16.msra.mxu0 %v2011
  %2029 = vmatprep.subr.bf16.mxu0 %v2014
  %2030 = vmatpush1.bf16.msra.mxu0 %v2013
  %2031 = vmatprep.subr.bf16.mxu0 0
  %2032 = vmatpush1.bf16.msra.mxu0 0
  %2033 = vmatprep.subr.bf16.mxu0 0
  %2034 = vmatpush1.bf16.msra.mxu0 0
  %2035 = vmatprep.subr.bf16.mxu0 0
  %2036 = vmatpush1.bf16.msra.mxu0 0
  %2037 = vmatprep.subr.bf16.mxu0 0
  %2038 = vmatpush1.bf16.msra.mxu0 0
  %2039 = vmatprep.subr.bf16.mxu0 0
  %2040 = vmatpush1.bf16.msra.mxu0 0
  %2041 = vmatprep.subr.bf16.mxu0 0
  %2042 = vmatpush1.bf16.msra.mxu0 0
  %2043 = vmatprep.subr.bf16.mxu0 0
  %2044 = vmatpush1.bf16.msra.mxu0 0
  %2045 = vmatprep.subr.bf16.mxu0 0
  %2046 = vmatpush1.bf16.msra.mxu0 0
  %2047 = vmatprep.subr.bf16.mxu0 0
  %2048 = vmatpush1.bf16.msra.mxu0 0
  %2049 = vmatprep.subr.bf16.mxu0 0
  %2050 = vmatpush1.bf16.msra.mxu0 0
  %2051 = vmatprep.subr.bf16.mxu0 0
  %2052 = vmatpush1.bf16.msra.mxu0 0
  %2053 = vmatprep.subr.bf16.mxu0 0
  %2054 = vmatpush1.bf16.msra.mxu0 0
  %2055 = vmatprep.mubr.bf16.mxu0 0
  %2056 = vmatmul.mubr.bf16.gmra.mrb[0].mxu0 %v1909
  %v2057 = vpop.f32.mrb[0].mxu0
  %v2058 = vadd.f32 %v1976, %v2057
  %v2059 = vpop.f32.mrb[0].mxu0
  %v2060 = vadd.f32 %v1980, %v2059
  %v2061 = vpop.f32.mrb[0].mxu0
  %v2062 = vpop.f32.mrb[0].mxu0
  %2063 = vdwg.mxu0
  %v2064 = vadd.f32 %v1970, %v2058
  %v2065 = vxor.u32 %v2064, 2147483648
  %v2066 = vmul.f32 %v2065, 1.442695
  %v2067 = vpow.pop %v2066
  %v2068 = vadd.f32 %v2067, 1.0
  %v2069 = vrcp.pop %v2068
  %v2070 = vmul.f32 1.0, %v2069
  %v2071 = vmul.f32 %v2070, %v2060
  %v2072 = vadd.f32 %v1971, %v2071
  %v2073 = vtanh.pop %v2072
  %v2074 = vsub.f32 1.0, %v2070
  %2076 = vrot.lane.b32.xlu0 %v2073, 64
  %v2077 = vpop.permute.xlu0 %2076
  %v2079 = vmul.f32 %v2074, %v2077
  %v2080 = vmul.f32 %v2070, 0.0
  %v2081 = vadd.f32 %v2079, %v2080
  %2083 = vrot.lane.b32.xlu0 %v1969, 64
  %v2084 = vpop.permute.xlu0 %2083
  %2086 = vst.msk [vmem:[#allocation4] sm:$0xff] %vm994, %v2084
  %2088 = vrot.lane.b32.xlu0 %v2081, 64
  %v2089 = vpop.permute.xlu0 %2088
  %2091 = vst.msk [vmem:[#allocation5 + $0x38] sm:$0xff] %vm994, %v2089
  %v2092 = vld [vmem:[#allocation2 + $0x10] sm:$0xff]
  %v2093 = vld [vmem:[#allocation2 + $0x18] sm:$0xff]
  %v2094 = vpack.c.bf16 %v1969, %v1969
  %2096 = vrot.lane.b32.xlu0 %v2094, 64
  %v2097 = vpop.permute.xlu0 %2096
  %v2099 = vsel %vm994, %v2097, 0
  %2101 = vmatprep.subr.bf16.mxu0 %v1893
  %2102 = vmatpush1.bf16.msra.mxu0 %v1892
  %2103 = vmatprep.subr.bf16.mxu0 %v1895
  %2104 = vmatpush1.bf16.msra.mxu0 %v1894
  %2105 = vmatprep.subr.bf16.mxu0 %v1897
  %2106 = vmatpush1.bf16.msra.mxu0 %v1896
  %2107 = vmatprep.subr.bf16.mxu0 %v1899
  %2108 = vmatpush1.bf16.msra.mxu0 %v1898
  %2109 = vmatprep.subr.bf16.mxu0 0
  %2110 = vmatpush1.bf16.msra.mxu0 0
  %2111 = vmatprep.subr.bf16.mxu0 0
  %2112 = vmatpush1.bf16.msra.mxu0 0
  %2113 = vmatprep.subr.bf16.mxu0 0
  %2114 = vmatpush1.bf16.msra.mxu0 0
  %2115 = vmatprep.subr.bf16.mxu0 0
  %2116 = vmatpush1.bf16.msra.mxu0 0
  %2117 = vmatprep.subr.bf16.mxu0 0
  %2118 = vmatpush1.bf16.msra.mxu0 0
  %2119 = vmatprep.subr.bf16.mxu0 0
  %2120 = vmatpush1.bf16.msra.mxu0 0
  %2121 = vmatprep.subr.bf16.mxu0 0
  %2122 = vmatpush1.bf16.msra.mxu0 0
  %2123 = vmatprep.subr.bf16.mxu0 0
  %2124 = vmatpush1.bf16.msra.mxu0 0
  %2125 = vmatprep.subr.bf16.mxu0 0
  %2126 = vmatpush1.bf16.msra.mxu0 0
  %2127 = vmatprep.subr.bf16.mxu0 0
  %2128 = vmatpush1.bf16.msra.mxu0 0
  %2129 = vmatprep.subr.bf16.mxu0 0
  %2130 = vmatpush1.bf16.msra.mxu0 0
  %2131 = vmatprep.subr.bf16.mxu0 0
  %2132 = vmatpush1.bf16.msra.mxu0 0
  %2133 = vmatprep.mubr.bf16.mxu0 0
  %2134 = vmatmul.mubr.bf16.gmra.mrb[0].mxu0 %v2099
  %v2135 = vpop.f32.mrb[0].mxu0
  %v2136 = vadd.f32 %v1861, %v2135
  %v2137 = vpop.f32.mrb[0].mxu0
  %v2138 = vadd.f32 %v1865, %v2137
  %v2139 = vpop.f32.mrb[0].mxu0
  %v2140 = vpop.f32.mrb[0].mxu0
  %2141 = vdwg.mxu0
  %v2142 = vadd.f32 %v2092, %v2136
  %v2143 = vxor.u32 %v2142, 2147483648
  %v2144 = vmul.f32 %v2143, 1.442695
  %v2145 = vpow.pop %v2144
  %v2146 = vadd.f32 %v2145, 1.0
  %v2147 = vrcp.pop %v2146
  %v2148 = vmul.f32 1.0, %v2147
  %v2149 = vmul.f32 %v2148, %v2138
  %v2150 = vadd.f32 %v2093, %v2149
  %v2151 = vtanh.pop %v2150
  %v2152 = vsub.f32 1.0, %v2148
  %2154 = vrot.lane.b32.xlu0 %v2151, 64
  %v2155 = vpop.permute.xlu0 %2154
  %v2157 = vmul.f32 %v2152, %v2155
  %v2158 = vmul.f32 %v2148, %v1969
  %v2159 = vadd.f32 %v2157, %v2158
  %v2160 = vld [vmem:[#allocation3 + $0x60] sm:$0xff]
  %v2161 = vld [vmem:[#allocation3 + $0x68] sm:$0xff]
  %v2162 = vpack.c.bf16 %v2081, %v2081
  %2164 = vrot.lane.b32.xlu0 %v2162, 64
  %v2165 = vpop.permute.xlu0 %2164
  %v2167 = vsel %vm994, %v2165, 0
  %2169 = vmatprep.subr.bf16.mxu0 %v2008
  %2170 = vmatpush1.bf16.msra.mxu0 %v2007
  %2171 = vmatprep.subr.bf16.mxu0 %v2010
  %2172 = vmatpush1.bf16.msra.mxu0 %v2009
  %2173 = vmatprep.subr.bf16.mxu0 %v2012
  %2174 = vmatpush1.bf16.msra.mxu0 %v2011
  %2175 = vmatprep.subr.bf16.mxu0 %v2014
  %2176 = vmatpush1.bf16.msra.mxu0 %v2013
  %2177 = vmatprep.subr.bf16.mxu0 0
  %2178 = vmatpush1.bf16.msra.mxu0 0
  %2179 = vmatprep.subr.bf16.mxu0 0
  %2180 = vmatpush1.bf16.msra.mxu0 0
  %2181 = vmatprep.subr.bf16.mxu0 0
  %2182 = vmatpush1.bf16.msra.mxu0 0
  %2183 = vmatprep.subr.bf16.mxu0 0
  %2184 = vmatpush1.bf16.msra.mxu0 0
  %2185 = vmatprep.subr.bf16.mxu0 0
  %2186 = vmatpush1.bf16.msra.mxu0 0
  %2187 = vmatprep.subr.bf16.mxu0 0
  %2188 = vmatpush1.bf16.msra.mxu0 0
  %2189 = vmatprep.subr.bf16.mxu0 0
  %2190 = vmatpush1.bf16.msra.mxu0 0
  %2191 = vmatprep.subr.bf16.mxu0 0
  %2192 = vmatpush1.bf16.msra.mxu0 0
  %2193 = vmatprep.subr.bf16.mxu0 0
  %2194 = vmatpush1.bf16.msra.mxu0 0
  %2195 = vmatprep.subr.bf16.mxu0 0
  %2196 = vmatpush1.bf16.msra.mxu0 0
  %2197 = vmatprep.subr.bf16.mxu0 0
  %2198 = vmatpush1.bf16.msra.mxu0 0
  %2199 = vmatprep.subr.bf16.mxu0 0
  %2200 = vmatpush1.bf16.msra.mxu0 0
  %2201 = vmatprep.mubr.bf16.mxu0 0
  %2202 = vmatmul.mubr.bf16.gmra.mrb[0].mxu0 %v2167
  %v2203 = vpop.f32.mrb[0].mxu0
  %v2204 = vadd.f32 %v1976, %v2203
  %v2205 = vpop.f32.mrb[0].mxu0
  %v2206 = vadd.f32 %v1980, %v2205
  %v2207 = vpop.f32.mrb[0].mxu0
  %v2208 = vpop.f32.mrb[0].mxu0
  %2209 = vdwg.mxu0
  %v2210 = vadd.f32 %v2160, %v2204
  %v2211 = vxor.u32 %v2210, 2147483648
  %v2212 = vmul.f32 %v2211, 1.442695
  %v2213 = vpow.pop %v2212
  %v2214 = vadd.f32 %v2213, 1.0
  %v2215 = vrcp.pop %v2214
  %v2216 = vmul.f32 1.0, %v2215
  %v2217 = vmul.f32 %v2216, %v2206
  %v2218 = vadd.f32 %v2161, %v2217
  %v2219 = vtanh.pop %v2218
  %v2220 = vsub.f32 1.0, %v2216
  %2222 = vrot.lane.b32.xlu0 %v2219, 64
  %v2223 = vpop.permute.xlu0 %2222
  %v2225 = vmul.f32 %v2220, %v2223
  %v2226 = vmul.f32 %v2216, %v2081
  %v2227 = vadd.f32 %v2225, %v2226
  %2229 = vrot.lane.b32.xlu0 %v2159, 64
  %v2230 = vpop.permute.xlu0 %2229
  %2232 = vst.msk [vmem:[#allocation4 + $0x8] sm:$0xff] %vm994, %v2230
  %2234 = vrot.lane.b32.xlu0 %v2227, 64
  %v2235 = vpop.permute.xlu0 %2234
  %2237 = vst.msk [vmem:[#allocation5 + $0x30] sm:$0xff] %vm994, %v2235
  %v2238 = vld [vmem:[#allocation2 + $0x20] sm:$0xff]
  %v2239 = vld [vmem:[#allocation2 + $0x28] sm:$0xff]
  %v2240 = vpack.c.bf16 %v2159, %v2159
  %2242 = vrot.lane.b32.xlu0 %v2240, 64
  %v2243 = vpop.permute.xlu0 %2242
  %v2245 = vsel %vm994, %v2243, 0
  %2247 = vmatprep.subr.bf16.mxu0 %v1893
  %2248 = vmatpush1.bf16.msra.mxu0 %v1892
  %2249 = vmatprep.subr.bf16.mxu0 %v1895
  %2250 = vmatpush1.bf16.msra.mxu0 %v1894
  %2251 = vmatprep.subr.bf16.mxu0 %v1897
  %2252 = vmatpush1.bf16.msra.mxu0 %v1896
  %2253 = vmatprep.subr.bf16.mxu0 %v1899
  %2254 = vmatpush1.bf16.msra.mxu0 %v1898
  %2255 = vmatprep.subr.bf16.mxu0 0
  %2256 = vmatpush1.bf16.msra.mxu0 0
  %2257 = vmatprep.subr.bf16.mxu0 0
  %2258 = vmatpush1.bf16.msra.mxu0 0
  %2259 = vmatprep.subr.bf16.mxu0 0
  %2260 = vmatpush1.bf16.msra.mxu0 0
  %2261 = vmatprep.subr.bf16.mxu0 0
  %2262 = vmatpush1.bf16.msra.mxu0 0
  %2263 = vmatprep.subr.bf16.mxu0 0
  %2264 = vmatpush1.bf16.msra.mxu0 0
  %2265 = vmatprep.subr.bf16.mxu0 0
  %2266 = vmatpush1.bf16.msra.mxu0 0
  %2267 = vmatprep.subr.bf16.mxu0 0
  %2268 = vmatpush1.bf16.msra.mxu0 0
  %2269 = vmatprep.subr.bf16.mxu0 0
  %2270 = vmatpush1.bf16.msra.mxu0 0
  %2271 = vmatprep.subr.bf16.mxu0 0
  %2272 = vmatpush1.bf16.msra.mxu0 0
  %2273 = vmatprep.subr.bf16.mxu0 0
  %2274 = vmatpush1.bf16.msra.mxu0 0
  %2275 = vmatprep.subr.bf16.mxu0 0
  %2276 = vmatpush1.bf16.msra.mxu0 0
  %2277 = vmatprep.subr.bf16.mxu0 0
  %2278 = vmatpush1.bf16.msra.mxu0 0
  %2279 = vmatprep.mubr.bf16.mxu0 0
  %2280 = vmatmul.mubr.bf16.gmra.mrb[0].mxu0 %v2245
  %v2281 = vpop.f32.mrb[0].mxu0
  %v2282 = vadd.f32 %v1861, %v2281
  %v2283 = vpop.f32.mrb[0].mxu0
  %v2284 = vadd.f32 %v1865, %v2283
  %v2285 = vpop.f32.mrb[0].mxu0
  %v2286 = vpop.f32.mrb[0].mxu0
  %2287 = vdwg.mxu0
  %v2288 = vadd.f32 %v2238, %v2282
  %v2289 = vxor.u32 %v2288, 2147483648
  %v2290 = vmul.f32 %v2289, 1.442695
  %v2291 = vpow.pop %v2290
  %v2292 = vadd.f32 %v2291, 1.0
  %v2293 = vrcp.pop %v2292
  %v2294 = vmul.f32 1.0, %v2293
  %v2295 = vmul.f32 %v2294, %v2284
  %v2296 = vadd.f32 %v2239, %v2295
  %v2297 = vtanh.pop %v2296
  %v2298 = vsub.f32 1.0, %v2294
  %2300 = vrot.lane.b32.xlu0 %v2297, 64
  %v2301 = vpop.permute.xlu0 %2300
  %v2303 = vmul.f32 %v2298, %v2301
  %v2304 = vmul.f32 %v2294, %v2159
  %v2305 = vadd.f32 %v2303, %v2304
  %v2306 = vld [vmem:[#allocation3 + $0x50] sm:$0xff]
  %v2307 = vld [vmem:[#allocation3 + $0x58] sm:$0xff]
  %v2308 = vpack.c.bf16 %v2227, %v2227
  %2310 = vrot.lane.b32.xlu0 %v2308, 64
  %v2311 = vpop.permute.xlu0 %2310
  %v2313 = vsel %vm994, %v2311, 0
  %2315 = vmatprep.subr.bf16.mxu0 %v2008
  %2316 = vmatpush1.bf16.msra.mxu0 %v2007
  %2317 = vmatprep.subr.bf16.mxu0 %v2010
  %2318 = vmatpush1.bf16.msra.mxu0 %v2009
  %2319 = vmatprep.subr.bf16.mxu0 %v2012
  %2320 = vmatpush1.bf16.msra.mxu0 %v2011
  %2321 = vmatprep.subr.bf16.mxu0 %v2014
  %2322 = vmatpush1.bf16.msra.mxu0 %v2013
  %2323 = vmatprep.subr.bf16.mxu0 0
  %2324 = vmatpush1.bf16.msra.mxu0 0
  %2325 = vmatprep.subr.bf16.mxu0 0
  %2326 = vmatpush1.bf16.msra.mxu0 0
  %2327 = vmatprep.subr.bf16.mxu0 0
  %2328 = vmatpush1.bf16.msra.mxu0 0
  %2329 = vmatprep.subr.bf16.mxu0 0
  %2330 = vmatpush1.bf16.msra.mxu0 0
  %2331 = vmatprep.subr.bf16.mxu0 0
  %2332 = vmatpush1.bf16.msra.mxu0 0
  %2333 = vmatprep.subr.bf16.mxu0 0
  %2334 = vmatpush1.bf16.msra.mxu0 0
  %2335 = vmatprep.subr.bf16.mxu0 0
  %2336 = vmatpush1.bf16.msra.mxu0 0
  %2337 = vmatprep.subr.bf16.mxu0 0
  %2338 = vmatpush1.bf16.msra.mxu0 0
  %2339 = vmatprep.subr.bf16.mxu0 0
  %2340 = vmatpush1.bf16.msra.mxu0 0
  %2341 = vmatprep.subr.bf16.mxu0 0
  %2342 = vmatpush1.bf16.msra.mxu0 0
  %2343 = vmatprep.subr.bf16.mxu0 0
  %2344 = vmatpush1.bf16.msra.mxu0 0
  %2345 = vmatprep.subr.bf16.mxu0 0
  %2346 = vmatpush1.bf16.msra.mxu0 0
  %2347 = vmatprep.mubr.bf16.mxu0 0
  %2348 = vmatmul.mubr.bf16.gmra.mrb[0].mxu0 %v2313
  %v2349 = vpop.f32.mrb[0].mxu0
  %v2350 = vadd.f32 %v1976, %v2349
  %v2351 = vpop.f32.mrb[0].mxu0
  %v2352 = vadd.f32 %v1980, %v2351
  %v2353 = vpop.f32.mrb[0].mxu0
  %v2354 = vpop.f32.mrb[0].mxu0
  %2355 = vdwg.mxu0
  %v2356 = vadd.f32 %v2306, %v2350
  %v2357 = vxor.u32 %v2356, 2147483648
  %v2358 = vmul.f32 %v2357, 1.442695
  %v2359 = vpow.pop %v2358
  %v2360 = vadd.f32 %v2359, 1.0
  %v2361 = vrcp.pop %v2360
  %v2362 = vmul.f32 1.0, %v2361
  %v2363 = vmul.f32 %v2362, %v2352
  %v2364 = vadd.f32 %v2307, %v2363
  %v2365 = vtanh.pop %v2364
  %v2366 = vsub.f32 1.0, %v2362
  %2368 = vrot.lane.b32.xlu0 %v2365, 64
  %v2369 = vpop.permute.xlu0 %2368
  %v2371 = vmul.f32 %v2366, %v2369
  %v2372 = vmul.f32 %v2362, %v2227
  %v2373 = vadd.f32 %v2371, %v2372
  %2375 = vrot.lane.b32.xlu0 %v2305, 64
  %v2376 = vpop.permute.xlu0 %2375
  %2378 = vst.msk [vmem:[#allocation4 + $0x10] sm:$0xff] %vm994, %v2376
  %2380 = vrot.lane.b32.xlu0 %v2373, 64
  %v2381 = vpop.permute.xlu0 %2380
  %2383 = vst.msk [vmem:[#allocation5 + $0x28] sm:$0xff] %vm994, %v2381
  %v2384 = vld [vmem:[#allocation2 + $0x30] sm:$0xff]
  %v2385 = vld [vmem:[#allocation2 + $0x38] sm:$0xff]
  %v2386 = vpack.c.bf16 %v2305, %v2305
  %2388 = vrot.lane.b32.xlu0 %v2386, 64
  %v2389 = vpop.permute.xlu0 %2388
  %v2391 = vsel %vm994, %v2389, 0
  %2393 = vmatprep.subr.bf16.mxu0 %v1893
  %2394 = vmatpush1.bf16.msra.mxu0 %v1892
  %2395 = vmatprep.subr.bf16.mxu0 %v1895
  %2396 = vmatpush1.bf16.msra.mxu0 %v1894
  %2397 = vmatprep.subr.bf16.mxu0 %v1897
  %2398 = vmatpush1.bf16.msra.mxu0 %v1896
  %2399 = vmatprep.subr.bf16.mxu0 %v1899
  %2400 = vmatpush1.bf16.msra.mxu0 %v1898
  %2401 = vmatprep.subr.bf16.mxu0 0
  %2402 = vmatpush1.bf16.msra.mxu0 0
  %2403 = vmatprep.subr.bf16.mxu0 0
  %2404 = vmatpush1.bf16.msra.mxu0 0
  %2405 = vmatprep.subr.bf16.mxu0 0
  %2406 = vmatpush1.bf16.msra.mxu0 0
  %2407 = vmatprep.subr.bf16.mxu0 0
  %2408 = vmatpush1.bf16.msra.mxu0 0
  %2409 = vmatprep.subr.bf16.mxu0 0
  %2410 = vmatpush1.bf16.msra.mxu0 0
  %2411 = vmatprep.subr.bf16.mxu0 0
  %2412 = vmatpush1.bf16.msra.mxu0 0
  %2413 = vmatprep.subr.bf16.mxu0 0
  %2414 = vmatpush1.bf16.msra.mxu0 0
  %2415 = vmatprep.subr.bf16.mxu0 0
  %2416 = vmatpush1.bf16.msra.mxu0 0
  %2417 = vmatprep.subr.bf16.mxu0 0
  %2418 = vmatpush1.bf16.msra.mxu0 0
  %2419 = vmatprep.subr.bf16.mxu0 0
  %2420 = vmatpush1.bf16.msra.mxu0 0
  %2421 = vmatprep.subr.bf16.mxu0 0
  %2422 = vmatpush1.bf16.msra.mxu0 0
  %2423 = vmatprep.subr.bf16.mxu0 0
  %2424 = vmatpush1.bf16.msra.mxu0 0
  %2425 = vmatprep.mubr.bf16.mxu0 0
  %2426 = vmatmul.mubr.bf16.gmra.mrb[0].mxu0 %v2391
  %v2427 = vpop.f32.mrb[0].mxu0
  %v2428 = vadd.f32 %v1861, %v2427
  %v2429 = vpop.f32.mrb[0].mxu0
  %v2430 = vadd.f32 %v1865, %v2429
  %v2431 = vpop.f32.mrb[0].mxu0
  %v2432 = vpop.f32.mrb[0].mxu0
  %2433 = vdwg.mxu0
  %v2434 = vadd.f32 %v2384, %v2428
  %v2435 = vxor.u32 %v2434, 2147483648
  %v2436 = vmul.f32 %v2435, 1.442695
  %v2437 = vpow.pop %v2436
  %v2438 = vadd.f32 %v2437, 1.0
  %v2439 = vrcp.pop %v2438
  %v2440 = vmul.f32 1.0, %v2439
  %v2441 = vmul.f32 %v2440, %v2430
  %v2442 = vadd.f32 %v2385, %v2441
  %v2443 = vtanh.pop %v2442
  %v2444 = vsub.f32 1.0, %v2440
  %2446 = vrot.lane.b32.xlu0 %v2443, 64
  %v2447 = vpop.permute.xlu0 %2446
  %v2449 = vmul.f32 %v2444, %v2447
  %v2450 = vmul.f32 %v2440, %v2305
  %v2451 = vadd.f32 %v2449, %v2450
  %v2452 = vld [vmem:[#allocation3 + $0x40] sm:$0xff]
  %v2453 = vld [vmem:[#allocation3 + $0x48] sm:$0xff]
  %v2454 = vpack.c.bf16 %v2373, %v2373
  %2456 = vrot.lane.b32.xlu0 %v2454, 64
  %v2457 = vpop.permute.xlu0 %2456
  %v2459 = vsel %vm994, %v2457, 0
  %2461 = vmatprep.subr.bf16.mxu0 %v2008
  %2462 = vmatpush1.bf16.msra.mxu0 %v2007
  %2463 = vmatprep.subr.bf16.mxu0 %v2010
  %2464 = vmatpush1.bf16.msra.mxu0 %v2009
  %2465 = vmatprep.subr.bf16.mxu0 %v2012
  %2466 = vmatpush1.bf16.msra.mxu0 %v2011
  %2467 = vmatprep.subr.bf16.mxu0 %v2014
  %2468 = vmatpush1.bf16.msra.mxu0 %v2013
  %2469 = vmatprep.subr.bf16.mxu0 0
  %2470 = vmatpush1.bf16.msra.mxu0 0
  %2471 = vmatprep.subr.bf16.mxu0 0
  %2472 = vmatpush1.bf16.msra.mxu0 0
  %2473 = vmatprep.subr.bf16.mxu0 0
  %2474 = vmatpush1.bf16.msra.mxu0 0
  %2475 = vmatprep.subr.bf16.mxu0 0
  %2476 = vmatpush1.bf16.msra.mxu0 0
  %2477 = vmatprep.subr.bf16.mxu0 0
  %2478 = vmatpush1.bf16.msra.mxu0 0
  %2479 = vmatprep.subr.bf16.mxu0 0
  %2480 = vmatpush1.bf16.msra.mxu0 0
  %2481 = vmatprep.subr.bf16.mxu0 0
  %2482 = vmatpush1.bf16.msra.mxu0 0
  %2483 = vmatprep.subr.bf16.mxu0 0
  %2484 = vmatpush1.bf16.msra.mxu0 0
  %2485 = vmatprep.subr.bf16.mxu0 0
  %2486 = vmatpush1.bf16.msra.mxu0 0
  %2487 = vmatprep.subr.bf16.mxu0 0
  %2488 = vmatpush1.bf16.msra.mxu0 0
  %2489 = vmatprep.subr.bf16.mxu0 0
  %2490 = vmatpush1.bf16.msra.mxu0 0
  %2491 = vmatprep.subr.bf16.mxu0 0
  %2492 = vmatpush1.bf16.msra.mxu0 0
  %2493 = vmatprep.mubr.bf16.mxu0 0
  %2494 = vmatmul.mubr.bf16.gmra.mrb[0].mxu0 %v2459
  %v2495 = vpop.f32.mrb[0].mxu0
  %v2496 = vadd.f32 %v1976, %v2495
  %v2497 = vpop.f32.mrb[0].mxu0
  %v2498 = vadd.f32 %v1980, %v2497
  %v2499 = vpop.f32.mrb[0].mxu0
  %v2500 = vpop.f32.mrb[0].mxu0
  %2501 = vdwg.mxu0
  %v2502 = vadd.f32 %v2452, %v2496
  %v2503 = vxor.u32 %v2502, 2147483648
  %v2504 = vmul.f32 %v2503, 1.442695
  %v2505 = vpow.pop %v2504
  %v2506 = vadd.f32 %v2505, 1.0
  %v2507 = vrcp.pop %v2506
  %v2508 = vmul.f32 1.0, %v2507
  %v2509 = vmul.f32 %v2508, %v2498
  %v2510 = vadd.f32 %v2453, %v2509
  %v2511 = vtanh.pop %v2510
  %v2512 = vsub.f32 1.0, %v2508
  %2514 = vrot.lane.b32.xlu0 %v2511, 64
  %v2515 = vpop.permute.xlu0 %2514
  %v2517 = vmul.f32 %v2512, %v2515
  %v2518 = vmul.f32 %v2508, %v2373
  %v2519 = vadd.f32 %v2517, %v2518
  %2521 = vrot.lane.b32.xlu0 %v2451, 64
  %v2522 = vpop.permute.xlu0 %2521
  %2524 = vst.msk [vmem:[#allocation4 + $0x18] sm:$0xff] %vm994, %v2522
  %2526 = vrot.lane.b32.xlu0 %v2519, 64
  %v2527 = vpop.permute.xlu0 %2526
  %2529 = vst.msk [vmem:[#allocation5 + $0x20] sm:$0xff] %vm994, %v2527
  %v2530 = vld [vmem:[#allocation2 + $0x40] sm:$0xff]
  %v2531 = vld [vmem:[#allocation2 + $0x48] sm:$0xff]
  %v2532 = vpack.c.bf16 %v2451, %v2451
  %2534 = vrot.lane.b32.xlu0 %v2532, 64
  %v2535 = vpop.permute.xlu0 %2534
  %v2537 = vsel %vm994, %v2535, 0
  %2539 = vmatprep.subr.bf16.mxu0 %v1893
  %2540 = vmatpush1.bf16.msra.mxu0 %v1892
  %2541 = vmatprep.subr.bf16.mxu0 %v1895
  %2542 = vmatpush1.bf16.msra.mxu0 %v1894
  %2543 = vmatprep.subr.bf16.mxu0 %v1897
  %2544 = vmatpush1.bf16.msra.mxu0 %v1896
  %2545 = vmatprep.subr.bf16.mxu0 %v1899
  %2546 = vmatpush1.bf16.msra.mxu0 %v1898
  %2547 = vmatprep.subr.bf16.mxu0 0
  %2548 = vmatpush1.bf16.msra.mxu0 0
  %2549 = vmatprep.subr.bf16.mxu0 0
  %2550 = vmatpush1.bf16.msra.mxu0 0
  %2551 = vmatprep.subr.bf16.mxu0 0
  %2552 = vmatpush1.bf16.msra.mxu0 0
  %2553 = vmatprep.subr.bf16.mxu0 0
  %2554 = vmatpush1.bf16.msra.mxu0 0
  %2555 = vmatprep.subr.bf16.mxu0 0
  %2556 = vmatpush1.bf16.msra.mxu0 0
  %2557 = vmatprep.subr.bf16.mxu0 0
  %2558 = vmatpush1.bf16.msra.mxu0 0
  %2559 = vmatprep.subr.bf16.mxu0 0
  %2560 = vmatpush1.bf16.msra.mxu0 0
  %2561 = vmatprep.subr.bf16.mxu0 0
  %2562 = vmatpush1.bf16.msra.mxu0 0
  %2563 = vmatprep.subr.bf16.mxu0 0
  %2564 = vmatpush1.bf16.msra.mxu0 0
  %2565 = vmatprep.subr.bf16.mxu0 0
  %2566 = vmatpush1.bf16.msra.mxu0 0
  %2567 = vmatprep.subr.bf16.mxu0 0
  %2568 = vmatpush1.bf16.msra.mxu0 0
  %2569 = vmatprep.subr.bf16.mxu0 0
  %2570 = vmatpush1.bf16.msra.mxu0 0
  %2571 = vmatprep.mubr.bf16.mxu0 0
  %2572 = vmatmul.mubr.bf16.gmra.mrb[0].mxu0 %v2537
  %v2573 = vpop.f32.mrb[0].mxu0
  %v2574 = vadd.f32 %v1861, %v2573
  %v2575 = vpop.f32.mrb[0].mxu0
  %v2576 = vadd.f32 %v1865, %v2575
  %v2577 = vpop.f32.mrb[0].mxu0
  %v2578 = vpop.f32.mrb[0].mxu0
  %2579 = vdwg.mxu0
  %v2580 = vadd.f32 %v2530, %v2574
  %v2581 = vxor.u32 %v2580, 2147483648
  %v2582 = vmul.f32 %v2581, 1.442695
  %v2583 = vpow.pop %v2582
  %v2584 = vadd.f32 %v2583, 1.0
  %v2585 = vrcp.pop %v2584
  %v2586 = vmul.f32 1.0, %v2585
  %v2587 = vmul.f32 %v2586, %v2576
  %v2588 = vadd.f32 %v2531, %v2587
  %v2589 = vtanh.pop %v2588
  %v2590 = vsub.f32 1.0, %v2586
  %2592 = vrot.lane.b32.xlu0 %v2589, 64
  %v2593 = vpop.permute.xlu0 %2592
  %v2595 = vmul.f32 %v2590, %v2593
  %v2596 = vmul.f32 %v2586, %v2451
  %v2597 = vadd.f32 %v2595, %v2596
  %v2598 = vld [vmem:[#allocation3 + $0x30] sm:$0xff]
  %v2599 = vld [vmem:[#allocation3 + $0x38] sm:$0xff]
  %v2600 = vpack.c.bf16 %v2519, %v2519
  %2602 = vrot.lane.b32.xlu0 %v2600, 64
  %v2603 = vpop.permute.xlu0 %2602
  %v2605 = vsel %vm994, %v2603, 0
  %2607 = vmatprep.subr.bf16.mxu0 %v2008
  %2608 = vmatpush1.bf16.msra.mxu0 %v2007
  %2609 = vmatprep.subr.bf16.mxu0 %v2010
  %2610 = vmatpush1.bf16.msra.mxu0 %v2009
  %2611 = vmatprep.subr.bf16.mxu0 %v2012
  %2612 = vmatpush1.bf16.msra.mxu0 %v2011
  %2613 = vmatprep.subr.bf16.mxu0 %v2014
  %2614 = vmatpush1.bf16.msra.mxu0 %v2013
  %2615 = vmatprep.subr.bf16.mxu0 0
  %2616 = vmatpush1.bf16.msra.mxu0 0
  %2617 = vmatprep.subr.bf16.mxu0 0
  %2618 = vmatpush1.bf16.msra.mxu0 0
  %2619 = vmatprep.subr.bf16.mxu0 0
  %2620 = vmatpush1.bf16.msra.mxu0 0
  %2621 = vmatprep.subr.bf16.mxu0 0
  %2622 = vmatpush1.bf16.msra.mxu0 0
  %2623 = vmatprep.subr.bf16.mxu0 0
  %2624 = vmatpush1.bf16.msra.mxu0 0
  %2625 = vmatprep.subr.bf16.mxu0 0
  %2626 = vmatpush1.bf16.msra.mxu0 0
  %2627 = vmatprep.subr.bf16.mxu0 0
  %2628 = vmatpush1.bf16.msra.mxu0 0
  %2629 = vmatprep.subr.bf16.mxu0 0
  %2630 = vmatpush1.bf16.msra.mxu0 0
  %2631 = vmatprep.subr.bf16.mxu0 0
  %2632 = vmatpush1.bf16.msra.mxu0 0
  %2633 = vmatprep.subr.bf16.mxu0 0
  %2634 = vmatpush1.bf16.msra.mxu0 0
  %2635 = vmatprep.subr.bf16.mxu0 0
  %2636 = vmatpush1.bf16.msra.mxu0 0
  %2637 = vmatprep.subr.bf16.mxu0 0
  %2638 = vmatpush1.bf16.msra.mxu0 0
  %2639 = vmatprep.mubr.bf16.mxu0 0
  %2640 = vmatmul.mubr.bf16.gmra.mrb[0].mxu0 %v2605
  %v2641 = vpop.f32.mrb[0].mxu0
  %v2642 = vadd.f32 %v1976, %v2641
  %v2643 = vpop.f32.mrb[0].mxu0
  %v2644 = vadd.f32 %v1980, %v2643
  %v2645 = vpop.f32.mrb[0].mxu0
  %v2646 = vpop.f32.mrb[0].mxu0
  %2647 = vdwg.mxu0
  %v2648 = vadd.f32 %v2598, %v2642
  %v2649 = vxor.u32 %v2648, 2147483648
  %v2650 = vmul.f32 %v2649, 1.442695
  %v2651 = vpow.pop %v2650
  %v2652 = vadd.f32 %v2651, 1.0
  %v2653 = vrcp.pop %v2652
  %v2654 = vmul.f32 1.0, %v2653
  %v2655 = vmul.f32 %v2654, %v2644
  %v2656 = vadd.f32 %v2599, %v2655
  %v2657 = vtanh.pop %v2656
  %v2658 = vsub.f32 1.0, %v2654
  %2660 = vrot.lane.b32.xlu0 %v2657, 64
  %v2661 = vpop.permute.xlu0 %2660
  %v2663 = vmul.f32 %v2658, %v2661
  %v2664 = vmul.f32 %v2654, %v2519
  %v2665 = vadd.f32 %v2663, %v2664
  %2667 = vrot.lane.b32.xlu0 %v2597, 64
  %v2668 = vpop.permute.xlu0 %2667
  %2670 = vst.msk [vmem:[#allocation4 + $0x20] sm:$0xff] %vm994, %v2668
  %2672 = vrot.lane.b32.xlu0 %v2665, 64
  %v2673 = vpop.permute.xlu0 %2672
  %2675 = vst.msk [vmem:[#allocation5 + $0x18] sm:$0xff] %vm994, %v2673
  %v2676 = vld [vmem:[#allocation2 + $0x50] sm:$0xff]
  %v2677 = vld [vmem:[#allocation2 + $0x58] sm:$0xff]
  %v2678 = vpack.c.bf16 %v2597, %v2597
  %2680 = vrot.lane.b32.xlu0 %v2678, 64
  %v2681 = vpop.permute.xlu0 %2680
  %v2683 = vsel %vm994, %v2681, 0
  %2685 = vmatprep.subr.bf16.mxu0 %v1893
  %2686 = vmatpush1.bf16.msra.mxu0 %v1892
  %2687 = vmatprep.subr.bf16.mxu0 %v1895
  %2688 = vmatpush1.bf16.msra.mxu0 %v1894
  %2689 = vmatprep.subr.bf16.mxu0 %v1897
  %2690 = vmatpush1.bf16.msra.mxu0 %v1896
  %2691 = vmatprep.subr.bf16.mxu0 %v1899
  %2692 = vmatpush1.bf16.msra.mxu0 %v1898
  %2693 = vmatprep.subr.bf16.mxu0 0
  %2694 = vmatpush1.bf16.msra.mxu0 0
  %2695 = vmatprep.subr.bf16.mxu0 0
  %2696 = vmatpush1.bf16.msra.mxu0 0
  %2697 = vmatprep.subr.bf16.mxu0 0
  %2698 = vmatpush1.bf16.msra.mxu0 0
  %2699 = vmatprep.subr.bf16.mxu0 0
  %2700 = vmatpush1.bf16.msra.mxu0 0
  %2701 = vmatprep.subr.bf16.mxu0 0
  %2702 = vmatpush1.bf16.msra.mxu0 0
  %2703 = vmatprep.subr.bf16.mxu0 0
  %2704 = vmatpush1.bf16.msra.mxu0 0
  %2705 = vmatprep.subr.bf16.mxu0 0
  %2706 = vmatpush1.bf16.msra.mxu0 0
  %2707 = vmatprep.subr.bf16.mxu0 0
  %2708 = vmatpush1.bf16.msra.mxu0 0
  %2709 = vmatprep.subr.bf16.mxu0 0
  %2710 = vmatpush1.bf16.msra.mxu0 0
  %2711 = vmatprep.subr.bf16.mxu0 0
  %2712 = vmatpush1.bf16.msra.mxu0 0
  %2713 = vmatprep.subr.bf16.mxu0 0
  %2714 = vmatpush1.bf16.msra.mxu0 0
  %2715 = vmatprep.subr.bf16.mxu0 0
  %2716 = vmatpush1.bf16.msra.mxu0 0
  %2717 = vmatprep.mubr.bf16.mxu0 0
  %2718 = vmatmul.mubr.bf16.gmra.mrb[0].mxu0 %v2683
  %v2719 = vpop.f32.mrb[0].mxu0
  %v2720 = vadd.f32 %v1861, %v2719
  %v2721 = vpop.f32.mrb[0].mxu0
  %v2722 = vadd.f32 %v1865, %v2721
  %v2723 = vpop.f32.mrb[0].mxu0
  %v2724 = vpop.f32.mrb[0].mxu0
  %2725 = vdwg.mxu0
  %v2726 = vadd.f32 %v2676, %v2720
  %v2727 = vxor.u32 %v2726, 2147483648
  %v2728 = vmul.f32 %v2727, 1.442695
  %v2729 = vpow.pop %v2728
  %v2730 = vadd.f32 %v2729, 1.0
  %v2731 = vrcp.pop %v2730
  %v2732 = vmul.f32 1.0, %v2731
  %v2733 = vmul.f32 %v2732, %v2722
  %v2734 = vadd.f32 %v2677, %v2733
  %v2735 = vtanh.pop %v2734
  %v2736 = vsub.f32 1.0, %v2732
  %2738 = vrot.lane.b32.xlu0 %v2735, 64
  %v2739 = vpop.permute.xlu0 %2738
  %v2741 = vmul.f32 %v2736, %v2739
  %v2742 = vmul.f32 %v2732, %v2597
  %v2743 = vadd.f32 %v2741, %v2742
  %v2744 = vld [vmem:[#allocation3 + $0x20] sm:$0xff]
  %v2745 = vld [vmem:[#allocation3 + $0x28] sm:$0xff]
  %v2746 = vpack.c.bf16 %v2665, %v2665
  %2748 = vrot.lane.b32.xlu0 %v2746, 64
  %v2749 = vpop.permute.xlu0 %2748
  %v2751 = vsel %vm994, %v2749, 0
  %2753 = vmatprep.subr.bf16.mxu0 %v2008
  %2754 = vmatpush1.bf16.msra.mxu0 %v2007
  %2755 = vmatprep.subr.bf16.mxu0 %v2010
  %2756 = vmatpush1.bf16.msra.mxu0 %v2009
  %2757 = vmatprep.subr.bf16.mxu0 %v2012
  %2758 = vmatpush1.bf16.msra.mxu0 %v2011
  %2759 = vmatprep.subr.bf16.mxu0 %v2014
  %2760 = vmatpush1.bf16.msra.mxu0 %v2013
  %2761 = vmatprep.subr.bf16.mxu0 0
  %2762 = vmatpush1.bf16.msra.mxu0 0
  %2763 = vmatprep.subr.bf16.mxu0 0
  %2764 = vmatpush1.bf16.msra.mxu0 0
  %2765 = vmatprep.subr.bf16.mxu0 0
  %2766 = vmatpush1.bf16.msra.mxu0 0
  %2767 = vmatprep.subr.bf16.mxu0 0
  %2768 = vmatpush1.bf16.msra.mxu0 0
  %2769 = vmatprep.subr.bf16.mxu0 0
  %2770 = vmatpush1.bf16.msra.mxu0 0
  %2771 = vmatprep.subr.bf16.mxu0 0
  %2772 = vmatpush1.bf16.msra.mxu0 0
  %2773 = vmatprep.subr.bf16.mxu0 0
  %2774 = vmatpush1.bf16.msra.mxu0 0
  %2775 = vmatprep.subr.bf16.mxu0 0
  %2776 = vmatpush1.bf16.msra.mxu0 0
  %2777 = vmatprep.subr.bf16.mxu0 0
  %2778 = vmatpush1.bf16.msra.mxu0 0
  %2779 = vmatprep.subr.bf16.mxu0 0
  %2780 = vmatpush1.bf16.msra.mxu0 0
  %2781 = vmatprep.subr.bf16.mxu0 0
  %2782 = vmatpush1.bf16.msra.mxu0 0
  %2783 = vmatprep.subr.bf16.mxu0 0
  %2784 = vmatpush1.bf16.msra.mxu0 0
  %2785 = vmatprep.mubr.bf16.mxu0 0
  %2786 = vmatmul.mubr.bf16.gmra.mrb[0].mxu0 %v2751
  %v2787 = vpop.f32.mrb[0].mxu0
  %v2788 = vadd.f32 %v1976, %v2787
  %v2789 = vpop.f32.mrb[0].mxu0
  %v2790 = vadd.f32 %v1980, %v2789
  %v2791 = vpop.f32.mrb[0].mxu0
  %v2792 = vpop.f32.mrb[0].mxu0
  %2793 = vdwg.mxu0
  %v2794 = vadd.f32 %v2744, %v2788
  %v2795 = vxor.u32 %v2794, 2147483648
  %v2796 = vmul.f32 %v2795, 1.442695
  %v2797 = vpow.pop %v2796
  %v2798 = vadd.f32 %v2797, 1.0
  %v2799 = vrcp.pop %v2798
  %v2800 = vmul.f32 1.0, %v2799
  %v2801 = vmul.f32 %v2800, %v2790
  %v2802 = vadd.f32 %v2745, %v2801
  %v2803 = vtanh.pop %v2802
  %v2804 = vsub.f32 1.0, %v2800
  %2806 = vrot.lane.b32.xlu0 %v2803, 64
  %v2807 = vpop.permute.xlu0 %2806
  %v2809 = vmul.f32 %v2804, %v2807
  %v2810 = vmul.f32 %v2800, %v2665
  %v2811 = vadd.f32 %v2809, %v2810
  %2813 = vrot.lane.b32.xlu0 %v2743, 64
  %v2814 = vpop.permute.xlu0 %2813
  %2816 = vst.msk [vmem:[#allocation4 + $0x28] sm:$0xff] %vm994, %v2814
  %2818 = vrot.lane.b32.xlu0 %v2811, 64
  %v2819 = vpop.permute.xlu0 %2818
  %2821 = vst.msk [vmem:[#allocation5 + $0x10] sm:$0xff] %vm994, %v2819
  %v2822 = vld [vmem:[#allocation2 + $0x60] sm:$0xff]
  %v2823 = vld [vmem:[#allocation2 + $0x68] sm:$0xff]
  %v2824 = vpack.c.bf16 %v2743, %v2743
  %2826 = vrot.lane.b32.xlu0 %v2824, 64
  %v2827 = vpop.permute.xlu0 %2826
  %v2829 = vsel %vm994, %v2827, 0
  %2831 = vmatprep.subr.bf16.mxu0 %v1893
  %2832 = vmatpush1.bf16.msra.mxu0 %v1892
  %2833 = vmatprep.subr.bf16.mxu0 %v1895
  %2834 = vmatpush1.bf16.msra.mxu0 %v1894
  %2835 = vmatprep.subr.bf16.mxu0 %v1897
  %2836 = vmatpush1.bf16.msra.mxu0 %v1896
  %2837 = vmatprep.subr.bf16.mxu0 %v1899
  %2838 = vmatpush1.bf16.msra.mxu0 %v1898
  %2839 = vmatprep.subr.bf16.mxu0 0
  %2840 = vmatpush1.bf16.msra.mxu0 0
  %2841 = vmatprep.subr.bf16.mxu0 0
  %2842 = vmatpush1.bf16.msra.mxu0 0
  %2843 = vmatprep.subr.bf16.mxu0 0
  %2844 = vmatpush1.bf16.msra.mxu0 0
  %2845 = vmatprep.subr.bf16.mxu0 0
  %2846 = vmatpush1.bf16.msra.mxu0 0
  %2847 = vmatprep.subr.bf16.mxu0 0
  %2848 = vmatpush1.bf16.msra.mxu0 0
  %2849 = vmatprep.subr.bf16.mxu0 0
  %2850 = vmatpush1.bf16.msra.mxu0 0
  %2851 = vmatprep.subr.bf16.mxu0 0
  %2852 = vmatpush1.bf16.msra.mxu0 0
  %2853 = vmatprep.subr.bf16.mxu0 0
  %2854 = vmatpush1.bf16.msra.mxu0 0
  %2855 = vmatprep.subr.bf16.mxu0 0
  %2856 = vmatpush1.bf16.msra.mxu0 0
  %2857 = vmatprep.subr.bf16.mxu0 0
  %2858 = vmatpush1.bf16.msra.mxu0 0
  %2859 = vmatprep.subr.bf16.mxu0 0
  %2860 = vmatpush1.bf16.msra.mxu0 0
  %2861 = vmatprep.subr.bf16.mxu0 0
  %2862 = vmatpush1.bf16.msra.mxu0 0
  %2863 = vmatprep.mubr.bf16.mxu0 0
  %2864 = vmatmul.mubr.bf16.gmra.mrb[0].mxu0 %v2829
  %v2865 = vpop.f32.mrb[0].mxu0
  %v2866 = vadd.f32 %v1861, %v2865
  %v2867 = vpop.f32.mrb[0].mxu0
  %v2868 = vadd.f32 %v1865, %v2867
  %v2869 = vpop.f32.mrb[0].mxu0
  %v2870 = vpop.f32.mrb[0].mxu0
  %2871 = vdwg.mxu0
  %v2872 = vadd.f32 %v2822, %v2866
  %v2873 = vxor.u32 %v2872, 2147483648
  %v2874 = vmul.f32 %v2873, 1.442695
  %v2875 = vpow.pop %v2874
  %v2876 = vadd.f32 %v2875, 1.0
  %v2877 = vrcp.pop %v2876
  %v2878 = vmul.f32 1.0, %v2877
  %v2879 = vmul.f32 %v2878, %v2868
  %v2880 = vadd.f32 %v2823, %v2879
  %v2881 = vtanh.pop %v2880
  %v2882 = vsub.f32 1.0, %v2878
  %2884 = vrot.lane.b32.xlu0 %v2881, 64
  %v2885 = vpop.permute.xlu0 %2884
  %v2887 = vmul.f32 %v2882, %v2885
  %v2888 = vmul.f32 %v2878, %v2743
  %v2889 = vadd.f32 %v2887, %v2888
  %v2890 = vld [vmem:[#allocation3 + $0x10] sm:$0xff]
  %v2891 = vld [vmem:[#allocation3 + $0x18] sm:$0xff]
  %v2892 = vpack.c.bf16 %v2811, %v2811
  %2894 = vrot.lane.b32.xlu0 %v2892, 64
  %v2895 = vpop.permute.xlu0 %2894
  %v2897 = vsel %vm994, %v2895, 0
  %2899 = vmatprep.subr.bf16.mxu0 %v2008
  %2900 = vmatpush1.bf16.msra.mxu0 %v2007
  %2901 = vmatprep.subr.bf16.mxu0 %v2010
  %2902 = vmatpush1.bf16.msra.mxu0 %v2009
  %2903 = vmatprep.subr.bf16.mxu0 %v2012
  %2904 = vmatpush1.bf16.msra.mxu0 %v2011
  %2905 = vmatprep.subr.bf16.mxu0 %v2014
  %2906 = vmatpush1.bf16.msra.mxu0 %v2013
  %2907 = vmatprep.subr.bf16.mxu0 0
  %2908 = vmatpush1.bf16.msra.mxu0 0
  %2909 = vmatprep.subr.bf16.mxu0 0
  %2910 = vmatpush1.bf16.msra.mxu0 0
  %2911 = vmatprep.subr.bf16.mxu0 0
  %2912 = vmatpush1.bf16.msra.mxu0 0
  %2913 = vmatprep.subr.bf16.mxu0 0
  %2914 = vmatpush1.bf16.msra.mxu0 0
  %2915 = vmatprep.subr.bf16.mxu0 0
  %2916 = vmatpush1.bf16.msra.mxu0 0
  %2917 = vmatprep.subr.bf16.mxu0 0
  %2918 = vmatpush1.bf16.msra.mxu0 0
  %2919 = vmatprep.subr.bf16.mxu0 0
  %2920 = vmatpush1.bf16.msra.mxu0 0
  %2921 = vmatprep.subr.bf16.mxu0 0
  %2922 = vmatpush1.bf16.msra.mxu0 0
  %2923 = vmatprep.subr.bf16.mxu0 0
  %2924 = vmatpush1.bf16.msra.mxu0 0
  %2925 = vmatprep.subr.bf16.mxu0 0
  %2926 = vmatpush1.bf16.msra.mxu0 0
  %2927 = vmatprep.subr.bf16.mxu0 0
  %2928 = vmatpush1.bf16.msra.mxu0 0
  %2929 = vmatprep.subr.bf16.mxu0 0
  %2930 = vmatpush1.bf16.msra.mxu0 0
  %2931 = vmatprep.mubr.bf16.mxu0 0
  %2932 = vmatmul.mubr.bf16.gmra.mrb[0].mxu0 %v2897
  %v2933 = vpop.f32.mrb[0].mxu0
  %v2934 = vadd.f32 %v1976, %v2933
  %v2935 = vpop.f32.mrb[0].mxu0
  %v2936 = vadd.f32 %v1980, %v2935
  %v2937 = vpop.f32.mrb[0].mxu0
  %v2938 = vpop.f32.mrb[0].mxu0
  %2939 = vdwg.mxu0
  %v2940 = vadd.f32 %v2890, %v2934
  %v2941 = vxor.u32 %v2940, 2147483648
  %v2942 = vmul.f32 %v2941, 1.442695
  %v2943 = vpow.pop %v2942
  %v2944 = vadd.f32 %v2943, 1.0
  %v2945 = vrcp.pop %v2944
  %v2946 = vmul.f32 1.0, %v2945
  %v2947 = vmul.f32 %v2946, %v2936
  %v2948 = vadd.f32 %v2891, %v2947
  %v2949 = vtanh.pop %v2948
  %v2950 = vsub.f32 1.0, %v2946
  %2952 = vrot.lane.b32.xlu0 %v2949, 64
  %v2953 = vpop.permute.xlu0 %2952
  %v2955 = vmul.f32 %v2950, %v2953
  %v2956 = vmul.f32 %v2946, %v2811
  %v2957 = vadd.f32 %v2955, %v2956
  %2959 = vrot.lane.b32.xlu0 %v2889, 64
  %v2960 = vpop.permute.xlu0 %2959
  %2962 = vst.msk [vmem:[#allocation4 + $0x30] sm:$0xff] %vm994, %v2960
  %2964 = vrot.lane.b32.xlu0 %v2957, 64
  %v2965 = vpop.permute.xlu0 %2964
  %2967 = vst.msk [vmem:[#allocation5 + $0x8] sm:$0xff] %vm994, %v2965
  %v2968 = vld [vmem:[#allocation2 + $0x70] sm:$0xff]
  %v2969 = vld [vmem:[#allocation2 + $0x78] sm:$0xff]
  %v2970 = vpack.c.bf16 %v2889, %v2889
  %2972 = vrot.lane.b32.xlu0 %v2970, 64
  %v2973 = vpop.permute.xlu0 %2972
  %v2975 = vsel %vm994, %v2973, 0
  %2977 = vmatprep.subr.bf16.mxu0 %v1893
  %2978 = vmatpush1.bf16.msra.mxu0 %v1892
  %2979 = vmatprep.subr.bf16.mxu0 %v1895
  %2980 = vmatpush1.bf16.msra.mxu0 %v1894
  %2981 = vmatprep.subr.bf16.mxu0 %v1897
  %2982 = vmatpush1.bf16.msra.mxu0 %v1896
  %2983 = vmatprep.subr.bf16.mxu0 %v1899
  %2984 = vmatpush1.bf16.msra.mxu0 %v1898
  %2985 = vmatprep.subr.bf16.mxu0 0
  %2986 = vmatpush1.bf16.msra.mxu0 0
  %2987 = vmatprep.subr.bf16.mxu0 0
  %2988 = vmatpush1.bf16.msra.mxu0 0
  %2989 = vmatprep.subr.bf16.mxu0 0
  %2990 = vmatpush1.bf16.msra.mxu0 0
  %2991 = vmatprep.subr.bf16.mxu0 0
  %2992 = vmatpush1.bf16.msra.mxu0 0
  %2993 = vmatprep.subr.bf16.mxu0 0
  %2994 = vmatpush1.bf16.msra.mxu0 0
  %2995 = vmatprep.subr.bf16.mxu0 0
  %2996 = vmatpush1.bf16.msra.mxu0 0
  %2997 = vmatprep.subr.bf16.mxu0 0
  %2998 = vmatpush1.bf16.msra.mxu0 0
  %2999 = vmatprep.subr.bf16.mxu0 0
  %3000 = vmatpush1.bf16.msra.mxu0 0
  %3001 = vmatprep.subr.bf16.mxu0 0
  %3002 = vmatpush1.bf16.msra.mxu0 0
  %3003 = vmatprep.subr.bf16.mxu0 0
  %3004 = vmatpush1.bf16.msra.mxu0 0
  %3005 = vmatprep.subr.bf16.mxu0 0
  %3006 = vmatpush1.bf16.msra.mxu0 0
  %3007 = vmatprep.subr.bf16.mxu0 0
  %3008 = vmatpush1.bf16.msra.mxu0 0
  %3009 = vmatprep.mubr.bf16.mxu0 0
  %3010 = vmatmul.mubr.bf16.gmra.mrb[0].mxu0 %v2975
  %v3011 = vpop.f32.mrb[0].mxu0
  %v3012 = vadd.f32 %v1861, %v3011
  %v3013 = vpop.f32.mrb[0].mxu0
  %v3014 = vadd.f32 %v1865, %v3013
  %v3015 = vpop.f32.mrb[0].mxu0
  %v3016 = vpop.f32.mrb[0].mxu0
  %3017 = vdwg.mxu0
  %v3018 = vadd.f32 %v2968, %v3012
  %v3019 = vxor.u32 %v3018, 2147483648
  %v3020 = vmul.f32 %v3019, 1.442695
  %v3021 = vpow.pop %v3020
  %v3022 = vadd.f32 %v3021, 1.0
  %v3023 = vrcp.pop %v3022
  %v3024 = vmul.f32 1.0, %v3023
  %v3025 = vmul.f32 %v3024, %v3014
  %v3026 = vadd.f32 %v2969, %v3025
  %v3027 = vtanh.pop %v3026
  %v3028 = vsub.f32 1.0, %v3024
  %3030 = vrot.lane.b32.xlu0 %v3027, 64
  %v3031 = vpop.permute.xlu0 %3030
  %v3033 = vmul.f32 %v3028, %v3031
  %v3034 = vmul.f32 %v3024, %v2889
  %v3035 = vadd.f32 %v3033, %v3034
  %v3036 = vld [vmem:[#allocation3] sm:$0xff]
  %v3037 = vld [vmem:[#allocation3 + $0x8] sm:$0xff]
  %v3038 = vpack.c.bf16 %v2957, %v2957
  %3040 = vrot.lane.b32.xlu0 %v3038, 64
  %v3041 = vpop.permute.xlu0 %3040
  %v3043 = vsel %vm994, %v3041, 0
  %3045 = vmatprep.subr.bf16.mxu0 %v2008
  %3046 = vmatpush1.bf16.msra.mxu0 %v2007
  %3047 = vmatprep.subr.bf16.mxu0 %v2010
  %3048 = vmatpush1.bf16.msra.mxu0 %v2009
  %3049 = vmatprep.subr.bf16.mxu0 %v2012
  %3050 = vmatpush1.bf16.msra.mxu0 %v2011
  %3051 = vmatprep.subr.bf16.mxu0 %v2014
  %3052 = vmatpush1.bf16.msra.mxu0 %v2013
  %3053 = vmatprep.subr.bf16.mxu0 0
  %3054 = vmatpush1.bf16.msra.mxu0 0
  %3055 = vmatprep.subr.bf16.mxu0 0
  %3056 = vmatpush1.bf16.msra.mxu0 0
  %3057 = vmatprep.subr.bf16.mxu0 0
  %3058 = vmatpush1.bf16.msra.mxu0 0
  %3059 = vmatprep.subr.bf16.mxu0 0
  %3060 = vmatpush1.bf16.msra.mxu0 0
  %3061 = vmatprep.subr.bf16.mxu0 0
  %3062 = vmatpush1.bf16.msra.mxu0 0
  %3063 = vmatprep.subr.bf16.mxu0 0
  %3064 = vmatpush1.bf16.msra.mxu0 0
  %3065 = vmatprep.subr.bf16.mxu0 0
  %3066 = vmatpush1.bf16.msra.mxu0 0
  %3067 = vmatprep.subr.bf16.mxu0 0
  %3068 = vmatpush1.bf16.msra.mxu0 0
  %3069 = vmatprep.subr.bf16.mxu0 0
  %3070 = vmatpush1.bf16.msra.mxu0 0
  %3071 = vmatprep.subr.bf16.mxu0 0
  %3072 = vmatpush1.bf16.msra.mxu0 0
  %3073 = vmatprep.subr.bf16.mxu0 0
  %3074 = vmatpush1.bf16.msra.mxu0 0
  %3075 = vmatprep.subr.bf16.mxu0 0
  %3076 = vmatpush1.bf16.msra.mxu0 0
  %3077 = vmatprep.mubr.bf16.mxu0 0
  %3078 = vmatmul.mubr.bf16.gmra.mrb[0].mxu0 %v3043
  %v3079 = vpop.f32.mrb[0].mxu0
  %v3080 = vadd.f32 %v1976, %v3079
  %v3081 = vpop.f32.mrb[0].mxu0
  %v3082 = vadd.f32 %v1980, %v3081
  %v3083 = vpop.f32.mrb[0].mxu0
  %v3084 = vpop.f32.mrb[0].mxu0
  %3085 = vdwg.mxu0
  %v3086 = vadd.f32 %v3036, %v3080
  %v3087 = vxor.u32 %v3086, 2147483648
  %v3088 = vmul.f32 %v3087, 1.442695
  %v3089 = vpow.pop %v3088
  %v3090 = vadd.f32 %v3089, 1.0
  %v3091 = vrcp.pop %v3090
  %v3092 = vmul.f32 1.0, %v3091
  %v3093 = vmul.f32 %v3092, %v3082
  %v3094 = vadd.f32 %v3037, %v3093
  %v3095 = vtanh.pop %v3094
  %v3096 = vsub.f32 1.0, %v3092
  %3098 = vrot.lane.b32.xlu0 %v3095, 64
  %v3099 = vpop.permute.xlu0 %3098
  %v3101 = vmul.f32 %v3096, %v3099
  %v3102 = vmul.f32 %v3092, %v2957
  %v3103 = vadd.f32 %v3101, %v3102
  %3105 = vrot.lane.b32.xlu0 %v3035, 64
  %v3106 = vpop.permute.xlu0 %3105
  %3108 = vst.msk [vmem:[#allocation4 + $0x38] sm:$0xff] %vm994, %v3106
  %3110 = vrot.lane.b32.xlu0 %v3103, 64
  %v3111 = vpop.permute.xlu0 %3110
  %3113 = vst.msk [vmem:[#allocation5] sm:$0xff] %vm994, %v3111
  %v3114 = vld [vmem:[#allocation4] sm:$0xff]
  %v3115 = vld [vmem:[#allocation4 + $0x8] sm:$0xff]
  %v3116 = vld [vmem:[#allocation4 + $0x10] sm:$0xff]
  %v3117 = vld [vmem:[#allocation4 + $0x18] sm:$0xff]
  %v3118 = vld [vmem:[#allocation4 + $0x20] sm:$0xff]
  %v3119 = vld [vmem:[#allocation4 + $0x28] sm:$0xff]
  %v3120 = vld [vmem:[#allocation4 + $0x30] sm:$0xff]
  %v3121 = vld [vmem:[#allocation4 + $0x38] sm:$0xff]
  %v3122 = vld [vmem:[#allocation5] sm:$0xff]
  %v3123 = vld [vmem:[#allocation5 + $0x8] sm:$0xff]
  %v3124 = vld [vmem:[#allocation5 + $0x10] sm:$0xff]
  %v3125 = vld [vmem:[#allocation5 + $0x18] sm:$0xff]
  %v3126 = vld [vmem:[#allocation5 + $0x20] sm:$0xff]
  %v3127 = vld [vmem:[#allocation5 + $0x28] sm:$0xff]
  %v3128 = vld [vmem:[#allocation5 + $0x30] sm:$0xff]
  %v3129 = vld [vmem:[#allocation5 + $0x38] sm:$0xff]
  %v3130 = vadd.f32 %v3114, %v3122
  %v3131 = vadd.f32 %v3115, %v3123
  %v3132 = vadd.f32 %v3116, %v3124
  %v3133 = vadd.f32 %v3117, %v3125
  %v3134 = vadd.f32 %v3118, %v3126
  %v3135 = vadd.f32 %v3119, %v3127
  %v3136 = vadd.f32 %v3120, %v3128
  %v3137 = vadd.f32 %v3121, %v3129
  %v3138 = vpack.c.bf16 %v3131, %v3130
  %v3139 = vpack.c.bf16 %v3133, %v3132
  %v3140 = vpack.c.bf16 %v3135, %v3134
  %v3141 = vpack.c.bf16 %v3137, %v3136
  %v3142 = vld [vmem:[%s5] sm:$0xff]
  %v3143 = vld [vmem:[%s5 + $0x8] sm:$0xff]
  %v3144 = vld [vmem:[%s5 + $0x10] sm:$0xff]
  %v3145 = vld [vmem:[%s5 + $0x18] sm:$0xff]
  %v3146 = vld [vmem:[%s5 + $0x20] sm:$0xff]
  %v3147 = vld [vmem:[%s5 + $0x28] sm:$0xff]
  %v3148 = vld [vmem:[%s5 + $0x30] sm:$0xff]
  %v3149 = vld [vmem:[%s5 + $0x38] sm:$0xff]
  %v3150 = vld [vmem:[%s6] sm:$0x3]
  %v3152 = vlaneseq
  %v3153 = vshrl.u32 %v3152, 7
  %v3154 = vsub.s32 0, %v3153
  %v3155 = vrot.slane %v3150, %v3154
  %v3156 = vlaneseq
  %v3157 = vshrl.u32 %v3156, 7
  %v3158 = vsub.s32 1, %v3157
  %v3159 = vrot.slane %v3150, %v3158
  %v3170 = vunpack.c.l.b16 %v3142
  %v3171 = vunpack.c.h.b16 %v3142
  %v3172 = vunpack.c.l.b16 %v3143
  %v3173 = vunpack.c.h.b16 %v3143
  %v3174 = vunpack.c.l.b16 %v3144
  %v3175 = vunpack.c.h.b16 %v3144
  %v3176 = vunpack.c.l.b16 %v3145
  %v3177 = vunpack.c.h.b16 %v3145
  %v3178 = vunpack.c.l.b16 %v3146
  %v3179 = vunpack.c.h.b16 %v3146
  %v3180 = vunpack.c.l.b16 %v3147
  %v3181 = vunpack.c.h.b16 %v3147
  %v3182 = vunpack.c.l.b16 %v3148
  %v3183 = vunpack.c.h.b16 %v3148
  %v3184 = vunpack.c.l.b16 %v3149
  %v3185 = vunpack.c.h.b16 %v3149
  %v3186 = vpack.c.b16 %v3172, %v3170
  %v3187 = vpack.c.b16 %v3173, %v3171
  %v3188 = vpack.c.b16 %v3176, %v3174
  %v3189 = vpack.c.b16 %v3177, %v3175
  %v3190 = vpack.c.b16 %v3180, %v3178
  %v3191 = vpack.c.b16 %v3181, %v3179
  %v3192 = vpack.c.b16 %v3184, %v3182
  %v3193 = vpack.c.b16 %v3185, %v3183
  %v3203 = vsel %vm994, %v3138, 0
  %v3206 = vsel %vm994, %v3139, 0
  %v3209 = vsel %vm994, %v3140, 0
  %v3212 = vsel %vm994, %v3141, 0
  %3214 = vmatprep.subr.bf16.mxu0 %v3187
  %3215 = vmatpush1.bf16.msra.mxu0 %v3186
  %3216 = vmatprep.subr.bf16.mxu0 %v3189
  %3217 = vmatpush1.bf16.msra.mxu0 %v3188
  %3218 = vmatprep.subr.bf16.mxu0 %v3191
  %3219 = vmatpush1.bf16.msra.mxu0 %v3190
  %3220 = vmatprep.subr.bf16.mxu0 %v3193
  %3221 = vmatpush1.bf16.msra.mxu0 %v3192
  %3222 = vmatprep.subr.bf16.mxu0 0
  %3223 = vmatpush1.bf16.msra.mxu0 0
  %3224 = vmatprep.subr.bf16.mxu0 0
  %3225 = vmatpush1.bf16.msra.mxu0 0
  %3226 = vmatprep.subr.bf16.mxu0 0
  %3227 = vmatpush1.bf16.msra.mxu0 0
  %3228 = vmatprep.subr.bf16.mxu0 0
  %3229 = vmatpush1.bf16.msra.mxu0 0
  %3230 = vmatprep.subr.bf16.mxu0 0
  %3231 = vmatpush1.bf16.msra.mxu0 0
  %3232 = vmatprep.subr.bf16.mxu0 0
  %3233 = vmatpush1.bf16.msra.mxu0 0
  %3234 = vmatprep.subr.bf16.mxu0 0
  %3235 = vmatpush1.bf16.msra.mxu0 0
  %3236 = vmatprep.subr.bf16.mxu0 0
  %3237 = vmatpush1.bf16.msra.mxu0 0
  %3238 = vmatprep.subr.bf16.mxu0 0
  %3239 = vmatpush1.bf16.msra.mxu0 0
  %3240 = vmatprep.subr.bf16.mxu0 0
  %3241 = vmatpush1.bf16.msra.mxu0 0
  %3242 = vmatprep.subr.bf16.mxu0 0
  %3243 = vmatpush1.bf16.msra.mxu0 0
  %3244 = vmatprep.subr.bf16.mxu0 0
  %3245 = vmatpush1.bf16.msra.mxu0 0
  %3246 = vmatprep.mubr.bf16.mxu0 0
  %3247 = vmatmul.mubr.bf16.gmra.mrb[0].mxu0 %v3203
  %v3248 = vpop.f32.mrb[0].mxu0
  %v3249 = vadd.f32 %v3155, %v3248
  %v3250 = vpop.f32.mrb[0].mxu0
  %v3251 = vadd.f32 %v3159, %v3250
  %v3252 = vpop.f32.mrb[0].mxu0
  %v3253 = vadd.f32 %v3155, %v3252
  %v3254 = vpop.f32.mrb[0].mxu0
  %v3255 = vadd.f32 %v3159, %v3254
  %3256 = vmatprep.mubr.bf16.mxu0 0
  %3257 = vmatmul.mubr.bf16.gmra.mrb[0].mxu0 %v3206
  %v3258 = vpop.f32.mrb[0].mxu0
  %v3259 = vadd.f32 %v3155, %v3258
  %v3260 = vpop.f32.mrb[0].mxu0
  %v3261 = vadd.f32 %v3159, %v3260
  %v3262 = vpop.f32.mrb[0].mxu0
  %v3263 = vadd.f32 %v3155, %v3262
  %v3264 = vpop.f32.mrb[0].mxu0
  %v3265 = vadd.f32 %v3159, %v3264
  %3266 = vmatprep.mubr.bf16.mxu0 0
  %3267 = vmatmul.mubr.bf16.gmra.mrb[0].mxu0 %v3209
  %v3268 = vpop.f32.mrb[0].mxu0
  %v3269 = vadd.f32 %v3155, %v3268
  %v3270 = vpop.f32.mrb[0].mxu0
  %v3271 = vadd.f32 %v3159, %v3270
  %v3272 = vpop.f32.mrb[0].mxu0
  %v3273 = vadd.f32 %v3155, %v3272
  %v3274 = vpop.f32.mrb[0].mxu0
  %v3275 = vadd.f32 %v3159, %v3274
  %3276 = vmatprep.mubr.bf16.mxu0 0
  %3277 = vmatmul.mubr.bf16.gmra.mrb[0].mxu0 %v3212
  %v3278 = vpop.f32.mrb[0].mxu0
  %v3279 = vadd.f32 %v3155, %v3278
  %v3280 = vpop.f32.mrb[0].mxu0
  %v3281 = vadd.f32 %v3159, %v3280
  %v3282 = vpop.f32.mrb[0].mxu0
  %v3283 = vadd.f32 %v3155, %v3282
  %v3284 = vpop.f32.mrb[0].mxu0
  %v3285 = vadd.f32 %v3159, %v3284
  %3286 = vdwg.mxu0
  %3287 = vst [vmem:[#allocation2] sm:$0xff] %v3249
  %3288 = vst.msk [vmem:[#allocation2 + $0x8] sm:$0xff] %vm994, %v3251
  %3289 = vst [vmem:[#allocation2 + $0x10] sm:$0xff] %v3253
  %3290 = vst.msk [vmem:[#allocation2 + $0x18] sm:$0xff] %vm994, %v3255
  %3291 = vst [vmem:[#allocation2 + $0x20] sm:$0xff] %v3259
  %3292 = vst.msk [vmem:[#allocation2 + $0x28] sm:$0xff] %vm994, %v3261
  %3293 = vst [vmem:[#allocation2 + $0x30] sm:$0xff] %v3263
  %3294 = vst.msk [vmem:[#allocation2 + $0x38] sm:$0xff] %vm994, %v3265
  %3295 = vst [vmem:[#allocation2 + $0x40] sm:$0xff] %v3269
  %3296 = vst.msk [vmem:[#allocation2 + $0x48] sm:$0xff] %vm994, %v3271
  %3297 = vst [vmem:[#allocation2 + $0x50] sm:$0xff] %v3273
  %3298 = vst.msk [vmem:[#allocation2 + $0x58] sm:$0xff] %vm994, %v3275
  %3299 = vst [vmem:[#allocation2 + $0x60] sm:$0xff] %v3279
  %3300 = vst.msk [vmem:[#allocation2 + $0x68] sm:$0xff] %vm994, %v3281
  %3301 = vst [vmem:[#allocation2 + $0x70] sm:$0xff] %v3283
  %3302 = vst.msk [vmem:[#allocation2 + $0x78] sm:$0xff] %vm994, %v3285
  %s3303 = scalar_lea.vmem %s5, 64
  %v3304 = vld [vmem:[%s3303] sm:$0xff]
  %v3305 = vld [vmem:[%s3303 + $0x8] sm:$0xff]
  %v3306 = vld [vmem:[%s3303 + $0x10] sm:$0xff]
  %v3307 = vld [vmem:[%s3303 + $0x18] sm:$0xff]
  %v3308 = vld [vmem:[%s3303 + $0x20] sm:$0xff]
  %v3309 = vld [vmem:[%s3303 + $0x28] sm:$0xff]
  %v3310 = vld [vmem:[%s3303 + $0x30] sm:$0xff]
  %v3311 = vld [vmem:[%s3303 + $0x38] sm:$0xff]
  %s3312 = scalar_lea.vmem %s6, 2
  %v3313 = vld [vmem:[%s3312] sm:$0x3]
  %v3315 = vlaneseq
  %v3316 = vshrl.u32 %v3315, 7
  %v3317 = vsub.s32 0, %v3316
  %v3318 = vrot.slane %v3313, %v3317
  %v3319 = vlaneseq
  %v3320 = vshrl.u32 %v3319, 7
  %v3321 = vsub.s32 1, %v3320
  %v3322 = vrot.slane %v3313, %v3321
  %v3333 = vunpack.c.l.b16 %v3304
  %v3334 = vunpack.c.h.b16 %v3304
  %v3335 = vunpack.c.l.b16 %v3305
  %v3336 = vunpack.c.h.b16 %v3305
  %v3337 = vunpack.c.l.b16 %v3306
  %v3338 = vunpack.c.h.b16 %v3306
  %v3339 = vunpack.c.l.b16 %v3307
  %v3340 = vunpack.c.h.b16 %v3307
  %v3341 = vunpack.c.l.b16 %v3308
  %v3342 = vunpack.c.h.b16 %v3308
  %v3343 = vunpack.c.l.b16 %v3309
  %v3344 = vunpack.c.h.b16 %v3309
  %v3345 = vunpack.c.l.b16 %v3310
  %v3346 = vunpack.c.h.b16 %v3310
  %v3347 = vunpack.c.l.b16 %v3311
  %v3348 = vunpack.c.h.b16 %v3311
  %v3349 = vpack.c.b16 %v3335, %v3333
  %v3350 = vpack.c.b16 %v3336, %v3334
  %v3351 = vpack.c.b16 %v3339, %v3337
  %v3352 = vpack.c.b16 %v3340, %v3338
  %v3353 = vpack.c.b16 %v3343, %v3341
  %v3354 = vpack.c.b16 %v3344, %v3342
  %v3355 = vpack.c.b16 %v3347, %v3345
  %v3356 = vpack.c.b16 %v3348, %v3346
  %3365 = vmatprep.subr.bf16.mxu0 %v3350
  %3366 = vmatpush1.bf16.msra.mxu0 %v3349
  %3367 = vmatprep.subr.bf16.mxu0 %v3352
  %3368 = vmatpush1.bf16.msra.mxu0 %v3351
  %3369 = vmatprep.subr.bf16.mxu0 %v3354
  %3370 = vmatpush1.bf16.msra.mxu0 %v3353
  %3371 = vmatprep.subr.bf16.mxu0 %v3356
  %3372 = vmatpush1.bf16.msra.mxu0 %v3355
  %3373 = vmatprep.subr.bf16.mxu0 0
  %3374 = vmatpush1.bf16.msra.mxu0 0
  %3375 = vmatprep.subr.bf16.mxu0 0
  %3376 = vmatpush1.bf16.msra.mxu0 0
  %3377 = vmatprep.subr.bf16.mxu0 0
  %3378 = vmatpush1.bf16.msra.mxu0 0
  %3379 = vmatprep.subr.bf16.mxu0 0
  %3380 = vmatpush1.bf16.msra.mxu0 0
  %3381 = vmatprep.subr.bf16.mxu0 0
  %3382 = vmatpush1.bf16.msra.mxu0 0
  %3383 = vmatprep.subr.bf16.mxu0 0
  %3384 = vmatpush1.bf16.msra.mxu0 0
  %3385 = vmatprep.subr.bf16.mxu0 0
  %3386 = vmatpush1.bf16.msra.mxu0 0
  %3387 = vmatprep.subr.bf16.mxu0 0
  %3388 = vmatpush1.bf16.msra.mxu0 0
  %3389 = vmatprep.subr.bf16.mxu0 0
  %3390 = vmatpush1.bf16.msra.mxu0 0
  %3391 = vmatprep.subr.bf16.mxu0 0
  %3392 = vmatpush1.bf16.msra.mxu0 0
  %3393 = vmatprep.subr.bf16.mxu0 0
  %3394 = vmatpush1.bf16.msra.mxu0 0
  %3395 = vmatprep.subr.bf16.mxu0 0
  %3396 = vmatpush1.bf16.msra.mxu0 0
  %3397 = vmatprep.mubr.bf16.mxu0 0
  %3398 = vmatmul.mubr.bf16.gmra.mrb[0].mxu0 %v3203
  %v3399 = vpop.f32.mrb[0].mxu0
  %v3400 = vadd.f32 %v3318, %v3399
  %v3401 = vpop.f32.mrb[0].mxu0
  %v3402 = vadd.f32 %v3322, %v3401
  %v3403 = vpop.f32.mrb[0].mxu0
  %v3404 = vadd.f32 %v3318, %v3403
  %v3405 = vpop.f32.mrb[0].mxu0
  %v3406 = vadd.f32 %v3322, %v3405
  %3407 = vmatprep.mubr.bf16.mxu0 0
  %3408 = vmatmul.mubr.bf16.gmra.mrb[0].mxu0 %v3206
  %v3409 = vpop.f32.mrb[0].mxu0
  %v3410 = vadd.f32 %v3318, %v3409
  %v3411 = vpop.f32.mrb[0].mxu0
  %v3412 = vadd.f32 %v3322, %v3411
  %v3413 = vpop.f32.mrb[0].mxu0
  %v3414 = vadd.f32 %v3318, %v3413
  %v3415 = vpop.f32.mrb[0].mxu0
  %v3416 = vadd.f32 %v3322, %v3415
  %3417 = vmatprep.mubr.bf16.mxu0 0
  %3418 = vmatmul.mubr.bf16.gmra.mrb[0].mxu0 %v3209
  %v3419 = vpop.f32.mrb[0].mxu0
  %v3420 = vadd.f32 %v3318, %v3419
  %v3421 = vpop.f32.mrb[0].mxu0
  %v3422 = vadd.f32 %v3322, %v3421
  %v3423 = vpop.f32.mrb[0].mxu0
  %v3424 = vadd.f32 %v3318, %v3423
  %v3425 = vpop.f32.mrb[0].mxu0
  %v3426 = vadd.f32 %v3322, %v3425
  %3427 = vmatprep.mubr.bf16.mxu0 0
  %3428 = vmatmul.mubr.bf16.gmra.mrb[0].mxu0 %v3212
  %v3429 = vpop.f32.mrb[0].mxu0
  %v3430 = vadd.f32 %v3318, %v3429
  %v3431 = vpop.f32.mrb[0].mxu0
  %v3432 = vadd.f32 %v3322, %v3431
  %v3433 = vpop.f32.mrb[0].mxu0
  %v3434 = vadd.f32 %v3318, %v3433
  %v3435 = vpop.f32.mrb[0].mxu0
  %v3436 = vadd.f32 %v3322, %v3435
  %3437 = vdwg.mxu0
  %3438 = vst [vmem:[#allocation3] sm:$0xff] %v3400
  %3439 = vst.msk [vmem:[#allocation3 + $0x8] sm:$0xff] %vm994, %v3402
  %3440 = vst [vmem:[#allocation3 + $0x10] sm:$0xff] %v3404
  %3441 = vst.msk [vmem:[#allocation3 + $0x18] sm:$0xff] %vm994, %v3406
  %3442 = vst [vmem:[#allocation3 + $0x20] sm:$0xff] %v3410
  %3443 = vst.msk [vmem:[#allocation3 + $0x28] sm:$0xff] %vm994, %v3412
  %3444 = vst [vmem:[#allocation3 + $0x30] sm:$0xff] %v3414
  %3445 = vst.msk [vmem:[#allocation3 + $0x38] sm:$0xff] %vm994, %v3416
  %3446 = vst [vmem:[#allocation3 + $0x40] sm:$0xff] %v3420
  %3447 = vst.msk [vmem:[#allocation3 + $0x48] sm:$0xff] %vm994, %v3422
  %3448 = vst [vmem:[#allocation3 + $0x50] sm:$0xff] %v3424
  %3449 = vst.msk [vmem:[#allocation3 + $0x58] sm:$0xff] %vm994, %v3426
  %3450 = vst [vmem:[#allocation3 + $0x60] sm:$0xff] %v3430
  %3451 = vst.msk [vmem:[#allocation3 + $0x68] sm:$0xff] %vm994, %v3432
  %3452 = vst [vmem:[#allocation3 + $0x70] sm:$0xff] %v3434
  %3453 = vst.msk [vmem:[#allocation3 + $0x78] sm:$0xff] %vm994, %v3436
  %v3454 = vld [vmem:[%s7] sm:$0xff]
  %v3455 = vld [vmem:[%s7 + $0x8] sm:$0xff]
  %v3456 = vld [vmem:[%s7 + $0x10] sm:$0xff]
  %v3457 = vld [vmem:[%s7 + $0x18] sm:$0xff]
  %v3458 = vld [vmem:[%s7 + $0x20] sm:$0xff]
  %v3459 = vld [vmem:[%s7 + $0x28] sm:$0xff]
  %v3460 = vld [vmem:[%s7 + $0x30] sm:$0xff]
  %v3461 = vld [vmem:[%s7 + $0x38] sm:$0xff]
  %s3462 = scalar_lea.vmem %s7, 64
  %v3463 = vld [vmem:[%s3462] sm:$0xff]
  %v3464 = vld [vmem:[%s3462 + $0x8] sm:$0xff]
  %v3465 = vld [vmem:[%s3462 + $0x10] sm:$0xff]
  %v3466 = vld [vmem:[%s3462 + $0x18] sm:$0xff]
  %v3467 = vld [vmem:[%s3462 + $0x20] sm:$0xff]
  %v3468 = vld [vmem:[%s3462 + $0x28] sm:$0xff]
  %v3469 = vld [vmem:[%s3462 + $0x30] sm:$0xff]
  %v3470 = vld [vmem:[%s3462 + $0x38] sm:$0xff]
  %v3471 = vld [vmem:[%s8] sm:$0x3]
  %s3472 = scalar_lea.vmem %s8, 2
  %v3473 = vld [vmem:[%s3472] sm:$0x3]
  %v3474 = vld [vmem:[#allocation2] sm:$0xff]
  %v3475 = vld [vmem:[#allocation2 + $0x8] sm:$0xff]
  %v3477 = vlaneseq
  %v3478 = vshrl.u32 %v3477, 7
  %v3479 = vsub.s32 0, %v3478
  %v3480 = vrot.slane %v3471, %v3479
  %v3481 = vlaneseq
  %v3482 = vshrl.u32 %v3481, 7
  %v3483 = vsub.s32 1, %v3482
  %v3484 = vrot.slane %v3471, %v3483
  %v3495 = vunpack.c.l.b16 %v3454
  %v3496 = vunpack.c.h.b16 %v3454
  %v3497 = vunpack.c.l.b16 %v3455
  %v3498 = vunpack.c.h.b16 %v3455
  %v3499 = vunpack.c.l.b16 %v3456
  %v3500 = vunpack.c.h.b16 %v3456
  %v3501 = vunpack.c.l.b16 %v3457
  %v3502 = vunpack.c.h.b16 %v3457
  %v3503 = vunpack.c.l.b16 %v3458
  %v3504 = vunpack.c.h.b16 %v3458
  %v3505 = vunpack.c.l.b16 %v3459
  %v3506 = vunpack.c.h.b16 %v3459
  %v3507 = vunpack.c.l.b16 %v3460
  %v3508 = vunpack.c.h.b16 %v3460
  %v3509 = vunpack.c.l.b16 %v3461
  %v3510 = vunpack.c.h.b16 %v3461
  %v3511 = vpack.c.b16 %v3497, %v3495
  %v3512 = vpack.c.b16 %v3498, %v3496
  %v3513 = vpack.c.b16 %v3501, %v3499
  %v3514 = vpack.c.b16 %v3502, %v3500
  %v3515 = vpack.c.b16 %v3505, %v3503
  %v3516 = vpack.c.b16 %v3506, %v3504
  %v3517 = vpack.c.b16 %v3509, %v3507
  %v3518 = vpack.c.b16 %v3510, %v3508
  %3527 = vmatprep.subr.bf16.mxu0 %v3512
  %3528 = vmatpush1.bf16.msra.mxu0 %v3511
  %3529 = vmatprep.subr.bf16.mxu0 %v3514
  %3530 = vmatpush1.bf16.msra.mxu0 %v3513
  %3531 = vmatprep.subr.bf16.mxu0 %v3516
  %3532 = vmatpush1.bf16.msra.mxu0 %v3515
  %3533 = vmatprep.subr.bf16.mxu0 %v3518
  %3534 = vmatpush1.bf16.msra.mxu0 %v3517
  %3535 = vmatprep.subr.bf16.mxu0 0
  %3536 = vmatpush1.bf16.msra.mxu0 0
  %3537 = vmatprep.subr.bf16.mxu0 0
  %3538 = vmatpush1.bf16.msra.mxu0 0
  %3539 = vmatprep.subr.bf16.mxu0 0
  %3540 = vmatpush1.bf16.msra.mxu0 0
  %3541 = vmatprep.subr.bf16.mxu0 0
  %3542 = vmatpush1.bf16.msra.mxu0 0
  %3543 = vmatprep.subr.bf16.mxu0 0
  %3544 = vmatpush1.bf16.msra.mxu0 0
  %3545 = vmatprep.subr.bf16.mxu0 0
  %3546 = vmatpush1.bf16.msra.mxu0 0
  %3547 = vmatprep.subr.bf16.mxu0 0
  %3548 = vmatpush1.bf16.msra.mxu0 0
  %3549 = vmatprep.subr.bf16.mxu0 0
  %3550 = vmatpush1.bf16.msra.mxu0 0
  %3551 = vmatprep.subr.bf16.mxu0 0
  %3552 = vmatpush1.bf16.msra.mxu0 0
  %3553 = vmatprep.subr.bf16.mxu0 0
  %3554 = vmatpush1.bf16.msra.mxu0 0
  %3555 = vmatprep.subr.bf16.mxu0 0
  %3556 = vmatpush1.bf16.msra.mxu0 0
  %3557 = vmatprep.subr.bf16.mxu0 0
  %3558 = vmatpush1.bf16.msra.mxu0 0
  %3559 = vmatprep.mubr.bf16.mxu0 0
  %3560 = vmatmul.mubr.bf16.gmra.mrb[0].mxu0 %v1909
  %v3561 = vpop.f32.mrb[0].mxu0
  %v3562 = vadd.f32 %v3480, %v3561
  %v3563 = vpop.f32.mrb[0].mxu0
  %v3564 = vadd.f32 %v3484, %v3563
  %v3565 = vpop.f32.mrb[0].mxu0
  %v3566 = vpop.f32.mrb[0].mxu0
  %3567 = vdwg.mxu0
  %v3568 = vadd.f32 %v3474, %v3562
  %v3569 = vxor.u32 %v3568, 2147483648
  %v3570 = vmul.f32 %v3569, 1.442695
  %v3571 = vpow.pop %v3570
  %v3572 = vadd.f32 %v3571, 1.0
  %v3573 = vrcp.pop %v3572
  %v3574 = vmul.f32 1.0, %v3573
  %v3575 = vmul.f32 %v3574, %v3564
  %v3576 = vadd.f32 %v3475, %v3575
  %v3577 = vtanh.pop %v3576
  %v3578 = vsub.f32 1.0, %v3574
  %3580 = vrot.lane.b32.xlu0 %v3577, 64
  %v3581 = vpop.permute.xlu0 %3580
  %v3583 = vmul.f32 %v3578, %v3581
  %v3584 = vmul.f32 %v3574, 0.0
  %v3585 = vadd.f32 %v3583, %v3584
  %v3586 = vld [vmem:[#allocation3 + $0x70] sm:$0xff]
  %v3587 = vld [vmem:[#allocation3 + $0x78] sm:$0xff]
  %v3589 = vlaneseq
  %v3590 = vshrl.u32 %v3589, 7
  %v3591 = vsub.s32 0, %v3590
  %v3592 = vrot.slane %v3473, %v3591
  %v3593 = vlaneseq
  %v3594 = vshrl.u32 %v3593, 7
  %v3595 = vsub.s32 1, %v3594
  %v3596 = vrot.slane %v3473, %v3595
  %v3607 = vunpack.c.l.b16 %v3463
  %v3608 = vunpack.c.h.b16 %v3463
  %v3609 = vunpack.c.l.b16 %v3464
  %v3610 = vunpack.c.h.b16 %v3464
  %v3611 = vunpack.c.l.b16 %v3465
  %v3612 = vunpack.c.h.b16 %v3465
  %v3613 = vunpack.c.l.b16 %v3466
  %v3614 = vunpack.c.h.b16 %v3466
  %v3615 = vunpack.c.l.b16 %v3467
  %v3616 = vunpack.c.h.b16 %v3467
  %v3617 = vunpack.c.l.b16 %v3468
  %v3618 = vunpack.c.h.b16 %v3468
  %v3619 = vunpack.c.l.b16 %v3469
  %v3620 = vunpack.c.h.b16 %v3469
  %v3621 = vunpack.c.l.b16 %v3470
  %v3622 = vunpack.c.h.b16 %v3470
  %v3623 = vpack.c.b16 %v3609, %v3607
  %v3624 = vpack.c.b16 %v3610, %v3608
  %v3625 = vpack.c.b16 %v3613, %v3611
  %v3626 = vpack.c.b16 %v3614, %v3612
  %v3627 = vpack.c.b16 %v3617, %v3615
  %v3628 = vpack.c.b16 %v3618, %v3616
  %v3629 = vpack.c.b16 %v3621, %v3619
  %v3630 = vpack.c.b16 %v3622, %v3620
  %3639 = vmatprep.subr.bf16.mxu0 %v3624
  %3640 = vmatpush1.bf16.msra.mxu0 %v3623
  %3641 = vmatprep.subr.bf16.mxu0 %v3626
  %3642 = vmatpush1.bf16.msra.mxu0 %v3625
  %3643 = vmatprep.subr.bf16.mxu0 %v3628
  %3644 = vmatpush1.bf16.msra.mxu0 %v3627
  %3645 = vmatprep.subr.bf16.mxu0 %v3630
  %3646 = vmatpush1.bf16.msra.mxu0 %v3629
  %3647 = vmatprep.subr.bf16.mxu0 0
  %3648 = vmatpush1.bf16.msra.mxu0 0
  %3649 = vmatprep.subr.bf16.mxu0 0
  %3650 = vmatpush1.bf16.msra.mxu0 0
  %3651 = vmatprep.subr.bf16.mxu0 0
  %3652 = vmatpush1.bf16.msra.mxu0 0
  %3653 = vmatprep.subr.bf16.mxu0 0
  %3654 = vmatpush1.bf16.msra.mxu0 0
  %3655 = vmatprep.subr.bf16.mxu0 0
  %3656 = vmatpush1.bf16.msra.mxu0 0
  %3657 = vmatprep.subr.bf16.mxu0 0
  %3658 = vmatpush1.bf16.msra.mxu0 0
  %3659 = vmatprep.subr.bf16.mxu0 0
  %3660 = vmatpush1.bf16.msra.mxu0 0
  %3661 = vmatprep.subr.bf16.mxu0 0
  %3662 = vmatpush1.bf16.msra.mxu0 0
  %3663 = vmatprep.subr.bf16.mxu0 0
  %3664 = vmatpush1.bf16.msra.mxu0 0
  %3665 = vmatprep.subr.bf16.mxu0 0
  %3666 = vmatpush1.bf16.msra.mxu0 0
  %3667 = vmatprep.subr.bf16.mxu0 0
  %3668 = vmatpush1.bf16.msra.mxu0 0
  %3669 = vmatprep.subr.bf16.mxu0 0
  %3670 = vmatpush1.bf16.msra.mxu0 0
  %3671 = vmatprep.mubr.bf16.mxu0 0
  %3672 = vmatmul.mubr.bf16.gmra.mrb[0].mxu0 %v1909
  %v3673 = vpop.f32.mrb[0].mxu0
  %v3674 = vadd.f32 %v3592, %v3673
  %v3675 = vpop.f32.mrb[0].mxu0
  %v3676 = vadd.f32 %v3596, %v3675
  %v3677 = vpop.f32.mrb[0].mxu0
  %v3678 = vpop.f32.mrb[0].mxu0
  %3679 = vdwg.mxu0
  %v3680 = vadd.f32 %v3586, %v3674
  %v3681 = vxor.u32 %v3680, 2147483648
  %v3682 = vmul.f32 %v3681, 1.442695
  %v3683 = vpow.pop %v3682
  %v3684 = vadd.f32 %v3683, 1.0
  %v3685 = vrcp.pop %v3684
  %v3686 = vmul.f32 1.0, %v3685
  %v3687 = vmul.f32 %v3686, %v3676
  %v3688 = vadd.f32 %v3587, %v3687
  %v3689 = vtanh.pop %v3688
  %v3690 = vsub.f32 1.0, %v3686
  %3692 = vrot.lane.b32.xlu0 %v3689, 64
  %v3693 = vpop.permute.xlu0 %3692
  %v3695 = vmul.f32 %v3690, %v3693
  %v3696 = vmul.f32 %v3686, 0.0
  %v3697 = vadd.f32 %v3695, %v3696
  %3699 = vrot.lane.b32.xlu0 %v3585, 64
  %v3700 = vpop.permute.xlu0 %3699
  %3702 = vst.msk [vmem:[#allocation4] sm:$0xff] %vm994, %v3700
  %3704 = vrot.lane.b32.xlu0 %v3697, 64
  %v3705 = vpop.permute.xlu0 %3704
  %3707 = vst.msk [vmem:[#allocation5 + $0x38] sm:$0xff] %vm994, %v3705
  %v3708 = vld [vmem:[#allocation2 + $0x10] sm:$0xff]
  %v3709 = vld [vmem:[#allocation2 + $0x18] sm:$0xff]
  %v3710 = vpack.c.bf16 %v3585, %v3585
  %3712 = vrot.lane.b32.xlu0 %v3710, 64
  %v3713 = vpop.permute.xlu0 %3712
  %v3715 = vsel %vm994, %v3713, 0
  %3717 = vmatprep.subr.bf16.mxu0 %v3512
  %3718 = vmatpush1.bf16.msra.mxu0 %v3511
  %3719 = vmatprep.subr.bf16.mxu0 %v3514
  %3720 = vmatpush1.bf16.msra.mxu0 %v3513
  %3721 = vmatprep.subr.bf16.mxu0 %v3516
  %3722 = vmatpush1.bf16.msra.mxu0 %v3515
  %3723 = vmatprep.subr.bf16.mxu0 %v3518
  %3724 = vmatpush1.bf16.msra.mxu0 %v3517
  %3725 = vmatprep.subr.bf16.mxu0 0
  %3726 = vmatpush1.bf16.msra.mxu0 0
  %3727 = vmatprep.subr.bf16.mxu0 0
  %3728 = vmatpush1.bf16.msra.mxu0 0
  %3729 = vmatprep.subr.bf16.mxu0 0
  %3730 = vmatpush1.bf16.msra.mxu0 0
  %3731 = vmatprep.subr.bf16.mxu0 0
  %3732 = vmatpush1.bf16.msra.mxu0 0
  %3733 = vmatprep.subr.bf16.mxu0 0
  %3734 = vmatpush1.bf16.msra.mxu0 0
  %3735 = vmatprep.subr.bf16.mxu0 0
  %3736 = vmatpush1.bf16.msra.mxu0 0
  %3737 = vmatprep.subr.bf16.mxu0 0
  %3738 = vmatpush1.bf16.msra.mxu0 0
  %3739 = vmatprep.subr.bf16.mxu0 0
  %3740 = vmatpush1.bf16.msra.mxu0 0
  %3741 = vmatprep.subr.bf16.mxu0 0
  %3742 = vmatpush1.bf16.msra.mxu0 0
  %3743 = vmatprep.subr.bf16.mxu0 0
  %3744 = vmatpush1.bf16.msra.mxu0 0
  %3745 = vmatprep.subr.bf16.mxu0 0
  %3746 = vmatpush1.bf16.msra.mxu0 0
  %3747 = vmatprep.subr.bf16.mxu0 0
  %3748 = vmatpush1.bf16.msra.mxu0 0
  %3749 = vmatprep.mubr.bf16.mxu0 0
  %3750 = vmatmul.mubr.bf16.gmra.mrb[0].mxu0 %v3715
  %v3751 = vpop.f32.mrb[0].mxu0
  %v3752 = vadd.f32 %v3480, %v3751
  %v3753 = vpop.f32.mrb[0].mxu0
  %v3754 = vadd.f32 %v3484, %v3753
  %v3755 = vpop.f32.mrb[0].mxu0
  %v3756 = vpop.f32.mrb[0].mxu0
  %3757 = vdwg.mxu0
  %v3758 = vadd.f32 %v3708, %v3752
  %v3759 = vxor.u32 %v3758, 2147483648
  %v3760 = vmul.f32 %v3759, 1.442695
  %v3761 = vpow.pop %v3760
  %v3762 = vadd.f32 %v3761, 1.0
  %v3763 = vrcp.pop %v3762
  %v3764 = vmul.f32 1.0, %v3763
  %v3765 = vmul.f32 %v3764, %v3754
  %v3766 = vadd.f32 %v3709, %v3765
  %v3767 = vtanh.pop %v3766
  %v3768 = vsub.f32 1.0, %v3764
  %3770 = vrot.lane.b32.xlu0 %v3767, 64
  %v3771 = vpop.permute.xlu0 %3770
  %v3773 = vmul.f32 %v3768, %v3771
  %v3774 = vmul.f32 %v3764, %v3585
  %v3775 = vadd.f32 %v3773, %v3774
  %v3776 = vld [vmem:[#allocation3 + $0x60] sm:$0xff]
  %v3777 = vld [vmem:[#allocation3 + $0x68] sm:$0xff]
  %v3778 = vpack.c.bf16 %v3697, %v3697
  %3780 = vrot.lane.b32.xlu0 %v3778, 64
  %v3781 = vpop.permute.xlu0 %3780
  %v3783 = vsel %vm994, %v3781, 0
  %3785 = vmatprep.subr.bf16.mxu0 %v3624
  %3786 = vmatpush1.bf16.msra.mxu0 %v3623
  %3787 = vmatprep.subr.bf16.mxu0 %v3626
  %3788 = vmatpush1.bf16.msra.mxu0 %v3625
  %3789 = vmatprep.subr.bf16.mxu0 %v3628
  %3790 = vmatpush1.bf16.msra.mxu0 %v3627
  %3791 = vmatprep.subr.bf16.mxu0 %v3630
  %3792 = vmatpush1.bf16.msra.mxu0 %v3629
  %3793 = vmatprep.subr.bf16.mxu0 0
  %3794 = vmatpush1.bf16.msra.mxu0 0
  %3795 = vmatprep.subr.bf16.mxu0 0
  %3796 = vmatpush1.bf16.msra.mxu0 0
  %3797 = vmatprep.subr.bf16.mxu0 0
  %3798 = vmatpush1.bf16.msra.mxu0 0
  %3799 = vmatprep.subr.bf16.mxu0 0
  %3800 = vmatpush1.bf16.msra.mxu0 0
  %3801 = vmatprep.subr.bf16.mxu0 0
  %3802 = vmatpush1.bf16.msra.mxu0 0
  %3803 = vmatprep.subr.bf16.mxu0 0
  %3804 = vmatpush1.bf16.msra.mxu0 0
  %3805 = vmatprep.subr.bf16.mxu0 0
  %3806 = vmatpush1.bf16.msra.mxu0 0
  %3807 = vmatprep.subr.bf16.mxu0 0
  %3808 = vmatpush1.bf16.msra.mxu0 0
  %3809 = vmatprep.subr.bf16.mxu0 0
  %3810 = vmatpush1.bf16.msra.mxu0 0
  %3811 = vmatprep.subr.bf16.mxu0 0
  %3812 = vmatpush1.bf16.msra.mxu0 0
  %3813 = vmatprep.subr.bf16.mxu0 0
  %3814 = vmatpush1.bf16.msra.mxu0 0
  %3815 = vmatprep.subr.bf16.mxu0 0
  %3816 = vmatpush1.bf16.msra.mxu0 0
  %3817 = vmatprep.mubr.bf16.mxu0 0
  %3818 = vmatmul.mubr.bf16.gmra.mrb[0].mxu0 %v3783
  %v3819 = vpop.f32.mrb[0].mxu0
  %v3820 = vadd.f32 %v3592, %v3819
  %v3821 = vpop.f32.mrb[0].mxu0
  %v3822 = vadd.f32 %v3596, %v3821
  %v3823 = vpop.f32.mrb[0].mxu0
  %v3824 = vpop.f32.mrb[0].mxu0
  %3825 = vdwg.mxu0
  %v3826 = vadd.f32 %v3776, %v3820
  %v3827 = vxor.u32 %v3826, 2147483648
  %v3828 = vmul.f32 %v3827, 1.442695
  %v3829 = vpow.pop %v3828
  %v3830 = vadd.f32 %v3829, 1.0
  %v3831 = vrcp.pop %v3830
  %v3832 = vmul.f32 1.0, %v3831
  %v3833 = vmul.f32 %v3832, %v3822
  %v3834 = vadd.f32 %v3777, %v3833
  %v3835 = vtanh.pop %v3834
  %v3836 = vsub.f32 1.0, %v3832
  %3838 = vrot.lane.b32.xlu0 %v3835, 64
  %v3839 = vpop.permute.xlu0 %3838
  %v3841 = vmul.f32 %v3836, %v3839
  %v3842 = vmul.f32 %v3832, %v3697
  %v3843 = vadd.f32 %v3841, %v3842
  %3845 = vrot.lane.b32.xlu0 %v3775, 64
  %v3846 = vpop.permute.xlu0 %3845
  %3848 = vst.msk [vmem:[#allocation4 + $0x8] sm:$0xff] %vm994, %v3846
  %3850 = vrot.lane.b32.xlu0 %v3843, 64
  %v3851 = vpop.permute.xlu0 %3850
  %3853 = vst.msk [vmem:[#allocation5 + $0x30] sm:$0xff] %vm994, %v3851
  %v3854 = vld [vmem:[#allocation2 + $0x20] sm:$0xff]
  %v3855 = vld [vmem:[#allocation2 + $0x28] sm:$0xff]
  %v3856 = vpack.c.bf16 %v3775, %v3775
  %3858 = vrot.lane.b32.xlu0 %v3856, 64
  %v3859 = vpop.permute.xlu0 %3858
  %v3861 = vsel %vm994, %v3859, 0
  %3863 = vmatprep.subr.bf16.mxu0 %v3512
  %3864 = vmatpush1.bf16.msra.mxu0 %v3511
  %3865 = vmatprep.subr.bf16.mxu0 %v3514
  %3866 = vmatpush1.bf16.msra.mxu0 %v3513
  %3867 = vmatprep.subr.bf16.mxu0 %v3516
  %3868 = vmatpush1.bf16.msra.mxu0 %v3515
  %3869 = vmatprep.subr.bf16.mxu0 %v3518
  %3870 = vmatpush1.bf16.msra.mxu0 %v3517
  %3871 = vmatprep.subr.bf16.mxu0 0
  %3872 = vmatpush1.bf16.msra.mxu0 0
  %3873 = vmatprep.subr.bf16.mxu0 0
  %3874 = vmatpush1.bf16.msra.mxu0 0
  %3875 = vmatprep.subr.bf16.mxu0 0
  %3876 = vmatpush1.bf16.msra.mxu0 0
  %3877 = vmatprep.subr.bf16.mxu0 0
  %3878 = vmatpush1.bf16.msra.mxu0 0
  %3879 = vmatprep.subr.bf16.mxu0 0
  %3880 = vmatpush1.bf16.msra.mxu0 0
  %3881 = vmatprep.subr.bf16.mxu0 0
  %3882 = vmatpush1.bf16.msra.mxu0 0
  %3883 = vmatprep.subr.bf16.mxu0 0
  %3884 = vmatpush1.bf16.msra.mxu0 0
  %3885 = vmatprep.subr.bf16.mxu0 0
  %3886 = vmatpush1.bf16.msra.mxu0 0
  %3887 = vmatprep.subr.bf16.mxu0 0
  %3888 = vmatpush1.bf16.msra.mxu0 0
  %3889 = vmatprep.subr.bf16.mxu0 0
  %3890 = vmatpush1.bf16.msra.mxu0 0
  %3891 = vmatprep.subr.bf16.mxu0 0
  %3892 = vmatpush1.bf16.msra.mxu0 0
  %3893 = vmatprep.subr.bf16.mxu0 0
  %3894 = vmatpush1.bf16.msra.mxu0 0
  %3895 = vmatprep.mubr.bf16.mxu0 0
  %3896 = vmatmul.mubr.bf16.gmra.mrb[0].mxu0 %v3861
  %v3897 = vpop.f32.mrb[0].mxu0
  %v3898 = vadd.f32 %v3480, %v3897
  %v3899 = vpop.f32.mrb[0].mxu0
  %v3900 = vadd.f32 %v3484, %v3899
  %v3901 = vpop.f32.mrb[0].mxu0
  %v3902 = vpop.f32.mrb[0].mxu0
  %3903 = vdwg.mxu0
  %v3904 = vadd.f32 %v3854, %v3898
  %v3905 = vxor.u32 %v3904, 2147483648
  %v3906 = vmul.f32 %v3905, 1.442695
  %v3907 = vpow.pop %v3906
  %v3908 = vadd.f32 %v3907, 1.0
  %v3909 = vrcp.pop %v3908
  %v3910 = vmul.f32 1.0, %v3909
  %v3911 = vmul.f32 %v3910, %v3900
  %v3912 = vadd.f32 %v3855, %v3911
  %v3913 = vtanh.pop %v3912
  %v3914 = vsub.f32 1.0, %v3910
  %3916 = vrot.lane.b32.xlu0 %v3913, 64
  %v3917 = vpop.permute.xlu0 %3916
  %v3919 = vmul.f32 %v3914, %v3917
  %v3920 = vmul.f32 %v3910, %v3775
  %v3921 = vadd.f32 %v3919, %v3920
  %v3922 = vld [vmem:[#allocation3 + $0x50] sm:$0xff]
  %v3923 = vld [vmem:[#allocation3 + $0x58] sm:$0xff]
  %v3924 = vpack.c.bf16 %v3843, %v3843
  %3926 = vrot.lane.b32.xlu0 %v3924, 64
  %v3927 = vpop.permute.xlu0 %3926
  %v3929 = vsel %vm994, %v3927, 0
  %3931 = vmatprep.subr.bf16.mxu0 %v3624
  %3932 = vmatpush1.bf16.msra.mxu0 %v3623
  %3933 = vmatprep.subr.bf16.mxu0 %v3626
  %3934 = vmatpush1.bf16.msra.mxu0 %v3625
  %3935 = vmatprep.subr.bf16.mxu0 %v3628
  %3936 = vmatpush1.bf16.msra.mxu0 %v3627
  %3937 = vmatprep.subr.bf16.mxu0 %v3630
  %3938 = vmatpush1.bf16.msra.mxu0 %v3629
  %3939 = vmatprep.subr.bf16.mxu0 0
  %3940 = vmatpush1.bf16.msra.mxu0 0
  %3941 = vmatprep.subr.bf16.mxu0 0
  %3942 = vmatpush1.bf16.msra.mxu0 0
  %3943 = vmatprep.subr.bf16.mxu0 0
  %3944 = vmatpush1.bf16.msra.mxu0 0
  %3945 = vmatprep.subr.bf16.mxu0 0
  %3946 = vmatpush1.bf16.msra.mxu0 0
  %3947 = vmatprep.subr.bf16.mxu0 0
  %3948 = vmatpush1.bf16.msra.mxu0 0
  %3949 = vmatprep.subr.bf16.mxu0 0
  %3950 = vmatpush1.bf16.msra.mxu0 0
  %3951 = vmatprep.subr.bf16.mxu0 0
  %3952 = vmatpush1.bf16.msra.mxu0 0
  %3953 = vmatprep.subr.bf16.mxu0 0
  %3954 = vmatpush1.bf16.msra.mxu0 0
  %3955 = vmatprep.subr.bf16.mxu0 0
  %3956 = vmatpush1.bf16.msra.mxu0 0
  %3957 = vmatprep.subr.bf16.mxu0 0
  %3958 = vmatpush1.bf16.msra.mxu0 0
  %3959 = vmatprep.subr.bf16.mxu0 0
  %3960 = vmatpush1.bf16.msra.mxu0 0
  %3961 = vmatprep.subr.bf16.mxu0 0
  %3962 = vmatpush1.bf16.msra.mxu0 0
  %3963 = vmatprep.mubr.bf16.mxu0 0
  %3964 = vmatmul.mubr.bf16.gmra.mrb[0].mxu0 %v3929
  %v3965 = vpop.f32.mrb[0].mxu0
  %v3966 = vadd.f32 %v3592, %v3965
  %v3967 = vpop.f32.mrb[0].mxu0
  %v3968 = vadd.f32 %v3596, %v3967
  %v3969 = vpop.f32.mrb[0].mxu0
  %v3970 = vpop.f32.mrb[0].mxu0
  %3971 = vdwg.mxu0
  %v3972 = vadd.f32 %v3922, %v3966
  %v3973 = vxor.u32 %v3972, 2147483648
  %v3974 = vmul.f32 %v3973, 1.442695
  %v3975 = vpow.pop %v3974
  %v3976 = vadd.f32 %v3975, 1.0
  %v3977 = vrcp.pop %v3976
  %v3978 = vmul.f32 1.0, %v3977
  %v3979 = vmul.f32 %v3978, %v3968
  %v3980 = vadd.f32 %v3923, %v3979
  %v3981 = vtanh.pop %v3980
  %v3982 = vsub.f32 1.0, %v3978
  %3984 = vrot.lane.b32.xlu0 %v3981, 64
  %v3985 = vpop.permute.xlu0 %3984
  %v3987 = vmul.f32 %v3982, %v3985
  %v3988 = vmul.f32 %v3978, %v3843
  %v3989 = vadd.f32 %v3987, %v3988
  %3991 = vrot.lane.b32.xlu0 %v3921, 64
  %v3992 = vpop.permute.xlu0 %3991
  %3994 = vst.msk [vmem:[#allocation4 + $0x10] sm:$0xff] %vm994, %v3992
  %3996 = vrot.lane.b32.xlu0 %v3989, 64
  %v3997 = vpop.permute.xlu0 %3996
  %3999 = vst.msk [vmem:[#allocation5 + $0x28] sm:$0xff] %vm994, %v3997
  %v4000 = vld [vmem:[#allocation2 + $0x30] sm:$0xff]
  %v4001 = vld [vmem:[#allocation2 + $0x38] sm:$0xff]
  %v4002 = vpack.c.bf16 %v3921, %v3921
  %4004 = vrot.lane.b32.xlu0 %v4002, 64
  %v4005 = vpop.permute.xlu0 %4004
  %v4007 = vsel %vm994, %v4005, 0
  %4009 = vmatprep.subr.bf16.mxu0 %v3512
  %4010 = vmatpush1.bf16.msra.mxu0 %v3511
  %4011 = vmatprep.subr.bf16.mxu0 %v3514
  %4012 = vmatpush1.bf16.msra.mxu0 %v3513
  %4013 = vmatprep.subr.bf16.mxu0 %v3516
  %4014 = vmatpush1.bf16.msra.mxu0 %v3515
  %4015 = vmatprep.subr.bf16.mxu0 %v3518
  %4016 = vmatpush1.bf16.msra.mxu0 %v3517
  %4017 = vmatprep.subr.bf16.mxu0 0
  %4018 = vmatpush1.bf16.msra.mxu0 0
  %4019 = vmatprep.subr.bf16.mxu0 0
  %4020 = vmatpush1.bf16.msra.mxu0 0
  %4021 = vmatprep.subr.bf16.mxu0 0
  %4022 = vmatpush1.bf16.msra.mxu0 0
  %4023 = vmatprep.subr.bf16.mxu0 0
  %4024 = vmatpush1.bf16.msra.mxu0 0
  %4025 = vmatprep.subr.bf16.mxu0 0
  %4026 = vmatpush1.bf16.msra.mxu0 0
  %4027 = vmatprep.subr.bf16.mxu0 0
  %4028 = vmatpush1.bf16.msra.mxu0 0
  %4029 = vmatprep.subr.bf16.mxu0 0
  %4030 = vmatpush1.bf16.msra.mxu0 0
  %4031 = vmatprep.subr.bf16.mxu0 0
  %4032 = vmatpush1.bf16.msra.mxu0 0
  %4033 = vmatprep.subr.bf16.mxu0 0
  %4034 = vmatpush1.bf16.msra.mxu0 0
  %4035 = vmatprep.subr.bf16.mxu0 0
  %4036 = vmatpush1.bf16.msra.mxu0 0
  %4037 = vmatprep.subr.bf16.mxu0 0
  %4038 = vmatpush1.bf16.msra.mxu0 0
  %4039 = vmatprep.subr.bf16.mxu0 0
  %4040 = vmatpush1.bf16.msra.mxu0 0
  %4041 = vmatprep.mubr.bf16.mxu0 0
  %4042 = vmatmul.mubr.bf16.gmra.mrb[0].mxu0 %v4007
  %v4043 = vpop.f32.mrb[0].mxu0
  %v4044 = vadd.f32 %v3480, %v4043
  %v4045 = vpop.f32.mrb[0].mxu0
  %v4046 = vadd.f32 %v3484, %v4045
  %v4047 = vpop.f32.mrb[0].mxu0
  %v4048 = vpop.f32.mrb[0].mxu0
  %4049 = vdwg.mxu0
  %v4050 = vadd.f32 %v4000, %v4044
  %v4051 = vxor.u32 %v4050, 2147483648
  %v4052 = vmul.f32 %v4051, 1.442695
  %v4053 = vpow.pop %v4052
  %v4054 = vadd.f32 %v4053, 1.0
  %v4055 = vrcp.pop %v4054
  %v4056 = vmul.f32 1.0, %v4055
  %v4057 = vmul.f32 %v4056, %v4046
  %v4058 = vadd.f32 %v4001, %v4057
  %v4059 = vtanh.pop %v4058
  %v4060 = vsub.f32 1.0, %v4056
  %4062 = vrot.lane.b32.xlu0 %v4059, 64
  %v4063 = vpop.permute.xlu0 %4062
  %v4065 = vmul.f32 %v4060, %v4063
  %v4066 = vmul.f32 %v4056, %v3921
  %v4067 = vadd.f32 %v4065, %v4066
  %v4068 = vld [vmem:[#allocation3 + $0x40] sm:$0xff]
  %v4069 = vld [vmem:[#allocation3 + $0x48] sm:$0xff]
  %v4070 = vpack.c.bf16 %v3989, %v3989
  %4072 = vrot.lane.b32.xlu0 %v4070, 64
  %v4073 = vpop.permute.xlu0 %4072
  %v4075 = vsel %vm994, %v4073, 0
  %4077 = vmatprep.subr.bf16.mxu0 %v3624
  %4078 = vmatpush1.bf16.msra.mxu0 %v3623
  %4079 = vmatprep.subr.bf16.mxu0 %v3626
  %4080 = vmatpush1.bf16.msra.mxu0 %v3625
  %4081 = vmatprep.subr.bf16.mxu0 %v3628
  %4082 = vmatpush1.bf16.msra.mxu0 %v3627
  %4083 = vmatprep.subr.bf16.mxu0 %v3630
  %4084 = vmatpush1.bf16.msra.mxu0 %v3629
  %4085 = vmatprep.subr.bf16.mxu0 0
  %4086 = vmatpush1.bf16.msra.mxu0 0
  %4087 = vmatprep.subr.bf16.mxu0 0
  %4088 = vmatpush1.bf16.msra.mxu0 0
  %4089 = vmatprep.subr.bf16.mxu0 0
  %4090 = vmatpush1.bf16.msra.mxu0 0
  %4091 = vmatprep.subr.bf16.mxu0 0
  %4092 = vmatpush1.bf16.msra.mxu0 0
  %4093 = vmatprep.subr.bf16.mxu0 0
  %4094 = vmatpush1.bf16.msra.mxu0 0
  %4095 = vmatprep.subr.bf16.mxu0 0
  %4096 = vmatpush1.bf16.msra.mxu0 0
  %4097 = vmatprep.subr.bf16.mxu0 0
  %4098 = vmatpush1.bf16.msra.mxu0 0
  %4099 = vmatprep.subr.bf16.mxu0 0
  %4100 = vmatpush1.bf16.msra.mxu0 0
  %4101 = vmatprep.subr.bf16.mxu0 0
  %4102 = vmatpush1.bf16.msra.mxu0 0
  %4103 = vmatprep.subr.bf16.mxu0 0
  %4104 = vmatpush1.bf16.msra.mxu0 0
  %4105 = vmatprep.subr.bf16.mxu0 0
  %4106 = vmatpush1.bf16.msra.mxu0 0
  %4107 = vmatprep.subr.bf16.mxu0 0
  %4108 = vmatpush1.bf16.msra.mxu0 0
  %4109 = vmatprep.mubr.bf16.mxu0 0
  %4110 = vmatmul.mubr.bf16.gmra.mrb[0].mxu0 %v4075
  %v4111 = vpop.f32.mrb[0].mxu0
  %v4112 = vadd.f32 %v3592, %v4111
  %v4113 = vpop.f32.mrb[0].mxu0
  %v4114 = vadd.f32 %v3596, %v4113
  %v4115 = vpop.f32.mrb[0].mxu0
  %v4116 = vpop.f32.mrb[0].mxu0
  %4117 = vdwg.mxu0
  %v4118 = vadd.f32 %v4068, %v4112
  %v4119 = vxor.u32 %v4118, 2147483648
  %v4120 = vmul.f32 %v4119, 1.442695
  %v4121 = vpow.pop %v4120
  %v4122 = vadd.f32 %v4121, 1.0
  %v4123 = vrcp.pop %v4122
  %v4124 = vmul.f32 1.0, %v4123
  %v4125 = vmul.f32 %v4124, %v4114
  %v4126 = vadd.f32 %v4069, %v4125
  %v4127 = vtanh.pop %v4126
  %v4128 = vsub.f32 1.0, %v4124
  %4130 = vrot.lane.b32.xlu0 %v4127, 64
  %v4131 = vpop.permute.xlu0 %4130
  %v4133 = vmul.f32 %v4128, %v4131
  %v4134 = vmul.f32 %v4124, %v3989
  %v4135 = vadd.f32 %v4133, %v4134
  %4137 = vrot.lane.b32.xlu0 %v4067, 64
  %v4138 = vpop.permute.xlu0 %4137
  %4140 = vst.msk [vmem:[#allocation4 + $0x18] sm:$0xff] %vm994, %v4138
  %4142 = vrot.lane.b32.xlu0 %v4135, 64
  %v4143 = vpop.permute.xlu0 %4142
  %4145 = vst.msk [vmem:[#allocation5 + $0x20] sm:$0xff] %vm994, %v4143
  %v4146 = vld [vmem:[#allocation2 + $0x40] sm:$0xff]
  %v4147 = vld [vmem:[#allocation2 + $0x48] sm:$0xff]
  %v4148 = vpack.c.bf16 %v4067, %v4067
  %4150 = vrot.lane.b32.xlu0 %v4148, 64
  %v4151 = vpop.permute.xlu0 %4150
  %v4153 = vsel %vm994, %v4151, 0
  %4155 = vmatprep.subr.bf16.mxu0 %v3512
  %4156 = vmatpush1.bf16.msra.mxu0 %v3511
  %4157 = vmatprep.subr.bf16.mxu0 %v3514
  %4158 = vmatpush1.bf16.msra.mxu0 %v3513
  %4159 = vmatprep.subr.bf16.mxu0 %v3516
  %4160 = vmatpush1.bf16.msra.mxu0 %v3515
  %4161 = vmatprep.subr.bf16.mxu0 %v3518
  %4162 = vmatpush1.bf16.msra.mxu0 %v3517
  %4163 = vmatprep.subr.bf16.mxu0 0
  %4164 = vmatpush1.bf16.msra.mxu0 0
  %4165 = vmatprep.subr.bf16.mxu0 0
  %4166 = vmatpush1.bf16.msra.mxu0 0
  %4167 = vmatprep.subr.bf16.mxu0 0
  %4168 = vmatpush1.bf16.msra.mxu0 0
  %4169 = vmatprep.subr.bf16.mxu0 0
  %4170 = vmatpush1.bf16.msra.mxu0 0
  %4171 = vmatprep.subr.bf16.mxu0 0
  %4172 = vmatpush1.bf16.msra.mxu0 0
  %4173 = vmatprep.subr.bf16.mxu0 0
  %4174 = vmatpush1.bf16.msra.mxu0 0
  %4175 = vmatprep.subr.bf16.mxu0 0
  %4176 = vmatpush1.bf16.msra.mxu0 0
  %4177 = vmatprep.subr.bf16.mxu0 0
  %4178 = vmatpush1.bf16.msra.mxu0 0
  %4179 = vmatprep.subr.bf16.mxu0 0
  %4180 = vmatpush1.bf16.msra.mxu0 0
  %4181 = vmatprep.subr.bf16.mxu0 0
  %4182 = vmatpush1.bf16.msra.mxu0 0
  %4183 = vmatprep.subr.bf16.mxu0 0
  %4184 = vmatpush1.bf16.msra.mxu0 0
  %4185 = vmatprep.subr.bf16.mxu0 0
  %4186 = vmatpush1.bf16.msra.mxu0 0
  %4187 = vmatprep.mubr.bf16.mxu0 0
  %4188 = vmatmul.mubr.bf16.gmra.mrb[0].mxu0 %v4153
  %v4189 = vpop.f32.mrb[0].mxu0
  %v4190 = vadd.f32 %v3480, %v4189
  %v4191 = vpop.f32.mrb[0].mxu0
  %v4192 = vadd.f32 %v3484, %v4191
  %v4193 = vpop.f32.mrb[0].mxu0
  %v4194 = vpop.f32.mrb[0].mxu0
  %4195 = vdwg.mxu0
  %v4196 = vadd.f32 %v4146, %v4190
  %v4197 = vxor.u32 %v4196, 2147483648
  %v4198 = vmul.f32 %v4197, 1.442695
  %v4199 = vpow.pop %v4198
  %v4200 = vadd.f32 %v4199, 1.0
  %v4201 = vrcp.pop %v4200
  %v4202 = vmul.f32 1.0, %v4201
  %v4203 = vmul.f32 %v4202, %v4192
  %v4204 = vadd.f32 %v4147, %v4203
  %v4205 = vtanh.pop %v4204
  %v4206 = vsub.f32 1.0, %v4202
  %4208 = vrot.lane.b32.xlu0 %v4205, 64
  %v4209 = vpop.permute.xlu0 %4208
  %v4211 = vmul.f32 %v4206, %v4209
  %v4212 = vmul.f32 %v4202, %v4067
  %v4213 = vadd.f32 %v4211, %v4212
  %v4214 = vld [vmem:[#allocation3 + $0x30] sm:$0xff]
  %v4215 = vld [vmem:[#allocation3 + $0x38] sm:$0xff]
  %v4216 = vpack.c.bf16 %v4135, %v4135
  %4218 = vrot.lane.b32.xlu0 %v4216, 64
  %v4219 = vpop.permute.xlu0 %4218
  %v4221 = vsel %vm994, %v4219, 0
  %4223 = vmatprep.subr.bf16.mxu0 %v3624
  %4224 = vmatpush1.bf16.msra.mxu0 %v3623
  %4225 = vmatprep.subr.bf16.mxu0 %v3626
  %4226 = vmatpush1.bf16.msra.mxu0 %v3625
  %4227 = vmatprep.subr.bf16.mxu0 %v3628
  %4228 = vmatpush1.bf16.msra.mxu0 %v3627
  %4229 = vmatprep.subr.bf16.mxu0 %v3630
  %4230 = vmatpush1.bf16.msra.mxu0 %v3629
  %4231 = vmatprep.subr.bf16.mxu0 0
  %4232 = vmatpush1.bf16.msra.mxu0 0
  %4233 = vmatprep.subr.bf16.mxu0 0
  %4234 = vmatpush1.bf16.msra.mxu0 0
  %4235 = vmatprep.subr.bf16.mxu0 0
  %4236 = vmatpush1.bf16.msra.mxu0 0
  %4237 = vmatprep.subr.bf16.mxu0 0
  %4238 = vmatpush1.bf16.msra.mxu0 0
  %4239 = vmatprep.subr.bf16.mxu0 0
  %4240 = vmatpush1.bf16.msra.mxu0 0
  %4241 = vmatprep.subr.bf16.mxu0 0
  %4242 = vmatpush1.bf16.msra.mxu0 0
  %4243 = vmatprep.subr.bf16.mxu0 0
  %4244 = vmatpush1.bf16.msra.mxu0 0
  %4245 = vmatprep.subr.bf16.mxu0 0
  %4246 = vmatpush1.bf16.msra.mxu0 0
  %4247 = vmatprep.subr.bf16.mxu0 0
  %4248 = vmatpush1.bf16.msra.mxu0 0
  %4249 = vmatprep.subr.bf16.mxu0 0
  %4250 = vmatpush1.bf16.msra.mxu0 0
  %4251 = vmatprep.subr.bf16.mxu0 0
  %4252 = vmatpush1.bf16.msra.mxu0 0
  %4253 = vmatprep.subr.bf16.mxu0 0
  %4254 = vmatpush1.bf16.msra.mxu0 0
  %4255 = vmatprep.mubr.bf16.mxu0 0
  %4256 = vmatmul.mubr.bf16.gmra.mrb[0].mxu0 %v4221
  %v4257 = vpop.f32.mrb[0].mxu0
  %v4258 = vadd.f32 %v3592, %v4257
  %v4259 = vpop.f32.mrb[0].mxu0
  %v4260 = vadd.f32 %v3596, %v4259
  %v4261 = vpop.f32.mrb[0].mxu0
  %v4262 = vpop.f32.mrb[0].mxu0
  %4263 = vdwg.mxu0
  %v4264 = vadd.f32 %v4214, %v4258
  %v4265 = vxor.u32 %v4264, 2147483648
  %v4266 = vmul.f32 %v4265, 1.442695
  %v4267 = vpow.pop %v4266
  %v4268 = vadd.f32 %v4267, 1.0
  %v4269 = vrcp.pop %v4268
  %v4270 = vmul.f32 1.0, %v4269
  %v4271 = vmul.f32 %v4270, %v4260
  %v4272 = vadd.f32 %v4215, %v4271
  %v4273 = vtanh.pop %v4272
  %v4274 = vsub.f32 1.0, %v4270
  %4276 = vrot.lane.b32.xlu0 %v4273, 64
  %v4277 = vpop.permute.xlu0 %4276
  %v4279 = vmul.f32 %v4274, %v4277
  %v4280 = vmul.f32 %v4270, %v4135
  %v4281 = vadd.f32 %v4279, %v4280
  %4283 = vrot.lane.b32.xlu0 %v4213, 64
  %v4284 = vpop.permute.xlu0 %4283
  %4286 = vst.msk [vmem:[#allocation4 + $0x20] sm:$0xff] %vm994, %v4284
  %4288 = vrot.lane.b32.xlu0 %v4281, 64
  %v4289 = vpop.permute.xlu0 %4288
  %4291 = vst.msk [vmem:[#allocation5 + $0x18] sm:$0xff] %vm994, %v4289
  %v4292 = vld [vmem:[#allocation2 + $0x50] sm:$0xff]
  %v4293 = vld [vmem:[#allocation2 + $0x58] sm:$0xff]
  %v4294 = vpack.c.bf16 %v4213, %v4213
  %4296 = vrot.lane.b32.xlu0 %v4294, 64
  %v4297 = vpop.permute.xlu0 %4296
  %v4299 = vsel %vm994, %v4297, 0
  %4301 = vmatprep.subr.bf16.mxu0 %v3512
  %4302 = vmatpush1.bf16.msra.mxu0 %v3511
  %4303 = vmatprep.subr.bf16.mxu0 %v3514
  %4304 = vmatpush1.bf16.msra.mxu0 %v3513
  %4305 = vmatprep.subr.bf16.mxu0 %v3516
  %4306 = vmatpush1.bf16.msra.mxu0 %v3515
  %4307 = vmatprep.subr.bf16.mxu0 %v3518
  %4308 = vmatpush1.bf16.msra.mxu0 %v3517
  %4309 = vmatprep.subr.bf16.mxu0 0
  %4310 = vmatpush1.bf16.msra.mxu0 0
  %4311 = vmatprep.subr.bf16.mxu0 0
  %4312 = vmatpush1.bf16.msra.mxu0 0
  %4313 = vmatprep.subr.bf16.mxu0 0
  %4314 = vmatpush1.bf16.msra.mxu0 0
  %4315 = vmatprep.subr.bf16.mxu0 0
  %4316 = vmatpush1.bf16.msra.mxu0 0
  %4317 = vmatprep.subr.bf16.mxu0 0
  %4318 = vmatpush1.bf16.msra.mxu0 0
  %4319 = vmatprep.subr.bf16.mxu0 0
  %4320 = vmatpush1.bf16.msra.mxu0 0
  %4321 = vmatprep.subr.bf16.mxu0 0
  %4322 = vmatpush1.bf16.msra.mxu0 0
  %4323 = vmatprep.subr.bf16.mxu0 0
  %4324 = vmatpush1.bf16.msra.mxu0 0
  %4325 = vmatprep.subr.bf16.mxu0 0
  %4326 = vmatpush1.bf16.msra.mxu0 0
  %4327 = vmatprep.subr.bf16.mxu0 0
  %4328 = vmatpush1.bf16.msra.mxu0 0
  %4329 = vmatprep.subr.bf16.mxu0 0
  %4330 = vmatpush1.bf16.msra.mxu0 0
  %4331 = vmatprep.subr.bf16.mxu0 0
  %4332 = vmatpush1.bf16.msra.mxu0 0
  %4333 = vmatprep.mubr.bf16.mxu0 0
  %4334 = vmatmul.mubr.bf16.gmra.mrb[0].mxu0 %v4299
  %v4335 = vpop.f32.mrb[0].mxu0
  %v4336 = vadd.f32 %v3480, %v4335
  %v4337 = vpop.f32.mrb[0].mxu0
  %v4338 = vadd.f32 %v3484, %v4337
  %v4339 = vpop.f32.mrb[0].mxu0
  %v4340 = vpop.f32.mrb[0].mxu0
  %4341 = vdwg.mxu0
  %v4342 = vadd.f32 %v4292, %v4336
  %v4343 = vxor.u32 %v4342, 2147483648
  %v4344 = vmul.f32 %v4343, 1.442695
  %v4345 = vpow.pop %v4344
  %v4346 = vadd.f32 %v4345, 1.0
  %v4347 = vrcp.pop %v4346
  %v4348 = vmul.f32 1.0, %v4347
  %v4349 = vmul.f32 %v4348, %v4338
  %v4350 = vadd.f32 %v4293, %v4349
  %v4351 = vtanh.pop %v4350
  %v4352 = vsub.f32 1.0, %v4348
  %4354 = vrot.lane.b32.xlu0 %v4351, 64
  %v4355 = vpop.permute.xlu0 %4354
  %v4357 = vmul.f32 %v4352, %v4355
  %v4358 = vmul.f32 %v4348, %v4213
  %v4359 = vadd.f32 %v4357, %v4358
  %v4360 = vld [vmem:[#allocation3 + $0x20] sm:$0xff]
  %v4361 = vld [vmem:[#allocation3 + $0x28] sm:$0xff]
  %v4362 = vpack.c.bf16 %v4281, %v4281
  %4364 = vrot.lane.b32.xlu0 %v4362, 64
  %v4365 = vpop.permute.xlu0 %4364
  %v4367 = vsel %vm994, %v4365, 0
  %4369 = vmatprep.subr.bf16.mxu0 %v3624
  %4370 = vmatpush1.bf16.msra.mxu0 %v3623
  %4371 = vmatprep.subr.bf16.mxu0 %v3626
  %4372 = vmatpush1.bf16.msra.mxu0 %v3625
  %4373 = vmatprep.subr.bf16.mxu0 %v3628
  %4374 = vmatpush1.bf16.msra.mxu0 %v3627
  %4375 = vmatprep.subr.bf16.mxu0 %v3630
  %4376 = vmatpush1.bf16.msra.mxu0 %v3629
  %4377 = vmatprep.subr.bf16.mxu0 0
  %4378 = vmatpush1.bf16.msra.mxu0 0
  %4379 = vmatprep.subr.bf16.mxu0 0
  %4380 = vmatpush1.bf16.msra.mxu0 0
  %4381 = vmatprep.subr.bf16.mxu0 0
  %4382 = vmatpush1.bf16.msra.mxu0 0
  %4383 = vmatprep.subr.bf16.mxu0 0
  %4384 = vmatpush1.bf16.msra.mxu0 0
  %4385 = vmatprep.subr.bf16.mxu0 0
  %4386 = vmatpush1.bf16.msra.mxu0 0
  %4387 = vmatprep.subr.bf16.mxu0 0
  %4388 = vmatpush1.bf16.msra.mxu0 0
  %4389 = vmatprep.subr.bf16.mxu0 0
  %4390 = vmatpush1.bf16.msra.mxu0 0
  %4391 = vmatprep.subr.bf16.mxu0 0
  %4392 = vmatpush1.bf16.msra.mxu0 0
  %4393 = vmatprep.subr.bf16.mxu0 0
  %4394 = vmatpush1.bf16.msra.mxu0 0
  %4395 = vmatprep.subr.bf16.mxu0 0
  %4396 = vmatpush1.bf16.msra.mxu0 0
  %4397 = vmatprep.subr.bf16.mxu0 0
  %4398 = vmatpush1.bf16.msra.mxu0 0
  %4399 = vmatprep.subr.bf16.mxu0 0
  %4400 = vmatpush1.bf16.msra.mxu0 0
  %4401 = vmatprep.mubr.bf16.mxu0 0
  %4402 = vmatmul.mubr.bf16.gmra.mrb[0].mxu0 %v4367
  %v4403 = vpop.f32.mrb[0].mxu0
  %v4404 = vadd.f32 %v3592, %v4403
  %v4405 = vpop.f32.mrb[0].mxu0
  %v4406 = vadd.f32 %v3596, %v4405
  %v4407 = vpop.f32.mrb[0].mxu0
  %v4408 = vpop.f32.mrb[0].mxu0
  %4409 = vdwg.mxu0
  %v4410 = vadd.f32 %v4360, %v4404
  %v4411 = vxor.u32 %v4410, 2147483648
  %v4412 = vmul.f32 %v4411, 1.442695
  %v4413 = vpow.pop %v4412
  %v4414 = vadd.f32 %v4413, 1.0
  %v4415 = vrcp.pop %v4414
  %v4416 = vmul.f32 1.0, %v4415
  %v4417 = vmul.f32 %v4416, %v4406
  %v4418 = vadd.f32 %v4361, %v4417
  %v4419 = vtanh.pop %v4418
  %v4420 = vsub.f32 1.0, %v4416
  %4422 = vrot.lane.b32.xlu0 %v4419, 64
  %v4423 = vpop.permute.xlu0 %4422
  %v4425 = vmul.f32 %v4420, %v4423
  %v4426 = vmul.f32 %v4416, %v4281
  %v4427 = vadd.f32 %v4425, %v4426
  %4429 = vrot.lane.b32.xlu0 %v4359, 64
  %v4430 = vpop.permute.xlu0 %4429
  %4432 = vst.msk [vmem:[#allocation4 + $0x28] sm:$0xff] %vm994, %v4430
  %4434 = vrot.lane.b32.xlu0 %v4427, 64
  %v4435 = vpop.permute.xlu0 %4434
  %4437 = vst.msk [vmem:[#allocation5 + $0x10] sm:$0xff] %vm994, %v4435
  %v4438 = vld [vmem:[#allocation2 + $0x60] sm:$0xff]
  %v4439 = vld [vmem:[#allocation2 + $0x68] sm:$0xff]
  %v4440 = vpack.c.bf16 %v4359, %v4359
  %4442 = vrot.lane.b32.xlu0 %v4440, 64
  %v4443 = vpop.permute.xlu0 %4442
  %v4445 = vsel %vm994, %v4443, 0
  %4447 = vmatprep.subr.bf16.mxu0 %v3512
  %4448 = vmatpush1.bf16.msra.mxu0 %v3511
  %4449 = vmatprep.subr.bf16.mxu0 %v3514
  %4450 = vmatpush1.bf16.msra.mxu0 %v3513
  %4451 = vmatprep.subr.bf16.mxu0 %v3516
  %4452 = vmatpush1.bf16.msra.mxu0 %v3515
  %4453 = vmatprep.subr.bf16.mxu0 %v3518
  %4454 = vmatpush1.bf16.msra.mxu0 %v3517
  %4455 = vmatprep.subr.bf16.mxu0 0
  %4456 = vmatpush1.bf16.msra.mxu0 0
  %4457 = vmatprep.subr.bf16.mxu0 0
  %4458 = vmatpush1.bf16.msra.mxu0 0
  %4459 = vmatprep.subr.bf16.mxu0 0
  %4460 = vmatpush1.bf16.msra.mxu0 0
  %4461 = vmatprep.subr.bf16.mxu0 0
  %4462 = vmatpush1.bf16.msra.mxu0 0
  %4463 = vmatprep.subr.bf16.mxu0 0
  %4464 = vmatpush1.bf16.msra.mxu0 0
  %4465 = vmatprep.subr.bf16.mxu0 0
  %4466 = vmatpush1.bf16.msra.mxu0 0
  %4467 = vmatprep.subr.bf16.mxu0 0
  %4468 = vmatpush1.bf16.msra.mxu0 0
  %4469 = vmatprep.subr.bf16.mxu0 0
  %4470 = vmatpush1.bf16.msra.mxu0 0
  %4471 = vmatprep.subr.bf16.mxu0 0
  %4472 = vmatpush1.bf16.msra.mxu0 0
  %4473 = vmatprep.subr.bf16.mxu0 0
  %4474 = vmatpush1.bf16.msra.mxu0 0
  %4475 = vmatprep.subr.bf16.mxu0 0
  %4476 = vmatpush1.bf16.msra.mxu0 0
  %4477 = vmatprep.subr.bf16.mxu0 0
  %4478 = vmatpush1.bf16.msra.mxu0 0
  %4479 = vmatprep.mubr.bf16.mxu0 0
  %4480 = vmatmul.mubr.bf16.gmra.mrb[0].mxu0 %v4445
  %v4481 = vpop.f32.mrb[0].mxu0
  %v4482 = vadd.f32 %v3480, %v4481
  %v4483 = vpop.f32.mrb[0].mxu0
  %v4484 = vadd.f32 %v3484, %v4483
  %v4485 = vpop.f32.mrb[0].mxu0
  %v4486 = vpop.f32.mrb[0].mxu0
  %4487 = vdwg.mxu0
  %v4488 = vadd.f32 %v4438, %v4482
  %v4489 = vxor.u32 %v4488, 2147483648
  %v4490 = vmul.f32 %v4489, 1.442695
  %v4491 = vpow.pop %v4490
  %v4492 = vadd.f32 %v4491, 1.0
  %v4493 = vrcp.pop %v4492
  %v4494 = vmul.f32 1.0, %v4493
  %v4495 = vmul.f32 %v4494, %v4484
  %v4496 = vadd.f32 %v4439, %v4495
  %v4497 = vtanh.pop %v4496
  %v4498 = vsub.f32 1.0, %v4494
  %4500 = vrot.lane.b32.xlu0 %v4497, 64
  %v4501 = vpop.permute.xlu0 %4500
  %v4503 = vmul.f32 %v4498, %v4501
  %v4504 = vmul.f32 %v4494, %v4359
  %v4505 = vadd.f32 %v4503, %v4504
  %v4506 = vld [vmem:[#allocation3 + $0x10] sm:$0xff]
  %v4507 = vld [vmem:[#allocation3 + $0x18] sm:$0xff]
  %v4508 = vpack.c.bf16 %v4427, %v4427
  %4510 = vrot.lane.b32.xlu0 %v4508, 64
  %v4511 = vpop.permute.xlu0 %4510
  %v4513 = vsel %vm994, %v4511, 0
  %4515 = vmatprep.subr.bf16.mxu0 %v3624
  %4516 = vmatpush1.bf16.msra.mxu0 %v3623
  %4517 = vmatprep.subr.bf16.mxu0 %v3626
  %4518 = vmatpush1.bf16.msra.mxu0 %v3625
  %4519 = vmatprep.subr.bf16.mxu0 %v3628
  %4520 = vmatpush1.bf16.msra.mxu0 %v3627
  %4521 = vmatprep.subr.bf16.mxu0 %v3630
  %4522 = vmatpush1.bf16.msra.mxu0 %v3629
  %4523 = vmatprep.subr.bf16.mxu0 0
  %4524 = vmatpush1.bf16.msra.mxu0 0
  %4525 = vmatprep.subr.bf16.mxu0 0
  %4526 = vmatpush1.bf16.msra.mxu0 0
  %4527 = vmatprep.subr.bf16.mxu0 0
  %4528 = vmatpush1.bf16.msra.mxu0 0
  %4529 = vmatprep.subr.bf16.mxu0 0
  %4530 = vmatpush1.bf16.msra.mxu0 0
  %4531 = vmatprep.subr.bf16.mxu0 0
  %4532 = vmatpush1.bf16.msra.mxu0 0
  %4533 = vmatprep.subr.bf16.mxu0 0
  %4534 = vmatpush1.bf16.msra.mxu0 0
  %4535 = vmatprep.subr.bf16.mxu0 0
  %4536 = vmatpush1.bf16.msra.mxu0 0
  %4537 = vmatprep.subr.bf16.mxu0 0
  %4538 = vmatpush1.bf16.msra.mxu0 0
  %4539 = vmatprep.subr.bf16.mxu0 0
  %4540 = vmatpush1.bf16.msra.mxu0 0
  %4541 = vmatprep.subr.bf16.mxu0 0
  %4542 = vmatpush1.bf16.msra.mxu0 0
  %4543 = vmatprep.subr.bf16.mxu0 0
  %4544 = vmatpush1.bf16.msra.mxu0 0
  %4545 = vmatprep.subr.bf16.mxu0 0
  %4546 = vmatpush1.bf16.msra.mxu0 0
  %4547 = vmatprep.mubr.bf16.mxu0 0
  %4548 = vmatmul.mubr.bf16.gmra.mrb[0].mxu0 %v4513
  %v4549 = vpop.f32.mrb[0].mxu0
  %v4550 = vadd.f32 %v3592, %v4549
  %v4551 = vpop.f32.mrb[0].mxu0
  %v4552 = vadd.f32 %v3596, %v4551
  %v4553 = vpop.f32.mrb[0].mxu0
  %v4554 = vpop.f32.mrb[0].mxu0
  %4555 = vdwg.mxu0
  %v4556 = vadd.f32 %v4506, %v4550
  %v4557 = vxor.u32 %v4556, 2147483648
  %v4558 = vmul.f32 %v4557, 1.442695
  %v4559 = vpow.pop %v4558
  %v4560 = vadd.f32 %v4559, 1.0
  %v4561 = vrcp.pop %v4560
  %v4562 = vmul.f32 1.0, %v4561
  %v4563 = vmul.f32 %v4562, %v4552
  %v4564 = vadd.f32 %v4507, %v4563
  %v4565 = vtanh.pop %v4564
  %v4566 = vsub.f32 1.0, %v4562
  %4568 = vrot.lane.b32.xlu0 %v4565, 64
  %v4569 = vpop.permute.xlu0 %4568
  %v4571 = vmul.f32 %v4566, %v4569
  %v4572 = vmul.f32 %v4562, %v4427
  %v4573 = vadd.f32 %v4571, %v4572
  %4575 = vrot.lane.b32.xlu0 %v4505, 64
  %v4576 = vpop.permute.xlu0 %4575
  %4578 = vst.msk [vmem:[#allocation4 + $0x30] sm:$0xff] %vm994, %v4576
  %4580 = vrot.lane.b32.xlu0 %v4573, 64
  %v4581 = vpop.permute.xlu0 %4580
  %4583 = vst.msk [vmem:[#allocation5 + $0x8] sm:$0xff] %vm994, %v4581
  %v4584 = vld [vmem:[#allocation2 + $0x70] sm:$0xff]
  %v4585 = vld [vmem:[#allocation2 + $0x78] sm:$0xff]
  %v4586 = vpack.c.bf16 %v4505, %v4505
  %4588 = vrot.lane.b32.xlu0 %v4586, 64
  %v4589 = vpop.permute.xlu0 %4588
  %v4591 = vsel %vm994, %v4589, 0
  %4593 = vmatprep.subr.bf16.mxu0 %v3512
  %4594 = vmatpush1.bf16.msra.mxu0 %v3511
  %4595 = vmatprep.subr.bf16.mxu0 %v3514
  %4596 = vmatpush1.bf16.msra.mxu0 %v3513
  %4597 = vmatprep.subr.bf16.mxu0 %v3516
  %4598 = vmatpush1.bf16.msra.mxu0 %v3515
  %4599 = vmatprep.subr.bf16.mxu0 %v3518
  %4600 = vmatpush1.bf16.msra.mxu0 %v3517
  %4601 = vmatprep.subr.bf16.mxu0 0
  %4602 = vmatpush1.bf16.msra.mxu0 0
  %4603 = vmatprep.subr.bf16.mxu0 0
  %4604 = vmatpush1.bf16.msra.mxu0 0
  %4605 = vmatprep.subr.bf16.mxu0 0
  %4606 = vmatpush1.bf16.msra.mxu0 0
  %4607 = vmatprep.subr.bf16.mxu0 0
  %4608 = vmatpush1.bf16.msra.mxu0 0
  %4609 = vmatprep.subr.bf16.mxu0 0
  %4610 = vmatpush1.bf16.msra.mxu0 0
  %4611 = vmatprep.subr.bf16.mxu0 0
  %4612 = vmatpush1.bf16.msra.mxu0 0
  %4613 = vmatprep.subr.bf16.mxu0 0
  %4614 = vmatpush1.bf16.msra.mxu0 0
  %4615 = vmatprep.subr.bf16.mxu0 0
  %4616 = vmatpush1.bf16.msra.mxu0 0
  %4617 = vmatprep.subr.bf16.mxu0 0
  %4618 = vmatpush1.bf16.msra.mxu0 0
  %4619 = vmatprep.subr.bf16.mxu0 0
  %4620 = vmatpush1.bf16.msra.mxu0 0
  %4621 = vmatprep.subr.bf16.mxu0 0
  %4622 = vmatpush1.bf16.msra.mxu0 0
  %4623 = vmatprep.subr.bf16.mxu0 0
  %4624 = vmatpush1.bf16.msra.mxu0 0
  %4625 = vmatprep.mubr.bf16.mxu0 0
  %4626 = vmatmul.mubr.bf16.gmra.mrb[0].mxu0 %v4591
  %v4627 = vpop.f32.mrb[0].mxu0
  %v4628 = vadd.f32 %v3480, %v4627
  %v4629 = vpop.f32.mrb[0].mxu0
  %v4630 = vadd.f32 %v3484, %v4629
  %v4631 = vpop.f32.mrb[0].mxu0
  %v4632 = vpop.f32.mrb[0].mxu0
  %4633 = vdwg.mxu0
  %v4634 = vadd.f32 %v4584, %v4628
  %v4635 = vxor.u32 %v4634, 2147483648
  %v4636 = vmul.f32 %v4635, 1.442695
  %v4637 = vpow.pop %v4636
  %v4638 = vadd.f32 %v4637, 1.0
  %v4639 = vrcp.pop %v4638
  %v4640 = vmul.f32 1.0, %v4639
  %v4641 = vmul.f32 %v4640, %v4630
  %v4642 = vadd.f32 %v4585, %v4641
  %v4643 = vtanh.pop %v4642
  %v4644 = vsub.f32 1.0, %v4640
  %4646 = vrot.lane.b32.xlu0 %v4643, 64
  %v4647 = vpop.permute.xlu0 %4646
  %v4649 = vmul.f32 %v4644, %v4647
  %v4650 = vmul.f32 %v4640, %v4505
  %v4651 = vadd.f32 %v4649, %v4650
  %v4652 = vld [vmem:[#allocation3] sm:$0xff]
  %v4653 = vld [vmem:[#allocation3 + $0x8] sm:$0xff]
  %v4654 = vpack.c.bf16 %v4573, %v4573
  %4656 = vrot.lane.b32.xlu0 %v4654, 64
  %v4657 = vpop.permute.xlu0 %4656
  %v4659 = vsel %vm994, %v4657, 0
  %4661 = vmatprep.subr.bf16.mxu0 %v3624
  %4662 = vmatpush1.bf16.msra.mxu0 %v3623
  %4663 = vmatprep.subr.bf16.mxu0 %v3626
  %4664 = vmatpush1.bf16.msra.mxu0 %v3625
  %4665 = vmatprep.subr.bf16.mxu0 %v3628
  %4666 = vmatpush1.bf16.msra.mxu0 %v3627
  %4667 = vmatprep.subr.bf16.mxu0 %v3630
  %4668 = vmatpush1.bf16.msra.mxu0 %v3629
  %4669 = vmatprep.subr.bf16.mxu0 0
  %4670 = vmatpush1.bf16.msra.mxu0 0
  %4671 = vmatprep.subr.bf16.mxu0 0
  %4672 = vmatpush1.bf16.msra.mxu0 0
  %4673 = vmatprep.subr.bf16.mxu0 0
  %4674 = vmatpush1.bf16.msra.mxu0 0
  %4675 = vmatprep.subr.bf16.mxu0 0
  %4676 = vmatpush1.bf16.msra.mxu0 0
  %4677 = vmatprep.subr.bf16.mxu0 0
  %4678 = vmatpush1.bf16.msra.mxu0 0
  %4679 = vmatprep.subr.bf16.mxu0 0
  %4680 = vmatpush1.bf16.msra.mxu0 0
  %4681 = vmatprep.subr.bf16.mxu0 0
  %4682 = vmatpush1.bf16.msra.mxu0 0
  %4683 = vmatprep.subr.bf16.mxu0 0
  %4684 = vmatpush1.bf16.msra.mxu0 0
  %4685 = vmatprep.subr.bf16.mxu0 0
  %4686 = vmatpush1.bf16.msra.mxu0 0
  %4687 = vmatprep.subr.bf16.mxu0 0
  %4688 = vmatpush1.bf16.msra.mxu0 0
  %4689 = vmatprep.subr.bf16.mxu0 0
  %4690 = vmatpush1.bf16.msra.mxu0 0
  %4691 = vmatprep.subr.bf16.mxu0 0
  %4692 = vmatpush1.bf16.msra.mxu0 0
  %4693 = vmatprep.mubr.bf16.mxu0 0
  %4694 = vmatmul.mubr.bf16.gmra.mrb[0].mxu0 %v4659
  %v4695 = vpop.f32.mrb[0].mxu0
  %v4696 = vadd.f32 %v3592, %v4695
  %v4697 = vpop.f32.mrb[0].mxu0
  %v4698 = vadd.f32 %v3596, %v4697
  %v4699 = vpop.f32.mrb[0].mxu0
  %v4700 = vpop.f32.mrb[0].mxu0
  %4701 = vdwg.mxu0
  %v4702 = vadd.f32 %v4652, %v4696
  %v4703 = vxor.u32 %v4702, 2147483648
  %v4704 = vmul.f32 %v4703, 1.442695
  %v4705 = vpow.pop %v4704
  %v4706 = vadd.f32 %v4705, 1.0
  %v4707 = vrcp.pop %v4706
  %v4708 = vmul.f32 1.0, %v4707
  %v4709 = vmul.f32 %v4708, %v4698
  %v4710 = vadd.f32 %v4653, %v4709
  %v4711 = vtanh.pop %v4710
  %v4712 = vsub.f32 1.0, %v4708
  %4714 = vrot.lane.b32.xlu0 %v4711, 64
  %v4715 = vpop.permute.xlu0 %4714
  %v4717 = vmul.f32 %v4712, %v4715
  %v4718 = vmul.f32 %v4708, %v4573
  %v4719 = vadd.f32 %v4717, %v4718
  %4721 = vrot.lane.b32.xlu0 %v4651, 64
  %v4722 = vpop.permute.xlu0 %4721
  %4724 = vst.msk [vmem:[#allocation4 + $0x38] sm:$0xff] %vm994, %v4722
  %4726 = vrot.lane.b32.xlu0 %v4719, 64
  %v4727 = vpop.permute.xlu0 %4726
  %4729 = vst.msk [vmem:[#allocation5] sm:$0xff] %vm994, %v4727
  %v4730 = vld [vmem:[#allocation4] sm:$0xff]
  %v4731 = vld [vmem:[#allocation4 + $0x8] sm:$0xff]
  %v4732 = vld [vmem:[#allocation4 + $0x10] sm:$0xff]
  %v4733 = vld [vmem:[#allocation4 + $0x18] sm:$0xff]
  %v4734 = vld [vmem:[#allocation4 + $0x20] sm:$0xff]
  %v4735 = vld [vmem:[#allocation4 + $0x28] sm:$0xff]
  %v4736 = vld [vmem:[#allocation4 + $0x30] sm:$0xff]
  %v4737 = vld [vmem:[#allocation4 + $0x38] sm:$0xff]
  %v4738 = vpack.c.bf16 %v4731, %v4730
  %v4739 = vpack.c.bf16 %v4733, %v4732
  %v4740 = vpack.c.bf16 %v4735, %v4734
  %v4741 = vpack.c.bf16 %v4737, %v4736
  %v4742 = vld [vmem:[%s9] sm:$0xf]
  %v4743 = vld [vmem:[%s9 + $0x4] sm:$0xf]
  %v4744 = vld [vmem:[%s9 + $0x8] sm:$0xf]
  %v4745 = vld [vmem:[%s9 + $0xc] sm:$0xf]
  %v4746 = vld [vmem:[%s9 + $0x10] sm:$0xf]
  %v4747 = vld [vmem:[%s9 + $0x14] sm:$0xf]
  %v4748 = vld [vmem:[%s9 + $0x18] sm:$0xf]
  %v4749 = vld [vmem:[%s9 + $0x1c] sm:$0xf]
  %v4750 = vld [vmem:[#allocation5] sm:$0xff]
  %v4751 = vld [vmem:[#allocation5 + $0x8] sm:$0xff]
  %v4752 = vld [vmem:[#allocation5 + $0x10] sm:$0xff]
  %v4753 = vld [vmem:[#allocation5 + $0x18] sm:$0xff]
  %v4754 = vld [vmem:[#allocation5 + $0x20] sm:$0xff]
  %v4755 = vld [vmem:[#allocation5 + $0x28] sm:$0xff]
  %v4756 = vld [vmem:[#allocation5 + $0x30] sm:$0xff]
  %v4757 = vld [vmem:[#allocation5 + $0x38] sm:$0xff]
  %v4758 = vpack.c.bf16 %v4751, %v4750
  %v4759 = vpack.c.bf16 %v4753, %v4752
  %v4760 = vpack.c.bf16 %v4755, %v4754
  %v4761 = vpack.c.bf16 %v4757, %v4756
  %v4762 = vld [vmem:[%s10] sm:$0xf]
  %v4763 = vld [vmem:[%s10 + $0x4] sm:$0xf]
  %v4764 = vld [vmem:[%s10 + $0x8] sm:$0xf]
  %v4765 = vld [vmem:[%s10 + $0xc] sm:$0xf]
  %v4766 = vld [vmem:[%s10 + $0x10] sm:$0xf]
  %v4767 = vld [vmem:[%s10 + $0x14] sm:$0xf]
  %v4768 = vld [vmem:[%s10 + $0x18] sm:$0xf]
  %v4769 = vld [vmem:[%s10 + $0x1c] sm:$0xf]
  %v4778 = vunpack.c.l.b16 %v4762
  %v4779 = vunpack.c.l.b16 %v4763
  %v4780 = vunpack.c.l.b16 %v4764
  %v4781 = vunpack.c.l.b16 %v4765
  %v4782 = vunpack.c.l.b16 %v4766
  %v4783 = vunpack.c.l.b16 %v4767
  %v4784 = vunpack.c.l.b16 %v4768
  %v4785 = vunpack.c.l.b16 %v4769
  %v4786 = vpack.c.b16 %v4779, %v4778
  %v4787 = vpack.c.b16 %v4781, %v4780
  %v4788 = vpack.c.b16 %v4783, %v4782
  %v4789 = vpack.c.b16 %v4785, %v4784
  %v4795 = vsel %vm994, %v4758, 0
  %v4798 = vsel %vm994, %v4759, 0
  %v4801 = vsel %vm994, %v4760, 0
  %v4804 = vsel %vm994, %v4761, 0
  %4806 = vmatprep.subr.bf16.mxu0 0
  %4807 = vmatpush1.bf16.msra.mxu0 %v4786
  %4808 = vmatprep.subr.bf16.mxu0 0
  %4809 = vmatpush1.bf16.msra.mxu0 %v4787
  %4810 = vmatprep.subr.bf16.mxu0 0
  %4811 = vmatpush1.bf16.msra.mxu0 %v4788
  %4812 = vmatprep.subr.bf16.mxu0 0
  %4813 = vmatpush1.bf16.msra.mxu0 %v4789
  %4814 = vmatprep.subr.bf16.mxu0 0
  %4815 = vmatpush1.bf16.msra.mxu0 0
  %4816 = vmatprep.subr.bf16.mxu0 0
  %4817 = vmatpush1.bf16.msra.mxu0 0
  %4818 = vmatprep.subr.bf16.mxu0 0
  %4819 = vmatpush1.bf16.msra.mxu0 0
  %4820 = vmatprep.subr.bf16.mxu0 0
  %4821 = vmatpush1.bf16.msra.mxu0 0
  %4822 = vmatprep.subr.bf16.mxu0 0
  %4823 = vmatpush1.bf16.msra.mxu0 0
  %4824 = vmatprep.subr.bf16.mxu0 0
  %4825 = vmatpush1.bf16.msra.mxu0 0
  %4826 = vmatprep.subr.bf16.mxu0 0
  %4827 = vmatpush1.bf16.msra.mxu0 0
  %4828 = vmatprep.subr.bf16.mxu0 0
  %4829 = vmatpush1.bf16.msra.mxu0 0
  %4830 = vmatprep.subr.bf16.mxu0 0
  %4831 = vmatpush1.bf16.msra.mxu0 0
  %4832 = vmatprep.subr.bf16.mxu0 0
  %4833 = vmatpush1.bf16.msra.mxu0 0
  %4834 = vmatprep.subr.bf16.mxu0 0
  %4835 = vmatpush1.bf16.msra.mxu0 0
  %4836 = vmatprep.subr.bf16.mxu0 0
  %4837 = vmatpush1.bf16.msra.mxu0 0
  %4838 = vmatprep.mubr.bf16.mxu0 0
  %4839 = vmatmul.mubr.bf16.gmra.mrb[0].mxu0 %v4795
  %v4840 = vpop.f32.mrb[0].mxu0
  %v4841 = vadd.f32 0.0, %v4840
  %v4842 = vpop.f32.mrb[0].mxu0
  %v4843 = vpop.f32.mrb[0].mxu0
  %v4844 = vadd.f32 0.0, %v4843
  %v4845 = vpop.f32.mrb[0].mxu0
  %4846 = vmatprep.mubr.bf16.mxu0 0
  %4847 = vmatmul.mubr.bf16.gmra.mrb[0].mxu0 %v4798
  %v4848 = vpop.f32.mrb[0].mxu0
  %v4849 = vadd.f32 0.0, %v4848
  %v4850 = vpop.f32.mrb[0].mxu0
  %v4851 = vpop.f32.mrb[0].mxu0
  %v4852 = vadd.f32 0.0, %v4851
  %v4853 = vpop.f32.mrb[0].mxu0
  %4854 = vmatprep.mubr.bf16.mxu0 0
  %4855 = vmatmul.mubr.bf16.gmra.mrb[0].mxu0 %v4801
  %v4856 = vpop.f32.mrb[0].mxu0
  %v4857 = vadd.f32 0.0, %v4856
  %v4858 = vpop.f32.mrb[0].mxu0
  %v4859 = vpop.f32.mrb[0].mxu0
  %v4860 = vadd.f32 0.0, %v4859
  %v4861 = vpop.f32.mrb[0].mxu0
  %4862 = vmatprep.mubr.bf16.mxu0 0
  %4863 = vmatmul.mubr.bf16.gmra.mrb[0].mxu0 %v4804
  %v4864 = vpop.f32.mrb[0].mxu0
  %v4865 = vadd.f32 0.0, %v4864
  %v4866 = vpop.f32.mrb[0].mxu0
  %v4867 = vpop.f32.mrb[0].mxu0
  %v4868 = vadd.f32 0.0, %v4867
  %v4869 = vpop.f32.mrb[0].mxu0
  %4870 = vdwg.mxu0
  %v4879 = vunpack.c.l.b16 %v4742
  %v4880 = vunpack.c.l.b16 %v4743
  %v4881 = vunpack.c.l.b16 %v4744
  %v4882 = vunpack.c.l.b16 %v4745
  %v4883 = vunpack.c.l.b16 %v4746
  %v4884 = vunpack.c.l.b16 %v4747
  %v4885 = vunpack.c.l.b16 %v4748
  %v4886 = vunpack.c.l.b16 %v4749
  %v4887 = vpack.c.b16 %v4880, %v4879
  %v4888 = vpack.c.b16 %v4882, %v4881
  %v4889 = vpack.c.b16 %v4884, %v4883
  %v4890 = vpack.c.b16 %v4886, %v4885
  %v4896 = vsel %vm994, %v4738, 0
  %v4899 = vsel %vm994, %v4739, 0
  %v4902 = vsel %vm994, %v4740, 0
  %v4905 = vsel %vm994, %v4741, 0
  %4907 = vmatprep.subr.bf16.mxu0 0
  %4908 = vmatpush1.bf16.msra.mxu0 %v4887
  %4909 = vmatprep.subr.bf16.mxu0 0
  %4910 = vmatpush1.bf16.msra.mxu0 %v4888
  %4911 = vmatprep.subr.bf16.mxu0 0
  %4912 = vmatpush1.bf16.msra.mxu0 %v4889
  %4913 = vmatprep.subr.bf16.mxu0 0
  %4914 = vmatpush1.bf16.msra.mxu0 %v4890
  %4915 = vmatprep.subr.bf16.mxu0 0
  %4916 = vmatpush1.bf16.msra.mxu0 0
  %4917 = vmatprep.subr.bf16.mxu0 0
  %4918 = vmatpush1.bf16.msra.mxu0 0
  %4919 = vmatprep.subr.bf16.mxu0 0
  %4920 = vmatpush1.bf16.msra.mxu0 0
  %4921 = vmatprep.subr.bf16.mxu0 0
  %4922 = vmatpush1.bf16.msra.mxu0 0
  %4923 = vmatprep.subr.bf16.mxu0 0
  %4924 = vmatpush1.bf16.msra.mxu0 0
  %4925 = vmatprep.subr.bf16.mxu0 0
  %4926 = vmatpush1.bf16.msra.mxu0 0
  %4927 = vmatprep.subr.bf16.mxu0 0
  %4928 = vmatpush1.bf16.msra.mxu0 0
  %4929 = vmatprep.subr.bf16.mxu0 0
  %4930 = vmatpush1.bf16.msra.mxu0 0
  %4931 = vmatprep.subr.bf16.mxu0 0
  %4932 = vmatpush1.bf16.msra.mxu0 0
  %4933 = vmatprep.subr.bf16.mxu0 0
  %4934 = vmatpush1.bf16.msra.mxu0 0
  %4935 = vmatprep.subr.bf16.mxu0 0
  %4936 = vmatpush1.bf16.msra.mxu0 0
  %4937 = vmatprep.subr.bf16.mxu0 0
  %4938 = vmatpush1.bf16.msra.mxu0 0
  %4939 = vmatprep.mubr.bf16.mxu0 0
  %4940 = vmatmul.mubr.bf16.gmra.mrb[0].mxu0 %v4896
  %v4941 = vpop.f32.mrb[0].mxu0
  %v4942 = vadd.f32 %v4841, %v4941
  %v4943 = vpop.f32.mrb[0].mxu0
  %v4944 = vpop.f32.mrb[0].mxu0
  %v4945 = vadd.f32 %v4844, %v4944
  %v4946 = vpop.f32.mrb[0].mxu0
  %4947 = vmatprep.mubr.bf16.mxu0 0
  %4948 = vmatmul.mubr.bf16.gmra.mrb[0].mxu0 %v4899
  %v4949 = vpop.f32.mrb[0].mxu0
  %v4950 = vadd.f32 %v4849, %v4949
  %v4951 = vpop.f32.mrb[0].mxu0
  %v4952 = vpop.f32.mrb[0].mxu0
  %v4953 = vadd.f32 %v4852, %v4952
  %v4954 = vpop.f32.mrb[0].mxu0
  %4955 = vmatprep.mubr.bf16.mxu0 0
  %4956 = vmatmul.mubr.bf16.gmra.mrb[0].mxu0 %v4902
  %v4957 = vpop.f32.mrb[0].mxu0
  %v4958 = vadd.f32 %v4857, %v4957
  %v4959 = vpop.f32.mrb[0].mxu0
  %v4960 = vpop.f32.mrb[0].mxu0
  %v4961 = vadd.f32 %v4860, %v4960
  %v4962 = vpop.f32.mrb[0].mxu0
  %4963 = vmatprep.mubr.bf16.mxu0 0
  %4964 = vmatmul.mubr.bf16.gmra.mrb[0].mxu0 %v4905
  %v4965 = vpop.f32.mrb[0].mxu0
  %v4966 = vadd.f32 %v4865, %v4965
  %v4967 = vpop.f32.mrb[0].mxu0
  %v4968 = vpop.f32.mrb[0].mxu0
  %v4969 = vadd.f32 %v4868, %v4968
  %v4970 = vpop.f32.mrb[0].mxu0
  %4971 = vdwg.mxu0
  %v4972 = vld [vmem:[%s11] sm:$0x1]
  %v4974 = vlaneseq
  %v4975 = vshrl.u32 %v4974, 7
  %v4976 = vsub.s32 0, %v4975
  %v4977 = vrot.slane %v4972, %v4976
  %v4979 = vadd.f32 %v4942, %v4977
  %v4980 = vadd.f32 %v4945, %v4977
  %v4981 = vadd.f32 %v4950, %v4977
  %v4982 = vadd.f32 %v4953, %v4977
  %v4983 = vadd.f32 %v4958, %v4977
  %v4984 = vadd.f32 %v4961, %v4977
  %v4985 = vadd.f32 %v4966, %v4977
  %v4986 = vadd.f32 %v4969, %v4977
  %4987 = vst [vmem:[%s12] sm:$0xff] %v4979
  %4988 = vst [vmem:[%s12 + $0x8] sm:$0xff] %v4980
  %4989 = vst [vmem:[%s12 + $0x10] sm:$0xff] %v4981
  %4990 = vst [vmem:[%s12 + $0x18] sm:$0xff] %v4982
  %4991 = vst [vmem:[%s12 + $0x20] sm:$0xff] %v4983
  %4992 = vst [vmem:[%s12 + $0x28] sm:$0xff] %v4984
  %4993 = vst [vmem:[%s12 + $0x30] sm:$0xff] %v4985
  %4994 = vst [vmem:[%s12 + $0x38] sm:$0xff] %v4986
  // Predicated region
  $region50: #{crnn_forward.7} parent=0 // pred_check
    _
  $region51: #{crnn_forward.7} parent=0 // pred_check_branch
    %4996 = sbr.rel (0) target = $region53
  $region52: #{crnn_forward.7} parent=0 // pred_region
    _
  $region53: #{crnn_forward.7} parent=0 // pred_fallthru
    _
  // Predicated region
  $region54: #{crnn_forward.7} parent=0 // pred_check
    _
  $region55: #{crnn_forward.7} parent=0 // pred_check_branch
    %4998 = sbr.rel (0) target = $region57
  $region56: #{crnn_forward.7} parent=0 // pred_region
    _
  $region57: #{crnn_forward.7} parent=0 // pred_fallthru
    _

</llo_original>
